<compile_context>
chip_gen: v7x
topology: tpu7x:2x2x1
jax: 0.10.0
libtpu: 0.0.40
codegen_flags: <defaults>
</compile_context>

<pallas_src>
import functools

import numpy as np

import jax
import jax.numpy as jnp
from jax.experimental import pallas as pl
from jax.experimental.pallas import tpu as pltpu

K = 3          # kernel_size (module default)
PAD = K // 2   # 'same' padding


def _build_layer_cfg(in_channels, channels, strides, H, W):
    """Static per-layer geometry mirroring Encoder.__init__/forward."""
    n_layers = len(channels) - 1
    io = [(in_channels, channels[0], 1)]                        # input_block
    for i in range(n_layers):
        io.append((channels[i], channels[i + 1], strides[i]))   # encoder_list[i]
    io.append((channels[-1], channels[-1], 1))                  # bottom

    L = len(io)
    out_layers = list(range(n_layers)) + [L - 1]                # skip features

    cfg = []
    h, w = H, W
    for l, (cin, cout, s) in enumerate(io):
        ho = (h + 2 * PAD - K) // s + 1
        wo = (w + 2 * PAD - K) // s + 1
        cfg.append(dict(cin=cin, cout=cout, hin=h, win=w, ho=ho, wo=wo,
                        stride=s,
                        out_idx=out_layers.index(l) if l in out_layers else -1))
        h, w = ho, wo
    return cfg


def _tap_matrices(hin, win, ho, wo, stride):
    """(K*K, Hin*Win, Ho*Wo) 0/1 matrices.

    Column q of T_t selects the input pixel that tap t=(kh,kw) of the 3x3
    'same'-padded, stride-`stride` conv reads for output position q (the
    column is all-zero when the tap falls into the zero padding).  The stride
    selection is folded in, so strided convs need no extra kernel work.
    """
    T = np.zeros((K * K, hin * win, ho * wo), np.float32)
    for kh in range(K):
        for kw in range(K):
            t = kh * K + kw
            for oh in range(ho):
                ih = stride * oh + kh - PAD
                if ih < 0 or ih >= hin:
                    continue
                for ow in range(wo):
                    iw = stride * ow + kw - PAD
                    if iw < 0 or iw >= win:
                        continue
                    T[t, ih * win + iw, oh * wo + ow] = 1.0
    return T


def _make_encoder_kernel(cfg):
    L = len(cfg)
    n_out = sum(1 for c in cfg if c["out_idx"] >= 0)

    def kernel(*refs):
        alpha_ref = refs[0]                     # SMEM (L,) PReLU slopes
        x_ref = refs[1]                         # (1, Cin, H*W)
        w_refs = refs[2:2 + L]                  # each (K*K, Cout_l, Cin_l)
        t_refs = refs[2 + L:2 + 2 * L]          # each (K*K, HW_l, HoWo_l)
        out_refs = refs[2 + 2 * L:2 + 2 * L + n_out]

        x = x_ref[0]                            # (Cin, H*W) value, stays on-chip
        for l, c in enumerate(cfg):
            cout, howo = c["cout"], c["ho"] * c["wo"]

            # Conv2d(k=3, pad=1, stride=s) as 9 tap-gather + weight matmuls.
            acc = jnp.zeros((cout, howo), jnp.float32)
            for t in range(K * K):
                z = jnp.dot(x, t_refs[l][t],
                            preferred_element_type=jnp.float32)      # (Cin, HoWo)
                acc = acc + jnp.dot(w_refs[l][t], z,
                                    preferred_element_type=jnp.float32)

            # InstanceNorm2d (biased variance, eps=1e-5).  Conv bias omitted:
            # the per-channel mean subtraction cancels it exactly.
            mean = jnp.mean(acc, axis=1, keepdims=True)
            d = acc - mean
            var = jnp.mean(d * d, axis=1, keepdims=True)
            y = d * jax.lax.rsqrt(var + 1e-5)

            # Dropout(p=0) is identity; PReLU with a single learnable slope.
            alpha = alpha_ref[l]
            y = jnp.where(y >= 0.0, y, alpha * y)

            if c["out_idx"] >= 0:               # skip feature -> HBM (lane-dense)
                out_refs[c["out_idx"]][0] = y

            x = y                               # feed next layer

    return kernel


def encoder_forward(x_nchw, weights, alphas, *, in_channels, channels, strides):
    """Fused Pallas forward; returns the skip-feature list in NCHW (like PyTorch)."""
    N, Cin, H, W = x_nchw.shape
    assert Cin == in_channels
    cfg = _build_layer_cfg(in_channels, channels, strides, H, W)
    L = len(cfg)
    assert len(weights) == L

    # Rearrange conv weights at trace time: (K, K, Cin, Cout) -> (K*K, Cout, Cin).
    w9 = [jnp.transpose(w.astype(jnp.float32).reshape(K * K, c["cin"], c["cout"]),
                        (0, 2, 1))
          for w, c in zip(weights, cfg)]
    # Constant tap/shift(+stride) matrices, one stack per layer.
    taps = [jnp.asarray(_tap_matrices(c["hin"], c["win"], c["ho"], c["wo"],
                                      c["stride"]))
            for c in cfg]

    # NCHW -> (N, C, H*W): a contiguous view, done outside the kernel.
    x_flat = x_nchw.astype(jnp.float32).reshape(N, Cin, H * W)

    in_specs = [
        pl.BlockSpec(memory_space=pltpu.MemorySpace.SMEM),        # PReLU alphas
        pl.BlockSpec((1, Cin, H * W), lambda n: (n, 0, 0)),       # one sample
    ]
    in_specs += [pl.BlockSpec(w.shape, lambda n: (0, 0, 0)) for w in w9]
    in_specs += [pl.BlockSpec(t.shape, lambda n: (0, 0, 0)) for t in taps]

    out_cfg = sorted([c for c in cfg if c["out_idx"] >= 0],
                     key=lambda c: c["out_idx"])
    out_shape = [jax.ShapeDtypeStruct((N, c["cout"], c["ho"] * c["wo"]),
                                      jnp.float32) for c in out_cfg]
    out_specs = [pl.BlockSpec((1, c["cout"], c["ho"] * c["wo"]),
                              lambda n: (n, 0, 0)) for c in out_cfg]

    feats_flat = pl.pallas_call(
        _make_encoder_kernel(cfg),
        out_shape=out_shape,
        grid=(N,),
        in_specs=in_specs,
        out_specs=out_specs,
        compiler_params=pltpu.CompilerParams(
            dimension_semantics=("parallel",)),
    )(alphas.astype(jnp.float32), x_flat, *w9, *taps)

    # (N, C, Ho*Wo) is already NCHW-flat: a pure reshape (no transpose) finishes it.
    return [f.reshape(N, c["cout"], c["ho"], c["wo"])
            for f, c in zip(feats_flat, out_cfg)]


def _reference_forward(x, weights, alphas, *, in_channels, channels, strides):
    """Plain-JAX reference of the PyTorch Encoder.forward (self-check only)."""
    n_layers = len(channels) - 1
    layer_strides = [1] + list(strides[:n_layers]) + [1]
    outs = []
    h = x.astype(jnp.float32)
    for l, (w, s) in enumerate(zip(weights, layer_strides)):
        y = jax.lax.conv_general_dilated(
            h, w.astype(jnp.float32), window_strides=(s, s),
            padding=((PAD, PAD), (PAD, PAD)),
            dimension_numbers=("NCHW", "HWIO", "NCHW"),
            precision=jax.lax.Precision.HIGHEST)
        mean = jnp.mean(y, axis=(2, 3), keepdims=True)
        var = jnp.mean((y - mean) ** 2, axis=(2, 3), keepdims=True)
        y = (y - mean) * jax.lax.rsqrt(var + 1e-5)
        y = jnp.where(y >= 0.0, y, alphas[l] * y)
        outs.append(y)
        h = y
    return [outs[i] for i in range(n_layers)] + [outs[-1]]


def init_encoder_params(key, in_channels, channels, strides, kernel_size=K):
    """Synthetic parameters matching the PyTorch module's layer structure.

    Conv weights are stored as (K, K, Cin, Cout).  The Conv2d bias (bias=True)
    is not materialised: InstanceNorm cancels a per-channel constant exactly.
    """
    n_layers = len(channels) - 1
    io = [(in_channels, channels[0])]
    for i in range(n_layers):
        io.append((channels[i], channels[i + 1]))
    io.append((channels[-1], channels[-1]))

    weights = []
    for cin, cout in io:
        key, kw = jax.random.split(key)
        weights.append(0.1 * jax.random.normal(
            kw, (kernel_size, kernel_size, cin, cout), jnp.float32))
    alphas = jnp.full((len(io),), 0.25, jnp.float32)   # PReLU default init
    return weights, alphas


if __name__ == "__main__":
    # Encoder(spatial_dims=2, in_channels=4, channels=(8, 16, 32), strides=(2, 2))
    in_channels = 4
    channels = (8, 16, 32)
    strides = (2, 2)

    key = jax.random.PRNGKey(0)
    key, kx = jax.random.split(key)
    x = jax.random.normal(kx, (2, in_channels, 16, 16), jnp.float32)   # NCHW

    weights, alphas = init_encoder_params(key, in_channels, channels, strides)

    fwd = jax.jit(functools.partial(
        encoder_forward, in_channels=in_channels, channels=channels,
        strides=strides))
    feats = fwd(x, weights, alphas)
    feats = jax.block_until_ready(feats)

    # Shape check: matches the PyTorch Encoder's skip-feature list.
    assert feats[0].shape == (2, 8, 16, 16)
    assert feats[1].shape == (2, 16, 8, 8)
    assert feats[2].shape == (2, 32, 4, 4)

    # Numerical self-check against a plain-JAX reference of the module.
    # (Loose tolerance only guards against MXU f32 multi-pass rounding; any
    #  structural bug would produce O(1) discrepancies.)
    ref = _reference_forward(x, weights, alphas, in_channels=in_channels,
                             channels=channels, strides=strides)
    for got, want in zip(feats, ref):
        np.testing.assert_allclose(np.asarray(got), np.asarray(want),
                                   rtol=2e-2, atol=2e-2)

    print("KERNEL_OK")
</pallas_src>

<mosaic_0001>
module attributes {stable_mosaic.version = 11 : i64} {
  func.func @kernel(%arg0: i32, %arg1: memref<4xf32, #tpu.memory_space<smem>>, %arg2: memref<1x4x256xf32, #tpu.memory_space<vmem>>, %arg3: memref<9x8x4xf32, #tpu.memory_space<vmem>>, %arg4: memref<9x16x8xf32, #tpu.memory_space<vmem>>, %arg5: memref<9x32x16xf32, #tpu.memory_space<vmem>>, %arg6: memref<9x32x32xf32, #tpu.memory_space<vmem>>, %arg7: memref<9x256x256xf32, #tpu.memory_space<vmem>>, %arg8: memref<9x256x64xf32, #tpu.memory_space<vmem>>, %arg9: memref<9x64x16xf32, #tpu.memory_space<vmem>>, %arg10: memref<9x16x16xf32, #tpu.memory_space<vmem>>, %arg11: memref<1x8x256xf32, #tpu.memory_space<vmem>>, %arg12: memref<1x16x64xf32, #tpu.memory_space<vmem>>, %arg13: memref<1x32x16xf32, #tpu.memory_space<vmem>>) attributes {dimension_semantics = [#tpu.dimension_semantics<parallel>], iteration_bounds = array<i64: 2>, scalar_prefetch = 0 : i64, scratch_operands = 0 : i64, tpu.core_type = #tpu.core_type<tc>, window_params = [{transform_indices = @transform_0, window_bounds = array<i64: 4>}, {transform_indices = @transform_1, window_bounds = array<i64: 1, 4, 256>}, {pipeline_mode = #tpu.pipeline_mode<synchronous>, transform_indices = @transform_2, window_bounds = array<i64: 9, 8, 4>}, {pipeline_mode = #tpu.pipeline_mode<synchronous>, transform_indices = @transform_3, window_bounds = array<i64: 9, 16, 8>}, {pipeline_mode = #tpu.pipeline_mode<synchronous>, transform_indices = @transform_4, window_bounds = array<i64: 9, 32, 16>}, {pipeline_mode = #tpu.pipeline_mode<synchronous>, transform_indices = @transform_5, window_bounds = array<i64: 9, 32, 32>}, {pipeline_mode = #tpu.pipeline_mode<synchronous>, transform_indices = @transform_6, window_bounds = array<i64: 9, 256, 256>}, {pipeline_mode = #tpu.pipeline_mode<synchronous>, transform_indices = @transform_7, window_bounds = array<i64: 9, 256, 64>}, {pipeline_mode = #tpu.pipeline_mode<synchronous>, transform_indices = @transform_8, window_bounds = array<i64: 9, 64, 16>}, {pipeline_mode = #tpu.pipeline_mode<synchronous>, transform_indices = @transform_9, window_bounds = array<i64: 9, 16, 16>}, {transform_indices = @transform_10, window_bounds = array<i64: 1, 8, 256>}, {transform_indices = @transform_11, window_bounds = array<i64: 1, 16, 64>}, {transform_indices = @transform_12, window_bounds = array<i64: 1, 32, 16>}]} {
    %c0 = arith.constant 0 : index
    %c0_0 = arith.constant 0 : index
    %c0_1 = arith.constant 0 : index
    %0 = vector.load %arg2[%c0, %c0_0, %c0_1] : memref<1x4x256xf32, #tpu.memory_space<vmem>>, vector<1x4x256xf32>
    %1 = vector.shape_cast %0 : vector<1x4x256xf32> to vector<4x256xf32>
    %cst = arith.constant 0.000000e+00 : f32
    %2 = vector.broadcast %cst : f32 to vector<8x256xf32>
    %c0_2 = arith.constant 0 : index
    %c0_3 = arith.constant 0 : index
    %c0_4 = arith.constant 0 : index
    %3 = vector.load %arg7[%c0_2, %c0_3, %c0_4] : memref<9x256x256xf32, #tpu.memory_space<vmem>>, vector<1x256x256xf32>
    %4 = vector.shape_cast %3 : vector<1x256x256xf32> to vector<256x256xf32>
    %cst_5 = arith.constant dense<0.000000e+00> : vector<4x256xf32>
    %5 = tpu.matmul %1, %4, %cst_5 {dimension_numbers = #tpu.dot_dimension_numbers<[1], [0], [0], [1], [0, 0, 1, 1], [], []>} : vector<4x256xf32>, vector<256x256xf32>, vector<4x256xf32> -> vector<4x256xf32>
    %c0_6 = arith.constant 0 : index
    %c0_7 = arith.constant 0 : index
    %c0_8 = arith.constant 0 : index
    %6 = vector.load %arg3[%c0_6, %c0_7, %c0_8] : memref<9x8x4xf32, #tpu.memory_space<vmem>>, vector<1x8x4xf32>
    %7 = vector.shape_cast %6 : vector<1x8x4xf32> to vector<8x4xf32>
    %cst_9 = arith.constant dense<0.000000e+00> : vector<8x256xf32>
    %8 = tpu.matmul %7, %5, %cst_9 {dimension_numbers = #tpu.dot_dimension_numbers<[1], [0], [0], [1], [0, 0, 1, 1], [], []>} : vector<8x4xf32>, vector<4x256xf32>, vector<8x256xf32> -> vector<8x256xf32>
    %9 = arith.addf %2, %8 : vector<8x256xf32>
    %c1 = arith.constant 1 : index
    %c0_10 = arith.constant 0 : index
    %c0_11 = arith.constant 0 : index
    %10 = vector.load %arg7[%c1, %c0_10, %c0_11] : memref<9x256x256xf32, #tpu.memory_space<vmem>>, vector<1x256x256xf32>
    %11 = vector.shape_cast %10 : vector<1x256x256xf32> to vector<256x256xf32>
    %cst_12 = arith.constant dense<0.000000e+00> : vector<4x256xf32>
    %12 = tpu.matmul %1, %11, %cst_12 {dimension_numbers = #tpu.dot_dimension_numbers<[1], [0], [0], [1], [0, 0, 1, 1], [], []>} : vector<4x256xf32>, vector<256x256xf32>, vector<4x256xf32> -> vector<4x256xf32>
    %c1_13 = arith.constant 1 : index
    %c0_14 = arith.constant 0 : index
    %c0_15 = arith.constant 0 : index
    %13 = vector.load %arg3[%c1_13, %c0_14, %c0_15] : memref<9x8x4xf32, #tpu.memory_space<vmem>>, vector<1x8x4xf32>
    %14 = vector.shape_cast %13 : vector<1x8x4xf32> to vector<8x4xf32>
    %cst_16 = arith.constant dense<0.000000e+00> : vector<8x256xf32>
    %15 = tpu.matmul %14, %12, %cst_16 {dimension_numbers = #tpu.dot_dimension_numbers<[1], [0], [0], [1], [0, 0, 1, 1], [], []>} : vector<8x4xf32>, vector<4x256xf32>, vector<8x256xf32> -> vector<8x256xf32>
    %16 = arith.addf %9, %15 : vector<8x256xf32>
    %c2 = arith.constant 2 : index
    %c0_17 = arith.constant 0 : index
    %c0_18 = arith.constant 0 : index
    %17 = vector.load %arg7[%c2, %c0_17, %c0_18] : memref<9x256x256xf32, #tpu.memory_space<vmem>>, vector<1x256x256xf32>
    %18 = vector.shape_cast %17 : vector<1x256x256xf32> to vector<256x256xf32>
    %cst_19 = arith.constant dense<0.000000e+00> : vector<4x256xf32>
    %19 = tpu.matmul %1, %18, %cst_19 {dimension_numbers = #tpu.dot_dimension_numbers<[1], [0], [0], [1], [0, 0, 1, 1], [], []>} : vector<4x256xf32>, vector<256x256xf32>, vector<4x256xf32> -> vector<4x256xf32>
    %c2_20 = arith.constant 2 : index
    %c0_21 = arith.constant 0 : index
    %c0_22 = arith.constant 0 : index
    %20 = vector.load %arg3[%c2_20, %c0_21, %c0_22] : memref<9x8x4xf32, #tpu.memory_space<vmem>>, vector<1x8x4xf32>
    %21 = vector.shape_cast %20 : vector<1x8x4xf32> to vector<8x4xf32>
    %cst_23 = arith.constant dense<0.000000e+00> : vector<8x256xf32>
    %22 = tpu.matmul %21, %19, %cst_23 {dimension_numbers = #tpu.dot_dimension_numbers<[1], [0], [0], [1], [0, 0, 1, 1], [], []>} : vector<8x4xf32>, vector<4x256xf32>, vector<8x256xf32> -> vector<8x256xf32>
    %23 = arith.addf %16, %22 : vector<8x256xf32>
    %c3 = arith.constant 3 : index
    %c0_24 = arith.constant 0 : index
    %c0_25 = arith.constant 0 : index
    %24 = vector.load %arg7[%c3, %c0_24, %c0_25] : memref<9x256x256xf32, #tpu.memory_space<vmem>>, vector<1x256x256xf32>
    %25 = vector.shape_cast %24 : vector<1x256x256xf32> to vector<256x256xf32>
    %cst_26 = arith.constant dense<0.000000e+00> : vector<4x256xf32>
    %26 = tpu.matmul %1, %25, %cst_26 {dimension_numbers = #tpu.dot_dimension_numbers<[1], [0], [0], [1], [0, 0, 1, 1], [], []>} : vector<4x256xf32>, vector<256x256xf32>, vector<4x256xf32> -> vector<4x256xf32>
    %c3_27 = arith.constant 3 : index
    %c0_28 = arith.constant 0 : index
    %c0_29 = arith.constant 0 : index
    %27 = vector.load %arg3[%c3_27, %c0_28, %c0_29] : memref<9x8x4xf32, #tpu.memory_space<vmem>>, vector<1x8x4xf32>
    %28 = vector.shape_cast %27 : vector<1x8x4xf32> to vector<8x4xf32>
    %cst_30 = arith.constant dense<0.000000e+00> : vector<8x256xf32>
    %29 = tpu.matmul %28, %26, %cst_30 {dimension_numbers = #tpu.dot_dimension_numbers<[1], [0], [0], [1], [0, 0, 1, 1], [], []>} : vector<8x4xf32>, vector<4x256xf32>, vector<8x256xf32> -> vector<8x256xf32>
    %30 = arith.addf %23, %29 : vector<8x256xf32>
    %c4 = arith.constant 4 : index
    %c0_31 = arith.constant 0 : index
    %c0_32 = arith.constant 0 : index
    %31 = vector.load %arg7[%c4, %c0_31, %c0_32] : memref<9x256x256xf32, #tpu.memory_space<vmem>>, vector<1x256x256xf32>
    %32 = vector.shape_cast %31 : vector<1x256x256xf32> to vector<256x256xf32>
    %cst_33 = arith.constant dense<0.000000e+00> : vector<4x256xf32>
    %33 = tpu.matmul %1, %32, %cst_33 {dimension_numbers = #tpu.dot_dimension_numbers<[1], [0], [0], [1], [0, 0, 1, 1], [], []>} : vector<4x256xf32>, vector<256x256xf32>, vector<4x256xf32> -> vector<4x256xf32>
    %c4_34 = arith.constant 4 : index
    %c0_35 = arith.constant 0 : index
    %c0_36 = arith.constant 0 : index
    %34 = vector.load %arg3[%c4_34, %c0_35, %c0_36] : memref<9x8x4xf32, #tpu.memory_space<vmem>>, vector<1x8x4xf32>
    %35 = vector.shape_cast %34 : vector<1x8x4xf32> to vector<8x4xf32>
    %cst_37 = arith.constant dense<0.000000e+00> : vector<8x256xf32>
    %36 = tpu.matmul %35, %33, %cst_37 {dimension_numbers = #tpu.dot_dimension_numbers<[1], [0], [0], [1], [0, 0, 1, 1], [], []>} : vector<8x4xf32>, vector<4x256xf32>, vector<8x256xf32> -> vector<8x256xf32>
    %37 = arith.addf %30, %36 : vector<8x256xf32>
    %c5 = arith.constant 5 : index
    %c0_38 = arith.constant 0 : index
    %c0_39 = arith.constant 0 : index
    %38 = vector.load %arg7[%c5, %c0_38, %c0_39] : memref<9x256x256xf32, #tpu.memory_space<vmem>>, vector<1x256x256xf32>
    %39 = vector.shape_cast %38 : vector<1x256x256xf32> to vector<256x256xf32>
    %cst_40 = arith.constant dense<0.000000e+00> : vector<4x256xf32>
    %40 = tpu.matmul %1, %39, %cst_40 {dimension_numbers = #tpu.dot_dimension_numbers<[1], [0], [0], [1], [0, 0, 1, 1], [], []>} : vector<4x256xf32>, vector<256x256xf32>, vector<4x256xf32> -> vector<4x256xf32>
    %c5_41 = arith.constant 5 : index
    %c0_42 = arith.constant 0 : index
    %c0_43 = arith.constant 0 : index
    %41 = vector.load %arg3[%c5_41, %c0_42, %c0_43] : memref<9x8x4xf32, #tpu.memory_space<vmem>>, vector<1x8x4xf32>
    %42 = vector.shape_cast %41 : vector<1x8x4xf32> to vector<8x4xf32>
    %cst_44 = arith.constant dense<0.000000e+00> : vector<8x256xf32>
    %43 = tpu.matmul %42, %40, %cst_44 {dimension_numbers = #tpu.dot_dimension_numbers<[1], [0], [0], [1], [0, 0, 1, 1], [], []>} : vector<8x4xf32>, vector<4x256xf32>, vector<8x256xf32> -> vector<8x256xf32>
    %44 = arith.addf %37, %43 : vector<8x256xf32>
    %c6 = arith.constant 6 : index
    %c0_45 = arith.constant 0 : index
    %c0_46 = arith.constant 0 : index
    %45 = vector.load %arg7[%c6, %c0_45, %c0_46] : memref<9x256x256xf32, #tpu.memory_space<vmem>>, vector<1x256x256xf32>
    %46 = vector.shape_cast %45 : vector<1x256x256xf32> to vector<256x256xf32>
    %cst_47 = arith.constant dense<0.000000e+00> : vector<4x256xf32>
    %47 = tpu.matmul %1, %46, %cst_47 {dimension_numbers = #tpu.dot_dimension_numbers<[1], [0], [0], [1], [0, 0, 1, 1], [], []>} : vector<4x256xf32>, vector<256x256xf32>, vector<4x256xf32> -> vector<4x256xf32>
    %c6_48 = arith.constant 6 : index
    %c0_49 = arith.constant 0 : index
    %c0_50 = arith.constant 0 : index
    %48 = vector.load %arg3[%c6_48, %c0_49, %c0_50] : memref<9x8x4xf32, #tpu.memory_space<vmem>>, vector<1x8x4xf32>
    %49 = vector.shape_cast %48 : vector<1x8x4xf32> to vector<8x4xf32>
    %cst_51 = arith.constant dense<0.000000e+00> : vector<8x256xf32>
    %50 = tpu.matmul %49, %47, %cst_51 {dimension_numbers = #tpu.dot_dimension_numbers<[1], [0], [0], [1], [0, 0, 1, 1], [], []>} : vector<8x4xf32>, vector<4x256xf32>, vector<8x256xf32> -> vector<8x256xf32>
    %51 = arith.addf %44, %50 : vector<8x256xf32>
    %c7 = arith.constant 7 : index
    %c0_52 = arith.constant 0 : index
    %c0_53 = arith.constant 0 : index
    %52 = vector.load %arg7[%c7, %c0_52, %c0_53] : memref<9x256x256xf32, #tpu.memory_space<vmem>>, vector<1x256x256xf32>
    %53 = vector.shape_cast %52 : vector<1x256x256xf32> to vector<256x256xf32>
    %cst_54 = arith.constant dense<0.000000e+00> : vector<4x256xf32>
    %54 = tpu.matmul %1, %53, %cst_54 {dimension_numbers = #tpu.dot_dimension_numbers<[1], [0], [0], [1], [0, 0, 1, 1], [], []>} : vector<4x256xf32>, vector<256x256xf32>, vector<4x256xf32> -> vector<4x256xf32>
    %c7_55 = arith.constant 7 : index
    %c0_56 = arith.constant 0 : index
    %c0_57 = arith.constant 0 : index
    %55 = vector.load %arg3[%c7_55, %c0_56, %c0_57] : memref<9x8x4xf32, #tpu.memory_space<vmem>>, vector<1x8x4xf32>
    %56 = vector.shape_cast %55 : vector<1x8x4xf32> to vector<8x4xf32>
    %cst_58 = arith.constant dense<0.000000e+00> : vector<8x256xf32>
    %57 = tpu.matmul %56, %54, %cst_58 {dimension_numbers = #tpu.dot_dimension_numbers<[1], [0], [0], [1], [0, 0, 1, 1], [], []>} : vector<8x4xf32>, vector<4x256xf32>, vector<8x256xf32> -> vector<8x256xf32>
    %58 = arith.addf %51, %57 : vector<8x256xf32>
    %c8 = arith.constant 8 : index
    %c0_59 = arith.constant 0 : index
    %c0_60 = arith.constant 0 : index
    %59 = vector.load %arg7[%c8, %c0_59, %c0_60] : memref<9x256x256xf32, #tpu.memory_space<vmem>>, vector<1x256x256xf32>
    %60 = vector.shape_cast %59 : vector<1x256x256xf32> to vector<256x256xf32>
    %cst_61 = arith.constant dense<0.000000e+00> : vector<4x256xf32>
    %61 = tpu.matmul %1, %60, %cst_61 {dimension_numbers = #tpu.dot_dimension_numbers<[1], [0], [0], [1], [0, 0, 1, 1], [], []>} : vector<4x256xf32>, vector<256x256xf32>, vector<4x256xf32> -> vector<4x256xf32>
    %c8_62 = arith.constant 8 : index
    %c0_63 = arith.constant 0 : index
    %c0_64 = arith.constant 0 : index
    %62 = vector.load %arg3[%c8_62, %c0_63, %c0_64] : memref<9x8x4xf32, #tpu.memory_space<vmem>>, vector<1x8x4xf32>
    %63 = vector.shape_cast %62 : vector<1x8x4xf32> to vector<8x4xf32>
    %cst_65 = arith.constant dense<0.000000e+00> : vector<8x256xf32>
    %64 = tpu.matmul %63, %61, %cst_65 {dimension_numbers = #tpu.dot_dimension_numbers<[1], [0], [0], [1], [0, 0, 1, 1], [], []>} : vector<8x4xf32>, vector<4x256xf32>, vector<8x256xf32> -> vector<8x256xf32>
    %65 = arith.addf %58, %64 : vector<8x256xf32>
    %cst_66 = arith.constant dense<0.000000e+00> : vector<8xf32>
    %66 = vector.multi_reduction <add>, %65, %cst_66 [1] : vector<8x256xf32> to vector<8xf32>
    %67 = vector.shape_cast %66 : vector<8xf32> to vector<8x1xf32>
    %cst_67 = arith.constant 2.560000e+02 : f32
    %68 = vector.broadcast %cst_67 : f32 to vector<8x1xf32>
    %69 = arith.divf %67, %68 : vector<8x1xf32>
    %70 = vector.broadcast %69 : vector<8x1xf32> to vector<8x256xf32>
    %71 = arith.subf %65, %70 : vector<8x256xf32>
    %72 = arith.mulf %71, %71 : vector<8x256xf32>
    %cst_68 = arith.constant dense<0.000000e+00> : vector<8xf32>
    %73 = vector.multi_reduction <add>, %72, %cst_68 [1] : vector<8x256xf32> to vector<8xf32>
    %74 = vector.shape_cast %73 : vector<8xf32> to vector<8x1xf32>
    %cst_69 = arith.constant 2.560000e+02 : f32
    %75 = vector.broadcast %cst_69 : f32 to vector<8x1xf32>
    %76 = arith.divf %74, %75 : vector<8x1xf32>
    %cst_70 = arith.constant 9.99999974E-6 : f32
    %77 = vector.broadcast %cst_70 : f32 to vector<8x1xf32>
    %78 = arith.addf %76, %77 : vector<8x1xf32>
    %79 = math.rsqrt %78 : vector<8x1xf32>
    %80 = vector.broadcast %79 : vector<8x1xf32> to vector<8x256xf32>
    %81 = arith.mulf %71, %80 : vector<8x256xf32>
    %c0_71 = arith.constant 0 : index
    %82 = memref.load %arg1[%c0_71] : memref<4xf32, #tpu.memory_space<smem>>
    %cst_72 = arith.constant 0.000000e+00 : f32
    %83 = vector.broadcast %cst_72 : f32 to vector<8x256xf32>
    %84 = arith.cmpf oge, %81, %83 : vector<8x256xf32>
    %85 = vector.broadcast %82 : f32 to vector<8x256xf32>
    %86 = arith.mulf %85, %81 : vector<8x256xf32>
    %87 = arith.select %84, %81, %86 : vector<8x256xi1>, vector<8x256xf32>
    %c0_73 = arith.constant 0 : index
    %c0_74 = arith.constant 0 : index
    %c0_75 = arith.constant 0 : index
    %88 = vector.load %arg11[%c0_73, %c0_74, %c0_75] : memref<1x8x256xf32, #tpu.memory_space<vmem>>, vector<1x8x256xf32>
    %89 = vector.shape_cast %88 : vector<1x8x256xf32> to vector<8x256xf32>
    %90 = vector.shape_cast %87 : vector<8x256xf32> to vector<1x8x256xf32>
    tpu.vector_store %arg11[%c0_73, %c0_74, %c0_75], %90 {strides = array<i32>} : memref<1x8x256xf32, #tpu.memory_space<vmem>>, vector<1x8x256xf32>,
    %cst_76 = arith.constant 0.000000e+00 : f32
    %91 = vector.broadcast %cst_76 : f32 to vector<16x64xf32>
    %c0_77 = arith.constant 0 : index
    %c0_78 = arith.constant 0 : index
    %c0_79 = arith.constant 0 : index
    %92 = vector.load %arg8[%c0_77, %c0_78, %c0_79] : memref<9x256x64xf32, #tpu.memory_space<vmem>>, vector<1x256x64xf32>
    %93 = vector.shape_cast %92 : vector<1x256x64xf32> to vector<256x64xf32>
    %cst_80 = arith.constant dense<0.000000e+00> : vector<8x64xf32>
    %94 = tpu.matmul %87, %93, %cst_80 {dimension_numbers = #tpu.dot_dimension_numbers<[1], [0], [0], [1], [0, 0, 1, 1], [], []>} : vector<8x256xf32>, vector<256x64xf32>, vector<8x64xf32> -> vector<8x64xf32>
    %c0_81 = arith.constant 0 : index
    %c0_82 = arith.constant 0 : index
    %c0_83 = arith.constant 0 : index
    %95 = vector.load %arg4[%c0_81, %c0_82, %c0_83] : memref<9x16x8xf32, #tpu.memory_space<vmem>>, vector<1x16x8xf32>
    %96 = vector.shape_cast %95 : vector<1x16x8xf32> to vector<16x8xf32>
    %cst_84 = arith.constant dense<0.000000e+00> : vector<16x64xf32>
    %97 = tpu.matmul %96, %94, %cst_84 {dimension_numbers = #tpu.dot_dimension_numbers<[1], [0], [0], [1], [0, 0, 1, 1], [], []>} : vector<16x8xf32>, vector<8x64xf32>, vector<16x64xf32> -> vector<16x64xf32>
    %98 = arith.addf %91, %97 : vector<16x64xf32>
    %c1_85 = arith.constant 1 : index
    %c0_86 = arith.constant 0 : index
    %c0_87 = arith.constant 0 : index
    %99 = vector.load %arg8[%c1_85, %c0_86, %c0_87] : memref<9x256x64xf32, #tpu.memory_space<vmem>>, vector<1x256x64xf32>
    %100 = vector.shape_cast %99 : vector<1x256x64xf32> to vector<256x64xf32>
    %cst_88 = arith.constant dense<0.000000e+00> : vector<8x64xf32>
    %101 = tpu.matmul %87, %100, %cst_88 {dimension_numbers = #tpu.dot_dimension_numbers<[1], [0], [0], [1], [0, 0, 1, 1], [], []>} : vector<8x256xf32>, vector<256x64xf32>, vector<8x64xf32> -> vector<8x64xf32>
    %c1_89 = arith.constant 1 : index
    %c0_90 = arith.constant 0 : index
    %c0_91 = arith.constant 0 : index
    %102 = vector.load %arg4[%c1_89, %c0_90, %c0_91] : memref<9x16x8xf32, #tpu.memory_space<vmem>>, vector<1x16x8xf32>
    %103 = vector.shape_cast %102 : vector<1x16x8xf32> to vector<16x8xf32>
    %cst_92 = arith.constant dense<0.000000e+00> : vector<16x64xf32>
    %104 = tpu.matmul %103, %101, %cst_92 {dimension_numbers = #tpu.dot_dimension_numbers<[1], [0], [0], [1], [0, 0, 1, 1], [], []>} : vector<16x8xf32>, vector<8x64xf32>, vector<16x64xf32> -> vector<16x64xf32>
    %105 = arith.addf %98, %104 : vector<16x64xf32>
    %c2_93 = arith.constant 2 : index
    %c0_94 = arith.constant 0 : index
    %c0_95 = arith.constant 0 : index
    %106 = vector.load %arg8[%c2_93, %c0_94, %c0_95] : memref<9x256x64xf32, #tpu.memory_space<vmem>>, vector<1x256x64xf32>
    %107 = vector.shape_cast %106 : vector<1x256x64xf32> to vector<256x64xf32>
    %cst_96 = arith.constant dense<0.000000e+00> : vector<8x64xf32>
    %108 = tpu.matmul %87, %107, %cst_96 {dimension_numbers = #tpu.dot_dimension_numbers<[1], [0], [0], [1], [0, 0, 1, 1], [], []>} : vector<8x256xf32>, vector<256x64xf32>, vector<8x64xf32> -> vector<8x64xf32>
    %c2_97 = arith.constant 2 : index
    %c0_98 = arith.constant 0 : index
    %c0_99 = arith.constant 0 : index
    %109 = vector.load %arg4[%c2_97, %c0_98, %c0_99] : memref<9x16x8xf32, #tpu.memory_space<vmem>>, vector<1x16x8xf32>
    %110 = vector.shape_cast %109 : vector<1x16x8xf32> to vector<16x8xf32>
    %cst_100 = arith.constant dense<0.000000e+00> : vector<16x64xf32>
    %111 = tpu.matmul %110, %108, %cst_100 {dimension_numbers = #tpu.dot_dimension_numbers<[1], [0], [0], [1], [0, 0, 1, 1], [], []>} : vector<16x8xf32>, vector<8x64xf32>, vector<16x64xf32> -> vector<16x64xf32>
    %112 = arith.addf %105, %111 : vector<16x64xf32>
    %c3_101 = arith.constant 3 : index
    %c0_102 = arith.constant 0 : index
    %c0_103 = arith.constant 0 : index
    %113 = vector.load %arg8[%c3_101, %c0_102, %c0_103] : memref<9x256x64xf32, #tpu.memory_space<vmem>>, vector<1x256x64xf32>
    %114 = vector.shape_cast %113 : vector<1x256x64xf32> to vector<256x64xf32>
    %cst_104 = arith.constant dense<0.000000e+00> : vector<8x64xf32>
    %115 = tpu.matmul %87, %114, %cst_104 {dimension_numbers = #tpu.dot_dimension_numbers<[1], [0], [0], [1], [0, 0, 1, 1], [], []>} : vector<8x256xf32>, vector<256x64xf32>, vector<8x64xf32> -> vector<8x64xf32>
    %c3_105 = arith.constant 3 : index
    %c0_106 = arith.constant 0 : index
    %c0_107 = arith.constant 0 : index
    %116 = vector.load %arg4[%c3_105, %c0_106, %c0_107] : memref<9x16x8xf32, #tpu.memory_space<vmem>>, vector<1x16x8xf32>
    %117 = vector.shape_cast %116 : vector<1x16x8xf32> to vector<16x8xf32>
    %cst_108 = arith.constant dense<0.000000e+00> : vector<16x64xf32>
    %118 = tpu.matmul %117, %115, %cst_108 {dimension_numbers = #tpu.dot_dimension_numbers<[1], [0], [0], [1], [0, 0, 1, 1], [], []>} : vector<16x8xf32>, vector<8x64xf32>, vector<16x64xf32> -> vector<16x64xf32>
    %119 = arith.addf %112, %118 : vector<16x64xf32>
    %c4_109 = arith.constant 4 : index
    %c0_110 = arith.constant 0 : index
    %c0_111 = arith.constant 0 : index
    %120 = vector.load %arg8[%c4_109, %c0_110, %c0_111] : memref<9x256x64xf32, #tpu.memory_space<vmem>>, vector<1x256x64xf32>
    %121 = vector.shape_cast %120 : vector<1x256x64xf32> to vector<256x64xf32>
    %cst_112 = arith.constant dense<0.000000e+00> : vector<8x64xf32>
    %122 = tpu.matmul %87, %121, %cst_112 {dimension_numbers = #tpu.dot_dimension_numbers<[1], [0], [0], [1], [0, 0, 1, 1], [], []>} : vector<8x256xf32>, vector<256x64xf32>, vector<8x64xf32> -> vector<8x64xf32>
    %c4_113 = arith.constant 4 : index
    %c0_114 = arith.constant 0 : index
    %c0_115 = arith.constant 0 : index
    %123 = vector.load %arg4[%c4_113, %c0_114, %c0_115] : memref<9x16x8xf32, #tpu.memory_space<vmem>>, vector<1x16x8xf32>
    %124 = vector.shape_cast %123 : vector<1x16x8xf32> to vector<16x8xf32>
    %cst_116 = arith.constant dense<0.000000e+00> : vector<16x64xf32>
    %125 = tpu.matmul %124, %122, %cst_116 {dimension_numbers = #tpu.dot_dimension_numbers<[1], [0], [0], [1], [0, 0, 1, 1], [], []>} : vector<16x8xf32>, vector<8x64xf32>, vector<16x64xf32> -> vector<16x64xf32>
    %126 = arith.addf %119, %125 : vector<16x64xf32>
    %c5_117 = arith.constant 5 : index
    %c0_118 = arith.constant 0 : index
    %c0_119 = arith.constant 0 : index
    %127 = vector.load %arg8[%c5_117, %c0_118, %c0_119] : memref<9x256x64xf32, #tpu.memory_space<vmem>>, vector<1x256x64xf32>
    %128 = vector.shape_cast %127 : vector<1x256x64xf32> to vector<256x64xf32>
    %cst_120 = arith.constant dense<0.000000e+00> : vector<8x64xf32>
    %129 = tpu.matmul %87, %128, %cst_120 {dimension_numbers = #tpu.dot_dimension_numbers<[1], [0], [0], [1], [0, 0, 1, 1], [], []>} : vector<8x256xf32>, vector<256x64xf32>, vector<8x64xf32> -> vector<8x64xf32>
    %c5_121 = arith.constant 5 : index
    %c0_122 = arith.constant 0 : index
    %c0_123 = arith.constant 0 : index
    %130 = vector.load %arg4[%c5_121, %c0_122, %c0_123] : memref<9x16x8xf32, #tpu.memory_space<vmem>>, vector<1x16x8xf32>
    %131 = vector.shape_cast %130 : vector<1x16x8xf32> to vector<16x8xf32>
    %cst_124 = arith.constant dense<0.000000e+00> : vector<16x64xf32>
    %132 = tpu.matmul %131, %129, %cst_124 {dimension_numbers = #tpu.dot_dimension_numbers<[1], [0], [0], [1], [0, 0, 1, 1], [], []>} : vector<16x8xf32>, vector<8x64xf32>, vector<16x64xf32> -> vector<16x64xf32>
    %133 = arith.addf %126, %132 : vector<16x64xf32>
    %c6_125 = arith.constant 6 : index
    %c0_126 = arith.constant 0 : index
    %c0_127 = arith.constant 0 : index
    %134 = vector.load %arg8[%c6_125, %c0_126, %c0_127] : memref<9x256x64xf32, #tpu.memory_space<vmem>>, vector<1x256x64xf32>
    %135 = vector.shape_cast %134 : vector<1x256x64xf32> to vector<256x64xf32>
    %cst_128 = arith.constant dense<0.000000e+00> : vector<8x64xf32>
    %136 = tpu.matmul %87, %135, %cst_128 {dimension_numbers = #tpu.dot_dimension_numbers<[1], [0], [0], [1], [0, 0, 1, 1], [], []>} : vector<8x256xf32>, vector<256x64xf32>, vector<8x64xf32> -> vector<8x64xf32>
    %c6_129 = arith.constant 6 : index
    %c0_130 = arith.constant 0 : index
    %c0_131 = arith.constant 0 : index
    %137 = vector.load %arg4[%c6_129, %c0_130, %c0_131] : memref<9x16x8xf32, #tpu.memory_space<vmem>>, vector<1x16x8xf32>
    %138 = vector.shape_cast %137 : vector<1x16x8xf32> to vector<16x8xf32>
    %cst_132 = arith.constant dense<0.000000e+00> : vector<16x64xf32>
    %139 = tpu.matmul %138, %136, %cst_132 {dimension_numbers = #tpu.dot_dimension_numbers<[1], [0], [0], [1], [0, 0, 1, 1], [], []>} : vector<16x8xf32>, vector<8x64xf32>, vector<16x64xf32> -> vector<16x64xf32>
    %140 = arith.addf %133, %139 : vector<16x64xf32>
    %c7_133 = arith.constant 7 : index
    %c0_134 = arith.constant 0 : index
    %c0_135 = arith.constant 0 : index
    %141 = vector.load %arg8[%c7_133, %c0_134, %c0_135] : memref<9x256x64xf32, #tpu.memory_space<vmem>>, vector<1x256x64xf32>
    %142 = vector.shape_cast %141 : vector<1x256x64xf32> to vector<256x64xf32>
    %cst_136 = arith.constant dense<0.000000e+00> : vector<8x64xf32>
    %143 = tpu.matmul %87, %142, %cst_136 {dimension_numbers = #tpu.dot_dimension_numbers<[1], [0], [0], [1], [0, 0, 1, 1], [], []>} : vector<8x256xf32>, vector<256x64xf32>, vector<8x64xf32> -> vector<8x64xf32>
    %c7_137 = arith.constant 7 : index
    %c0_138 = arith.constant 0 : index
    %c0_139 = arith.constant 0 : index
    %144 = vector.load %arg4[%c7_137, %c0_138, %c0_139] : memref<9x16x8xf32, #tpu.memory_space<vmem>>, vector<1x16x8xf32>
    %145 = vector.shape_cast %144 : vector<1x16x8xf32> to vector<16x8xf32>
    %cst_140 = arith.constant dense<0.000000e+00> : vector<16x64xf32>
    %146 = tpu.matmul %145, %143, %cst_140 {dimension_numbers = #tpu.dot_dimension_numbers<[1], [0], [0], [1], [0, 0, 1, 1], [], []>} : vector<16x8xf32>, vector<8x64xf32>, vector<16x64xf32> -> vector<16x64xf32>
    %147 = arith.addf %140, %146 : vector<16x64xf32>
    %c8_141 = arith.constant 8 : index
    %c0_142 = arith.constant 0 : index
    %c0_143 = arith.constant 0 : index
    %148 = vector.load %arg8[%c8_141, %c0_142, %c0_143] : memref<9x256x64xf32, #tpu.memory_space<vmem>>, vector<1x256x64xf32>
    %149 = vector.shape_cast %148 : vector<1x256x64xf32> to vector<256x64xf32>
    %cst_144 = arith.constant dense<0.000000e+00> : vector<8x64xf32>
    %150 = tpu.matmul %87, %149, %cst_144 {dimension_numbers = #tpu.dot_dimension_numbers<[1], [0], [0], [1], [0, 0, 1, 1], [], []>} : vector<8x256xf32>, vector<256x64xf32>, vector<8x64xf32> -> vector<8x64xf32>
    %c8_145 = arith.constant 8 : index
    %c0_146 = arith.constant 0 : index
    %c0_147 = arith.constant 0 : index
    %151 = vector.load %arg4[%c8_145, %c0_146, %c0_147] : memref<9x16x8xf32, #tpu.memory_space<vmem>>, vector<1x16x8xf32>
    %152 = vector.shape_cast %151 : vector<1x16x8xf32> to vector<16x8xf32>
    %cst_148 = arith.constant dense<0.000000e+00> : vector<16x64xf32>
    %153 = tpu.matmul %152, %150, %cst_148 {dimension_numbers = #tpu.dot_dimension_numbers<[1], [0], [0], [1], [0, 0, 1, 1], [], []>} : vector<16x8xf32>, vector<8x64xf32>, vector<16x64xf32> -> vector<16x64xf32>
    %154 = arith.addf %147, %153 : vector<16x64xf32>
    %cst_149 = arith.constant dense<0.000000e+00> : vector<16xf32>
    %155 = vector.multi_reduction <add>, %154, %cst_149 [1] : vector<16x64xf32> to vector<16xf32>
    %156 = vector.shape_cast %155 : vector<16xf32> to vector<16x1xf32>
    %cst_150 = arith.constant 6.400000e+01 : f32
    %157 = vector.broadcast %cst_150 : f32 to vector<16x1xf32>
    %158 = arith.divf %156, %157 : vector<16x1xf32>
    %159 = vector.broadcast %158 : vector<16x1xf32> to vector<16x64xf32>
    %160 = arith.subf %154, %159 : vector<16x64xf32>
    %161 = arith.mulf %160, %160 : vector<16x64xf32>
    %cst_151 = arith.constant dense<0.000000e+00> : vector<16xf32>
    %162 = vector.multi_reduction <add>, %161, %cst_151 [1] : vector<16x64xf32> to vector<16xf32>
    %163 = vector.shape_cast %162 : vector<16xf32> to vector<16x1xf32>
    %cst_152 = arith.constant 6.400000e+01 : f32
    %164 = vector.broadcast %cst_152 : f32 to vector<16x1xf32>
    %165 = arith.divf %163, %164 : vector<16x1xf32>
    %cst_153 = arith.constant 9.99999974E-6 : f32
    %166 = vector.broadcast %cst_153 : f32 to vector<16x1xf32>
    %167 = arith.addf %165, %166 : vector<16x1xf32>
    %168 = math.rsqrt %167 : vector<16x1xf32>
    %169 = vector.broadcast %168 : vector<16x1xf32> to vector<16x64xf32>
    %170 = arith.mulf %160, %169 : vector<16x64xf32>
    %c1_154 = arith.constant 1 : index
    %171 = memref.load %arg1[%c1_154] : memref<4xf32, #tpu.memory_space<smem>>
    %cst_155 = arith.constant 0.000000e+00 : f32
    %172 = vector.broadcast %cst_155 : f32 to vector<16x64xf32>
    %173 = arith.cmpf oge, %170, %172 : vector<16x64xf32>
    %174 = vector.broadcast %171 : f32 to vector<16x64xf32>
    %175 = arith.mulf %174, %170 : vector<16x64xf32>
    %176 = arith.select %173, %170, %175 : vector<16x64xi1>, vector<16x64xf32>
    %c0_156 = arith.constant 0 : index
    %c0_157 = arith.constant 0 : index
    %c0_158 = arith.constant 0 : index
    %177 = vector.load %arg12[%c0_156, %c0_157, %c0_158] : memref<1x16x64xf32, #tpu.memory_space<vmem>>, vector<1x16x64xf32>
    %178 = vector.shape_cast %177 : vector<1x16x64xf32> to vector<16x64xf32>
    %179 = vector.shape_cast %176 : vector<16x64xf32> to vector<1x16x64xf32>
    tpu.vector_store %arg12[%c0_156, %c0_157, %c0_158], %179 {strides = array<i32>} : memref<1x16x64xf32, #tpu.memory_space<vmem>>, vector<1x16x64xf32>,
    %cst_159 = arith.constant 0.000000e+00 : f32
    %180 = vector.broadcast %cst_159 : f32 to vector<32x16xf32>
    %c0_160 = arith.constant 0 : index
    %c0_161 = arith.constant 0 : index
    %c0_162 = arith.constant 0 : index
    %181 = vector.load %arg9[%c0_160, %c0_161, %c0_162] : memref<9x64x16xf32, #tpu.memory_space<vmem>>, vector<1x64x16xf32>
    %182 = vector.shape_cast %181 : vector<1x64x16xf32> to vector<64x16xf32>
    %cst_163 = arith.constant dense<0.000000e+00> : vector<16x16xf32>
    %183 = tpu.matmul %176, %182, %cst_163 {dimension_numbers = #tpu.dot_dimension_numbers<[1], [0], [0], [1], [0, 0, 1, 1], [], []>} : vector<16x64xf32>, vector<64x16xf32>, vector<16x16xf32> -> vector<16x16xf32>
    %c0_164 = arith.constant 0 : index
    %c0_165 = arith.constant 0 : index
    %c0_166 = arith.constant 0 : index
    %184 = vector.load %arg5[%c0_164, %c0_165, %c0_166] : memref<9x32x16xf32, #tpu.memory_space<vmem>>, vector<1x32x16xf32>
    %185 = vector.shape_cast %184 : vector<1x32x16xf32> to vector<32x16xf32>
    %cst_167 = arith.constant dense<0.000000e+00> : vector<32x16xf32>
    %186 = tpu.matmul %185, %183, %cst_167 {dimension_numbers = #tpu.dot_dimension_numbers<[1], [0], [0], [1], [0, 0, 1, 1], [], []>} : vector<32x16xf32>, vector<16x16xf32>, vector<32x16xf32> -> vector<32x16xf32>
    %187 = arith.addf %180, %186 : vector<32x16xf32>
    %c1_168 = arith.constant 1 : index
    %c0_169 = arith.constant 0 : index
    %c0_170 = arith.constant 0 : index
    %188 = vector.load %arg9[%c1_168, %c0_169, %c0_170] : memref<9x64x16xf32, #tpu.memory_space<vmem>>, vector<1x64x16xf32>
    %189 = vector.shape_cast %188 : vector<1x64x16xf32> to vector<64x16xf32>
    %cst_171 = arith.constant dense<0.000000e+00> : vector<16x16xf32>
    %190 = tpu.matmul %176, %189, %cst_171 {dimension_numbers = #tpu.dot_dimension_numbers<[1], [0], [0], [1], [0, 0, 1, 1], [], []>} : vector<16x64xf32>, vector<64x16xf32>, vector<16x16xf32> -> vector<16x16xf32>
    %c1_172 = arith.constant 1 : index
    %c0_173 = arith.constant 0 : index
    %c0_174 = arith.constant 0 : index
    %191 = vector.load %arg5[%c1_172, %c0_173, %c0_174] : memref<9x32x16xf32, #tpu.memory_space<vmem>>, vector<1x32x16xf32>
    %192 = vector.shape_cast %191 : vector<1x32x16xf32> to vector<32x16xf32>
    %cst_175 = arith.constant dense<0.000000e+00> : vector<32x16xf32>
    %193 = tpu.matmul %192, %190, %cst_175 {dimension_numbers = #tpu.dot_dimension_numbers<[1], [0], [0], [1], [0, 0, 1, 1], [], []>} : vector<32x16xf32>, vector<16x16xf32>, vector<32x16xf32> -> vector<32x16xf32>
    %194 = arith.addf %187, %193 : vector<32x16xf32>
    %c2_176 = arith.constant 2 : index
    %c0_177 = arith.constant 0 : index
    %c0_178 = arith.constant 0 : index
    %195 = vector.load %arg9[%c2_176, %c0_177, %c0_178] : memref<9x64x16xf32, #tpu.memory_space<vmem>>, vector<1x64x16xf32>
    %196 = vector.shape_cast %195 : vector<1x64x16xf32> to vector<64x16xf32>
    %cst_179 = arith.constant dense<0.000000e+00> : vector<16x16xf32>
    %197 = tpu.matmul %176, %196, %cst_179 {dimension_numbers = #tpu.dot_dimension_numbers<[1], [0], [0], [1], [0, 0, 1, 1], [], []>} : vector<16x64xf32>, vector<64x16xf32>, vector<16x16xf32> -> vector<16x16xf32>
    %c2_180 = arith.constant 2 : index
    %c0_181 = arith.constant 0 : index
    %c0_182 = arith.constant 0 : index
    %198 = vector.load %arg5[%c2_180, %c0_181, %c0_182] : memref<9x32x16xf32, #tpu.memory_space<vmem>>, vector<1x32x16xf32>
    %199 = vector.shape_cast %198 : vector<1x32x16xf32> to vector<32x16xf32>
    %cst_183 = arith.constant dense<0.000000e+00> : vector<32x16xf32>
    %200 = tpu.matmul %199, %197, %cst_183 {dimension_numbers = #tpu.dot_dimension_numbers<[1], [0], [0], [1], [0, 0, 1, 1], [], []>} : vector<32x16xf32>, vector<16x16xf32>, vector<32x16xf32> -> vector<32x16xf32>
    %201 = arith.addf %194, %200 : vector<32x16xf32>
    %c3_184 = arith.constant 3 : index
    %c0_185 = arith.constant 0 : index
    %c0_186 = arith.constant 0 : index
    %202 = vector.load %arg9[%c3_184, %c0_185, %c0_186] : memref<9x64x16xf32, #tpu.memory_space<vmem>>, vector<1x64x16xf32>
    %203 = vector.shape_cast %202 : vector<1x64x16xf32> to vector<64x16xf32>
    %cst_187 = arith.constant dense<0.000000e+00> : vector<16x16xf32>
    %204 = tpu.matmul %176, %203, %cst_187 {dimension_numbers = #tpu.dot_dimension_numbers<[1], [0], [0], [1], [0, 0, 1, 1], [], []>} : vector<16x64xf32>, vector<64x16xf32>, vector<16x16xf32> -> vector<16x16xf32>
    %c3_188 = arith.constant 3 : index
    %c0_189 = arith.constant 0 : index
    %c0_190 = arith.constant 0 : index
    %205 = vector.load %arg5[%c3_188, %c0_189, %c0_190] : memref<9x32x16xf32, #tpu.memory_space<vmem>>, vector<1x32x16xf32>
    %206 = vector.shape_cast %205 : vector<1x32x16xf32> to vector<32x16xf32>
    %cst_191 = arith.constant dense<0.000000e+00> : vector<32x16xf32>
    %207 = tpu.matmul %206, %204, %cst_191 {dimension_numbers = #tpu.dot_dimension_numbers<[1], [0], [0], [1], [0, 0, 1, 1], [], []>} : vector<32x16xf32>, vector<16x16xf32>, vector<32x16xf32> -> vector<32x16xf32>
    %208 = arith.addf %201, %207 : vector<32x16xf32>
    %c4_192 = arith.constant 4 : index
    %c0_193 = arith.constant 0 : index
    %c0_194 = arith.constant 0 : index
    %209 = vector.load %arg9[%c4_192, %c0_193, %c0_194] : memref<9x64x16xf32, #tpu.memory_space<vmem>>, vector<1x64x16xf32>
    %210 = vector.shape_cast %209 : vector<1x64x16xf32> to vector<64x16xf32>
    %cst_195 = arith.constant dense<0.000000e+00> : vector<16x16xf32>
    %211 = tpu.matmul %176, %210, %cst_195 {dimension_numbers = #tpu.dot_dimension_numbers<[1], [0], [0], [1], [0, 0, 1, 1], [], []>} : vector<16x64xf32>, vector<64x16xf32>, vector<16x16xf32> -> vector<16x16xf32>
    %c4_196 = arith.constant 4 : index
    %c0_197 = arith.constant 0 : index
    %c0_198 = arith.constant 0 : index
    %212 = vector.load %arg5[%c4_196, %c0_197, %c0_198] : memref<9x32x16xf32, #tpu.memory_space<vmem>>, vector<1x32x16xf32>
    %213 = vector.shape_cast %212 : vector<1x32x16xf32> to vector<32x16xf32>
    %cst_199 = arith.constant dense<0.000000e+00> : vector<32x16xf32>
    %214 = tpu.matmul %213, %211, %cst_199 {dimension_numbers = #tpu.dot_dimension_numbers<[1], [0], [0], [1], [0, 0, 1, 1], [], []>} : vector<32x16xf32>, vector<16x16xf32>, vector<32x16xf32> -> vector<32x16xf32>
    %215 = arith.addf %208, %214 : vector<32x16xf32>
    %c5_200 = arith.constant 5 : index
    %c0_201 = arith.constant 0 : index
    %c0_202 = arith.constant 0 : index
    %216 = vector.load %arg9[%c5_200, %c0_201, %c0_202] : memref<9x64x16xf32, #tpu.memory_space<vmem>>, vector<1x64x16xf32>
    %217 = vector.shape_cast %216 : vector<1x64x16xf32> to vector<64x16xf32>
    %cst_203 = arith.constant dense<0.000000e+00> : vector<16x16xf32>
    %218 = tpu.matmul %176, %217, %cst_203 {dimension_numbers = #tpu.dot_dimension_numbers<[1], [0], [0], [1], [0, 0, 1, 1], [], []>} : vector<16x64xf32>, vector<64x16xf32>, vector<16x16xf32> -> vector<16x16xf32>
    %c5_204 = arith.constant 5 : index
    %c0_205 = arith.constant 0 : index
    %c0_206 = arith.constant 0 : index
    %219 = vector.load %arg5[%c5_204, %c0_205, %c0_206] : memref<9x32x16xf32, #tpu.memory_space<vmem>>, vector<1x32x16xf32>
    %220 = vector.shape_cast %219 : vector<1x32x16xf32> to vector<32x16xf32>
    %cst_207 = arith.constant dense<0.000000e+00> : vector<32x16xf32>
    %221 = tpu.matmul %220, %218, %cst_207 {dimension_numbers = #tpu.dot_dimension_numbers<[1], [0], [0], [1], [0, 0, 1, 1], [], []>} : vector<32x16xf32>, vector<16x16xf32>, vector<32x16xf32> -> vector<32x16xf32>
    %222 = arith.addf %215, %221 : vector<32x16xf32>
    %c6_208 = arith.constant 6 : index
    %c0_209 = arith.constant 0 : index
    %c0_210 = arith.constant 0 : index
    %223 = vector.load %arg9[%c6_208, %c0_209, %c0_210] : memref<9x64x16xf32, #tpu.memory_space<vmem>>, vector<1x64x16xf32>
    %224 = vector.shape_cast %223 : vector<1x64x16xf32> to vector<64x16xf32>
    %cst_211 = arith.constant dense<0.000000e+00> : vector<16x16xf32>
    %225 = tpu.matmul %176, %224, %cst_211 {dimension_numbers = #tpu.dot_dimension_numbers<[1], [0], [0], [1], [0, 0, 1, 1], [], []>} : vector<16x64xf32>, vector<64x16xf32>, vector<16x16xf32> -> vector<16x16xf32>
    %c6_212 = arith.constant 6 : index
    %c0_213 = arith.constant 0 : index
    %c0_214 = arith.constant 0 : index
    %226 = vector.load %arg5[%c6_212, %c0_213, %c0_214] : memref<9x32x16xf32, #tpu.memory_space<vmem>>, vector<1x32x16xf32>
    %227 = vector.shape_cast %226 : vector<1x32x16xf32> to vector<32x16xf32>
    %cst_215 = arith.constant dense<0.000000e+00> : vector<32x16xf32>
    %228 = tpu.matmul %227, %225, %cst_215 {dimension_numbers = #tpu.dot_dimension_numbers<[1], [0], [0], [1], [0, 0, 1, 1], [], []>} : vector<32x16xf32>, vector<16x16xf32>, vector<32x16xf32> -> vector<32x16xf32>
    %229 = arith.addf %222, %228 : vector<32x16xf32>
    %c7_216 = arith.constant 7 : index
    %c0_217 = arith.constant 0 : index
    %c0_218 = arith.constant 0 : index
    %230 = vector.load %arg9[%c7_216, %c0_217, %c0_218] : memref<9x64x16xf32, #tpu.memory_space<vmem>>, vector<1x64x16xf32>
    %231 = vector.shape_cast %230 : vector<1x64x16xf32> to vector<64x16xf32>
    %cst_219 = arith.constant dense<0.000000e+00> : vector<16x16xf32>
    %232 = tpu.matmul %176, %231, %cst_219 {dimension_numbers = #tpu.dot_dimension_numbers<[1], [0], [0], [1], [0, 0, 1, 1], [], []>} : vector<16x64xf32>, vector<64x16xf32>, vector<16x16xf32> -> vector<16x16xf32>
    %c7_220 = arith.constant 7 : index
    %c0_221 = arith.constant 0 : index
    %c0_222 = arith.constant 0 : index
    %233 = vector.load %arg5[%c7_220, %c0_221, %c0_222] : memref<9x32x16xf32, #tpu.memory_space<vmem>>, vector<1x32x16xf32>
    %234 = vector.shape_cast %233 : vector<1x32x16xf32> to vector<32x16xf32>
    %cst_223 = arith.constant dense<0.000000e+00> : vector<32x16xf32>
    %235 = tpu.matmul %234, %232, %cst_223 {dimension_numbers = #tpu.dot_dimension_numbers<[1], [0], [0], [1], [0, 0, 1, 1], [], []>} : vector<32x16xf32>, vector<16x16xf32>, vector<32x16xf32> -> vector<32x16xf32>
    %236 = arith.addf %229, %235 : vector<32x16xf32>
    %c8_224 = arith.constant 8 : index
    %c0_225 = arith.constant 0 : index
    %c0_226 = arith.constant 0 : index
    %237 = vector.load %arg9[%c8_224, %c0_225, %c0_226] : memref<9x64x16xf32, #tpu.memory_space<vmem>>, vector<1x64x16xf32>
    %238 = vector.shape_cast %237 : vector<1x64x16xf32> to vector<64x16xf32>
    %cst_227 = arith.constant dense<0.000000e+00> : vector<16x16xf32>
    %239 = tpu.matmul %176, %238, %cst_227 {dimension_numbers = #tpu.dot_dimension_numbers<[1], [0], [0], [1], [0, 0, 1, 1], [], []>} : vector<16x64xf32>, vector<64x16xf32>, vector<16x16xf32> -> vector<16x16xf32>
    %c8_228 = arith.constant 8 : index
    %c0_229 = arith.constant 0 : index
    %c0_230 = arith.constant 0 : index
    %240 = vector.load %arg5[%c8_228, %c0_229, %c0_230] : memref<9x32x16xf32, #tpu.memory_space<vmem>>, vector<1x32x16xf32>
    %241 = vector.shape_cast %240 : vector<1x32x16xf32> to vector<32x16xf32>
    %cst_231 = arith.constant dense<0.000000e+00> : vector<32x16xf32>
    %242 = tpu.matmul %241, %239, %cst_231 {dimension_numbers = #tpu.dot_dimension_numbers<[1], [0], [0], [1], [0, 0, 1, 1], [], []>} : vector<32x16xf32>, vector<16x16xf32>, vector<32x16xf32> -> vector<32x16xf32>
    %243 = arith.addf %236, %242 : vector<32x16xf32>
    %cst_232 = arith.constant dense<0.000000e+00> : vector<32xf32>
    %244 = vector.multi_reduction <add>, %243, %cst_232 [1] : vector<32x16xf32> to vector<32xf32>
    %245 = vector.shape_cast %244 : vector<32xf32> to vector<32x1xf32>
    %cst_233 = arith.constant 1.600000e+01 : f32
    %246 = vector.broadcast %cst_233 : f32 to vector<32x1xf32>
    %247 = arith.divf %245, %246 : vector<32x1xf32>
    %248 = vector.broadcast %247 : vector<32x1xf32> to vector<32x16xf32>
    %249 = arith.subf %243, %248 : vector<32x16xf32>
    %250 = arith.mulf %249, %249 : vector<32x16xf32>
    %cst_234 = arith.constant dense<0.000000e+00> : vector<32xf32>
    %251 = vector.multi_reduction <add>, %250, %cst_234 [1] : vector<32x16xf32> to vector<32xf32>
    %252 = vector.shape_cast %251 : vector<32xf32> to vector<32x1xf32>
    %cst_235 = arith.constant 1.600000e+01 : f32
    %253 = vector.broadcast %cst_235 : f32 to vector<32x1xf32>
    %254 = arith.divf %252, %253 : vector<32x1xf32>
    %cst_236 = arith.constant 9.99999974E-6 : f32
    %255 = vector.broadcast %cst_236 : f32 to vector<32x1xf32>
    %256 = arith.addf %254, %255 : vector<32x1xf32>
    %257 = math.rsqrt %256 : vector<32x1xf32>
    %258 = vector.broadcast %257 : vector<32x1xf32> to vector<32x16xf32>
    %259 = arith.mulf %249, %258 : vector<32x16xf32>
    %c2_237 = arith.constant 2 : index
    %260 = memref.load %arg1[%c2_237] : memref<4xf32, #tpu.memory_space<smem>>
    %cst_238 = arith.constant 0.000000e+00 : f32
    %261 = vector.broadcast %cst_238 : f32 to vector<32x16xf32>
    %262 = arith.cmpf oge, %259, %261 : vector<32x16xf32>
    %263 = vector.broadcast %260 : f32 to vector<32x16xf32>
    %264 = arith.mulf %263, %259 : vector<32x16xf32>
    %265 = arith.select %262, %259, %264 : vector<32x16xi1>, vector<32x16xf32>
    %cst_239 = arith.constant 0.000000e+00 : f32
    %266 = vector.broadcast %cst_239 : f32 to vector<32x16xf32>
    %c0_240 = arith.constant 0 : index
    %c0_241 = arith.constant 0 : index
    %c0_242 = arith.constant 0 : index
    %267 = vector.load %arg10[%c0_240, %c0_241, %c0_242] : memref<9x16x16xf32, #tpu.memory_space<vmem>>, vector<1x16x16xf32>
    %268 = vector.shape_cast %267 : vector<1x16x16xf32> to vector<16x16xf32>
    %cst_243 = arith.constant dense<0.000000e+00> : vector<32x16xf32>
    %269 = tpu.matmul %265, %268, %cst_243 {dimension_numbers = #tpu.dot_dimension_numbers<[1], [0], [0], [1], [0, 0, 1, 1], [], []>} : vector<32x16xf32>, vector<16x16xf32>, vector<32x16xf32> -> vector<32x16xf32>
    %c0_244 = arith.constant 0 : index
    %c0_245 = arith.constant 0 : index
    %c0_246 = arith.constant 0 : index
    %270 = vector.load %arg6[%c0_244, %c0_245, %c0_246] : memref<9x32x32xf32, #tpu.memory_space<vmem>>, vector<1x32x32xf32>
    %271 = vector.shape_cast %270 : vector<1x32x32xf32> to vector<32x32xf32>
    %cst_247 = arith.constant dense<0.000000e+00> : vector<32x16xf32>
    %272 = tpu.matmul %271, %269, %cst_247 {dimension_numbers = #tpu.dot_dimension_numbers<[1], [0], [0], [1], [0, 0, 1, 1], [], []>} : vector<32x32xf32>, vector<32x16xf32>, vector<32x16xf32> -> vector<32x16xf32>
    %273 = arith.addf %266, %272 : vector<32x16xf32>
    %c1_248 = arith.constant 1 : index
    %c0_249 = arith.constant 0 : index
    %c0_250 = arith.constant 0 : index
    %274 = vector.load %arg10[%c1_248, %c0_249, %c0_250] : memref<9x16x16xf32, #tpu.memory_space<vmem>>, vector<1x16x16xf32>
    %275 = vector.shape_cast %274 : vector<1x16x16xf32> to vector<16x16xf32>
    %cst_251 = arith.constant dense<0.000000e+00> : vector<32x16xf32>
    %276 = tpu.matmul %265, %275, %cst_251 {dimension_numbers = #tpu.dot_dimension_numbers<[1], [0], [0], [1], [0, 0, 1, 1], [], []>} : vector<32x16xf32>, vector<16x16xf32>, vector<32x16xf32> -> vector<32x16xf32>
    %c1_252 = arith.constant 1 : index
    %c0_253 = arith.constant 0 : index
    %c0_254 = arith.constant 0 : index
    %277 = vector.load %arg6[%c1_252, %c0_253, %c0_254] : memref<9x32x32xf32, #tpu.memory_space<vmem>>, vector<1x32x32xf32>
    %278 = vector.shape_cast %277 : vector<1x32x32xf32> to vector<32x32xf32>
    %cst_255 = arith.constant dense<0.000000e+00> : vector<32x16xf32>
    %279 = tpu.matmul %278, %276, %cst_255 {dimension_numbers = #tpu.dot_dimension_numbers<[1], [0], [0], [1], [0, 0, 1, 1], [], []>} : vector<32x32xf32>, vector<32x16xf32>, vector<32x16xf32> -> vector<32x16xf32>
    %280 = arith.addf %273, %279 : vector<32x16xf32>
    %c2_256 = arith.constant 2 : index
    %c0_257 = arith.constant 0 : index
    %c0_258 = arith.constant 0 : index
    %281 = vector.load %arg10[%c2_256, %c0_257, %c0_258] : memref<9x16x16xf32, #tpu.memory_space<vmem>>, vector<1x16x16xf32>
    %282 = vector.shape_cast %281 : vector<1x16x16xf32> to vector<16x16xf32>
    %cst_259 = arith.constant dense<0.000000e+00> : vector<32x16xf32>
    %283 = tpu.matmul %265, %282, %cst_259 {dimension_numbers = #tpu.dot_dimension_numbers<[1], [0], [0], [1], [0, 0, 1, 1], [], []>} : vector<32x16xf32>, vector<16x16xf32>, vector<32x16xf32> -> vector<32x16xf32>
    %c2_260 = arith.constant 2 : index
    %c0_261 = arith.constant 0 : index
    %c0_262 = arith.constant 0 : index
    %284 = vector.load %arg6[%c2_260, %c0_261, %c0_262] : memref<9x32x32xf32, #tpu.memory_space<vmem>>, vector<1x32x32xf32>
    %285 = vector.shape_cast %284 : vector<1x32x32xf32> to vector<32x32xf32>
    %cst_263 = arith.constant dense<0.000000e+00> : vector<32x16xf32>
    %286 = tpu.matmul %285, %283, %cst_263 {dimension_numbers = #tpu.dot_dimension_numbers<[1], [0], [0], [1], [0, 0, 1, 1], [], []>} : vector<32x32xf32>, vector<32x16xf32>, vector<32x16xf32> -> vector<32x16xf32>
    %287 = arith.addf %280, %286 : vector<32x16xf32>
    %c3_264 = arith.constant 3 : index
    %c0_265 = arith.constant 0 : index
    %c0_266 = arith.constant 0 : index
    %288 = vector.load %arg10[%c3_264, %c0_265, %c0_266] : memref<9x16x16xf32, #tpu.memory_space<vmem>>, vector<1x16x16xf32>
    %289 = vector.shape_cast %288 : vector<1x16x16xf32> to vector<16x16xf32>
    %cst_267 = arith.constant dense<0.000000e+00> : vector<32x16xf32>
    %290 = tpu.matmul %265, %289, %cst_267 {dimension_numbers = #tpu.dot_dimension_numbers<[1], [0], [0], [1], [0, 0, 1, 1], [], []>} : vector<32x16xf32>, vector<16x16xf32>, vector<32x16xf32> -> vector<32x16xf32>
    %c3_268 = arith.constant 3 : index
    %c0_269 = arith.constant 0 : index
    %c0_270 = arith.constant 0 : index
    %291 = vector.load %arg6[%c3_268, %c0_269, %c0_270] : memref<9x32x32xf32, #tpu.memory_space<vmem>>, vector<1x32x32xf32>
    %292 = vector.shape_cast %291 : vector<1x32x32xf32> to vector<32x32xf32>
    %cst_271 = arith.constant dense<0.000000e+00> : vector<32x16xf32>
    %293 = tpu.matmul %292, %290, %cst_271 {dimension_numbers = #tpu.dot_dimension_numbers<[1], [0], [0], [1], [0, 0, 1, 1], [], []>} : vector<32x32xf32>, vector<32x16xf32>, vector<32x16xf32> -> vector<32x16xf32>
    %294 = arith.addf %287, %293 : vector<32x16xf32>
    %c4_272 = arith.constant 4 : index
    %c0_273 = arith.constant 0 : index
    %c0_274 = arith.constant 0 : index
    %295 = vector.load %arg10[%c4_272, %c0_273, %c0_274] : memref<9x16x16xf32, #tpu.memory_space<vmem>>, vector<1x16x16xf32>
    %296 = vector.shape_cast %295 : vector<1x16x16xf32> to vector<16x16xf32>
    %cst_275 = arith.constant dense<0.000000e+00> : vector<32x16xf32>
    %297 = tpu.matmul %265, %296, %cst_275 {dimension_numbers = #tpu.dot_dimension_numbers<[1], [0], [0], [1], [0, 0, 1, 1], [], []>} : vector<32x16xf32>, vector<16x16xf32>, vector<32x16xf32> -> vector<32x16xf32>
    %c4_276 = arith.constant 4 : index
    %c0_277 = arith.constant 0 : index
    %c0_278 = arith.constant 0 : index
    %298 = vector.load %arg6[%c4_276, %c0_277, %c0_278] : memref<9x32x32xf32, #tpu.memory_space<vmem>>, vector<1x32x32xf32>
    %299 = vector.shape_cast %298 : vector<1x32x32xf32> to vector<32x32xf32>
    %cst_279 = arith.constant dense<0.000000e+00> : vector<32x16xf32>
    %300 = tpu.matmul %299, %297, %cst_279 {dimension_numbers = #tpu.dot_dimension_numbers<[1], [0], [0], [1], [0, 0, 1, 1], [], []>} : vector<32x32xf32>, vector<32x16xf32>, vector<32x16xf32> -> vector<32x16xf32>
    %301 = arith.addf %294, %300 : vector<32x16xf32>
    %c5_280 = arith.constant 5 : index
    %c0_281 = arith.constant 0 : index
    %c0_282 = arith.constant 0 : index
    %302 = vector.load %arg10[%c5_280, %c0_281, %c0_282] : memref<9x16x16xf32, #tpu.memory_space<vmem>>, vector<1x16x16xf32>
    %303 = vector.shape_cast %302 : vector<1x16x16xf32> to vector<16x16xf32>
    %cst_283 = arith.constant dense<0.000000e+00> : vector<32x16xf32>
    %304 = tpu.matmul %265, %303, %cst_283 {dimension_numbers = #tpu.dot_dimension_numbers<[1], [0], [0], [1], [0, 0, 1, 1], [], []>} : vector<32x16xf32>, vector<16x16xf32>, vector<32x16xf32> -> vector<32x16xf32>
    %c5_284 = arith.constant 5 : index
    %c0_285 = arith.constant 0 : index
    %c0_286 = arith.constant 0 : index
    %305 = vector.load %arg6[%c5_284, %c0_285, %c0_286] : memref<9x32x32xf32, #tpu.memory_space<vmem>>, vector<1x32x32xf32>
    %306 = vector.shape_cast %305 : vector<1x32x32xf32> to vector<32x32xf32>
    %cst_287 = arith.constant dense<0.000000e+00> : vector<32x16xf32>
    %307 = tpu.matmul %306, %304, %cst_287 {dimension_numbers = #tpu.dot_dimension_numbers<[1], [0], [0], [1], [0, 0, 1, 1], [], []>} : vector<32x32xf32>, vector<32x16xf32>, vector<32x16xf32> -> vector<32x16xf32>
    %308 = arith.addf %301, %307 : vector<32x16xf32>
    %c6_288 = arith.constant 6 : index
    %c0_289 = arith.constant 0 : index
    %c0_290 = arith.constant 0 : index
    %309 = vector.load %arg10[%c6_288, %c0_289, %c0_290] : memref<9x16x16xf32, #tpu.memory_space<vmem>>, vector<1x16x16xf32>
    %310 = vector.shape_cast %309 : vector<1x16x16xf32> to vector<16x16xf32>
    %cst_291 = arith.constant dense<0.000000e+00> : vector<32x16xf32>
    %311 = tpu.matmul %265, %310, %cst_291 {dimension_numbers = #tpu.dot_dimension_numbers<[1], [0], [0], [1], [0, 0, 1, 1], [], []>} : vector<32x16xf32>, vector<16x16xf32>, vector<32x16xf32> -> vector<32x16xf32>
    %c6_292 = arith.constant 6 : index
    %c0_293 = arith.constant 0 : index
    %c0_294 = arith.constant 0 : index
    %312 = vector.load %arg6[%c6_292, %c0_293, %c0_294] : memref<9x32x32xf32, #tpu.memory_space<vmem>>, vector<1x32x32xf32>
    %313 = vector.shape_cast %312 : vector<1x32x32xf32> to vector<32x32xf32>
    %cst_295 = arith.constant dense<0.000000e+00> : vector<32x16xf32>
    %314 = tpu.matmul %313, %311, %cst_295 {dimension_numbers = #tpu.dot_dimension_numbers<[1], [0], [0], [1], [0, 0, 1, 1], [], []>} : vector<32x32xf32>, vector<32x16xf32>, vector<32x16xf32> -> vector<32x16xf32>
    %315 = arith.addf %308, %314 : vector<32x16xf32>
    %c7_296 = arith.constant 7 : index
    %c0_297 = arith.constant 0 : index
    %c0_298 = arith.constant 0 : index
    %316 = vector.load %arg10[%c7_296, %c0_297, %c0_298] : memref<9x16x16xf32, #tpu.memory_space<vmem>>, vector<1x16x16xf32>
    %317 = vector.shape_cast %316 : vector<1x16x16xf32> to vector<16x16xf32>
    %cst_299 = arith.constant dense<0.000000e+00> : vector<32x16xf32>
    %318 = tpu.matmul %265, %317, %cst_299 {dimension_numbers = #tpu.dot_dimension_numbers<[1], [0], [0], [1], [0, 0, 1, 1], [], []>} : vector<32x16xf32>, vector<16x16xf32>, vector<32x16xf32> -> vector<32x16xf32>
    %c7_300 = arith.constant 7 : index
    %c0_301 = arith.constant 0 : index
    %c0_302 = arith.constant 0 : index
    %319 = vector.load %arg6[%c7_300, %c0_301, %c0_302] : memref<9x32x32xf32, #tpu.memory_space<vmem>>, vector<1x32x32xf32>
    %320 = vector.shape_cast %319 : vector<1x32x32xf32> to vector<32x32xf32>
    %cst_303 = arith.constant dense<0.000000e+00> : vector<32x16xf32>
    %321 = tpu.matmul %320, %318, %cst_303 {dimension_numbers = #tpu.dot_dimension_numbers<[1], [0], [0], [1], [0, 0, 1, 1], [], []>} : vector<32x32xf32>, vector<32x16xf32>, vector<32x16xf32> -> vector<32x16xf32>
    %322 = arith.addf %315, %321 : vector<32x16xf32>
    %c8_304 = arith.constant 8 : index
    %c0_305 = arith.constant 0 : index
    %c0_306 = arith.constant 0 : index
    %323 = vector.load %arg10[%c8_304, %c0_305, %c0_306] : memref<9x16x16xf32, #tpu.memory_space<vmem>>, vector<1x16x16xf32>
    %324 = vector.shape_cast %323 : vector<1x16x16xf32> to vector<16x16xf32>
    %cst_307 = arith.constant dense<0.000000e+00> : vector<32x16xf32>
    %325 = tpu.matmul %265, %324, %cst_307 {dimension_numbers = #tpu.dot_dimension_numbers<[1], [0], [0], [1], [0, 0, 1, 1], [], []>} : vector<32x16xf32>, vector<16x16xf32>, vector<32x16xf32> -> vector<32x16xf32>
    %c8_308 = arith.constant 8 : index
    %c0_309 = arith.constant 0 : index
    %c0_310 = arith.constant 0 : index
    %326 = vector.load %arg6[%c8_308, %c0_309, %c0_310] : memref<9x32x32xf32, #tpu.memory_space<vmem>>, vector<1x32x32xf32>
    %327 = vector.shape_cast %326 : vector<1x32x32xf32> to vector<32x32xf32>
    %cst_311 = arith.constant dense<0.000000e+00> : vector<32x16xf32>
    %328 = tpu.matmul %327, %325, %cst_311 {dimension_numbers = #tpu.dot_dimension_numbers<[1], [0], [0], [1], [0, 0, 1, 1], [], []>} : vector<32x32xf32>, vector<32x16xf32>, vector<32x16xf32> -> vector<32x16xf32>
    %329 = arith.addf %322, %328 : vector<32x16xf32>
    %cst_312 = arith.constant dense<0.000000e+00> : vector<32xf32>
    %330 = vector.multi_reduction <add>, %329, %cst_312 [1] : vector<32x16xf32> to vector<32xf32>
    %331 = vector.shape_cast %330 : vector<32xf32> to vector<32x1xf32>
    %cst_313 = arith.constant 1.600000e+01 : f32
    %332 = vector.broadcast %cst_313 : f32 to vector<32x1xf32>
    %333 = arith.divf %331, %332 : vector<32x1xf32>
    %334 = vector.broadcast %333 : vector<32x1xf32> to vector<32x16xf32>
    %335 = arith.subf %329, %334 : vector<32x16xf32>
    %336 = arith.mulf %335, %335 : vector<32x16xf32>
    %cst_314 = arith.constant dense<0.000000e+00> : vector<32xf32>
    %337 = vector.multi_reduction <add>, %336, %cst_314 [1] : vector<32x16xf32> to vector<32xf32>
    %338 = vector.shape_cast %337 : vector<32xf32> to vector<32x1xf32>
    %cst_315 = arith.constant 1.600000e+01 : f32
    %339 = vector.broadcast %cst_315 : f32 to vector<32x1xf32>
    %340 = arith.divf %338, %339 : vector<32x1xf32>
    %cst_316 = arith.constant 9.99999974E-6 : f32
    %341 = vector.broadcast %cst_316 : f32 to vector<32x1xf32>
    %342 = arith.addf %340, %341 : vector<32x1xf32>
    %343 = math.rsqrt %342 : vector<32x1xf32>
    %344 = vector.broadcast %343 : vector<32x1xf32> to vector<32x16xf32>
    %345 = arith.mulf %335, %344 : vector<32x16xf32>
    %c3_317 = arith.constant 3 : index
    %346 = memref.load %arg1[%c3_317] : memref<4xf32, #tpu.memory_space<smem>>
    %cst_318 = arith.constant 0.000000e+00 : f32
    %347 = vector.broadcast %cst_318 : f32 to vector<32x16xf32>
    %348 = arith.cmpf oge, %345, %347 : vector<32x16xf32>
    %349 = vector.broadcast %346 : f32 to vector<32x16xf32>
    %350 = arith.mulf %349, %345 : vector<32x16xf32>
    %351 = arith.select %348, %345, %350 : vector<32x16xi1>, vector<32x16xf32>
    %c0_319 = arith.constant 0 : index
    %c0_320 = arith.constant 0 : index
    %c0_321 = arith.constant 0 : index
    %352 = vector.load %arg13[%c0_319, %c0_320, %c0_321] : memref<1x32x16xf32, #tpu.memory_space<vmem>>, vector<1x32x16xf32>
    %353 = vector.shape_cast %352 : vector<1x32x16xf32> to vector<32x16xf32>
    %354 = vector.shape_cast %351 : vector<32x16xf32> to vector<1x32x16xf32>
    tpu.vector_store %arg13[%c0_319, %c0_320, %c0_321], %354 {strides = array<i32>} : memref<1x32x16xf32, #tpu.memory_space<vmem>>, vector<1x32x16xf32>,
    return
  }
  func.func @transform_0(%arg0: i32) -> i32 {
    %c0_i32 = arith.constant 0 : i32
    %c0_i32_0 = arith.constant 0 : i32
    return %c0_i32 : i32
  }
  func.func @transform_1(%arg0: i32) -> (i32, i32, i32) {
    %c0_i32 = arith.constant 0 : i32
    %c0_i32_0 = arith.constant 0 : i32
    %c0_i32_1 = arith.constant 0 : i32
    return %arg0, %c0_i32, %c0_i32_0 : i32, i32, i32
  }
  func.func @transform_2(%arg0: i32) -> (i32, i32, i32) {
    %c0_i32 = arith.constant 0 : i32
    %c0_i32_0 = arith.constant 0 : i32
    %c0_i32_1 = arith.constant 0 : i32
    %c0_i32_2 = arith.constant 0 : i32
    return %c0_i32, %c0_i32_0, %c0_i32_1 : i32, i32, i32
  }
  func.func @transform_3(%arg0: i32) -> (i32, i32, i32) {
    %c0_i32 = arith.constant 0 : i32
    %c0_i32_0 = arith.constant 0 : i32
    %c0_i32_1 = arith.constant 0 : i32
    %c0_i32_2 = arith.constant 0 : i32
    return %c0_i32, %c0_i32_0, %c0_i32_1 : i32, i32, i32
  }
  func.func @transform_4(%arg0: i32) -> (i32, i32, i32) {
    %c0_i32 = arith.constant 0 : i32
    %c0_i32_0 = arith.constant 0 : i32
    %c0_i32_1 = arith.constant 0 : i32
    %c0_i32_2 = arith.constant 0 : i32
    return %c0_i32, %c0_i32_0, %c0_i32_1 : i32, i32, i32
  }
  func.func @transform_5(%arg0: i32) -> (i32, i32, i32) {
    %c0_i32 = arith.constant 0 : i32
    %c0_i32_0 = arith.constant 0 : i32
    %c0_i32_1 = arith.constant 0 : i32
    %c0_i32_2 = arith.constant 0 : i32
    return %c0_i32, %c0_i32_0, %c0_i32_1 : i32, i32, i32
  }
  func.func @transform_6(%arg0: i32) -> (i32, i32, i32) {
    %c0_i32 = arith.constant 0 : i32
    %c0_i32_0 = arith.constant 0 : i32
    %c0_i32_1 = arith.constant 0 : i32
    %c0_i32_2 = arith.constant 0 : i32
    return %c0_i32, %c0_i32_0, %c0_i32_1 : i32, i32, i32
  }
  func.func @transform_7(%arg0: i32) -> (i32, i32, i32) {
    %c0_i32 = arith.constant 0 : i32
    %c0_i32_0 = arith.constant 0 : i32
    %c0_i32_1 = arith.constant 0 : i32
    %c0_i32_2 = arith.constant 0 : i32
    return %c0_i32, %c0_i32_0, %c0_i32_1 : i32, i32, i32
  }
  func.func @transform_8(%arg0: i32) -> (i32, i32, i32) {
    %c0_i32 = arith.constant 0 : i32
    %c0_i32_0 = arith.constant 0 : i32
    %c0_i32_1 = arith.constant 0 : i32
    %c0_i32_2 = arith.constant 0 : i32
    return %c0_i32, %c0_i32_0, %c0_i32_1 : i32, i32, i32
  }
  func.func @transform_9(%arg0: i32) -> (i32, i32, i32) {
    %c0_i32 = arith.constant 0 : i32
    %c0_i32_0 = arith.constant 0 : i32
    %c0_i32_1 = arith.constant 0 : i32
    %c0_i32_2 = arith.constant 0 : i32
    return %c0_i32, %c0_i32_0, %c0_i32_1 : i32, i32, i32
  }
  func.func @transform_10(%arg0: i32) -> (i32, i32, i32) {
    %c0_i32 = arith.constant 0 : i32
    %c0_i32_0 = arith.constant 0 : i32
    %c0_i32_1 = arith.constant 0 : i32
    return %arg0, %c0_i32, %c0_i32_0 : i32, i32, i32
  }
  func.func @transform_11(%arg0: i32) -> (i32, i32, i32) {
    %c0_i32 = arith.constant 0 : i32
    %c0_i32_0 = arith.constant 0 : i32
    %c0_i32_1 = arith.constant 0 : i32
    return %arg0, %c0_i32, %c0_i32_0 : i32, i32, i32
  }
  func.func @transform_12(%arg0: i32) -> (i32, i32, i32) {
    %c0_i32 = arith.constant 0 : i32
    %c0_i32_0 = arith.constant 0 : i32
    %c0_i32_1 = arith.constant 0 : i32
    return %arg0, %c0_i32, %c0_i32_0 : i32, i32, i32
  }
}

</mosaic_0001>

<llo_original>
// kernel: encoder_forward.1
$region0: #{encoder_forward.1}
  #allocation0 [shape = 'u32[]', space=smem, size = 0x4, offset = 0x4, fixed_abs, tag = 'smem constant byte address 0x4 - core index']
  #allocation1 [shape = 'u32[144,128]{1,0:T(1,128)}', space=vmem, size = 0x12000, scoped, tag = 'internal scratch']
  %s0 = inlined_call_operand.hbm [shape: f32[4], index: 0, kind: input, shape index: {}]
  %s1 = inlined_call_operand.vmem [shape: f32[2,4,256], index: 1, kind: input, shape index: {}]
  %s2 = inlined_call_operand.vmem [shape: f32[9,8,4], index: 2, kind: input, shape index: {}]
  %s3 = inlined_call_operand.vmem [shape: f32[9,16,8], index: 3, kind: input, shape index: {}]
  %s4 = inlined_call_operand.vmem [shape: f32[9,32,16], index: 4, kind: input, shape index: {}]
  %s5 = inlined_call_operand.vmem [shape: f32[9,32,32], index: 5, kind: input, shape index: {}]
  %s6 = inlined_call_operand.hbm [shape: f32[9,256,256], index: 6, kind: input, shape index: {}]
  %s7 = inlined_call_operand.hbm [shape: f32[9,256,64], index: 7, kind: input, shape index: {}]
  %s8 = inlined_call_operand.hbm [shape: f32[9,64,16], index: 8, kind: input, shape index: {}]
  %s9 = inlined_call_operand.hbm [shape: f32[9,16,16], index: 9, kind: input, shape index: {}]
  %s10 = inlined_call_operand.vmem [shape: f32[2,8,256], index: 10, kind: output, shape index: {0}]
  %s11 = inlined_call_operand.vmem [shape: f32[2,16,64], index: 11, kind: output, shape index: {1}]
  %s12 = inlined_call_operand.vmem [shape: f32[2,32,16], index: 12, kind: output, shape index: {2}]
  %13 = xla_tuple %s10, %s11, %s12
  %s14 = sld [smem:[#allocation0]]
  $region109: #{encoder_forward.1} parent=0
    _
  %s16 = ssub.s32 1, %s14
  %s17 = scalar_select 0, %s16, %s14
  $region1: #{encoder_forward.1} parent=0
    #allocation2 [shape = 'u8[512]{0}', space=smem, size = 0x200, scoped, tag = 'input window, operand 0, single buffered']
    #allocation3 [shape = 's32[2]{0}', space=sflag, size = 0x8, scoped, tag = 'scoped memory for encoder_forward.1']
    #allocation4 [shape = 's32[2]{0}', space=sflag, size = 0x8, scoped, tag = 'scoped memory for encoder_forward.1']
    #allocation5 [shape = 'u8[2359296]{0}', space=vmem, size = 0x240000, scoped, tag = 'input window, operand 6, single buffered']
    #allocation6 [shape = 'u8[1179648]{0}', space=vmem, size = 0x120000, scoped, tag = 'input window, operand 7, single buffered']
    #allocation7 [shape = 's32[1]{0}', space=sflag, size = 0x4, scoped, tag = 'scoped memory for encoder_forward.1']
    #allocation8 [shape = 'u8[294912]{0}', space=vmem, size = 0x48000, scoped, tag = 'input window, operand 8, single buffered']
    #allocation9 [shape = 'u8[73728]{0}', space=vmem, size = 0x12000, scoped, tag = 'input window, operand 9, single buffered']
    #allocation10 [shape = 's32[1]{0}', space=sflag, size = 0x4, scoped, tag = 'scoped memory for encoder_forward.1']
    %18 = vsyncpa [#allocation4], 0
    %19 = vsyncpa [#allocation3], 0
    %20 = vsyncpa [#allocation7], 0
    %21 = vsyncpa [#allocation10], 0
    loop: start=0, step=1, limit=4
    $region2: #{encoder_forward.1} parent=1 // loop_pre_header
      _
    $region3: #{encoder_forward.1} parent=1 // loop_header
      %s23 = sphi 0, %s27
      %p24 = scmp.ge.s32.totalorder %s23, 4
      %s31 = sphi 0, %s31
      %s33 = sphi 0, %s31
      %s34 = sphi 0, %s33
      %s48 = sphi 0, %s34
      %s54 = sphi 0, %s56
      %s57 = sphi 0, %s54
      %s58 = sphi 0, %s57
      %s74 = sphi 0, %s58
      %s78 = sphi 0, %s78
      %s80 = sphi 0, %s78
      %s81 = sphi 0, %s80
      %s95 = sphi 0, %s81
      %s99 = sphi 0, %s99
      %s101 = sphi 0, %s99
      %s102 = sphi 0, %s101
      %s116 = sphi 0, %s102
      %s120 = sphi 0, %s120
      %s122 = sphi 0, %s120
      %s123 = sphi 0, %s122
      %s137 = sphi 0, %s123
      %s141 = sphi 0, %s141
      %s143 = sphi 0, %s141
      %s144 = sphi 0, %s143
      %s158 = sphi 0, %s144
      %s162 = sphi 0, %s162
      %s164 = sphi 0, %s162
      %s165 = sphi 0, %s164
      %s179 = sphi 0, %s165
      %s183 = sphi 0, %s183
      %s185 = sphi 0, %s183
      %s186 = sphi 0, %s185
      %s200 = sphi 0, %s186
      %s204 = sphi 0, %s204
      %s206 = sphi 0, %s204
      %s207 = sphi 0, %s206
      %s221 = sphi 0, %s207
      %s225 = sphi 0, %s225
      %s227 = sphi 0, %s225
      %s228 = sphi 0, %s227
      %s242 = sphi 0, %s228
      %s248 = sphi 0, %s250
      %s251 = sphi 0, %s248
      %s252 = sphi 0, %s251
      %s268 = sphi 0, %s252
      %s274 = sphi 0, %s276
      %s277 = sphi 0, %s274
      %s278 = sphi 0, %s277
      %s294 = sphi 0, %s278
      %s300 = sphi 0, %s302
      %s303 = sphi 0, %s300
      %s304 = sphi 0, %s303
      %s320 = sphi 0, %s304
    $region4: #{encoder_forward.1} parent=1 // loop_header_branch
      %26 = sbr.rel (%p24) target = $region8
    $region5: #{encoder_forward.1} parent=1 // loop_body
      %s28 = ssub.s32 %s23, 1
      %s29 = ssub.s32 %s23, 2
      %s30 = sadd.s32 %s23, 1
      %s32 = sadd.s32 %s31, 1
      %p35 = scmp.eq.s32.totalorder %s23, 1
      %p36 = scmp.ne.s32.totalorder %s31, %s33
      %p37 = scmp.eq.s32.totalorder %s23, 0
      %p38 = por %p36, %p37
      %p39 = scmp.ne.s32.totalorder %s31, %s33
      %p40 = scmp.eq.s32.totalorder %s28, 1
      %p41 = por %p39, %p40
      %p42 = scmp.ne.s32.totalorder %s33, %s34
      %p43 = scmp.eq.s32.totalorder %s28, 0
      %p44 = por %p42, %p43
      %p45 = scmp.ne.s32.totalorder %s33, %s34
      %p46 = scmp.eq.s32.totalorder %s29, 1
      %p47 = por %p45, %p46
      %p49 = scmp.ne.s32.totalorder %s34, %s48
      %p50 = scmp.eq.s32.totalorder %s29, 0
      %p51 = por %p49, %p50
      %s52 = ssub.s32 %s23, %s30
      %p53 = scmp.eq.s32.totalorder %s52, 0
      %s55 = sadd.s32 %s54, 1
      %s56 = scalar_select %p53, %s54, %s55
      %p59 = pneg %p53
      %p60 = scmp.eq.s32.totalorder %s23, 1
      %p61 = por %p59, %p60
      %p62 = scmp.ne.s32.totalorder %s54, %s57
      %p63 = scmp.eq.s32.totalorder %s23, 0
      %p64 = por %p62, %p63
      %p65 = scmp.ne.s32.totalorder %s54, %s57
      %p66 = scmp.eq.s32.totalorder %s28, 1
      %p67 = por %p65, %p66
      %p68 = scmp.ne.s32.totalorder %s57, %s58
      %p69 = scmp.eq.s32.totalorder %s28, 0
      %p70 = por %p68, %p69
      %p71 = scmp.ne.s32.totalorder %s57, %s58
      %p72 = scmp.eq.s32.totalorder %s29, 1
      %p73 = por %p71, %p72
      %p75 = scmp.ne.s32.totalorder %s58, %s74
      %p76 = scmp.eq.s32.totalorder %s29, 0
      %p77 = por %p75, %p76
      %s79 = sadd.s32 %s78, 1
      %p82 = scmp.eq.s32.totalorder %s23, 1
      %p83 = scmp.ne.s32.totalorder %s78, %s80
      %p84 = scmp.eq.s32.totalorder %s23, 0
      %p85 = por %p83, %p84
      %p86 = scmp.ne.s32.totalorder %s78, %s80
      %p87 = scmp.eq.s32.totalorder %s28, 1
      %p88 = por %p86, %p87
      %p89 = scmp.ne.s32.totalorder %s80, %s81
      %p90 = scmp.eq.s32.totalorder %s28, 0
      %p91 = por %p89, %p90
      %p92 = scmp.ne.s32.totalorder %s80, %s81
      %p93 = scmp.eq.s32.totalorder %s29, 1
      %p94 = por %p92, %p93
      %p96 = scmp.ne.s32.totalorder %s81, %s95
      %p97 = scmp.eq.s32.totalorder %s29, 0
      %p98 = por %p96, %p97
      %s100 = sadd.s32 %s99, 1
      %p103 = scmp.eq.s32.totalorder %s23, 1
      %p104 = scmp.ne.s32.totalorder %s99, %s101
      %p105 = scmp.eq.s32.totalorder %s23, 0
      %p106 = por %p104, %p105
      %p107 = scmp.ne.s32.totalorder %s99, %s101
      %p108 = scmp.eq.s32.totalorder %s28, 1
      %p109 = por %p107, %p108
      %p110 = scmp.ne.s32.totalorder %s101, %s102
      %p111 = scmp.eq.s32.totalorder %s28, 0
      %p112 = por %p110, %p111
      %p113 = scmp.ne.s32.totalorder %s101, %s102
      %p114 = scmp.eq.s32.totalorder %s29, 1
      %p115 = por %p113, %p114
      %p117 = scmp.ne.s32.totalorder %s102, %s116
      %p118 = scmp.eq.s32.totalorder %s29, 0
      %p119 = por %p117, %p118
      %s121 = sadd.s32 %s120, 1
      %p124 = scmp.eq.s32.totalorder %s23, 1
      %p125 = scmp.ne.s32.totalorder %s120, %s122
      %p126 = scmp.eq.s32.totalorder %s23, 0
      %p127 = por %p125, %p126
      %p128 = scmp.ne.s32.totalorder %s120, %s122
      %p129 = scmp.eq.s32.totalorder %s28, 1
      %p130 = por %p128, %p129
      %p131 = scmp.ne.s32.totalorder %s122, %s123
      %p132 = scmp.eq.s32.totalorder %s28, 0
      %p133 = por %p131, %p132
      %p134 = scmp.ne.s32.totalorder %s122, %s123
      %p135 = scmp.eq.s32.totalorder %s29, 1
      %p136 = por %p134, %p135
      %p138 = scmp.ne.s32.totalorder %s123, %s137
      %p139 = scmp.eq.s32.totalorder %s29, 0
      %p140 = por %p138, %p139
      %s142 = sadd.s32 %s141, 1
      %p145 = scmp.eq.s32.totalorder %s23, 1
      %p146 = scmp.ne.s32.totalorder %s141, %s143
      %p147 = scmp.eq.s32.totalorder %s23, 0
      %p148 = por %p146, %p147
      %p149 = scmp.ne.s32.totalorder %s141, %s143
      %p150 = scmp.eq.s32.totalorder %s28, 1
      %p151 = por %p149, %p150
      %p152 = scmp.ne.s32.totalorder %s143, %s144
      %p153 = scmp.eq.s32.totalorder %s28, 0
      %p154 = por %p152, %p153
      %p155 = scmp.ne.s32.totalorder %s143, %s144
      %p156 = scmp.eq.s32.totalorder %s29, 1
      %p157 = por %p155, %p156
      %p159 = scmp.ne.s32.totalorder %s144, %s158
      %p160 = scmp.eq.s32.totalorder %s29, 0
      %p161 = por %p159, %p160
      %s163 = sadd.s32 %s162, 1
      %p166 = scmp.eq.s32.totalorder %s23, 1
      %p167 = scmp.ne.s32.totalorder %s162, %s164
      %p168 = scmp.eq.s32.totalorder %s23, 0
      %p169 = por %p167, %p168
      %p170 = scmp.ne.s32.totalorder %s162, %s164
      %p171 = scmp.eq.s32.totalorder %s28, 1
      %p172 = por %p170, %p171
      %p173 = scmp.ne.s32.totalorder %s164, %s165
      %p174 = scmp.eq.s32.totalorder %s28, 0
      %p175 = por %p173, %p174
      %p176 = scmp.ne.s32.totalorder %s164, %s165
      %p177 = scmp.eq.s32.totalorder %s29, 1
      %p178 = por %p176, %p177
      %p180 = scmp.ne.s32.totalorder %s165, %s179
      %p181 = scmp.eq.s32.totalorder %s29, 0
      %p182 = por %p180, %p181
      %s184 = sadd.s32 %s183, 1
      %p187 = scmp.eq.s32.totalorder %s23, 1
      %p188 = scmp.ne.s32.totalorder %s183, %s185
      %p189 = scmp.eq.s32.totalorder %s23, 0
      %p190 = por %p188, %p189
      %p191 = scmp.ne.s32.totalorder %s183, %s185
      %p192 = scmp.eq.s32.totalorder %s28, 1
      %p193 = por %p191, %p192
      %p194 = scmp.ne.s32.totalorder %s185, %s186
      %p195 = scmp.eq.s32.totalorder %s28, 0
      %p196 = por %p194, %p195
      %p197 = scmp.ne.s32.totalorder %s185, %s186
      %p198 = scmp.eq.s32.totalorder %s29, 1
      %p199 = por %p197, %p198
      %p201 = scmp.ne.s32.totalorder %s186, %s200
      %p202 = scmp.eq.s32.totalorder %s29, 0
      %p203 = por %p201, %p202
      %s205 = sadd.s32 %s204, 1
      %p208 = scmp.eq.s32.totalorder %s23, 1
      %p209 = scmp.ne.s32.totalorder %s204, %s206
      %p210 = scmp.eq.s32.totalorder %s23, 0
      %p211 = por %p209, %p210
      %p212 = scmp.ne.s32.totalorder %s204, %s206
      %p213 = scmp.eq.s32.totalorder %s28, 1
      %p214 = por %p212, %p213
      %p215 = scmp.ne.s32.totalorder %s206, %s207
      %p216 = scmp.eq.s32.totalorder %s28, 0
      %p217 = por %p215, %p216
      %p218 = scmp.ne.s32.totalorder %s206, %s207
      %p219 = scmp.eq.s32.totalorder %s29, 1
      %p220 = por %p218, %p219
      %p222 = scmp.ne.s32.totalorder %s207, %s221
      %p223 = scmp.eq.s32.totalorder %s29, 0
      %p224 = por %p222, %p223
      %s226 = sadd.s32 %s225, 1
      %p229 = scmp.eq.s32.totalorder %s23, 1
      %p230 = scmp.ne.s32.totalorder %s225, %s227
      %p231 = scmp.eq.s32.totalorder %s23, 0
      %p232 = por %p230, %p231
      %p233 = scmp.ne.s32.totalorder %s225, %s227
      %p234 = scmp.eq.s32.totalorder %s28, 1
      %p235 = por %p233, %p234
      %p236 = scmp.ne.s32.totalorder %s227, %s228
      %p237 = scmp.eq.s32.totalorder %s28, 0
      %p238 = por %p236, %p237
      %p239 = scmp.ne.s32.totalorder %s227, %s228
      %p240 = scmp.eq.s32.totalorder %s29, 1
      %p241 = por %p239, %p240
      %p243 = scmp.ne.s32.totalorder %s228, %s242
      %p244 = scmp.eq.s32.totalorder %s29, 0
      %p245 = por %p243, %p244
      %s246 = ssub.s32 %s23, %s30
      %p247 = scmp.eq.s32.totalorder %s246, 0
      %s249 = sadd.s32 %s248, 1
      %s250 = scalar_select %p247, %s248, %s249
      %p253 = pneg %p247
      %p254 = scmp.eq.s32.totalorder %s23, 1
      %p255 = por %p253, %p254
      %p256 = scmp.ne.s32.totalorder %s248, %s251
      %p257 = scmp.eq.s32.totalorder %s23, 0
      %p258 = por %p256, %p257
      %p259 = scmp.ne.s32.totalorder %s248, %s251
      %p260 = scmp.eq.s32.totalorder %s28, 1
      %p261 = por %p259, %p260
      %p262 = scmp.ne.s32.totalorder %s251, %s252
      %p263 = scmp.eq.s32.totalorder %s28, 0
      %p264 = por %p262, %p263
      %p265 = scmp.ne.s32.totalorder %s251, %s252
      %p266 = scmp.eq.s32.totalorder %s29, 1
      %p267 = por %p265, %p266
      %p269 = scmp.ne.s32.totalorder %s252, %s268
      %p270 = scmp.eq.s32.totalorder %s29, 0
      %p271 = por %p269, %p270
      %s272 = ssub.s32 %s23, %s30
      %p273 = scmp.eq.s32.totalorder %s272, 0
      %s275 = sadd.s32 %s274, 1
      %s276 = scalar_select %p273, %s274, %s275
      %p279 = pneg %p273
      %p280 = scmp.eq.s32.totalorder %s23, 1
      %p281 = por %p279, %p280
      %p282 = scmp.ne.s32.totalorder %s274, %s277
      %p283 = scmp.eq.s32.totalorder %s23, 0
      %p284 = por %p282, %p283
      %p285 = scmp.ne.s32.totalorder %s274, %s277
      %p286 = scmp.eq.s32.totalorder %s28, 1
      %p287 = por %p285, %p286
      %p288 = scmp.ne.s32.totalorder %s277, %s278
      %p289 = scmp.eq.s32.totalorder %s28, 0
      %p290 = por %p288, %p289
      %p291 = scmp.ne.s32.totalorder %s277, %s278
      %p292 = scmp.eq.s32.totalorder %s29, 1
      %p293 = por %p291, %p292
      %p295 = scmp.ne.s32.totalorder %s278, %s294
      %p296 = scmp.eq.s32.totalorder %s29, 0
      %p297 = por %p295, %p296
      %s298 = ssub.s32 %s23, %s30
      %p299 = scmp.eq.s32.totalorder %s298, 0
      %s301 = sadd.s32 %s300, 1
      %s302 = scalar_select %p299, %s300, %s301
      %p305 = pneg %p299
      %p306 = scmp.eq.s32.totalorder %s23, 1
      %p307 = por %p305, %p306
      %p308 = scmp.ne.s32.totalorder %s300, %s303
      %p309 = scmp.eq.s32.totalorder %s23, 0
      %p310 = por %p308, %p309
      %p311 = scmp.ne.s32.totalorder %s300, %s303
      %p312 = scmp.eq.s32.totalorder %s28, 1
      %p313 = por %p311, %p312
      %p314 = scmp.ne.s32.totalorder %s303, %s304
      %p315 = scmp.eq.s32.totalorder %s28, 0
      %p316 = por %p314, %p315
      %p317 = scmp.ne.s32.totalorder %s303, %s304
      %p318 = scmp.eq.s32.totalorder %s29, 1
      %p319 = por %p317, %p318
      %p321 = scmp.ne.s32.totalorder %s304, %s320
      %p322 = scmp.eq.s32.totalorder %s29, 0
      %p323 = por %p321, %p322
      %p324 = scmp.le.s32.totalorder 1, %s23
      %p325 = scmp.lt.s32.totalorder %s23, 3
      %p326 = pnand %p324, %p325
      %p327 = pneg %p326
      // Predicated region
      $region9: #{encoder_forward.1} parent=5 // pred_check
        _
      $region10: #{encoder_forward.1} parent=5 // pred_check_branch
        %329 = sbr.rel (%p326) target = $region12
      $region11: #{encoder_forward.1} parent=5 // pred_region
        %s330 = ssub.s32 %s23, 1
        // Predicated region
        $region13: #{encoder_forward.1} parent=11 // pred_check
          %p331 = pneg %p44
        $region14: #{encoder_forward.1} parent=11 // pred_check_branch
          %333 = sbr.rel (%p331) target = $region16
        $region15: #{encoder_forward.1} parent=11 // pred_region
          %s335 = ssub.s32 16, 16
          %336 = vsyncadd [#allocation4], %s335
          %339 = dma.hbm_to_smem %s0, 16, [#allocation2], [#allocation4]
        $region16: #{encoder_forward.1} parent=11 // pred_fallthru
          _
        // Predicated region
        $region17: #{encoder_forward.1} parent=11 // pred_check
          %p340 = pneg %p91
        $region18: #{encoder_forward.1} parent=11 // pred_check_branch
          %342 = sbr.rel (%p340) target = $region20
        $region19: #{encoder_forward.1} parent=11 // pred_region
          _
        $region20: #{encoder_forward.1} parent=11 // pred_fallthru
          _
        // Predicated region
        $region21: #{encoder_forward.1} parent=11 // pred_check
          %p343 = pneg %p112
        $region22: #{encoder_forward.1} parent=11 // pred_check_branch
          %345 = sbr.rel (%p343) target = $region24
        $region23: #{encoder_forward.1} parent=11 // pred_region
          _
        $region24: #{encoder_forward.1} parent=11 // pred_fallthru
          _
        // Predicated region
        $region25: #{encoder_forward.1} parent=11 // pred_check
          %p346 = pneg %p133
        $region26: #{encoder_forward.1} parent=11 // pred_check_branch
          %348 = sbr.rel (%p346) target = $region28
        $region27: #{encoder_forward.1} parent=11 // pred_region
          _
        $region28: #{encoder_forward.1} parent=11 // pred_fallthru
          _
        // Predicated region
        $region29: #{encoder_forward.1} parent=11 // pred_check
          %p349 = pneg %p154
        $region30: #{encoder_forward.1} parent=11 // pred_check_branch
          %351 = sbr.rel (%p349) target = $region32
        $region31: #{encoder_forward.1} parent=11 // pred_region
          _
        $region32: #{encoder_forward.1} parent=11 // pred_fallthru
          _
        // Predicated region
        $region33: #{encoder_forward.1} parent=11 // pred_check
          %p352 = pneg %p175
        $region34: #{encoder_forward.1} parent=11 // pred_check_branch
          %354 = sbr.rel (%p352) target = $region36
        $region35: #{encoder_forward.1} parent=11 // pred_region
          %s356 = ssub.s32 73728, 73728
          %357 = vsyncadd [#allocation3], %s356
          %s358 = sshll.u32 [#allocation5], 4
          %s359 = int_to_ptr.vmem [resolvable:$true] %s358
          %364 = dma.hbm_to_vmem [thread:$0]  %s6, 73728, %s359, [#allocation3], 256, 256, 16
        $region36: #{encoder_forward.1} parent=11 // pred_fallthru
          _
        // Predicated region
        $region37: #{encoder_forward.1} parent=11 // pred_check
          %p365 = pneg %p196
        $region38: #{encoder_forward.1} parent=11 // pred_check_branch
          %367 = sbr.rel (%p365) target = $region40
        $region39: #{encoder_forward.1} parent=11 // pred_region
          %s369 = ssub.s32 36864, 36864
          %370 = vsyncadd [#allocation7], %s369
          %s371 = sshll.u32 [#allocation6], 4
          %s372 = int_to_ptr.vmem [resolvable:$true] %s371
          %377 = dma.hbm_to_vmem [thread:$0]  %s7, 36864, %s372, [#allocation7], 128, 128, 8
        $region40: #{encoder_forward.1} parent=11 // pred_fallthru
          _
        // Predicated region
        $region41: #{encoder_forward.1} parent=11 // pred_check
          %p378 = pneg %p217
        $region42: #{encoder_forward.1} parent=11 // pred_check_branch
          %380 = sbr.rel (%p378) target = $region44
        $region43: #{encoder_forward.1} parent=11 // pred_region
          %s382 = ssub.s32 9216, 9216
          %383 = vsyncadd [#allocation7], %s382
          %s384 = sshll.u32 [#allocation8], 4
          %s385 = int_to_ptr.vmem [resolvable:$true] %s384
          %390 = dma.hbm_to_vmem [thread:$0]  %s8, 9216, %s385, [#allocation7], 128, 128, 8
        $region44: #{encoder_forward.1} parent=11 // pred_fallthru
          _
        // Predicated region
        $region45: #{encoder_forward.1} parent=11 // pred_check
          %p391 = pneg %p238
        $region46: #{encoder_forward.1} parent=11 // pred_check_branch
          %393 = sbr.rel (%p391) target = $region48
        $region47: #{encoder_forward.1} parent=11 // pred_region
          %s395 = ssub.s32 2304, 2304
          %396 = vsyncadd [#allocation10], %s395
          %s397 = sshll.u32 [#allocation9], 4
          %s398 = int_to_ptr.vmem [resolvable:$true] %s397
          %403 = dma.hbm_to_vmem [thread:$0]  %s9, 2304, %s398, [#allocation10], 128, 128, 8
        $region48: #{encoder_forward.1} parent=11 // pred_fallthru
          _
      $region12: #{encoder_forward.1} parent=5 // pred_fallthru
        _
      %p404 = scmp.lt.s32.totalorder %s23, 2
      // Predicated region
      $region49: #{encoder_forward.1} parent=5 // pred_check
        %p405 = pneg %p404
      $region50: #{encoder_forward.1} parent=5 // pred_check_branch
        %407 = sbr.rel (%p405) target = $region52
      $region51: #{encoder_forward.1} parent=5 // pred_region
        // Predicated region
        $region53: #{encoder_forward.1} parent=51 // pred_check
          %p408 = pneg %p64
        $region54: #{encoder_forward.1} parent=51 // pred_check_branch
          %410 = sbr.rel (%p408) target = $region56
        $region55: #{encoder_forward.1} parent=51 // pred_region
          %p411 = scmp.lt.s32.totalorder %s23, 1
          %s412 = scalar_select %p411, %s23, 1
          %s413 = smul.addr %s412, 2
          %s414 = smul.addr %s413, 4
          %s415 = scalar_lea.vmem %s1, %s414
        $region56: #{encoder_forward.1} parent=51 // pred_fallthru
          _
      $region52: #{encoder_forward.1} parent=5 // pred_fallthru
        _
      %p416 = scmp.le.s32.totalorder 1, %s23
      %p417 = scmp.lt.s32.totalorder %s23, 3
      %p418 = pnand %p416, %p417
      %p419 = pneg %p418
      // Predicated region
      $region57: #{encoder_forward.1} parent=5 // pred_check
        _
      $region58: #{encoder_forward.1} parent=5 // pred_check_branch
        %421 = sbr.rel (%p418) target = $region60
      $region59: #{encoder_forward.1} parent=5 // pred_region
        %s422 = ssub.s32 %s23, 1
        // Predicated region
        $region61: #{encoder_forward.1} parent=59 // pred_check
          %p423 = pneg %p44
        $region62: #{encoder_forward.1} parent=59 // pred_check_branch
          %425 = sbr.rel (%p423) target = $region64
        $region63: #{encoder_forward.1} parent=59 // pred_region
          %426 = dma.done [#allocation4], 16
        $region64: #{encoder_forward.1} parent=59 // pred_fallthru
          _
        // Predicated region
        $region65: #{encoder_forward.1} parent=59 // pred_check
          %p427 = pneg %p175
        $region66: #{encoder_forward.1} parent=59 // pred_check_branch
          %429 = sbr.rel (%p427) target = $region68
        $region67: #{encoder_forward.1} parent=59 // pred_region
          %430 = dma.done [#allocation3], 73728
        $region68: #{encoder_forward.1} parent=59 // pred_fallthru
          _
        // Predicated region
        $region69: #{encoder_forward.1} parent=59 // pred_check
          %p431 = pneg %p196
        $region70: #{encoder_forward.1} parent=59 // pred_check_branch
          %433 = sbr.rel (%p431) target = $region72
        $region71: #{encoder_forward.1} parent=59 // pred_region
          %434 = dma.done [#allocation7], 36864
        $region72: #{encoder_forward.1} parent=59 // pred_fallthru
          _
        // Predicated region
        $region73: #{encoder_forward.1} parent=59 // pred_check
          %p435 = pneg %p217
        $region74: #{encoder_forward.1} parent=59 // pred_check_branch
          %437 = sbr.rel (%p435) target = $region76
        $region75: #{encoder_forward.1} parent=59 // pred_region
          %438 = dma.done [#allocation7], 9216
        $region76: #{encoder_forward.1} parent=59 // pred_fallthru
          _
        // Predicated region
        $region77: #{encoder_forward.1} parent=59 // pred_check
          %p439 = pneg %p238
        $region78: #{encoder_forward.1} parent=59 // pred_check_branch
          %441 = sbr.rel (%p439) target = $region80
        $region79: #{encoder_forward.1} parent=59 // pred_region
          %442 = dma.done [#allocation10], 2304
        $region80: #{encoder_forward.1} parent=59 // pred_fallthru
          _
        %443 = sfence
        %p444 = pneg %p44
        %p445 = pneg %p41
        %p446 = scmp.lt.s32.totalorder %s28, 1
        %s447 = scalar_select %p446, %s28, 1
        %s448 = smul.addr %s447, 2
        %s449 = smul.addr %s448, 4
        %s450 = scalar_lea.vmem %s1, %s449
        %p451 = pneg %p70
        %p452 = pneg %p67
        %p453 = pneg %p91
        %p454 = pneg %p88
        %p455 = pneg %p112
        %p456 = pneg %p109
        %p457 = pneg %p133
        %p458 = pneg %p130
        %p459 = pneg %p154
        %p460 = pneg %p151
        %p461 = pneg %p175
        %p462 = pneg %p172
        %p463 = pneg %p196
        %p464 = pneg %p193
        %p465 = pneg %p217
        %p466 = pneg %p214
        %p467 = pneg %p238
        %p468 = pneg %p235
        %p469 = pneg %p264
        %p470 = pneg %p261
        %p471 = scmp.lt.s32.totalorder %s28, 1
        %s472 = scalar_select %p471, %s28, 1
        %s473 = smul.addr %s472, 2
        %s474 = smul.addr %s473, 8
        %s475 = scalar_lea.vmem %s10, %s474
        %p476 = pneg %p290
        %p477 = pneg %p287
        %p478 = scmp.lt.s32.totalorder %s28, 1
        %s479 = scalar_select %p478, %s28, 1
        %s480 = smul.addr %s479, 2
        %s481 = smul.addr %s480, 8
        %s482 = scalar_lea.vmem %s11, %s481
        %p483 = pneg %p316
        %p484 = pneg %p313
        %p485 = scmp.lt.s32.totalorder %s28, 1
        %s486 = scalar_select %p485, %s28, 1
        %s487 = smul.addr %s486, 4
        %s488 = smul.addr %s487, 8
        %s489 = scalar_lea.vmem %s12, %s488
        %p490 = scmp.lt.s32.totalorder %s28, 1
        %s491 = scalar_select %p490, %s28, 1
        %s492 = smul.addr %s491, 2
        %s493 = smul.addr %s492, 4
        %s494 = scalar_lea.vmem %s1, %s493
        %p495 = scmp.lt.s32.totalorder %s28, 1
        %s496 = scalar_select %p495, %s28, 1
        %s497 = smul.addr %s496, 2
        %s498 = smul.addr %s497, 8
        %s499 = scalar_lea.vmem %s10, %s498
        %p500 = scmp.lt.s32.totalorder %s28, 1
        %s501 = scalar_select %p500, %s28, 1
        %s502 = smul.addr %s501, 2
        %s503 = smul.addr %s502, 8
        %s504 = scalar_lea.vmem %s11, %s503
        %p505 = scmp.lt.s32.totalorder %s28, 1
        %s506 = scalar_select %p505, %s28, 1
        %s507 = smul.addr %s506, 4
        %s508 = smul.addr %s507, 8
        %s509 = scalar_lea.vmem %s12, %s508
        %v510 = vld [vmem:[%s494] sm:$0xff]
        %v511 = vld [vmem:[#allocation5] sm:$0xff]
        %v512 = vld [vmem:[#allocation5 + $0x8] sm:$0xff]
        %v513 = vld [vmem:[#allocation5 + $0x10] sm:$0xff]
        %v514 = vld [vmem:[#allocation5 + $0x18] sm:$0xff]
        %v515 = vld [vmem:[#allocation5 + $0x20] sm:$0xff]
        %v516 = vld [vmem:[#allocation5 + $0x28] sm:$0xff]
        %v517 = vld [vmem:[#allocation5 + $0x30] sm:$0xff]
        %v518 = vld [vmem:[#allocation5 + $0x38] sm:$0xff]
        %v519 = vld [vmem:[#allocation5 + $0x40] sm:$0xff]
        %v520 = vld [vmem:[#allocation5 + $0x48] sm:$0xff]
        %v521 = vld [vmem:[#allocation5 + $0x50] sm:$0xff]
        %v522 = vld [vmem:[#allocation5 + $0x58] sm:$0xff]
        %v523 = vld [vmem:[#allocation5 + $0x60] sm:$0xff]
        %v524 = vld [vmem:[#allocation5 + $0x68] sm:$0xff]
        %v525 = vld [vmem:[#allocation5 + $0x70] sm:$0xff]
        %v526 = vld [vmem:[#allocation5 + $0x78] sm:$0xff]
        %v527 = vld [vmem:[#allocation5 + $0x80] sm:$0xff]
        %v528 = vld [vmem:[#allocation5 + $0x88] sm:$0xff]
        %v529 = vld [vmem:[#allocation5 + $0x90] sm:$0xff]
        %v530 = vld [vmem:[#allocation5 + $0x98] sm:$0xff]
        %v531 = vld [vmem:[#allocation5 + $0xa0] sm:$0xff]
        %v532 = vld [vmem:[#allocation5 + $0xa8] sm:$0xff]
        %v533 = vld [vmem:[#allocation5 + $0xb0] sm:$0xff]
        %v534 = vld [vmem:[#allocation5 + $0xb8] sm:$0xff]
        %v535 = vld [vmem:[#allocation5 + $0xc0] sm:$0xff]
        %v536 = vld [vmem:[#allocation5 + $0xc8] sm:$0xff]
        %v537 = vld [vmem:[#allocation5 + $0xd0] sm:$0xff]
        %v538 = vld [vmem:[#allocation5 + $0xd8] sm:$0xff]
        %v539 = vld [vmem:[#allocation5 + $0xe0] sm:$0xff]
        %v540 = vld [vmem:[#allocation5 + $0xe8] sm:$0xff]
        %v541 = vld [vmem:[#allocation5 + $0xf0] sm:$0xff]
        %v542 = vld [vmem:[#allocation5 + $0xf8] sm:$0xff]
        %v543 = vld [vmem:[#allocation5 + $0x100] sm:$0xff]
        %v544 = vld [vmem:[#allocation5 + $0x108] sm:$0xff]
        %v545 = vld [vmem:[#allocation5 + $0x110] sm:$0xff]
        %v546 = vld [vmem:[#allocation5 + $0x118] sm:$0xff]
        %v547 = vld [vmem:[#allocation5 + $0x120] sm:$0xff]
        %v548 = vld [vmem:[#allocation5 + $0x128] sm:$0xff]
        %v549 = vld [vmem:[#allocation5 + $0x130] sm:$0xff]
        %v550 = vld [vmem:[#allocation5 + $0x138] sm:$0xff]
        %v551 = vld [vmem:[#allocation5 + $0x140] sm:$0xff]
        %v552 = vld [vmem:[#allocation5 + $0x148] sm:$0xff]
        %v553 = vld [vmem:[#allocation5 + $0x150] sm:$0xff]
        %v554 = vld [vmem:[#allocation5 + $0x158] sm:$0xff]
        %v555 = vld [vmem:[#allocation5 + $0x160] sm:$0xff]
        %v556 = vld [vmem:[#allocation5 + $0x168] sm:$0xff]
        %v557 = vld [vmem:[#allocation5 + $0x170] sm:$0xff]
        %v558 = vld [vmem:[#allocation5 + $0x178] sm:$0xff]
        %v559 = vld [vmem:[#allocation5 + $0x180] sm:$0xff]
        %v560 = vld [vmem:[#allocation5 + $0x188] sm:$0xff]
        %v561 = vld [vmem:[#allocation5 + $0x190] sm:$0xff]
        %v562 = vld [vmem:[#allocation5 + $0x198] sm:$0xff]
        %v563 = vld [vmem:[#allocation5 + $0x1a0] sm:$0xff]
        %v564 = vld [vmem:[#allocation5 + $0x1a8] sm:$0xff]
        %v565 = vld [vmem:[#allocation5 + $0x1b0] sm:$0xff]
        %v566 = vld [vmem:[#allocation5 + $0x1b8] sm:$0xff]
        %v567 = vld [vmem:[#allocation5 + $0x1c0] sm:$0xff]
        %v568 = vld [vmem:[#allocation5 + $0x1c8] sm:$0xff]
        %v569 = vld [vmem:[#allocation5 + $0x1d0] sm:$0xff]
        %v570 = vld [vmem:[#allocation5 + $0x1d8] sm:$0xff]
        %v571 = vld [vmem:[#allocation5 + $0x1e0] sm:$0xff]
        %v572 = vld [vmem:[#allocation5 + $0x1e8] sm:$0xff]
        %v573 = vld [vmem:[#allocation5 + $0x1f0] sm:$0xff]
        %v574 = vld [vmem:[#allocation5 + $0x1f8] sm:$0xff]
        %v576 = vcombine.high %v510, %v510
        %578 = vmatprep.subr.mxu0 %v512
        %579 = vmatpush1.msra.mxu0 %v511
        %580 = vmatprep.subr.mxu0 %v514
        %581 = vmatpush1.msra.mxu0 %v513
        %582 = vmatprep.subr.mxu0 %v516
        %583 = vmatpush1.msra.mxu0 %v515
        %584 = vmatprep.subr.mxu0 %v518
        %585 = vmatpush1.msra.mxu0 %v517
        %586 = vmatprep.subr.mxu0 %v520
        %587 = vmatpush1.msra.mxu0 %v519
        %588 = vmatprep.subr.mxu0 %v522
        %589 = vmatpush1.msra.mxu0 %v521
        %590 = vmatprep.subr.mxu0 %v524
        %591 = vmatpush1.msra.mxu0 %v523
        %592 = vmatprep.subr.mxu0 %v526
        %593 = vmatpush1.msra.mxu0 %v525
        %594 = vmatprep.subr.mxu0 %v528
        %595 = vmatpush1.msra.mxu0 %v527
        %596 = vmatprep.subr.mxu0 %v530
        %597 = vmatpush1.msra.mxu0 %v529
        %598 = vmatprep.subr.mxu0 %v532
        %599 = vmatpush1.msra.mxu0 %v531
        %600 = vmatprep.subr.mxu0 %v534
        %601 = vmatpush1.msra.mxu0 %v533
        %602 = vmatprep.subr.mxu0 %v536
        %603 = vmatpush1.msra.mxu0 %v535
        %604 = vmatprep.subr.mxu0 %v538
        %605 = vmatpush1.msra.mxu0 %v537
        %606 = vmatprep.subr.mxu0 %v540
        %607 = vmatpush1.msra.mxu0 %v539
        %608 = vmatprep.subr.mxu0 %v542
        %609 = vmatpush1.msra.mxu0 %v541
        %610 = vmatprep.subr.mxu0 %v544
        %611 = vmatpush1.msra.mxu0 %v543
        %612 = vmatprep.subr.mxu0 %v546
        %613 = vmatpush1.msra.mxu0 %v545
        %614 = vmatprep.subr.mxu0 %v548
        %615 = vmatpush1.msra.mxu0 %v547
        %616 = vmatprep.subr.mxu0 %v550
        %617 = vmatpush1.msra.mxu0 %v549
        %618 = vmatprep.subr.mxu0 %v552
        %619 = vmatpush1.msra.mxu0 %v551
        %620 = vmatprep.subr.mxu0 %v554
        %621 = vmatpush1.msra.mxu0 %v553
        %622 = vmatprep.subr.mxu0 %v556
        %623 = vmatpush1.msra.mxu0 %v555
        %624 = vmatprep.subr.mxu0 %v558
        %625 = vmatpush1.msra.mxu0 %v557
        %626 = vmatprep.subr.mxu0 %v560
        %627 = vmatpush1.msra.mxu0 %v559
        %628 = vmatprep.subr.mxu0 %v562
        %629 = vmatpush1.msra.mxu0 %v561
        %630 = vmatprep.subr.mxu0 %v564
        %631 = vmatpush1.msra.mxu0 %v563
        %632 = vmatprep.subr.mxu0 %v566
        %633 = vmatpush1.msra.mxu0 %v565
        %634 = vmatprep.subr.mxu0 %v568
        %635 = vmatpush1.msra.mxu0 %v567
        %636 = vmatprep.subr.mxu0 %v570
        %637 = vmatpush1.msra.mxu0 %v569
        %638 = vmatprep.subr.mxu0 %v572
        %639 = vmatpush1.msra.mxu0 %v571
        %640 = vmatprep.subr.mxu0 %v574
        %641 = vmatpush1.msra.mxu0 %v573
        %642 = vmatprep.mubr.f32.mxu0 %v576
        %643 = vmatmul.mubr.f32.gmra.mrb[0].mxu0 %v510
        %v644 = vpop.f32.mrb[0].mxu0
        %v645 = vadd.f32 0.0, %v644
        %v646 = vpop.f32.mrb[0].mxu0
        %v647 = vadd.f32 0.0, %v646
        %648 = vdwg.mxu0
        %v649 = vld [vmem:[%s2] sm:$0xff]
        %s650 = scalar_lea.vmem [#allocation5], 512
        %v651 = vld [vmem:[%s650] sm:$0xff]
        %v652 = vld [vmem:[%s650 + $0x8] sm:$0xff]
        %v653 = vld [vmem:[%s650 + $0x10] sm:$0xff]
        %v654 = vld [vmem:[%s650 + $0x18] sm:$0xff]
        %v655 = vld [vmem:[%s650 + $0x20] sm:$0xff]
        %v656 = vld [vmem:[%s650 + $0x28] sm:$0xff]
        %v657 = vld [vmem:[%s650 + $0x30] sm:$0xff]
        %v658 = vld [vmem:[%s650 + $0x38] sm:$0xff]
        %v659 = vld [vmem:[%s650 + $0x40] sm:$0xff]
        %v660 = vld [vmem:[%s650 + $0x48] sm:$0xff]
        %v661 = vld [vmem:[%s650 + $0x50] sm:$0xff]
        %v662 = vld [vmem:[%s650 + $0x58] sm:$0xff]
        %v663 = vld [vmem:[%s650 + $0x60] sm:$0xff]
        %v664 = vld [vmem:[%s650 + $0x68] sm:$0xff]
        %v665 = vld [vmem:[%s650 + $0x70] sm:$0xff]
        %v666 = vld [vmem:[%s650 + $0x78] sm:$0xff]
        %v667 = vld [vmem:[%s650 + $0x80] sm:$0xff]
        %v668 = vld [vmem:[%s650 + $0x88] sm:$0xff]
        %v669 = vld [vmem:[%s650 + $0x90] sm:$0xff]
        %v670 = vld [vmem:[%s650 + $0x98] sm:$0xff]
        %v671 = vld [vmem:[%s650 + $0xa0] sm:$0xff]
        %v672 = vld [vmem:[%s650 + $0xa8] sm:$0xff]
        %v673 = vld [vmem:[%s650 + $0xb0] sm:$0xff]
        %v674 = vld [vmem:[%s650 + $0xb8] sm:$0xff]
        %v675 = vld [vmem:[%s650 + $0xc0] sm:$0xff]
        %v676 = vld [vmem:[%s650 + $0xc8] sm:$0xff]
        %v677 = vld [vmem:[%s650 + $0xd0] sm:$0xff]
        %v678 = vld [vmem:[%s650 + $0xd8] sm:$0xff]
        %v679 = vld [vmem:[%s650 + $0xe0] sm:$0xff]
        %v680 = vld [vmem:[%s650 + $0xe8] sm:$0xff]
        %v681 = vld [vmem:[%s650 + $0xf0] sm:$0xff]
        %v682 = vld [vmem:[%s650 + $0xf8] sm:$0xff]
        %v683 = vld [vmem:[%s650 + $0x100] sm:$0xff]
        %v684 = vld [vmem:[%s650 + $0x108] sm:$0xff]
        %v685 = vld [vmem:[%s650 + $0x110] sm:$0xff]
        %v686 = vld [vmem:[%s650 + $0x118] sm:$0xff]
        %v687 = vld [vmem:[%s650 + $0x120] sm:$0xff]
        %v688 = vld [vmem:[%s650 + $0x128] sm:$0xff]
        %v689 = vld [vmem:[%s650 + $0x130] sm:$0xff]
        %v690 = vld [vmem:[%s650 + $0x138] sm:$0xff]
        %v691 = vld [vmem:[%s650 + $0x140] sm:$0xff]
        %v692 = vld [vmem:[%s650 + $0x148] sm:$0xff]
        %v693 = vld [vmem:[%s650 + $0x150] sm:$0xff]
        %v694 = vld [vmem:[%s650 + $0x158] sm:$0xff]
        %v695 = vld [vmem:[%s650 + $0x160] sm:$0xff]
        %v696 = vld [vmem:[%s650 + $0x168] sm:$0xff]
        %v697 = vld [vmem:[%s650 + $0x170] sm:$0xff]
        %v698 = vld [vmem:[%s650 + $0x178] sm:$0xff]
        %v699 = vld [vmem:[%s650 + $0x180] sm:$0xff]
        %v700 = vld [vmem:[%s650 + $0x188] sm:$0xff]
        %v701 = vld [vmem:[%s650 + $0x190] sm:$0xff]
        %v702 = vld [vmem:[%s650 + $0x198] sm:$0xff]
        %v703 = vld [vmem:[%s650 + $0x1a0] sm:$0xff]
        %v704 = vld [vmem:[%s650 + $0x1a8] sm:$0xff]
        %v705 = vld [vmem:[%s650 + $0x1b0] sm:$0xff]
        %v706 = vld [vmem:[%s650 + $0x1b8] sm:$0xff]
        %v707 = vld [vmem:[%s650 + $0x1c0] sm:$0xff]
        %v708 = vld [vmem:[%s650 + $0x1c8] sm:$0xff]
        %v709 = vld [vmem:[%s650 + $0x1d0] sm:$0xff]
        %v710 = vld [vmem:[%s650 + $0x1d8] sm:$0xff]
        %v711 = vld [vmem:[%s650 + $0x1e0] sm:$0xff]
        %v712 = vld [vmem:[%s650 + $0x1e8] sm:$0xff]
        %v713 = vld [vmem:[%s650 + $0x1f0] sm:$0xff]
        %v714 = vld [vmem:[%s650 + $0x1f8] sm:$0xff]
        %715 = vmatprep.subr.mxu0 %v652
        %716 = vmatpush1.msra.mxu0 %v651
        %717 = vmatprep.subr.mxu0 %v654
        %718 = vmatpush1.msra.mxu0 %v653
        %719 = vmatprep.subr.mxu0 %v656
        %720 = vmatpush1.msra.mxu0 %v655
        %721 = vmatprep.subr.mxu0 %v658
        %722 = vmatpush1.msra.mxu0 %v657
        %723 = vmatprep.subr.mxu0 %v660
        %724 = vmatpush1.msra.mxu0 %v659
        %725 = vmatprep.subr.mxu0 %v662
        %726 = vmatpush1.msra.mxu0 %v661
        %727 = vmatprep.subr.mxu0 %v664
        %728 = vmatpush1.msra.mxu0 %v663
        %729 = vmatprep.subr.mxu0 %v666
        %730 = vmatpush1.msra.mxu0 %v665
        %731 = vmatprep.subr.mxu0 %v668
        %732 = vmatpush1.msra.mxu0 %v667
        %733 = vmatprep.subr.mxu0 %v670
        %734 = vmatpush1.msra.mxu0 %v669
        %735 = vmatprep.subr.mxu0 %v672
        %736 = vmatpush1.msra.mxu0 %v671
        %737 = vmatprep.subr.mxu0 %v674
        %738 = vmatpush1.msra.mxu0 %v673
        %739 = vmatprep.subr.mxu0 %v676
        %740 = vmatpush1.msra.mxu0 %v675
        %741 = vmatprep.subr.mxu0 %v678
        %742 = vmatpush1.msra.mxu0 %v677
        %743 = vmatprep.subr.mxu0 %v680
        %744 = vmatpush1.msra.mxu0 %v679
        %745 = vmatprep.subr.mxu0 %v682
        %746 = vmatpush1.msra.mxu0 %v681
        %747 = vmatprep.subr.mxu0 %v684
        %748 = vmatpush1.msra.mxu0 %v683
        %749 = vmatprep.subr.mxu0 %v686
        %750 = vmatpush1.msra.mxu0 %v685
        %751 = vmatprep.subr.mxu0 %v688
        %752 = vmatpush1.msra.mxu0 %v687
        %753 = vmatprep.subr.mxu0 %v690
        %754 = vmatpush1.msra.mxu0 %v689
        %755 = vmatprep.subr.mxu0 %v692
        %756 = vmatpush1.msra.mxu0 %v691
        %757 = vmatprep.subr.mxu0 %v694
        %758 = vmatpush1.msra.mxu0 %v693
        %759 = vmatprep.subr.mxu0 %v696
        %760 = vmatpush1.msra.mxu0 %v695
        %761 = vmatprep.subr.mxu0 %v698
        %762 = vmatpush1.msra.mxu0 %v697
        %763 = vmatprep.subr.mxu0 %v700
        %764 = vmatpush1.msra.mxu0 %v699
        %765 = vmatprep.subr.mxu0 %v702
        %766 = vmatpush1.msra.mxu0 %v701
        %767 = vmatprep.subr.mxu0 %v704
        %768 = vmatpush1.msra.mxu0 %v703
        %769 = vmatprep.subr.mxu0 %v706
        %770 = vmatpush1.msra.mxu0 %v705
        %771 = vmatprep.subr.mxu0 %v708
        %772 = vmatpush1.msra.mxu0 %v707
        %773 = vmatprep.subr.mxu0 %v710
        %774 = vmatpush1.msra.mxu0 %v709
        %775 = vmatprep.subr.mxu0 %v712
        %776 = vmatpush1.msra.mxu0 %v711
        %777 = vmatprep.subr.mxu0 %v714
        %778 = vmatpush1.msra.mxu0 %v713
        %779 = vmatprep.mubr.f32.mxu0 %v576
        %780 = vmatmul.mubr.f32.gmra.mrb[0].mxu0 %v510
        %v781 = vpop.f32.mrb[0].mxu0
        %v782 = vadd.f32 0.0, %v781
        %v783 = vpop.f32.mrb[0].mxu0
        %v784 = vadd.f32 0.0, %v783
        %785 = vdwg.mxu0
        %s786 = scalar_lea.vmem %s2, 8
        %v787 = vld [vmem:[%s786] sm:$0xff]
        %vm788 = vcmask 31744
        %v790 = vsel %vm788, %v787, 0
        %vm792 = vcmask 1043456
        %v794 = vsel %vm792, %v782, 0
        %v797 = vsel %vm792, %v784, 0
        %799 = vmatprep.subr.mxu0 %v797
        %800 = vmatpush1.msra.mxu0 %v794
        %801 = vmatprep.subr.mxu0 0.0
        %802 = vmatpush1.msra.mxu0 0.0
        %803 = vmatprep.subr.mxu0 0.0
        %804 = vmatpush1.msra.mxu0 0.0
        %805 = vmatprep.subr.mxu0 0.0
        %806 = vmatpush1.msra.mxu0 0.0
        %807 = vmatprep.subr.mxu0 0.0
        %808 = vmatpush1.msra.mxu0 0.0
        %809 = vmatprep.subr.mxu0 0.0
        %810 = vmatpush1.msra.mxu0 0.0
        %811 = vmatprep.subr.mxu0 0.0
        %812 = vmatpush1.msra.mxu0 0.0
        %813 = vmatprep.subr.mxu0 0.0
        %814 = vmatpush1.msra.mxu0 0.0
        %815 = vmatprep.subr.mxu0 0.0
        %816 = vmatpush1.msra.mxu0 0.0
        %817 = vmatprep.subr.mxu0 0.0
        %818 = vmatpush1.msra.mxu0 0.0
        %819 = vmatprep.subr.mxu0 0.0
        %820 = vmatpush1.msra.mxu0 0.0
        %821 = vmatprep.subr.mxu0 0.0
        %822 = vmatpush1.msra.mxu0 0.0
        %823 = vmatprep.subr.mxu0 0.0
        %824 = vmatpush1.msra.mxu0 0.0
        %825 = vmatprep.subr.mxu0 0.0
        %826 = vmatpush1.msra.mxu0 0.0
        %827 = vmatprep.subr.mxu0 0.0
        %828 = vmatpush1.msra.mxu0 0.0
        %829 = vmatprep.subr.mxu0 0.0
        %830 = vmatpush1.msra.mxu0 0.0
        %831 = vmatprep.subr.mxu0 0.0
        %832 = vmatpush1.msra.mxu0 0.0
        %833 = vmatprep.subr.mxu0 0.0
        %834 = vmatpush1.msra.mxu0 0.0
        %835 = vmatprep.subr.mxu0 0.0
        %836 = vmatpush1.msra.mxu0 0.0
        %837 = vmatprep.subr.mxu0 0.0
        %838 = vmatpush1.msra.mxu0 0.0
        %839 = vmatprep.subr.mxu0 0.0
        %840 = vmatpush1.msra.mxu0 0.0
        %841 = vmatprep.subr.mxu0 0.0
        %842 = vmatpush1.msra.mxu0 0.0
        %843 = vmatprep.subr.mxu0 0.0
        %844 = vmatpush1.msra.mxu0 0.0
        %845 = vmatprep.subr.mxu0 0.0
        %846 = vmatpush1.msra.mxu0 0.0
        %847 = vmatprep.subr.mxu0 0.0
        %848 = vmatpush1.msra.mxu0 0.0
        %849 = vmatprep.subr.mxu0 0.0
        %850 = vmatpush1.msra.mxu0 0.0
        %851 = vmatprep.subr.mxu0 0.0
        %852 = vmatpush1.msra.mxu0 0.0
        %853 = vmatprep.subr.mxu0 0.0
        %854 = vmatpush1.msra.mxu0 0.0
        %855 = vmatprep.subr.mxu0 0.0
        %856 = vmatpush1.msra.mxu0 0.0
        %857 = vmatprep.subr.mxu0 0.0
        %858 = vmatpush1.msra.mxu0 0.0
        %859 = vmatprep.subr.mxu0 0.0
        %860 = vmatpush1.msra.mxu0 0.0
        %861 = vmatprep.subr.mxu0 0.0
        %862 = vmatpush1.msra.mxu0 0.0
        %863 = vmatprep.mubr.f32.mxu0 0.0
        %864 = vmatmul.mubr.f32.gmra.mrb[0].mxu0 %v790
        %v865 = vpop.f32.mrb[0].mxu0
        %v866 = vadd.f32 0.0, %v865
        %v867 = vpop.f32.mrb[0].mxu0
        %v868 = vadd.f32 0.0, %v867
        %869 = vdwg.mxu0
        %v871 = vsel %vm788, %v649, 0
        %v874 = vsel %vm792, %v645, 0
        %v877 = vsel %vm792, %v647, 0
        %879 = vmatprep.subr.mxu0 %v877
        %880 = vmatpush1.msra.mxu0 %v874
        %881 = vmatprep.subr.mxu0 0.0
        %882 = vmatpush1.msra.mxu0 0.0
        %883 = vmatprep.subr.mxu0 0.0
        %884 = vmatpush1.msra.mxu0 0.0
        %885 = vmatprep.subr.mxu0 0.0
        %886 = vmatpush1.msra.mxu0 0.0
        %887 = vmatprep.subr.mxu0 0.0
        %888 = vmatpush1.msra.mxu0 0.0
        %889 = vmatprep.subr.mxu0 0.0
        %890 = vmatpush1.msra.mxu0 0.0
        %891 = vmatprep.subr.mxu0 0.0
        %892 = vmatpush1.msra.mxu0 0.0
        %893 = vmatprep.subr.mxu0 0.0
        %894 = vmatpush1.msra.mxu0 0.0
        %895 = vmatprep.subr.mxu0 0.0
        %896 = vmatpush1.msra.mxu0 0.0
        %897 = vmatprep.subr.mxu0 0.0
        %898 = vmatpush1.msra.mxu0 0.0
        %899 = vmatprep.subr.mxu0 0.0
        %900 = vmatpush1.msra.mxu0 0.0
        %901 = vmatprep.subr.mxu0 0.0
        %902 = vmatpush1.msra.mxu0 0.0
        %903 = vmatprep.subr.mxu0 0.0
        %904 = vmatpush1.msra.mxu0 0.0
        %905 = vmatprep.subr.mxu0 0.0
        %906 = vmatpush1.msra.mxu0 0.0
        %907 = vmatprep.subr.mxu0 0.0
        %908 = vmatpush1.msra.mxu0 0.0
        %909 = vmatprep.subr.mxu0 0.0
        %910 = vmatpush1.msra.mxu0 0.0
        %911 = vmatprep.subr.mxu0 0.0
        %912 = vmatpush1.msra.mxu0 0.0
        %913 = vmatprep.subr.mxu0 0.0
        %914 = vmatpush1.msra.mxu0 0.0
        %915 = vmatprep.subr.mxu0 0.0
        %916 = vmatpush1.msra.mxu0 0.0
        %917 = vmatprep.subr.mxu0 0.0
        %918 = vmatpush1.msra.mxu0 0.0
        %919 = vmatprep.subr.mxu0 0.0
        %920 = vmatpush1.msra.mxu0 0.0
        %921 = vmatprep.subr.mxu0 0.0
        %922 = vmatpush1.msra.mxu0 0.0
        %923 = vmatprep.subr.mxu0 0.0
        %924 = vmatpush1.msra.mxu0 0.0
        %925 = vmatprep.subr.mxu0 0.0
        %926 = vmatpush1.msra.mxu0 0.0
        %927 = vmatprep.subr.mxu0 0.0
        %928 = vmatpush1.msra.mxu0 0.0
        %929 = vmatprep.subr.mxu0 0.0
        %930 = vmatpush1.msra.mxu0 0.0
        %931 = vmatprep.subr.mxu0 0.0
        %932 = vmatpush1.msra.mxu0 0.0
        %933 = vmatprep.subr.mxu0 0.0
        %934 = vmatpush1.msra.mxu0 0.0
        %935 = vmatprep.subr.mxu0 0.0
        %936 = vmatpush1.msra.mxu0 0.0
        %937 = vmatprep.subr.mxu0 0.0
        %938 = vmatpush1.msra.mxu0 0.0
        %939 = vmatprep.subr.mxu0 0.0
        %940 = vmatpush1.msra.mxu0 0.0
        %941 = vmatprep.subr.mxu0 0.0
        %942 = vmatpush1.msra.mxu0 0.0
        %943 = vmatprep.mubr.f32.mxu0 0.0
        %944 = vmatmul.mubr.f32.gmra.mrb[0].mxu0 %v871
        %v945 = vpop.f32.mrb[0].mxu0
        %v946 = vadd.f32 %v866, %v945
        %v947 = vpop.f32.mrb[0].mxu0
        %v948 = vadd.f32 %v868, %v947
        %949 = vdwg.mxu0
        %s950 = scalar_lea.vmem [#allocation5], 1024
        %v951 = vld [vmem:[%s950] sm:$0xff]
        %v952 = vld [vmem:[%s950 + $0x8] sm:$0xff]
        %v953 = vld [vmem:[%s950 + $0x10] sm:$0xff]
        %v954 = vld [vmem:[%s950 + $0x18] sm:$0xff]
        %v955 = vld [vmem:[%s950 + $0x20] sm:$0xff]
        %v956 = vld [vmem:[%s950 + $0x28] sm:$0xff]
        %v957 = vld [vmem:[%s950 + $0x30] sm:$0xff]
        %v958 = vld [vmem:[%s950 + $0x38] sm:$0xff]
        %v959 = vld [vmem:[%s950 + $0x40] sm:$0xff]
        %v960 = vld [vmem:[%s950 + $0x48] sm:$0xff]
        %v961 = vld [vmem:[%s950 + $0x50] sm:$0xff]
        %v962 = vld [vmem:[%s950 + $0x58] sm:$0xff]
        %v963 = vld [vmem:[%s950 + $0x60] sm:$0xff]
        %v964 = vld [vmem:[%s950 + $0x68] sm:$0xff]
        %v965 = vld [vmem:[%s950 + $0x70] sm:$0xff]
        %v966 = vld [vmem:[%s950 + $0x78] sm:$0xff]
        %v967 = vld [vmem:[%s950 + $0x80] sm:$0xff]
        %v968 = vld [vmem:[%s950 + $0x88] sm:$0xff]
        %v969 = vld [vmem:[%s950 + $0x90] sm:$0xff]
        %v970 = vld [vmem:[%s950 + $0x98] sm:$0xff]
        %v971 = vld [vmem:[%s950 + $0xa0] sm:$0xff]
        %v972 = vld [vmem:[%s950 + $0xa8] sm:$0xff]
        %v973 = vld [vmem:[%s950 + $0xb0] sm:$0xff]
        %v974 = vld [vmem:[%s950 + $0xb8] sm:$0xff]
        %v975 = vld [vmem:[%s950 + $0xc0] sm:$0xff]
        %v976 = vld [vmem:[%s950 + $0xc8] sm:$0xff]
        %v977 = vld [vmem:[%s950 + $0xd0] sm:$0xff]
        %v978 = vld [vmem:[%s950 + $0xd8] sm:$0xff]
        %v979 = vld [vmem:[%s950 + $0xe0] sm:$0xff]
        %v980 = vld [vmem:[%s950 + $0xe8] sm:$0xff]
        %v981 = vld [vmem:[%s950 + $0xf0] sm:$0xff]
        %v982 = vld [vmem:[%s950 + $0xf8] sm:$0xff]
        %v983 = vld [vmem:[%s950 + $0x100] sm:$0xff]
        %v984 = vld [vmem:[%s950 + $0x108] sm:$0xff]
        %v985 = vld [vmem:[%s950 + $0x110] sm:$0xff]
        %v986 = vld [vmem:[%s950 + $0x118] sm:$0xff]
        %v987 = vld [vmem:[%s950 + $0x120] sm:$0xff]
        %v988 = vld [vmem:[%s950 + $0x128] sm:$0xff]
        %v989 = vld [vmem:[%s950 + $0x130] sm:$0xff]
        %v990 = vld [vmem:[%s950 + $0x138] sm:$0xff]
        %v991 = vld [vmem:[%s950 + $0x140] sm:$0xff]
        %v992 = vld [vmem:[%s950 + $0x148] sm:$0xff]
        %v993 = vld [vmem:[%s950 + $0x150] sm:$0xff]
        %v994 = vld [vmem:[%s950 + $0x158] sm:$0xff]
        %v995 = vld [vmem:[%s950 + $0x160] sm:$0xff]
        %v996 = vld [vmem:[%s950 + $0x168] sm:$0xff]
        %v997 = vld [vmem:[%s950 + $0x170] sm:$0xff]
        %v998 = vld [vmem:[%s950 + $0x178] sm:$0xff]
        %v999 = vld [vmem:[%s950 + $0x180] sm:$0xff]
        %v1000 = vld [vmem:[%s950 + $0x188] sm:$0xff]
        %v1001 = vld [vmem:[%s950 + $0x190] sm:$0xff]
        %v1002 = vld [vmem:[%s950 + $0x198] sm:$0xff]
        %v1003 = vld [vmem:[%s950 + $0x1a0] sm:$0xff]
        %v1004 = vld [vmem:[%s950 + $0x1a8] sm:$0xff]
        %v1005 = vld [vmem:[%s950 + $0x1b0] sm:$0xff]
        %v1006 = vld [vmem:[%s950 + $0x1b8] sm:$0xff]
        %v1007 = vld [vmem:[%s950 + $0x1c0] sm:$0xff]
        %v1008 = vld [vmem:[%s950 + $0x1c8] sm:$0xff]
        %v1009 = vld [vmem:[%s950 + $0x1d0] sm:$0xff]
        %v1010 = vld [vmem:[%s950 + $0x1d8] sm:$0xff]
        %v1011 = vld [vmem:[%s950 + $0x1e0] sm:$0xff]
        %v1012 = vld [vmem:[%s950 + $0x1e8] sm:$0xff]
        %v1013 = vld [vmem:[%s950 + $0x1f0] sm:$0xff]
        %v1014 = vld [vmem:[%s950 + $0x1f8] sm:$0xff]
        %1015 = vmatprep.subr.mxu0 %v952
        %1016 = vmatpush1.msra.mxu0 %v951
        %1017 = vmatprep.subr.mxu0 %v954
        %1018 = vmatpush1.msra.mxu0 %v953
        %1019 = vmatprep.subr.mxu0 %v956
        %1020 = vmatpush1.msra.mxu0 %v955
        %1021 = vmatprep.subr.mxu0 %v958
        %1022 = vmatpush1.msra.mxu0 %v957
        %1023 = vmatprep.subr.mxu0 %v960
        %1024 = vmatpush1.msra.mxu0 %v959
        %1025 = vmatprep.subr.mxu0 %v962
        %1026 = vmatpush1.msra.mxu0 %v961
        %1027 = vmatprep.subr.mxu0 %v964
        %1028 = vmatpush1.msra.mxu0 %v963
        %1029 = vmatprep.subr.mxu0 %v966
        %1030 = vmatpush1.msra.mxu0 %v965
        %1031 = vmatprep.subr.mxu0 %v968
        %1032 = vmatpush1.msra.mxu0 %v967
        %1033 = vmatprep.subr.mxu0 %v970
        %1034 = vmatpush1.msra.mxu0 %v969
        %1035 = vmatprep.subr.mxu0 %v972
        %1036 = vmatpush1.msra.mxu0 %v971
        %1037 = vmatprep.subr.mxu0 %v974
        %1038 = vmatpush1.msra.mxu0 %v973
        %1039 = vmatprep.subr.mxu0 %v976
        %1040 = vmatpush1.msra.mxu0 %v975
        %1041 = vmatprep.subr.mxu0 %v978
        %1042 = vmatpush1.msra.mxu0 %v977
        %1043 = vmatprep.subr.mxu0 %v980
        %1044 = vmatpush1.msra.mxu0 %v979
        %1045 = vmatprep.subr.mxu0 %v982
        %1046 = vmatpush1.msra.mxu0 %v981
        %1047 = vmatprep.subr.mxu0 %v984
        %1048 = vmatpush1.msra.mxu0 %v983
        %1049 = vmatprep.subr.mxu0 %v986
        %1050 = vmatpush1.msra.mxu0 %v985
        %1051 = vmatprep.subr.mxu0 %v988
        %1052 = vmatpush1.msra.mxu0 %v987
        %1053 = vmatprep.subr.mxu0 %v990
        %1054 = vmatpush1.msra.mxu0 %v989
        %1055 = vmatprep.subr.mxu0 %v992
        %1056 = vmatpush1.msra.mxu0 %v991
        %1057 = vmatprep.subr.mxu0 %v994
        %1058 = vmatpush1.msra.mxu0 %v993
        %1059 = vmatprep.subr.mxu0 %v996
        %1060 = vmatpush1.msra.mxu0 %v995
        %1061 = vmatprep.subr.mxu0 %v998
        %1062 = vmatpush1.msra.mxu0 %v997
        %1063 = vmatprep.subr.mxu0 %v1000
        %1064 = vmatpush1.msra.mxu0 %v999
        %1065 = vmatprep.subr.mxu0 %v1002
        %1066 = vmatpush1.msra.mxu0 %v1001
        %1067 = vmatprep.subr.mxu0 %v1004
        %1068 = vmatpush1.msra.mxu0 %v1003
        %1069 = vmatprep.subr.mxu0 %v1006
        %1070 = vmatpush1.msra.mxu0 %v1005
        %1071 = vmatprep.subr.mxu0 %v1008
        %1072 = vmatpush1.msra.mxu0 %v1007
        %1073 = vmatprep.subr.mxu0 %v1010
        %1074 = vmatpush1.msra.mxu0 %v1009
        %1075 = vmatprep.subr.mxu0 %v1012
        %1076 = vmatpush1.msra.mxu0 %v1011
        %1077 = vmatprep.subr.mxu0 %v1014
        %1078 = vmatpush1.msra.mxu0 %v1013
        %1079 = vmatprep.mubr.f32.mxu0 %v576
        %1080 = vmatmul.mubr.f32.gmra.mrb[0].mxu0 %v510
        %v1081 = vpop.f32.mrb[0].mxu0
        %v1082 = vadd.f32 0.0, %v1081
        %v1083 = vpop.f32.mrb[0].mxu0
        %v1084 = vadd.f32 0.0, %v1083
        %1085 = vdwg.mxu0
        %s1086 = scalar_lea.vmem %s2, 16
        %v1087 = vld [vmem:[%s1086] sm:$0xff]
        %v1089 = vsel %vm788, %v1087, 0
        %v1092 = vsel %vm792, %v1082, 0
        %v1095 = vsel %vm792, %v1084, 0
        %1097 = vmatprep.subr.mxu0 %v1095
        %1098 = vmatpush1.msra.mxu0 %v1092
        %1099 = vmatprep.subr.mxu0 0.0
        %1100 = vmatpush1.msra.mxu0 0.0
        %1101 = vmatprep.subr.mxu0 0.0
        %1102 = vmatpush1.msra.mxu0 0.0
        %1103 = vmatprep.subr.mxu0 0.0
        %1104 = vmatpush1.msra.mxu0 0.0
        %1105 = vmatprep.subr.mxu0 0.0
        %1106 = vmatpush1.msra.mxu0 0.0
        %1107 = vmatprep.subr.mxu0 0.0
        %1108 = vmatpush1.msra.mxu0 0.0
        %1109 = vmatprep.subr.mxu0 0.0
        %1110 = vmatpush1.msra.mxu0 0.0
        %1111 = vmatprep.subr.mxu0 0.0
        %1112 = vmatpush1.msra.mxu0 0.0
        %1113 = vmatprep.subr.mxu0 0.0
        %1114 = vmatpush1.msra.mxu0 0.0
        %1115 = vmatprep.subr.mxu0 0.0
        %1116 = vmatpush1.msra.mxu0 0.0
        %1117 = vmatprep.subr.mxu0 0.0
        %1118 = vmatpush1.msra.mxu0 0.0
        %1119 = vmatprep.subr.mxu0 0.0
        %1120 = vmatpush1.msra.mxu0 0.0
        %1121 = vmatprep.subr.mxu0 0.0
        %1122 = vmatpush1.msra.mxu0 0.0
        %1123 = vmatprep.subr.mxu0 0.0
        %1124 = vmatpush1.msra.mxu0 0.0
        %1125 = vmatprep.subr.mxu0 0.0
        %1126 = vmatpush1.msra.mxu0 0.0
        %1127 = vmatprep.subr.mxu0 0.0
        %1128 = vmatpush1.msra.mxu0 0.0
        %1129 = vmatprep.subr.mxu0 0.0
        %1130 = vmatpush1.msra.mxu0 0.0
        %1131 = vmatprep.subr.mxu0 0.0
        %1132 = vmatpush1.msra.mxu0 0.0
        %1133 = vmatprep.subr.mxu0 0.0
        %1134 = vmatpush1.msra.mxu0 0.0
        %1135 = vmatprep.subr.mxu0 0.0
        %1136 = vmatpush1.msra.mxu0 0.0
        %1137 = vmatprep.subr.mxu0 0.0
        %1138 = vmatpush1.msra.mxu0 0.0
        %1139 = vmatprep.subr.mxu0 0.0
        %1140 = vmatpush1.msra.mxu0 0.0
        %1141 = vmatprep.subr.mxu0 0.0
        %1142 = vmatpush1.msra.mxu0 0.0
        %1143 = vmatprep.subr.mxu0 0.0
        %1144 = vmatpush1.msra.mxu0 0.0
        %1145 = vmatprep.subr.mxu0 0.0
        %1146 = vmatpush1.msra.mxu0 0.0
        %1147 = vmatprep.subr.mxu0 0.0
        %1148 = vmatpush1.msra.mxu0 0.0
        %1149 = vmatprep.subr.mxu0 0.0
        %1150 = vmatpush1.msra.mxu0 0.0
        %1151 = vmatprep.subr.mxu0 0.0
        %1152 = vmatpush1.msra.mxu0 0.0
        %1153 = vmatprep.subr.mxu0 0.0
        %1154 = vmatpush1.msra.mxu0 0.0
        %1155 = vmatprep.subr.mxu0 0.0
        %1156 = vmatpush1.msra.mxu0 0.0
        %1157 = vmatprep.subr.mxu0 0.0
        %1158 = vmatpush1.msra.mxu0 0.0
        %1159 = vmatprep.subr.mxu0 0.0
        %1160 = vmatpush1.msra.mxu0 0.0
        %1161 = vmatprep.mubr.f32.mxu0 0.0
        %1162 = vmatmul.mubr.f32.gmra.mrb[0].mxu0 %v1089
        %v1163 = vpop.f32.mrb[0].mxu0
        %v1164 = vadd.f32 0.0, %v1163
        %v1165 = vpop.f32.mrb[0].mxu0
        %v1166 = vadd.f32 0.0, %v1165
        %1167 = vdwg.mxu0
        %v1168 = vadd.f32 %v946, %v1164
        %v1169 = vadd.f32 %v948, %v1166
        %s1170 = scalar_lea.vmem [#allocation5], 1536
        %v1171 = vld [vmem:[%s1170] sm:$0xff]
        %v1172 = vld [vmem:[%s1170 + $0x8] sm:$0xff]
        %v1173 = vld [vmem:[%s1170 + $0x10] sm:$0xff]
        %v1174 = vld [vmem:[%s1170 + $0x18] sm:$0xff]
        %v1175 = vld [vmem:[%s1170 + $0x20] sm:$0xff]
        %v1176 = vld [vmem:[%s1170 + $0x28] sm:$0xff]
        %v1177 = vld [vmem:[%s1170 + $0x30] sm:$0xff]
        %v1178 = vld [vmem:[%s1170 + $0x38] sm:$0xff]
        %v1179 = vld [vmem:[%s1170 + $0x40] sm:$0xff]
        %v1180 = vld [vmem:[%s1170 + $0x48] sm:$0xff]
        %v1181 = vld [vmem:[%s1170 + $0x50] sm:$0xff]
        %v1182 = vld [vmem:[%s1170 + $0x58] sm:$0xff]
        %v1183 = vld [vmem:[%s1170 + $0x60] sm:$0xff]
        %v1184 = vld [vmem:[%s1170 + $0x68] sm:$0xff]
        %v1185 = vld [vmem:[%s1170 + $0x70] sm:$0xff]
        %v1186 = vld [vmem:[%s1170 + $0x78] sm:$0xff]
        %v1187 = vld [vmem:[%s1170 + $0x80] sm:$0xff]
        %v1188 = vld [vmem:[%s1170 + $0x88] sm:$0xff]
        %v1189 = vld [vmem:[%s1170 + $0x90] sm:$0xff]
        %v1190 = vld [vmem:[%s1170 + $0x98] sm:$0xff]
        %v1191 = vld [vmem:[%s1170 + $0xa0] sm:$0xff]
        %v1192 = vld [vmem:[%s1170 + $0xa8] sm:$0xff]
        %v1193 = vld [vmem:[%s1170 + $0xb0] sm:$0xff]
        %v1194 = vld [vmem:[%s1170 + $0xb8] sm:$0xff]
        %v1195 = vld [vmem:[%s1170 + $0xc0] sm:$0xff]
        %v1196 = vld [vmem:[%s1170 + $0xc8] sm:$0xff]
        %v1197 = vld [vmem:[%s1170 + $0xd0] sm:$0xff]
        %v1198 = vld [vmem:[%s1170 + $0xd8] sm:$0xff]
        %v1199 = vld [vmem:[%s1170 + $0xe0] sm:$0xff]
        %v1200 = vld [vmem:[%s1170 + $0xe8] sm:$0xff]
        %v1201 = vld [vmem:[%s1170 + $0xf0] sm:$0xff]
        %v1202 = vld [vmem:[%s1170 + $0xf8] sm:$0xff]
        %v1203 = vld [vmem:[%s1170 + $0x100] sm:$0xff]
        %v1204 = vld [vmem:[%s1170 + $0x108] sm:$0xff]
        %v1205 = vld [vmem:[%s1170 + $0x110] sm:$0xff]
        %v1206 = vld [vmem:[%s1170 + $0x118] sm:$0xff]
        %v1207 = vld [vmem:[%s1170 + $0x120] sm:$0xff]
        %v1208 = vld [vmem:[%s1170 + $0x128] sm:$0xff]
        %v1209 = vld [vmem:[%s1170 + $0x130] sm:$0xff]
        %v1210 = vld [vmem:[%s1170 + $0x138] sm:$0xff]
        %v1211 = vld [vmem:[%s1170 + $0x140] sm:$0xff]
        %v1212 = vld [vmem:[%s1170 + $0x148] sm:$0xff]
        %v1213 = vld [vmem:[%s1170 + $0x150] sm:$0xff]
        %v1214 = vld [vmem:[%s1170 + $0x158] sm:$0xff]
        %v1215 = vld [vmem:[%s1170 + $0x160] sm:$0xff]
        %v1216 = vld [vmem:[%s1170 + $0x168] sm:$0xff]
        %v1217 = vld [vmem:[%s1170 + $0x170] sm:$0xff]
        %v1218 = vld [vmem:[%s1170 + $0x178] sm:$0xff]
        %v1219 = vld [vmem:[%s1170 + $0x180] sm:$0xff]
        %v1220 = vld [vmem:[%s1170 + $0x188] sm:$0xff]
        %v1221 = vld [vmem:[%s1170 + $0x190] sm:$0xff]
        %v1222 = vld [vmem:[%s1170 + $0x198] sm:$0xff]
        %v1223 = vld [vmem:[%s1170 + $0x1a0] sm:$0xff]
        %v1224 = vld [vmem:[%s1170 + $0x1a8] sm:$0xff]
        %v1225 = vld [vmem:[%s1170 + $0x1b0] sm:$0xff]
        %v1226 = vld [vmem:[%s1170 + $0x1b8] sm:$0xff]
        %v1227 = vld [vmem:[%s1170 + $0x1c0] sm:$0xff]
        %v1228 = vld [vmem:[%s1170 + $0x1c8] sm:$0xff]
        %v1229 = vld [vmem:[%s1170 + $0x1d0] sm:$0xff]
        %v1230 = vld [vmem:[%s1170 + $0x1d8] sm:$0xff]
        %v1231 = vld [vmem:[%s1170 + $0x1e0] sm:$0xff]
        %v1232 = vld [vmem:[%s1170 + $0x1e8] sm:$0xff]
        %v1233 = vld [vmem:[%s1170 + $0x1f0] sm:$0xff]
        %v1234 = vld [vmem:[%s1170 + $0x1f8] sm:$0xff]
        %1235 = vmatprep.subr.mxu0 %v1172
        %1236 = vmatpush1.msra.mxu0 %v1171
        %1237 = vmatprep.subr.mxu0 %v1174
        %1238 = vmatpush1.msra.mxu0 %v1173
        %1239 = vmatprep.subr.mxu0 %v1176
        %1240 = vmatpush1.msra.mxu0 %v1175
        %1241 = vmatprep.subr.mxu0 %v1178
        %1242 = vmatpush1.msra.mxu0 %v1177
        %1243 = vmatprep.subr.mxu0 %v1180
        %1244 = vmatpush1.msra.mxu0 %v1179
        %1245 = vmatprep.subr.mxu0 %v1182
        %1246 = vmatpush1.msra.mxu0 %v1181
        %1247 = vmatprep.subr.mxu0 %v1184
        %1248 = vmatpush1.msra.mxu0 %v1183
        %1249 = vmatprep.subr.mxu0 %v1186
        %1250 = vmatpush1.msra.mxu0 %v1185
        %1251 = vmatprep.subr.mxu0 %v1188
        %1252 = vmatpush1.msra.mxu0 %v1187
        %1253 = vmatprep.subr.mxu0 %v1190
        %1254 = vmatpush1.msra.mxu0 %v1189
        %1255 = vmatprep.subr.mxu0 %v1192
        %1256 = vmatpush1.msra.mxu0 %v1191
        %1257 = vmatprep.subr.mxu0 %v1194
        %1258 = vmatpush1.msra.mxu0 %v1193
        %1259 = vmatprep.subr.mxu0 %v1196
        %1260 = vmatpush1.msra.mxu0 %v1195
        %1261 = vmatprep.subr.mxu0 %v1198
        %1262 = vmatpush1.msra.mxu0 %v1197
        %1263 = vmatprep.subr.mxu0 %v1200
        %1264 = vmatpush1.msra.mxu0 %v1199
        %1265 = vmatprep.subr.mxu0 %v1202
        %1266 = vmatpush1.msra.mxu0 %v1201
        %1267 = vmatprep.subr.mxu0 %v1204
        %1268 = vmatpush1.msra.mxu0 %v1203
        %1269 = vmatprep.subr.mxu0 %v1206
        %1270 = vmatpush1.msra.mxu0 %v1205
        %1271 = vmatprep.subr.mxu0 %v1208
        %1272 = vmatpush1.msra.mxu0 %v1207
        %1273 = vmatprep.subr.mxu0 %v1210
        %1274 = vmatpush1.msra.mxu0 %v1209
        %1275 = vmatprep.subr.mxu0 %v1212
        %1276 = vmatpush1.msra.mxu0 %v1211
        %1277 = vmatprep.subr.mxu0 %v1214
        %1278 = vmatpush1.msra.mxu0 %v1213
        %1279 = vmatprep.subr.mxu0 %v1216
        %1280 = vmatpush1.msra.mxu0 %v1215
        %1281 = vmatprep.subr.mxu0 %v1218
        %1282 = vmatpush1.msra.mxu0 %v1217
        %1283 = vmatprep.subr.mxu0 %v1220
        %1284 = vmatpush1.msra.mxu0 %v1219
        %1285 = vmatprep.subr.mxu0 %v1222
        %1286 = vmatpush1.msra.mxu0 %v1221
        %1287 = vmatprep.subr.mxu0 %v1224
        %1288 = vmatpush1.msra.mxu0 %v1223
        %1289 = vmatprep.subr.mxu0 %v1226
        %1290 = vmatpush1.msra.mxu0 %v1225
        %1291 = vmatprep.subr.mxu0 %v1228
        %1292 = vmatpush1.msra.mxu0 %v1227
        %1293 = vmatprep.subr.mxu0 %v1230
        %1294 = vmatpush1.msra.mxu0 %v1229
        %1295 = vmatprep.subr.mxu0 %v1232
        %1296 = vmatpush1.msra.mxu0 %v1231
        %1297 = vmatprep.subr.mxu0 %v1234
        %1298 = vmatpush1.msra.mxu0 %v1233
        %1299 = vmatprep.mubr.f32.mxu0 %v576
        %1300 = vmatmul.mubr.f32.gmra.mrb[0].mxu0 %v510
        %v1301 = vpop.f32.mrb[0].mxu0
        %v1302 = vadd.f32 0.0, %v1301
        %v1303 = vpop.f32.mrb[0].mxu0
        %v1304 = vadd.f32 0.0, %v1303
        %1305 = vdwg.mxu0
        %s1306 = scalar_lea.vmem %s2, 24
        %v1307 = vld [vmem:[%s1306] sm:$0xff]
        %v1309 = vsel %vm788, %v1307, 0
        %v1312 = vsel %vm792, %v1302, 0
        %v1315 = vsel %vm792, %v1304, 0
        %1317 = vmatprep.subr.mxu0 %v1315
        %1318 = vmatpush1.msra.mxu0 %v1312
        %1319 = vmatprep.subr.mxu0 0.0
        %1320 = vmatpush1.msra.mxu0 0.0
        %1321 = vmatprep.subr.mxu0 0.0
        %1322 = vmatpush1.msra.mxu0 0.0
        %1323 = vmatprep.subr.mxu0 0.0
        %1324 = vmatpush1.msra.mxu0 0.0
        %1325 = vmatprep.subr.mxu0 0.0
        %1326 = vmatpush1.msra.mxu0 0.0
        %1327 = vmatprep.subr.mxu0 0.0
        %1328 = vmatpush1.msra.mxu0 0.0
        %1329 = vmatprep.subr.mxu0 0.0
        %1330 = vmatpush1.msra.mxu0 0.0
        %1331 = vmatprep.subr.mxu0 0.0
        %1332 = vmatpush1.msra.mxu0 0.0
        %1333 = vmatprep.subr.mxu0 0.0
        %1334 = vmatpush1.msra.mxu0 0.0
        %1335 = vmatprep.subr.mxu0 0.0
        %1336 = vmatpush1.msra.mxu0 0.0
        %1337 = vmatprep.subr.mxu0 0.0
        %1338 = vmatpush1.msra.mxu0 0.0
        %1339 = vmatprep.subr.mxu0 0.0
        %1340 = vmatpush1.msra.mxu0 0.0
        %1341 = vmatprep.subr.mxu0 0.0
        %1342 = vmatpush1.msra.mxu0 0.0
        %1343 = vmatprep.subr.mxu0 0.0
        %1344 = vmatpush1.msra.mxu0 0.0
        %1345 = vmatprep.subr.mxu0 0.0
        %1346 = vmatpush1.msra.mxu0 0.0
        %1347 = vmatprep.subr.mxu0 0.0
        %1348 = vmatpush1.msra.mxu0 0.0
        %1349 = vmatprep.subr.mxu0 0.0
        %1350 = vmatpush1.msra.mxu0 0.0
        %1351 = vmatprep.subr.mxu0 0.0
        %1352 = vmatpush1.msra.mxu0 0.0
        %1353 = vmatprep.subr.mxu0 0.0
        %1354 = vmatpush1.msra.mxu0 0.0
        %1355 = vmatprep.subr.mxu0 0.0
        %1356 = vmatpush1.msra.mxu0 0.0
        %1357 = vmatprep.subr.mxu0 0.0
        %1358 = vmatpush1.msra.mxu0 0.0
        %1359 = vmatprep.subr.mxu0 0.0
        %1360 = vmatpush1.msra.mxu0 0.0
        %1361 = vmatprep.subr.mxu0 0.0
        %1362 = vmatpush1.msra.mxu0 0.0
        %1363 = vmatprep.subr.mxu0 0.0
        %1364 = vmatpush1.msra.mxu0 0.0
        %1365 = vmatprep.subr.mxu0 0.0
        %1366 = vmatpush1.msra.mxu0 0.0
        %1367 = vmatprep.subr.mxu0 0.0
        %1368 = vmatpush1.msra.mxu0 0.0
        %1369 = vmatprep.subr.mxu0 0.0
        %1370 = vmatpush1.msra.mxu0 0.0
        %1371 = vmatprep.subr.mxu0 0.0
        %1372 = vmatpush1.msra.mxu0 0.0
        %1373 = vmatprep.subr.mxu0 0.0
        %1374 = vmatpush1.msra.mxu0 0.0
        %1375 = vmatprep.subr.mxu0 0.0
        %1376 = vmatpush1.msra.mxu0 0.0
        %1377 = vmatprep.subr.mxu0 0.0
        %1378 = vmatpush1.msra.mxu0 0.0
        %1379 = vmatprep.subr.mxu0 0.0
        %1380 = vmatpush1.msra.mxu0 0.0
        %1381 = vmatprep.mubr.f32.mxu0 0.0
        %1382 = vmatmul.mubr.f32.gmra.mrb[0].mxu0 %v1309
        %v1383 = vpop.f32.mrb[0].mxu0
        %v1384 = vadd.f32 0.0, %v1383
        %v1385 = vpop.f32.mrb[0].mxu0
        %v1386 = vadd.f32 0.0, %v1385
        %1387 = vdwg.mxu0
        %v1388 = vadd.f32 %v1168, %v1384
        %v1389 = vadd.f32 %v1169, %v1386
        %s1390 = scalar_lea.vmem [#allocation5], 2048
        %v1391 = vld [vmem:[%s1390] sm:$0xff]
        %v1392 = vld [vmem:[%s1390 + $0x8] sm:$0xff]
        %v1393 = vld [vmem:[%s1390 + $0x10] sm:$0xff]
        %v1394 = vld [vmem:[%s1390 + $0x18] sm:$0xff]
        %v1395 = vld [vmem:[%s1390 + $0x20] sm:$0xff]
        %v1396 = vld [vmem:[%s1390 + $0x28] sm:$0xff]
        %v1397 = vld [vmem:[%s1390 + $0x30] sm:$0xff]
        %v1398 = vld [vmem:[%s1390 + $0x38] sm:$0xff]
        %v1399 = vld [vmem:[%s1390 + $0x40] sm:$0xff]
        %v1400 = vld [vmem:[%s1390 + $0x48] sm:$0xff]
        %v1401 = vld [vmem:[%s1390 + $0x50] sm:$0xff]
        %v1402 = vld [vmem:[%s1390 + $0x58] sm:$0xff]
        %v1403 = vld [vmem:[%s1390 + $0x60] sm:$0xff]
        %v1404 = vld [vmem:[%s1390 + $0x68] sm:$0xff]
        %v1405 = vld [vmem:[%s1390 + $0x70] sm:$0xff]
        %v1406 = vld [vmem:[%s1390 + $0x78] sm:$0xff]
        %v1407 = vld [vmem:[%s1390 + $0x80] sm:$0xff]
        %v1408 = vld [vmem:[%s1390 + $0x88] sm:$0xff]
        %v1409 = vld [vmem:[%s1390 + $0x90] sm:$0xff]
        %v1410 = vld [vmem:[%s1390 + $0x98] sm:$0xff]
        %v1411 = vld [vmem:[%s1390 + $0xa0] sm:$0xff]
        %v1412 = vld [vmem:[%s1390 + $0xa8] sm:$0xff]
        %v1413 = vld [vmem:[%s1390 + $0xb0] sm:$0xff]
        %v1414 = vld [vmem:[%s1390 + $0xb8] sm:$0xff]
        %v1415 = vld [vmem:[%s1390 + $0xc0] sm:$0xff]
        %v1416 = vld [vmem:[%s1390 + $0xc8] sm:$0xff]
        %v1417 = vld [vmem:[%s1390 + $0xd0] sm:$0xff]
        %v1418 = vld [vmem:[%s1390 + $0xd8] sm:$0xff]
        %v1419 = vld [vmem:[%s1390 + $0xe0] sm:$0xff]
        %v1420 = vld [vmem:[%s1390 + $0xe8] sm:$0xff]
        %v1421 = vld [vmem:[%s1390 + $0xf0] sm:$0xff]
        %v1422 = vld [vmem:[%s1390 + $0xf8] sm:$0xff]
        %v1423 = vld [vmem:[%s1390 + $0x100] sm:$0xff]
        %v1424 = vld [vmem:[%s1390 + $0x108] sm:$0xff]
        %v1425 = vld [vmem:[%s1390 + $0x110] sm:$0xff]
        %v1426 = vld [vmem:[%s1390 + $0x118] sm:$0xff]
        %v1427 = vld [vmem:[%s1390 + $0x120] sm:$0xff]
        %v1428 = vld [vmem:[%s1390 + $0x128] sm:$0xff]
        %v1429 = vld [vmem:[%s1390 + $0x130] sm:$0xff]
        %v1430 = vld [vmem:[%s1390 + $0x138] sm:$0xff]
        %v1431 = vld [vmem:[%s1390 + $0x140] sm:$0xff]
        %v1432 = vld [vmem:[%s1390 + $0x148] sm:$0xff]
        %v1433 = vld [vmem:[%s1390 + $0x150] sm:$0xff]
        %v1434 = vld [vmem:[%s1390 + $0x158] sm:$0xff]
        %v1435 = vld [vmem:[%s1390 + $0x160] sm:$0xff]
        %v1436 = vld [vmem:[%s1390 + $0x168] sm:$0xff]
        %v1437 = vld [vmem:[%s1390 + $0x170] sm:$0xff]
        %v1438 = vld [vmem:[%s1390 + $0x178] sm:$0xff]
        %v1439 = vld [vmem:[%s1390 + $0x180] sm:$0xff]
        %v1440 = vld [vmem:[%s1390 + $0x188] sm:$0xff]
        %v1441 = vld [vmem:[%s1390 + $0x190] sm:$0xff]
        %v1442 = vld [vmem:[%s1390 + $0x198] sm:$0xff]
        %v1443 = vld [vmem:[%s1390 + $0x1a0] sm:$0xff]
        %v1444 = vld [vmem:[%s1390 + $0x1a8] sm:$0xff]
        %v1445 = vld [vmem:[%s1390 + $0x1b0] sm:$0xff]
        %v1446 = vld [vmem:[%s1390 + $0x1b8] sm:$0xff]
        %v1447 = vld [vmem:[%s1390 + $0x1c0] sm:$0xff]
        %v1448 = vld [vmem:[%s1390 + $0x1c8] sm:$0xff]
        %v1449 = vld [vmem:[%s1390 + $0x1d0] sm:$0xff]
        %v1450 = vld [vmem:[%s1390 + $0x1d8] sm:$0xff]
        %v1451 = vld [vmem:[%s1390 + $0x1e0] sm:$0xff]
        %v1452 = vld [vmem:[%s1390 + $0x1e8] sm:$0xff]
        %v1453 = vld [vmem:[%s1390 + $0x1f0] sm:$0xff]
        %v1454 = vld [vmem:[%s1390 + $0x1f8] sm:$0xff]
        %1455 = vmatprep.subr.mxu0 %v1392
        %1456 = vmatpush1.msra.mxu0 %v1391
        %1457 = vmatprep.subr.mxu0 %v1394
        %1458 = vmatpush1.msra.mxu0 %v1393
        %1459 = vmatprep.subr.mxu0 %v1396
        %1460 = vmatpush1.msra.mxu0 %v1395
        %1461 = vmatprep.subr.mxu0 %v1398
        %1462 = vmatpush1.msra.mxu0 %v1397
        %1463 = vmatprep.subr.mxu0 %v1400
        %1464 = vmatpush1.msra.mxu0 %v1399
        %1465 = vmatprep.subr.mxu0 %v1402
        %1466 = vmatpush1.msra.mxu0 %v1401
        %1467 = vmatprep.subr.mxu0 %v1404
        %1468 = vmatpush1.msra.mxu0 %v1403
        %1469 = vmatprep.subr.mxu0 %v1406
        %1470 = vmatpush1.msra.mxu0 %v1405
        %1471 = vmatprep.subr.mxu0 %v1408
        %1472 = vmatpush1.msra.mxu0 %v1407
        %1473 = vmatprep.subr.mxu0 %v1410
        %1474 = vmatpush1.msra.mxu0 %v1409
        %1475 = vmatprep.subr.mxu0 %v1412
        %1476 = vmatpush1.msra.mxu0 %v1411
        %1477 = vmatprep.subr.mxu0 %v1414
        %1478 = vmatpush1.msra.mxu0 %v1413
        %1479 = vmatprep.subr.mxu0 %v1416
        %1480 = vmatpush1.msra.mxu0 %v1415
        %1481 = vmatprep.subr.mxu0 %v1418
        %1482 = vmatpush1.msra.mxu0 %v1417
        %1483 = vmatprep.subr.mxu0 %v1420
        %1484 = vmatpush1.msra.mxu0 %v1419
        %1485 = vmatprep.subr.mxu0 %v1422
        %1486 = vmatpush1.msra.mxu0 %v1421
        %1487 = vmatprep.subr.mxu0 %v1424
        %1488 = vmatpush1.msra.mxu0 %v1423
        %1489 = vmatprep.subr.mxu0 %v1426
        %1490 = vmatpush1.msra.mxu0 %v1425
        %1491 = vmatprep.subr.mxu0 %v1428
        %1492 = vmatpush1.msra.mxu0 %v1427
        %1493 = vmatprep.subr.mxu0 %v1430
        %1494 = vmatpush1.msra.mxu0 %v1429
        %1495 = vmatprep.subr.mxu0 %v1432
        %1496 = vmatpush1.msra.mxu0 %v1431
        %1497 = vmatprep.subr.mxu0 %v1434
        %1498 = vmatpush1.msra.mxu0 %v1433
        %1499 = vmatprep.subr.mxu0 %v1436
        %1500 = vmatpush1.msra.mxu0 %v1435
        %1501 = vmatprep.subr.mxu0 %v1438
        %1502 = vmatpush1.msra.mxu0 %v1437
        %1503 = vmatprep.subr.mxu0 %v1440
        %1504 = vmatpush1.msra.mxu0 %v1439
        %1505 = vmatprep.subr.mxu0 %v1442
        %1506 = vmatpush1.msra.mxu0 %v1441
        %1507 = vmatprep.subr.mxu0 %v1444
        %1508 = vmatpush1.msra.mxu0 %v1443
        %1509 = vmatprep.subr.mxu0 %v1446
        %1510 = vmatpush1.msra.mxu0 %v1445
        %1511 = vmatprep.subr.mxu0 %v1448
        %1512 = vmatpush1.msra.mxu0 %v1447
        %1513 = vmatprep.subr.mxu0 %v1450
        %1514 = vmatpush1.msra.mxu0 %v1449
        %1515 = vmatprep.subr.mxu0 %v1452
        %1516 = vmatpush1.msra.mxu0 %v1451
        %1517 = vmatprep.subr.mxu0 %v1454
        %1518 = vmatpush1.msra.mxu0 %v1453
        %1519 = vmatprep.mubr.f32.mxu0 %v576
        %1520 = vmatmul.mubr.f32.gmra.mrb[0].mxu0 %v510
        %v1521 = vpop.f32.mrb[0].mxu0
        %v1522 = vadd.f32 0.0, %v1521
        %v1523 = vpop.f32.mrb[0].mxu0
        %v1524 = vadd.f32 0.0, %v1523
        %1525 = vdwg.mxu0
        %s1526 = scalar_lea.vmem %s2, 32
        %v1527 = vld [vmem:[%s1526] sm:$0xff]
        %v1529 = vsel %vm788, %v1527, 0
        %v1532 = vsel %vm792, %v1522, 0
        %v1535 = vsel %vm792, %v1524, 0
        %1537 = vmatprep.subr.mxu0 %v1535
        %1538 = vmatpush1.msra.mxu0 %v1532
        %1539 = vmatprep.subr.mxu0 0.0
        %1540 = vmatpush1.msra.mxu0 0.0
        %1541 = vmatprep.subr.mxu0 0.0
        %1542 = vmatpush1.msra.mxu0 0.0
        %1543 = vmatprep.subr.mxu0 0.0
        %1544 = vmatpush1.msra.mxu0 0.0
        %1545 = vmatprep.subr.mxu0 0.0
        %1546 = vmatpush1.msra.mxu0 0.0
        %1547 = vmatprep.subr.mxu0 0.0
        %1548 = vmatpush1.msra.mxu0 0.0
        %1549 = vmatprep.subr.mxu0 0.0
        %1550 = vmatpush1.msra.mxu0 0.0
        %1551 = vmatprep.subr.mxu0 0.0
        %1552 = vmatpush1.msra.mxu0 0.0
        %1553 = vmatprep.subr.mxu0 0.0
        %1554 = vmatpush1.msra.mxu0 0.0
        %1555 = vmatprep.subr.mxu0 0.0
        %1556 = vmatpush1.msra.mxu0 0.0
        %1557 = vmatprep.subr.mxu0 0.0
        %1558 = vmatpush1.msra.mxu0 0.0
        %1559 = vmatprep.subr.mxu0 0.0
        %1560 = vmatpush1.msra.mxu0 0.0
        %1561 = vmatprep.subr.mxu0 0.0
        %1562 = vmatpush1.msra.mxu0 0.0
        %1563 = vmatprep.subr.mxu0 0.0
        %1564 = vmatpush1.msra.mxu0 0.0
        %1565 = vmatprep.subr.mxu0 0.0
        %1566 = vmatpush1.msra.mxu0 0.0
        %1567 = vmatprep.subr.mxu0 0.0
        %1568 = vmatpush1.msra.mxu0 0.0
        %1569 = vmatprep.subr.mxu0 0.0
        %1570 = vmatpush1.msra.mxu0 0.0
        %1571 = vmatprep.subr.mxu0 0.0
        %1572 = vmatpush1.msra.mxu0 0.0
        %1573 = vmatprep.subr.mxu0 0.0
        %1574 = vmatpush1.msra.mxu0 0.0
        %1575 = vmatprep.subr.mxu0 0.0
        %1576 = vmatpush1.msra.mxu0 0.0
        %1577 = vmatprep.subr.mxu0 0.0
        %1578 = vmatpush1.msra.mxu0 0.0
        %1579 = vmatprep.subr.mxu0 0.0
        %1580 = vmatpush1.msra.mxu0 0.0
        %1581 = vmatprep.subr.mxu0 0.0
        %1582 = vmatpush1.msra.mxu0 0.0
        %1583 = vmatprep.subr.mxu0 0.0
        %1584 = vmatpush1.msra.mxu0 0.0
        %1585 = vmatprep.subr.mxu0 0.0
        %1586 = vmatpush1.msra.mxu0 0.0
        %1587 = vmatprep.subr.mxu0 0.0
        %1588 = vmatpush1.msra.mxu0 0.0
        %1589 = vmatprep.subr.mxu0 0.0
        %1590 = vmatpush1.msra.mxu0 0.0
        %1591 = vmatprep.subr.mxu0 0.0
        %1592 = vmatpush1.msra.mxu0 0.0
        %1593 = vmatprep.subr.mxu0 0.0
        %1594 = vmatpush1.msra.mxu0 0.0
        %1595 = vmatprep.subr.mxu0 0.0
        %1596 = vmatpush1.msra.mxu0 0.0
        %1597 = vmatprep.subr.mxu0 0.0
        %1598 = vmatpush1.msra.mxu0 0.0
        %1599 = vmatprep.subr.mxu0 0.0
        %1600 = vmatpush1.msra.mxu0 0.0
        %1601 = vmatprep.mubr.f32.mxu0 0.0
        %1602 = vmatmul.mubr.f32.gmra.mrb[0].mxu0 %v1529
        %v1603 = vpop.f32.mrb[0].mxu0
        %v1604 = vadd.f32 0.0, %v1603
        %v1605 = vpop.f32.mrb[0].mxu0
        %v1606 = vadd.f32 0.0, %v1605
        %1607 = vdwg.mxu0
        %v1608 = vadd.f32 %v1388, %v1604
        %v1609 = vadd.f32 %v1389, %v1606
        %s1610 = scalar_lea.vmem [#allocation5], 2560
        %v1611 = vld [vmem:[%s1610] sm:$0xff]
        %v1612 = vld [vmem:[%s1610 + $0x8] sm:$0xff]
        %v1613 = vld [vmem:[%s1610 + $0x10] sm:$0xff]
        %v1614 = vld [vmem:[%s1610 + $0x18] sm:$0xff]
        %v1615 = vld [vmem:[%s1610 + $0x20] sm:$0xff]
        %v1616 = vld [vmem:[%s1610 + $0x28] sm:$0xff]
        %v1617 = vld [vmem:[%s1610 + $0x30] sm:$0xff]
        %v1618 = vld [vmem:[%s1610 + $0x38] sm:$0xff]
        %v1619 = vld [vmem:[%s1610 + $0x40] sm:$0xff]
        %v1620 = vld [vmem:[%s1610 + $0x48] sm:$0xff]
        %v1621 = vld [vmem:[%s1610 + $0x50] sm:$0xff]
        %v1622 = vld [vmem:[%s1610 + $0x58] sm:$0xff]
        %v1623 = vld [vmem:[%s1610 + $0x60] sm:$0xff]
        %v1624 = vld [vmem:[%s1610 + $0x68] sm:$0xff]
        %v1625 = vld [vmem:[%s1610 + $0x70] sm:$0xff]
        %v1626 = vld [vmem:[%s1610 + $0x78] sm:$0xff]
        %v1627 = vld [vmem:[%s1610 + $0x80] sm:$0xff]
        %v1628 = vld [vmem:[%s1610 + $0x88] sm:$0xff]
        %v1629 = vld [vmem:[%s1610 + $0x90] sm:$0xff]
        %v1630 = vld [vmem:[%s1610 + $0x98] sm:$0xff]
        %v1631 = vld [vmem:[%s1610 + $0xa0] sm:$0xff]
        %v1632 = vld [vmem:[%s1610 + $0xa8] sm:$0xff]
        %v1633 = vld [vmem:[%s1610 + $0xb0] sm:$0xff]
        %v1634 = vld [vmem:[%s1610 + $0xb8] sm:$0xff]
        %v1635 = vld [vmem:[%s1610 + $0xc0] sm:$0xff]
        %v1636 = vld [vmem:[%s1610 + $0xc8] sm:$0xff]
        %v1637 = vld [vmem:[%s1610 + $0xd0] sm:$0xff]
        %v1638 = vld [vmem:[%s1610 + $0xd8] sm:$0xff]
        %v1639 = vld [vmem:[%s1610 + $0xe0] sm:$0xff]
        %v1640 = vld [vmem:[%s1610 + $0xe8] sm:$0xff]
        %v1641 = vld [vmem:[%s1610 + $0xf0] sm:$0xff]
        %v1642 = vld [vmem:[%s1610 + $0xf8] sm:$0xff]
        %v1643 = vld [vmem:[%s1610 + $0x100] sm:$0xff]
        %v1644 = vld [vmem:[%s1610 + $0x108] sm:$0xff]
        %v1645 = vld [vmem:[%s1610 + $0x110] sm:$0xff]
        %v1646 = vld [vmem:[%s1610 + $0x118] sm:$0xff]
        %v1647 = vld [vmem:[%s1610 + $0x120] sm:$0xff]
        %v1648 = vld [vmem:[%s1610 + $0x128] sm:$0xff]
        %v1649 = vld [vmem:[%s1610 + $0x130] sm:$0xff]
        %v1650 = vld [vmem:[%s1610 + $0x138] sm:$0xff]
        %v1651 = vld [vmem:[%s1610 + $0x140] sm:$0xff]
        %v1652 = vld [vmem:[%s1610 + $0x148] sm:$0xff]
        %v1653 = vld [vmem:[%s1610 + $0x150] sm:$0xff]
        %v1654 = vld [vmem:[%s1610 + $0x158] sm:$0xff]
        %v1655 = vld [vmem:[%s1610 + $0x160] sm:$0xff]
        %v1656 = vld [vmem:[%s1610 + $0x168] sm:$0xff]
        %v1657 = vld [vmem:[%s1610 + $0x170] sm:$0xff]
        %v1658 = vld [vmem:[%s1610 + $0x178] sm:$0xff]
        %v1659 = vld [vmem:[%s1610 + $0x180] sm:$0xff]
        %v1660 = vld [vmem:[%s1610 + $0x188] sm:$0xff]
        %v1661 = vld [vmem:[%s1610 + $0x190] sm:$0xff]
        %v1662 = vld [vmem:[%s1610 + $0x198] sm:$0xff]
        %v1663 = vld [vmem:[%s1610 + $0x1a0] sm:$0xff]
        %v1664 = vld [vmem:[%s1610 + $0x1a8] sm:$0xff]
        %v1665 = vld [vmem:[%s1610 + $0x1b0] sm:$0xff]
        %v1666 = vld [vmem:[%s1610 + $0x1b8] sm:$0xff]
        %v1667 = vld [vmem:[%s1610 + $0x1c0] sm:$0xff]
        %v1668 = vld [vmem:[%s1610 + $0x1c8] sm:$0xff]
        %v1669 = vld [vmem:[%s1610 + $0x1d0] sm:$0xff]
        %v1670 = vld [vmem:[%s1610 + $0x1d8] sm:$0xff]
        %v1671 = vld [vmem:[%s1610 + $0x1e0] sm:$0xff]
        %v1672 = vld [vmem:[%s1610 + $0x1e8] sm:$0xff]
        %v1673 = vld [vmem:[%s1610 + $0x1f0] sm:$0xff]
        %v1674 = vld [vmem:[%s1610 + $0x1f8] sm:$0xff]
        %1675 = vmatprep.subr.mxu0 %v1612
        %1676 = vmatpush1.msra.mxu0 %v1611
        %1677 = vmatprep.subr.mxu0 %v1614
        %1678 = vmatpush1.msra.mxu0 %v1613
        %1679 = vmatprep.subr.mxu0 %v1616
        %1680 = vmatpush1.msra.mxu0 %v1615
        %1681 = vmatprep.subr.mxu0 %v1618
        %1682 = vmatpush1.msra.mxu0 %v1617
        %1683 = vmatprep.subr.mxu0 %v1620
        %1684 = vmatpush1.msra.mxu0 %v1619
        %1685 = vmatprep.subr.mxu0 %v1622
        %1686 = vmatpush1.msra.mxu0 %v1621
        %1687 = vmatprep.subr.mxu0 %v1624
        %1688 = vmatpush1.msra.mxu0 %v1623
        %1689 = vmatprep.subr.mxu0 %v1626
        %1690 = vmatpush1.msra.mxu0 %v1625
        %1691 = vmatprep.subr.mxu0 %v1628
        %1692 = vmatpush1.msra.mxu0 %v1627
        %1693 = vmatprep.subr.mxu0 %v1630
        %1694 = vmatpush1.msra.mxu0 %v1629
        %1695 = vmatprep.subr.mxu0 %v1632
        %1696 = vmatpush1.msra.mxu0 %v1631
        %1697 = vmatprep.subr.mxu0 %v1634
        %1698 = vmatpush1.msra.mxu0 %v1633
        %1699 = vmatprep.subr.mxu0 %v1636
        %1700 = vmatpush1.msra.mxu0 %v1635
        %1701 = vmatprep.subr.mxu0 %v1638
        %1702 = vmatpush1.msra.mxu0 %v1637
        %1703 = vmatprep.subr.mxu0 %v1640
        %1704 = vmatpush1.msra.mxu0 %v1639
        %1705 = vmatprep.subr.mxu0 %v1642
        %1706 = vmatpush1.msra.mxu0 %v1641
        %1707 = vmatprep.subr.mxu0 %v1644
        %1708 = vmatpush1.msra.mxu0 %v1643
        %1709 = vmatprep.subr.mxu0 %v1646
        %1710 = vmatpush1.msra.mxu0 %v1645
        %1711 = vmatprep.subr.mxu0 %v1648
        %1712 = vmatpush1.msra.mxu0 %v1647
        %1713 = vmatprep.subr.mxu0 %v1650
        %1714 = vmatpush1.msra.mxu0 %v1649
        %1715 = vmatprep.subr.mxu0 %v1652
        %1716 = vmatpush1.msra.mxu0 %v1651
        %1717 = vmatprep.subr.mxu0 %v1654
        %1718 = vmatpush1.msra.mxu0 %v1653
        %1719 = vmatprep.subr.mxu0 %v1656
        %1720 = vmatpush1.msra.mxu0 %v1655
        %1721 = vmatprep.subr.mxu0 %v1658
        %1722 = vmatpush1.msra.mxu0 %v1657
        %1723 = vmatprep.subr.mxu0 %v1660
        %1724 = vmatpush1.msra.mxu0 %v1659
        %1725 = vmatprep.subr.mxu0 %v1662
        %1726 = vmatpush1.msra.mxu0 %v1661
        %1727 = vmatprep.subr.mxu0 %v1664
        %1728 = vmatpush1.msra.mxu0 %v1663
        %1729 = vmatprep.subr.mxu0 %v1666
        %1730 = vmatpush1.msra.mxu0 %v1665
        %1731 = vmatprep.subr.mxu0 %v1668
        %1732 = vmatpush1.msra.mxu0 %v1667
        %1733 = vmatprep.subr.mxu0 %v1670
        %1734 = vmatpush1.msra.mxu0 %v1669
        %1735 = vmatprep.subr.mxu0 %v1672
        %1736 = vmatpush1.msra.mxu0 %v1671
        %1737 = vmatprep.subr.mxu0 %v1674
        %1738 = vmatpush1.msra.mxu0 %v1673
        %1739 = vmatprep.mubr.f32.mxu0 %v576
        %1740 = vmatmul.mubr.f32.gmra.mrb[0].mxu0 %v510
        %v1741 = vpop.f32.mrb[0].mxu0
        %v1742 = vadd.f32 0.0, %v1741
        %v1743 = vpop.f32.mrb[0].mxu0
        %v1744 = vadd.f32 0.0, %v1743
        %1745 = vdwg.mxu0
        %s1746 = scalar_lea.vmem %s2, 40
        %v1747 = vld [vmem:[%s1746] sm:$0xff]
        %v1749 = vsel %vm788, %v1747, 0
        %v1752 = vsel %vm792, %v1742, 0
        %v1755 = vsel %vm792, %v1744, 0
        %1757 = vmatprep.subr.mxu0 %v1755
        %1758 = vmatpush1.msra.mxu0 %v1752
        %1759 = vmatprep.subr.mxu0 0.0
        %1760 = vmatpush1.msra.mxu0 0.0
        %1761 = vmatprep.subr.mxu0 0.0
        %1762 = vmatpush1.msra.mxu0 0.0
        %1763 = vmatprep.subr.mxu0 0.0
        %1764 = vmatpush1.msra.mxu0 0.0
        %1765 = vmatprep.subr.mxu0 0.0
        %1766 = vmatpush1.msra.mxu0 0.0
        %1767 = vmatprep.subr.mxu0 0.0
        %1768 = vmatpush1.msra.mxu0 0.0
        %1769 = vmatprep.subr.mxu0 0.0
        %1770 = vmatpush1.msra.mxu0 0.0
        %1771 = vmatprep.subr.mxu0 0.0
        %1772 = vmatpush1.msra.mxu0 0.0
        %1773 = vmatprep.subr.mxu0 0.0
        %1774 = vmatpush1.msra.mxu0 0.0
        %1775 = vmatprep.subr.mxu0 0.0
        %1776 = vmatpush1.msra.mxu0 0.0
        %1777 = vmatprep.subr.mxu0 0.0
        %1778 = vmatpush1.msra.mxu0 0.0
        %1779 = vmatprep.subr.mxu0 0.0
        %1780 = vmatpush1.msra.mxu0 0.0
        %1781 = vmatprep.subr.mxu0 0.0
        %1782 = vmatpush1.msra.mxu0 0.0
        %1783 = vmatprep.subr.mxu0 0.0
        %1784 = vmatpush1.msra.mxu0 0.0
        %1785 = vmatprep.subr.mxu0 0.0
        %1786 = vmatpush1.msra.mxu0 0.0
        %1787 = vmatprep.subr.mxu0 0.0
        %1788 = vmatpush1.msra.mxu0 0.0
        %1789 = vmatprep.subr.mxu0 0.0
        %1790 = vmatpush1.msra.mxu0 0.0
        %1791 = vmatprep.subr.mxu0 0.0
        %1792 = vmatpush1.msra.mxu0 0.0
        %1793 = vmatprep.subr.mxu0 0.0
        %1794 = vmatpush1.msra.mxu0 0.0
        %1795 = vmatprep.subr.mxu0 0.0
        %1796 = vmatpush1.msra.mxu0 0.0
        %1797 = vmatprep.subr.mxu0 0.0
        %1798 = vmatpush1.msra.mxu0 0.0
        %1799 = vmatprep.subr.mxu0 0.0
        %1800 = vmatpush1.msra.mxu0 0.0
        %1801 = vmatprep.subr.mxu0 0.0
        %1802 = vmatpush1.msra.mxu0 0.0
        %1803 = vmatprep.subr.mxu0 0.0
        %1804 = vmatpush1.msra.mxu0 0.0
        %1805 = vmatprep.subr.mxu0 0.0
        %1806 = vmatpush1.msra.mxu0 0.0
        %1807 = vmatprep.subr.mxu0 0.0
        %1808 = vmatpush1.msra.mxu0 0.0
        %1809 = vmatprep.subr.mxu0 0.0
        %1810 = vmatpush1.msra.mxu0 0.0
        %1811 = vmatprep.subr.mxu0 0.0
        %1812 = vmatpush1.msra.mxu0 0.0
        %1813 = vmatprep.subr.mxu0 0.0
        %1814 = vmatpush1.msra.mxu0 0.0
        %1815 = vmatprep.subr.mxu0 0.0
        %1816 = vmatpush1.msra.mxu0 0.0
        %1817 = vmatprep.subr.mxu0 0.0
        %1818 = vmatpush1.msra.mxu0 0.0
        %1819 = vmatprep.subr.mxu0 0.0
        %1820 = vmatpush1.msra.mxu0 0.0
        %1821 = vmatprep.mubr.f32.mxu0 0.0
        %1822 = vmatmul.mubr.f32.gmra.mrb[0].mxu0 %v1749
        %v1823 = vpop.f32.mrb[0].mxu0
        %v1824 = vadd.f32 0.0, %v1823
        %v1825 = vpop.f32.mrb[0].mxu0
        %v1826 = vadd.f32 0.0, %v1825
        %1827 = vdwg.mxu0
        %v1828 = vadd.f32 %v1608, %v1824
        %v1829 = vadd.f32 %v1609, %v1826
        %s1830 = scalar_lea.vmem [#allocation5], 3072
        %v1831 = vld [vmem:[%s1830] sm:$0xff]
        %v1832 = vld [vmem:[%s1830 + $0x8] sm:$0xff]
        %v1833 = vld [vmem:[%s1830 + $0x10] sm:$0xff]
        %v1834 = vld [vmem:[%s1830 + $0x18] sm:$0xff]
        %v1835 = vld [vmem:[%s1830 + $0x20] sm:$0xff]
        %v1836 = vld [vmem:[%s1830 + $0x28] sm:$0xff]
        %v1837 = vld [vmem:[%s1830 + $0x30] sm:$0xff]
        %v1838 = vld [vmem:[%s1830 + $0x38] sm:$0xff]
        %v1839 = vld [vmem:[%s1830 + $0x40] sm:$0xff]
        %v1840 = vld [vmem:[%s1830 + $0x48] sm:$0xff]
        %v1841 = vld [vmem:[%s1830 + $0x50] sm:$0xff]
        %v1842 = vld [vmem:[%s1830 + $0x58] sm:$0xff]
        %v1843 = vld [vmem:[%s1830 + $0x60] sm:$0xff]
        %v1844 = vld [vmem:[%s1830 + $0x68] sm:$0xff]
        %v1845 = vld [vmem:[%s1830 + $0x70] sm:$0xff]
        %v1846 = vld [vmem:[%s1830 + $0x78] sm:$0xff]
        %v1847 = vld [vmem:[%s1830 + $0x80] sm:$0xff]
        %v1848 = vld [vmem:[%s1830 + $0x88] sm:$0xff]
        %v1849 = vld [vmem:[%s1830 + $0x90] sm:$0xff]
        %v1850 = vld [vmem:[%s1830 + $0x98] sm:$0xff]
        %v1851 = vld [vmem:[%s1830 + $0xa0] sm:$0xff]
        %v1852 = vld [vmem:[%s1830 + $0xa8] sm:$0xff]
        %v1853 = vld [vmem:[%s1830 + $0xb0] sm:$0xff]
        %v1854 = vld [vmem:[%s1830 + $0xb8] sm:$0xff]
        %v1855 = vld [vmem:[%s1830 + $0xc0] sm:$0xff]
        %v1856 = vld [vmem:[%s1830 + $0xc8] sm:$0xff]
        %v1857 = vld [vmem:[%s1830 + $0xd0] sm:$0xff]
        %v1858 = vld [vmem:[%s1830 + $0xd8] sm:$0xff]
        %v1859 = vld [vmem:[%s1830 + $0xe0] sm:$0xff]
        %v1860 = vld [vmem:[%s1830 + $0xe8] sm:$0xff]
        %v1861 = vld [vmem:[%s1830 + $0xf0] sm:$0xff]
        %v1862 = vld [vmem:[%s1830 + $0xf8] sm:$0xff]
        %v1863 = vld [vmem:[%s1830 + $0x100] sm:$0xff]
        %v1864 = vld [vmem:[%s1830 + $0x108] sm:$0xff]
        %v1865 = vld [vmem:[%s1830 + $0x110] sm:$0xff]
        %v1866 = vld [vmem:[%s1830 + $0x118] sm:$0xff]
        %v1867 = vld [vmem:[%s1830 + $0x120] sm:$0xff]
        %v1868 = vld [vmem:[%s1830 + $0x128] sm:$0xff]
        %v1869 = vld [vmem:[%s1830 + $0x130] sm:$0xff]
        %v1870 = vld [vmem:[%s1830 + $0x138] sm:$0xff]
        %v1871 = vld [vmem:[%s1830 + $0x140] sm:$0xff]
        %v1872 = vld [vmem:[%s1830 + $0x148] sm:$0xff]
        %v1873 = vld [vmem:[%s1830 + $0x150] sm:$0xff]
        %v1874 = vld [vmem:[%s1830 + $0x158] sm:$0xff]
        %v1875 = vld [vmem:[%s1830 + $0x160] sm:$0xff]
        %v1876 = vld [vmem:[%s1830 + $0x168] sm:$0xff]
        %v1877 = vld [vmem:[%s1830 + $0x170] sm:$0xff]
        %v1878 = vld [vmem:[%s1830 + $0x178] sm:$0xff]
        %v1879 = vld [vmem:[%s1830 + $0x180] sm:$0xff]
        %v1880 = vld [vmem:[%s1830 + $0x188] sm:$0xff]
        %v1881 = vld [vmem:[%s1830 + $0x190] sm:$0xff]
        %v1882 = vld [vmem:[%s1830 + $0x198] sm:$0xff]
        %v1883 = vld [vmem:[%s1830 + $0x1a0] sm:$0xff]
        %v1884 = vld [vmem:[%s1830 + $0x1a8] sm:$0xff]
        %v1885 = vld [vmem:[%s1830 + $0x1b0] sm:$0xff]
        %v1886 = vld [vmem:[%s1830 + $0x1b8] sm:$0xff]
        %v1887 = vld [vmem:[%s1830 + $0x1c0] sm:$0xff]
        %v1888 = vld [vmem:[%s1830 + $0x1c8] sm:$0xff]
        %v1889 = vld [vmem:[%s1830 + $0x1d0] sm:$0xff]
        %v1890 = vld [vmem:[%s1830 + $0x1d8] sm:$0xff]
        %v1891 = vld [vmem:[%s1830 + $0x1e0] sm:$0xff]
        %v1892 = vld [vmem:[%s1830 + $0x1e8] sm:$0xff]
        %v1893 = vld [vmem:[%s1830 + $0x1f0] sm:$0xff]
        %v1894 = vld [vmem:[%s1830 + $0x1f8] sm:$0xff]
        %1895 = vmatprep.subr.mxu0 %v1832
        %1896 = vmatpush1.msra.mxu0 %v1831
        %1897 = vmatprep.subr.mxu0 %v1834
        %1898 = vmatpush1.msra.mxu0 %v1833
        %1899 = vmatprep.subr.mxu0 %v1836
        %1900 = vmatpush1.msra.mxu0 %v1835
        %1901 = vmatprep.subr.mxu0 %v1838
        %1902 = vmatpush1.msra.mxu0 %v1837
        %1903 = vmatprep.subr.mxu0 %v1840
        %1904 = vmatpush1.msra.mxu0 %v1839
        %1905 = vmatprep.subr.mxu0 %v1842
        %1906 = vmatpush1.msra.mxu0 %v1841
        %1907 = vmatprep.subr.mxu0 %v1844
        %1908 = vmatpush1.msra.mxu0 %v1843
        %1909 = vmatprep.subr.mxu0 %v1846
        %1910 = vmatpush1.msra.mxu0 %v1845
        %1911 = vmatprep.subr.mxu0 %v1848
        %1912 = vmatpush1.msra.mxu0 %v1847
        %1913 = vmatprep.subr.mxu0 %v1850
        %1914 = vmatpush1.msra.mxu0 %v1849
        %1915 = vmatprep.subr.mxu0 %v1852
        %1916 = vmatpush1.msra.mxu0 %v1851
        %1917 = vmatprep.subr.mxu0 %v1854
        %1918 = vmatpush1.msra.mxu0 %v1853
        %1919 = vmatprep.subr.mxu0 %v1856
        %1920 = vmatpush1.msra.mxu0 %v1855
        %1921 = vmatprep.subr.mxu0 %v1858
        %1922 = vmatpush1.msra.mxu0 %v1857
        %1923 = vmatprep.subr.mxu0 %v1860
        %1924 = vmatpush1.msra.mxu0 %v1859
        %1925 = vmatprep.subr.mxu0 %v1862
        %1926 = vmatpush1.msra.mxu0 %v1861
        %1927 = vmatprep.subr.mxu0 %v1864
        %1928 = vmatpush1.msra.mxu0 %v1863
        %1929 = vmatprep.subr.mxu0 %v1866
        %1930 = vmatpush1.msra.mxu0 %v1865
        %1931 = vmatprep.subr.mxu0 %v1868
        %1932 = vmatpush1.msra.mxu0 %v1867
        %1933 = vmatprep.subr.mxu0 %v1870
        %1934 = vmatpush1.msra.mxu0 %v1869
        %1935 = vmatprep.subr.mxu0 %v1872
        %1936 = vmatpush1.msra.mxu0 %v1871
        %1937 = vmatprep.subr.mxu0 %v1874
        %1938 = vmatpush1.msra.mxu0 %v1873
        %1939 = vmatprep.subr.mxu0 %v1876
        %1940 = vmatpush1.msra.mxu0 %v1875
        %1941 = vmatprep.subr.mxu0 %v1878
        %1942 = vmatpush1.msra.mxu0 %v1877
        %1943 = vmatprep.subr.mxu0 %v1880
        %1944 = vmatpush1.msra.mxu0 %v1879
        %1945 = vmatprep.subr.mxu0 %v1882
        %1946 = vmatpush1.msra.mxu0 %v1881
        %1947 = vmatprep.subr.mxu0 %v1884
        %1948 = vmatpush1.msra.mxu0 %v1883
        %1949 = vmatprep.subr.mxu0 %v1886
        %1950 = vmatpush1.msra.mxu0 %v1885
        %1951 = vmatprep.subr.mxu0 %v1888
        %1952 = vmatpush1.msra.mxu0 %v1887
        %1953 = vmatprep.subr.mxu0 %v1890
        %1954 = vmatpush1.msra.mxu0 %v1889
        %1955 = vmatprep.subr.mxu0 %v1892
        %1956 = vmatpush1.msra.mxu0 %v1891
        %1957 = vmatprep.subr.mxu0 %v1894
        %1958 = vmatpush1.msra.mxu0 %v1893
        %1959 = vmatprep.mubr.f32.mxu0 %v576
        %1960 = vmatmul.mubr.f32.gmra.mrb[0].mxu0 %v510
        %v1961 = vpop.f32.mrb[0].mxu0
        %v1962 = vadd.f32 0.0, %v1961
        %v1963 = vpop.f32.mrb[0].mxu0
        %v1964 = vadd.f32 0.0, %v1963
        %1965 = vdwg.mxu0
        %s1966 = scalar_lea.vmem %s2, 48
        %v1967 = vld [vmem:[%s1966] sm:$0xff]
        %v1969 = vsel %vm788, %v1967, 0
        %v1972 = vsel %vm792, %v1962, 0
        %v1975 = vsel %vm792, %v1964, 0
        %1977 = vmatprep.subr.mxu0 %v1975
        %1978 = vmatpush1.msra.mxu0 %v1972
        %1979 = vmatprep.subr.mxu0 0.0
        %1980 = vmatpush1.msra.mxu0 0.0
        %1981 = vmatprep.subr.mxu0 0.0
        %1982 = vmatpush1.msra.mxu0 0.0
        %1983 = vmatprep.subr.mxu0 0.0
        %1984 = vmatpush1.msra.mxu0 0.0
        %1985 = vmatprep.subr.mxu0 0.0
        %1986 = vmatpush1.msra.mxu0 0.0
        %1987 = vmatprep.subr.mxu0 0.0
        %1988 = vmatpush1.msra.mxu0 0.0
        %1989 = vmatprep.subr.mxu0 0.0
        %1990 = vmatpush1.msra.mxu0 0.0
        %1991 = vmatprep.subr.mxu0 0.0
        %1992 = vmatpush1.msra.mxu0 0.0
        %1993 = vmatprep.subr.mxu0 0.0
        %1994 = vmatpush1.msra.mxu0 0.0
        %1995 = vmatprep.subr.mxu0 0.0
        %1996 = vmatpush1.msra.mxu0 0.0
        %1997 = vmatprep.subr.mxu0 0.0
        %1998 = vmatpush1.msra.mxu0 0.0
        %1999 = vmatprep.subr.mxu0 0.0
        %2000 = vmatpush1.msra.mxu0 0.0
        %2001 = vmatprep.subr.mxu0 0.0
        %2002 = vmatpush1.msra.mxu0 0.0
        %2003 = vmatprep.subr.mxu0 0.0
        %2004 = vmatpush1.msra.mxu0 0.0
        %2005 = vmatprep.subr.mxu0 0.0
        %2006 = vmatpush1.msra.mxu0 0.0
        %2007 = vmatprep.subr.mxu0 0.0
        %2008 = vmatpush1.msra.mxu0 0.0
        %2009 = vmatprep.subr.mxu0 0.0
        %2010 = vmatpush1.msra.mxu0 0.0
        %2011 = vmatprep.subr.mxu0 0.0
        %2012 = vmatpush1.msra.mxu0 0.0
        %2013 = vmatprep.subr.mxu0 0.0
        %2014 = vmatpush1.msra.mxu0 0.0
        %2015 = vmatprep.subr.mxu0 0.0
        %2016 = vmatpush1.msra.mxu0 0.0
        %2017 = vmatprep.subr.mxu0 0.0
        %2018 = vmatpush1.msra.mxu0 0.0
        %2019 = vmatprep.subr.mxu0 0.0
        %2020 = vmatpush1.msra.mxu0 0.0
        %2021 = vmatprep.subr.mxu0 0.0
        %2022 = vmatpush1.msra.mxu0 0.0
        %2023 = vmatprep.subr.mxu0 0.0
        %2024 = vmatpush1.msra.mxu0 0.0
        %2025 = vmatprep.subr.mxu0 0.0
        %2026 = vmatpush1.msra.mxu0 0.0
        %2027 = vmatprep.subr.mxu0 0.0
        %2028 = vmatpush1.msra.mxu0 0.0
        %2029 = vmatprep.subr.mxu0 0.0
        %2030 = vmatpush1.msra.mxu0 0.0
        %2031 = vmatprep.subr.mxu0 0.0
        %2032 = vmatpush1.msra.mxu0 0.0
        %2033 = vmatprep.subr.mxu0 0.0
        %2034 = vmatpush1.msra.mxu0 0.0
        %2035 = vmatprep.subr.mxu0 0.0
        %2036 = vmatpush1.msra.mxu0 0.0
        %2037 = vmatprep.subr.mxu0 0.0
        %2038 = vmatpush1.msra.mxu0 0.0
        %2039 = vmatprep.subr.mxu0 0.0
        %2040 = vmatpush1.msra.mxu0 0.0
        %2041 = vmatprep.mubr.f32.mxu0 0.0
        %2042 = vmatmul.mubr.f32.gmra.mrb[0].mxu0 %v1969
        %v2043 = vpop.f32.mrb[0].mxu0
        %v2044 = vadd.f32 0.0, %v2043
        %v2045 = vpop.f32.mrb[0].mxu0
        %v2046 = vadd.f32 0.0, %v2045
        %2047 = vdwg.mxu0
        %v2048 = vadd.f32 %v1828, %v2044
        %v2049 = vadd.f32 %v1829, %v2046
        %s2050 = scalar_lea.vmem [#allocation5], 3584
        %v2051 = vld [vmem:[%s2050] sm:$0xff]
        %v2052 = vld [vmem:[%s2050 + $0x8] sm:$0xff]
        %v2053 = vld [vmem:[%s2050 + $0x10] sm:$0xff]
        %v2054 = vld [vmem:[%s2050 + $0x18] sm:$0xff]
        %v2055 = vld [vmem:[%s2050 + $0x20] sm:$0xff]
        %v2056 = vld [vmem:[%s2050 + $0x28] sm:$0xff]
        %v2057 = vld [vmem:[%s2050 + $0x30] sm:$0xff]
        %v2058 = vld [vmem:[%s2050 + $0x38] sm:$0xff]
        %v2059 = vld [vmem:[%s2050 + $0x40] sm:$0xff]
        %v2060 = vld [vmem:[%s2050 + $0x48] sm:$0xff]
        %v2061 = vld [vmem:[%s2050 + $0x50] sm:$0xff]
        %v2062 = vld [vmem:[%s2050 + $0x58] sm:$0xff]
        %v2063 = vld [vmem:[%s2050 + $0x60] sm:$0xff]
        %v2064 = vld [vmem:[%s2050 + $0x68] sm:$0xff]
        %v2065 = vld [vmem:[%s2050 + $0x70] sm:$0xff]
        %v2066 = vld [vmem:[%s2050 + $0x78] sm:$0xff]
        %v2067 = vld [vmem:[%s2050 + $0x80] sm:$0xff]
        %v2068 = vld [vmem:[%s2050 + $0x88] sm:$0xff]
        %v2069 = vld [vmem:[%s2050 + $0x90] sm:$0xff]
        %v2070 = vld [vmem:[%s2050 + $0x98] sm:$0xff]
        %v2071 = vld [vmem:[%s2050 + $0xa0] sm:$0xff]
        %v2072 = vld [vmem:[%s2050 + $0xa8] sm:$0xff]
        %v2073 = vld [vmem:[%s2050 + $0xb0] sm:$0xff]
        %v2074 = vld [vmem:[%s2050 + $0xb8] sm:$0xff]
        %v2075 = vld [vmem:[%s2050 + $0xc0] sm:$0xff]
        %v2076 = vld [vmem:[%s2050 + $0xc8] sm:$0xff]
        %v2077 = vld [vmem:[%s2050 + $0xd0] sm:$0xff]
        %v2078 = vld [vmem:[%s2050 + $0xd8] sm:$0xff]
        %v2079 = vld [vmem:[%s2050 + $0xe0] sm:$0xff]
        %v2080 = vld [vmem:[%s2050 + $0xe8] sm:$0xff]
        %v2081 = vld [vmem:[%s2050 + $0xf0] sm:$0xff]
        %v2082 = vld [vmem:[%s2050 + $0xf8] sm:$0xff]
        %v2083 = vld [vmem:[%s2050 + $0x100] sm:$0xff]
        %v2084 = vld [vmem:[%s2050 + $0x108] sm:$0xff]
        %v2085 = vld [vmem:[%s2050 + $0x110] sm:$0xff]
        %v2086 = vld [vmem:[%s2050 + $0x118] sm:$0xff]
        %v2087 = vld [vmem:[%s2050 + $0x120] sm:$0xff]
        %v2088 = vld [vmem:[%s2050 + $0x128] sm:$0xff]
        %v2089 = vld [vmem:[%s2050 + $0x130] sm:$0xff]
        %v2090 = vld [vmem:[%s2050 + $0x138] sm:$0xff]
        %v2091 = vld [vmem:[%s2050 + $0x140] sm:$0xff]
        %v2092 = vld [vmem:[%s2050 + $0x148] sm:$0xff]
        %v2093 = vld [vmem:[%s2050 + $0x150] sm:$0xff]
        %v2094 = vld [vmem:[%s2050 + $0x158] sm:$0xff]
        %v2095 = vld [vmem:[%s2050 + $0x160] sm:$0xff]
        %v2096 = vld [vmem:[%s2050 + $0x168] sm:$0xff]
        %v2097 = vld [vmem:[%s2050 + $0x170] sm:$0xff]
        %v2098 = vld [vmem:[%s2050 + $0x178] sm:$0xff]
        %v2099 = vld [vmem:[%s2050 + $0x180] sm:$0xff]
        %v2100 = vld [vmem:[%s2050 + $0x188] sm:$0xff]
        %v2101 = vld [vmem:[%s2050 + $0x190] sm:$0xff]
        %v2102 = vld [vmem:[%s2050 + $0x198] sm:$0xff]
        %v2103 = vld [vmem:[%s2050 + $0x1a0] sm:$0xff]
        %v2104 = vld [vmem:[%s2050 + $0x1a8] sm:$0xff]
        %v2105 = vld [vmem:[%s2050 + $0x1b0] sm:$0xff]
        %v2106 = vld [vmem:[%s2050 + $0x1b8] sm:$0xff]
        %v2107 = vld [vmem:[%s2050 + $0x1c0] sm:$0xff]
        %v2108 = vld [vmem:[%s2050 + $0x1c8] sm:$0xff]
        %v2109 = vld [vmem:[%s2050 + $0x1d0] sm:$0xff]
        %v2110 = vld [vmem:[%s2050 + $0x1d8] sm:$0xff]
        %v2111 = vld [vmem:[%s2050 + $0x1e0] sm:$0xff]
        %v2112 = vld [vmem:[%s2050 + $0x1e8] sm:$0xff]
        %v2113 = vld [vmem:[%s2050 + $0x1f0] sm:$0xff]
        %v2114 = vld [vmem:[%s2050 + $0x1f8] sm:$0xff]
        %2115 = vmatprep.subr.mxu0 %v2052
        %2116 = vmatpush1.msra.mxu0 %v2051
        %2117 = vmatprep.subr.mxu0 %v2054
        %2118 = vmatpush1.msra.mxu0 %v2053
        %2119 = vmatprep.subr.mxu0 %v2056
        %2120 = vmatpush1.msra.mxu0 %v2055
        %2121 = vmatprep.subr.mxu0 %v2058
        %2122 = vmatpush1.msra.mxu0 %v2057
        %2123 = vmatprep.subr.mxu0 %v2060
        %2124 = vmatpush1.msra.mxu0 %v2059
        %2125 = vmatprep.subr.mxu0 %v2062
        %2126 = vmatpush1.msra.mxu0 %v2061
        %2127 = vmatprep.subr.mxu0 %v2064
        %2128 = vmatpush1.msra.mxu0 %v2063
        %2129 = vmatprep.subr.mxu0 %v2066
        %2130 = vmatpush1.msra.mxu0 %v2065
        %2131 = vmatprep.subr.mxu0 %v2068
        %2132 = vmatpush1.msra.mxu0 %v2067
        %2133 = vmatprep.subr.mxu0 %v2070
        %2134 = vmatpush1.msra.mxu0 %v2069
        %2135 = vmatprep.subr.mxu0 %v2072
        %2136 = vmatpush1.msra.mxu0 %v2071
        %2137 = vmatprep.subr.mxu0 %v2074
        %2138 = vmatpush1.msra.mxu0 %v2073
        %2139 = vmatprep.subr.mxu0 %v2076
        %2140 = vmatpush1.msra.mxu0 %v2075
        %2141 = vmatprep.subr.mxu0 %v2078
        %2142 = vmatpush1.msra.mxu0 %v2077
        %2143 = vmatprep.subr.mxu0 %v2080
        %2144 = vmatpush1.msra.mxu0 %v2079
        %2145 = vmatprep.subr.mxu0 %v2082
        %2146 = vmatpush1.msra.mxu0 %v2081
        %2147 = vmatprep.subr.mxu0 %v2084
        %2148 = vmatpush1.msra.mxu0 %v2083
        %2149 = vmatprep.subr.mxu0 %v2086
        %2150 = vmatpush1.msra.mxu0 %v2085
        %2151 = vmatprep.subr.mxu0 %v2088
        %2152 = vmatpush1.msra.mxu0 %v2087
        %2153 = vmatprep.subr.mxu0 %v2090
        %2154 = vmatpush1.msra.mxu0 %v2089
        %2155 = vmatprep.subr.mxu0 %v2092
        %2156 = vmatpush1.msra.mxu0 %v2091
        %2157 = vmatprep.subr.mxu0 %v2094
        %2158 = vmatpush1.msra.mxu0 %v2093
        %2159 = vmatprep.subr.mxu0 %v2096
        %2160 = vmatpush1.msra.mxu0 %v2095
        %2161 = vmatprep.subr.mxu0 %v2098
        %2162 = vmatpush1.msra.mxu0 %v2097
        %2163 = vmatprep.subr.mxu0 %v2100
        %2164 = vmatpush1.msra.mxu0 %v2099
        %2165 = vmatprep.subr.mxu0 %v2102
        %2166 = vmatpush1.msra.mxu0 %v2101
        %2167 = vmatprep.subr.mxu0 %v2104
        %2168 = vmatpush1.msra.mxu0 %v2103
        %2169 = vmatprep.subr.mxu0 %v2106
        %2170 = vmatpush1.msra.mxu0 %v2105
        %2171 = vmatprep.subr.mxu0 %v2108
        %2172 = vmatpush1.msra.mxu0 %v2107
        %2173 = vmatprep.subr.mxu0 %v2110
        %2174 = vmatpush1.msra.mxu0 %v2109
        %2175 = vmatprep.subr.mxu0 %v2112
        %2176 = vmatpush1.msra.mxu0 %v2111
        %2177 = vmatprep.subr.mxu0 %v2114
        %2178 = vmatpush1.msra.mxu0 %v2113
        %2179 = vmatprep.mubr.f32.mxu0 %v576
        %2180 = vmatmul.mubr.f32.gmra.mrb[0].mxu0 %v510
        %v2181 = vpop.f32.mrb[0].mxu0
        %v2182 = vadd.f32 0.0, %v2181
        %v2183 = vpop.f32.mrb[0].mxu0
        %v2184 = vadd.f32 0.0, %v2183
        %2185 = vdwg.mxu0
        %s2186 = scalar_lea.vmem %s2, 56
        %v2187 = vld [vmem:[%s2186] sm:$0xff]
        %v2189 = vsel %vm788, %v2187, 0
        %v2192 = vsel %vm792, %v2182, 0
        %v2195 = vsel %vm792, %v2184, 0
        %2197 = vmatprep.subr.mxu0 %v2195
        %2198 = vmatpush1.msra.mxu0 %v2192
        %2199 = vmatprep.subr.mxu0 0.0
        %2200 = vmatpush1.msra.mxu0 0.0
        %2201 = vmatprep.subr.mxu0 0.0
        %2202 = vmatpush1.msra.mxu0 0.0
        %2203 = vmatprep.subr.mxu0 0.0
        %2204 = vmatpush1.msra.mxu0 0.0
        %2205 = vmatprep.subr.mxu0 0.0
        %2206 = vmatpush1.msra.mxu0 0.0
        %2207 = vmatprep.subr.mxu0 0.0
        %2208 = vmatpush1.msra.mxu0 0.0
        %2209 = vmatprep.subr.mxu0 0.0
        %2210 = vmatpush1.msra.mxu0 0.0
        %2211 = vmatprep.subr.mxu0 0.0
        %2212 = vmatpush1.msra.mxu0 0.0
        %2213 = vmatprep.subr.mxu0 0.0
        %2214 = vmatpush1.msra.mxu0 0.0
        %2215 = vmatprep.subr.mxu0 0.0
        %2216 = vmatpush1.msra.mxu0 0.0
        %2217 = vmatprep.subr.mxu0 0.0
        %2218 = vmatpush1.msra.mxu0 0.0
        %2219 = vmatprep.subr.mxu0 0.0
        %2220 = vmatpush1.msra.mxu0 0.0
        %2221 = vmatprep.subr.mxu0 0.0
        %2222 = vmatpush1.msra.mxu0 0.0
        %2223 = vmatprep.subr.mxu0 0.0
        %2224 = vmatpush1.msra.mxu0 0.0
        %2225 = vmatprep.subr.mxu0 0.0
        %2226 = vmatpush1.msra.mxu0 0.0
        %2227 = vmatprep.subr.mxu0 0.0
        %2228 = vmatpush1.msra.mxu0 0.0
        %2229 = vmatprep.subr.mxu0 0.0
        %2230 = vmatpush1.msra.mxu0 0.0
        %2231 = vmatprep.subr.mxu0 0.0
        %2232 = vmatpush1.msra.mxu0 0.0
        %2233 = vmatprep.subr.mxu0 0.0
        %2234 = vmatpush1.msra.mxu0 0.0
        %2235 = vmatprep.subr.mxu0 0.0
        %2236 = vmatpush1.msra.mxu0 0.0
        %2237 = vmatprep.subr.mxu0 0.0
        %2238 = vmatpush1.msra.mxu0 0.0
        %2239 = vmatprep.subr.mxu0 0.0
        %2240 = vmatpush1.msra.mxu0 0.0
        %2241 = vmatprep.subr.mxu0 0.0
        %2242 = vmatpush1.msra.mxu0 0.0
        %2243 = vmatprep.subr.mxu0 0.0
        %2244 = vmatpush1.msra.mxu0 0.0
        %2245 = vmatprep.subr.mxu0 0.0
        %2246 = vmatpush1.msra.mxu0 0.0
        %2247 = vmatprep.subr.mxu0 0.0
        %2248 = vmatpush1.msra.mxu0 0.0
        %2249 = vmatprep.subr.mxu0 0.0
        %2250 = vmatpush1.msra.mxu0 0.0
        %2251 = vmatprep.subr.mxu0 0.0
        %2252 = vmatpush1.msra.mxu0 0.0
        %2253 = vmatprep.subr.mxu0 0.0
        %2254 = vmatpush1.msra.mxu0 0.0
        %2255 = vmatprep.subr.mxu0 0.0
        %2256 = vmatpush1.msra.mxu0 0.0
        %2257 = vmatprep.subr.mxu0 0.0
        %2258 = vmatpush1.msra.mxu0 0.0
        %2259 = vmatprep.subr.mxu0 0.0
        %2260 = vmatpush1.msra.mxu0 0.0
        %2261 = vmatprep.mubr.f32.mxu0 0.0
        %2262 = vmatmul.mubr.f32.gmra.mrb[0].mxu0 %v2189
        %v2263 = vpop.f32.mrb[0].mxu0
        %v2264 = vadd.f32 0.0, %v2263
        %v2265 = vpop.f32.mrb[0].mxu0
        %v2266 = vadd.f32 0.0, %v2265
        %2267 = vdwg.mxu0
        %v2268 = vadd.f32 %v2048, %v2264
        %v2269 = vadd.f32 %v2049, %v2266
        %s2270 = scalar_lea.vmem [#allocation5], 4096
        %v2271 = vld [vmem:[%s2270] sm:$0xff]
        %v2272 = vld [vmem:[%s2270 + $0x8] sm:$0xff]
        %v2273 = vld [vmem:[%s2270 + $0x10] sm:$0xff]
        %v2274 = vld [vmem:[%s2270 + $0x18] sm:$0xff]
        %v2275 = vld [vmem:[%s2270 + $0x20] sm:$0xff]
        %v2276 = vld [vmem:[%s2270 + $0x28] sm:$0xff]
        %v2277 = vld [vmem:[%s2270 + $0x30] sm:$0xff]
        %v2278 = vld [vmem:[%s2270 + $0x38] sm:$0xff]
        %v2279 = vld [vmem:[%s2270 + $0x40] sm:$0xff]
        %v2280 = vld [vmem:[%s2270 + $0x48] sm:$0xff]
        %v2281 = vld [vmem:[%s2270 + $0x50] sm:$0xff]
        %v2282 = vld [vmem:[%s2270 + $0x58] sm:$0xff]
        %v2283 = vld [vmem:[%s2270 + $0x60] sm:$0xff]
        %v2284 = vld [vmem:[%s2270 + $0x68] sm:$0xff]
        %v2285 = vld [vmem:[%s2270 + $0x70] sm:$0xff]
        %v2286 = vld [vmem:[%s2270 + $0x78] sm:$0xff]
        %v2287 = vld [vmem:[%s2270 + $0x80] sm:$0xff]
        %v2288 = vld [vmem:[%s2270 + $0x88] sm:$0xff]
        %v2289 = vld [vmem:[%s2270 + $0x90] sm:$0xff]
        %v2290 = vld [vmem:[%s2270 + $0x98] sm:$0xff]
        %v2291 = vld [vmem:[%s2270 + $0xa0] sm:$0xff]
        %v2292 = vld [vmem:[%s2270 + $0xa8] sm:$0xff]
        %v2293 = vld [vmem:[%s2270 + $0xb0] sm:$0xff]
        %v2294 = vld [vmem:[%s2270 + $0xb8] sm:$0xff]
        %v2295 = vld [vmem:[%s2270 + $0xc0] sm:$0xff]
        %v2296 = vld [vmem:[%s2270 + $0xc8] sm:$0xff]
        %v2297 = vld [vmem:[%s2270 + $0xd0] sm:$0xff]
        %v2298 = vld [vmem:[%s2270 + $0xd8] sm:$0xff]
        %v2299 = vld [vmem:[%s2270 + $0xe0] sm:$0xff]
        %v2300 = vld [vmem:[%s2270 + $0xe8] sm:$0xff]
        %v2301 = vld [vmem:[%s2270 + $0xf0] sm:$0xff]
        %v2302 = vld [vmem:[%s2270 + $0xf8] sm:$0xff]
        %v2303 = vld [vmem:[%s2270 + $0x100] sm:$0xff]
        %v2304 = vld [vmem:[%s2270 + $0x108] sm:$0xff]
        %v2305 = vld [vmem:[%s2270 + $0x110] sm:$0xff]
        %v2306 = vld [vmem:[%s2270 + $0x118] sm:$0xff]
        %v2307 = vld [vmem:[%s2270 + $0x120] sm:$0xff]
        %v2308 = vld [vmem:[%s2270 + $0x128] sm:$0xff]
        %v2309 = vld [vmem:[%s2270 + $0x130] sm:$0xff]
        %v2310 = vld [vmem:[%s2270 + $0x138] sm:$0xff]
        %v2311 = vld [vmem:[%s2270 + $0x140] sm:$0xff]
        %v2312 = vld [vmem:[%s2270 + $0x148] sm:$0xff]
        %v2313 = vld [vmem:[%s2270 + $0x150] sm:$0xff]
        %v2314 = vld [vmem:[%s2270 + $0x158] sm:$0xff]
        %v2315 = vld [vmem:[%s2270 + $0x160] sm:$0xff]
        %v2316 = vld [vmem:[%s2270 + $0x168] sm:$0xff]
        %v2317 = vld [vmem:[%s2270 + $0x170] sm:$0xff]
        %v2318 = vld [vmem:[%s2270 + $0x178] sm:$0xff]
        %v2319 = vld [vmem:[%s2270 + $0x180] sm:$0xff]
        %v2320 = vld [vmem:[%s2270 + $0x188] sm:$0xff]
        %v2321 = vld [vmem:[%s2270 + $0x190] sm:$0xff]
        %v2322 = vld [vmem:[%s2270 + $0x198] sm:$0xff]
        %v2323 = vld [vmem:[%s2270 + $0x1a0] sm:$0xff]
        %v2324 = vld [vmem:[%s2270 + $0x1a8] sm:$0xff]
        %v2325 = vld [vmem:[%s2270 + $0x1b0] sm:$0xff]
        %v2326 = vld [vmem:[%s2270 + $0x1b8] sm:$0xff]
        %v2327 = vld [vmem:[%s2270 + $0x1c0] sm:$0xff]
        %v2328 = vld [vmem:[%s2270 + $0x1c8] sm:$0xff]
        %v2329 = vld [vmem:[%s2270 + $0x1d0] sm:$0xff]
        %v2330 = vld [vmem:[%s2270 + $0x1d8] sm:$0xff]
        %v2331 = vld [vmem:[%s2270 + $0x1e0] sm:$0xff]
        %v2332 = vld [vmem:[%s2270 + $0x1e8] sm:$0xff]
        %v2333 = vld [vmem:[%s2270 + $0x1f0] sm:$0xff]
        %v2334 = vld [vmem:[%s2270 + $0x1f8] sm:$0xff]
        %2335 = vmatprep.subr.mxu0 %v2272
        %2336 = vmatpush1.msra.mxu0 %v2271
        %2337 = vmatprep.subr.mxu0 %v2274
        %2338 = vmatpush1.msra.mxu0 %v2273
        %2339 = vmatprep.subr.mxu0 %v2276
        %2340 = vmatpush1.msra.mxu0 %v2275
        %2341 = vmatprep.subr.mxu0 %v2278
        %2342 = vmatpush1.msra.mxu0 %v2277
        %2343 = vmatprep.subr.mxu0 %v2280
        %2344 = vmatpush1.msra.mxu0 %v2279
        %2345 = vmatprep.subr.mxu0 %v2282
        %2346 = vmatpush1.msra.mxu0 %v2281
        %2347 = vmatprep.subr.mxu0 %v2284
        %2348 = vmatpush1.msra.mxu0 %v2283
        %2349 = vmatprep.subr.mxu0 %v2286
        %2350 = vmatpush1.msra.mxu0 %v2285
        %2351 = vmatprep.subr.mxu0 %v2288
        %2352 = vmatpush1.msra.mxu0 %v2287
        %2353 = vmatprep.subr.mxu0 %v2290
        %2354 = vmatpush1.msra.mxu0 %v2289
        %2355 = vmatprep.subr.mxu0 %v2292
        %2356 = vmatpush1.msra.mxu0 %v2291
        %2357 = vmatprep.subr.mxu0 %v2294
        %2358 = vmatpush1.msra.mxu0 %v2293
        %2359 = vmatprep.subr.mxu0 %v2296
        %2360 = vmatpush1.msra.mxu0 %v2295
        %2361 = vmatprep.subr.mxu0 %v2298
        %2362 = vmatpush1.msra.mxu0 %v2297
        %2363 = vmatprep.subr.mxu0 %v2300
        %2364 = vmatpush1.msra.mxu0 %v2299
        %2365 = vmatprep.subr.mxu0 %v2302
        %2366 = vmatpush1.msra.mxu0 %v2301
        %2367 = vmatprep.subr.mxu0 %v2304
        %2368 = vmatpush1.msra.mxu0 %v2303
        %2369 = vmatprep.subr.mxu0 %v2306
        %2370 = vmatpush1.msra.mxu0 %v2305
        %2371 = vmatprep.subr.mxu0 %v2308
        %2372 = vmatpush1.msra.mxu0 %v2307
        %2373 = vmatprep.subr.mxu0 %v2310
        %2374 = vmatpush1.msra.mxu0 %v2309
        %2375 = vmatprep.subr.mxu0 %v2312
        %2376 = vmatpush1.msra.mxu0 %v2311
        %2377 = vmatprep.subr.mxu0 %v2314
        %2378 = vmatpush1.msra.mxu0 %v2313
        %2379 = vmatprep.subr.mxu0 %v2316
        %2380 = vmatpush1.msra.mxu0 %v2315
        %2381 = vmatprep.subr.mxu0 %v2318
        %2382 = vmatpush1.msra.mxu0 %v2317
        %2383 = vmatprep.subr.mxu0 %v2320
        %2384 = vmatpush1.msra.mxu0 %v2319
        %2385 = vmatprep.subr.mxu0 %v2322
        %2386 = vmatpush1.msra.mxu0 %v2321
        %2387 = vmatprep.subr.mxu0 %v2324
        %2388 = vmatpush1.msra.mxu0 %v2323
        %2389 = vmatprep.subr.mxu0 %v2326
        %2390 = vmatpush1.msra.mxu0 %v2325
        %2391 = vmatprep.subr.mxu0 %v2328
        %2392 = vmatpush1.msra.mxu0 %v2327
        %2393 = vmatprep.subr.mxu0 %v2330
        %2394 = vmatpush1.msra.mxu0 %v2329
        %2395 = vmatprep.subr.mxu0 %v2332
        %2396 = vmatpush1.msra.mxu0 %v2331
        %2397 = vmatprep.subr.mxu0 %v2334
        %2398 = vmatpush1.msra.mxu0 %v2333
        %2399 = vmatprep.mubr.f32.mxu0 %v576
        %2400 = vmatmul.mubr.f32.gmra.mrb[0].mxu0 %v510
        %v2401 = vpop.f32.mrb[0].mxu0
        %v2402 = vadd.f32 0.0, %v2401
        %v2403 = vpop.f32.mrb[0].mxu0
        %v2404 = vadd.f32 0.0, %v2403
        %2405 = vdwg.mxu0
        %s2406 = scalar_lea.vmem %s2, 64
        %v2407 = vld [vmem:[%s2406] sm:$0xff]
        %v2409 = vsel %vm788, %v2407, 0
        %v2412 = vsel %vm792, %v2402, 0
        %v2415 = vsel %vm792, %v2404, 0
        %2417 = vmatprep.subr.mxu0 %v2415
        %2418 = vmatpush1.msra.mxu0 %v2412
        %2419 = vmatprep.subr.mxu0 0.0
        %2420 = vmatpush1.msra.mxu0 0.0
        %2421 = vmatprep.subr.mxu0 0.0
        %2422 = vmatpush1.msra.mxu0 0.0
        %2423 = vmatprep.subr.mxu0 0.0
        %2424 = vmatpush1.msra.mxu0 0.0
        %2425 = vmatprep.subr.mxu0 0.0
        %2426 = vmatpush1.msra.mxu0 0.0
        %2427 = vmatprep.subr.mxu0 0.0
        %2428 = vmatpush1.msra.mxu0 0.0
        %2429 = vmatprep.subr.mxu0 0.0
        %2430 = vmatpush1.msra.mxu0 0.0
        %2431 = vmatprep.subr.mxu0 0.0
        %2432 = vmatpush1.msra.mxu0 0.0
        %2433 = vmatprep.subr.mxu0 0.0
        %2434 = vmatpush1.msra.mxu0 0.0
        %2435 = vmatprep.subr.mxu0 0.0
        %2436 = vmatpush1.msra.mxu0 0.0
        %2437 = vmatprep.subr.mxu0 0.0
        %2438 = vmatpush1.msra.mxu0 0.0
        %2439 = vmatprep.subr.mxu0 0.0
        %2440 = vmatpush1.msra.mxu0 0.0
        %2441 = vmatprep.subr.mxu0 0.0
        %2442 = vmatpush1.msra.mxu0 0.0
        %2443 = vmatprep.subr.mxu0 0.0
        %2444 = vmatpush1.msra.mxu0 0.0
        %2445 = vmatprep.subr.mxu0 0.0
        %2446 = vmatpush1.msra.mxu0 0.0
        %2447 = vmatprep.subr.mxu0 0.0
        %2448 = vmatpush1.msra.mxu0 0.0
        %2449 = vmatprep.subr.mxu0 0.0
        %2450 = vmatpush1.msra.mxu0 0.0
        %2451 = vmatprep.subr.mxu0 0.0
        %2452 = vmatpush1.msra.mxu0 0.0
        %2453 = vmatprep.subr.mxu0 0.0
        %2454 = vmatpush1.msra.mxu0 0.0
        %2455 = vmatprep.subr.mxu0 0.0
        %2456 = vmatpush1.msra.mxu0 0.0
        %2457 = vmatprep.subr.mxu0 0.0
        %2458 = vmatpush1.msra.mxu0 0.0
        %2459 = vmatprep.subr.mxu0 0.0
        %2460 = vmatpush1.msra.mxu0 0.0
        %2461 = vmatprep.subr.mxu0 0.0
        %2462 = vmatpush1.msra.mxu0 0.0
        %2463 = vmatprep.subr.mxu0 0.0
        %2464 = vmatpush1.msra.mxu0 0.0
        %2465 = vmatprep.subr.mxu0 0.0
        %2466 = vmatpush1.msra.mxu0 0.0
        %2467 = vmatprep.subr.mxu0 0.0
        %2468 = vmatpush1.msra.mxu0 0.0
        %2469 = vmatprep.subr.mxu0 0.0
        %2470 = vmatpush1.msra.mxu0 0.0
        %2471 = vmatprep.subr.mxu0 0.0
        %2472 = vmatpush1.msra.mxu0 0.0
        %2473 = vmatprep.subr.mxu0 0.0
        %2474 = vmatpush1.msra.mxu0 0.0
        %2475 = vmatprep.subr.mxu0 0.0
        %2476 = vmatpush1.msra.mxu0 0.0
        %2477 = vmatprep.subr.mxu0 0.0
        %2478 = vmatpush1.msra.mxu0 0.0
        %2479 = vmatprep.subr.mxu0 0.0
        %2480 = vmatpush1.msra.mxu0 0.0
        %2481 = vmatprep.mubr.f32.mxu0 0.0
        %2482 = vmatmul.mubr.f32.gmra.mrb[0].mxu0 %v2409
        %v2483 = vpop.f32.mrb[0].mxu0
        %v2484 = vadd.f32 0.0, %v2483
        %v2485 = vpop.f32.mrb[0].mxu0
        %v2486 = vadd.f32 0.0, %v2485
        %2487 = vdwg.mxu0
        %v2488 = vadd.f32 %v2268, %v2484
        %v2489 = vadd.f32 %v2269, %v2486
        %v2490 = vadd.f32 %v2488, %v2489
        %2491 = vadd.xlane.f32.xlu0 %v2490
        %v2492 = vpop.xlane.xlu0 %2491
        %v2493 = vrcp.pop 256.0
        %v2494 = vmul.f32 %v2492, %v2493
        %v2495 = vsub.f32 %v2488, %v2494
        %v2496 = vsub.f32 %v2489, %v2494
        %v2497 = vmul.f32 %v2495, %v2495
        %v2498 = vmul.f32 %v2496, %v2496
        %v2499 = vadd.f32 %v2497, %v2498
        %2500 = vadd.xlane.f32.xlu0 %v2499
        %v2501 = vpop.xlane.xlu0 %2500
        %v2502 = vmul.f32 %v2501, %v2493
        %v2503 = vadd.f32 %v2502, 1e-05
        %v2504 = vrsqrt.pop %v2503
        %v2505 = vmul.f32 %v2495, %v2504
        %v2506 = vmul.f32 %v2496, %v2504
        %s2507 = sld [smem:[#allocation2]]
        %vm2508 = vcmp.ge.f32.partialorder %v2505, 0.0
        %vm2509 = vcmp.ge.f32.partialorder %v2506, 0.0
        %v2510 = vstv %s2507
        %v2511 = vmul.f32 %v2510, %v2505
        %v2512 = vmul.f32 %v2510, %v2506
        %v2513 = vsel %vm2508, %v2505, %v2511
        %v2514 = vsel %vm2509, %v2506, %v2512
        %2515 = vst [vmem:[%s499] sm:$0xff] %v2513
        %2516 = vst [vmem:[%s499 + $0x8] sm:$0xff] %v2514
        %v2517 = vld [vmem:[#allocation6] sm:$0xff]
        %v2518 = vld [vmem:[#allocation6 + $0x8] sm:$0xff]
        %v2519 = vld [vmem:[#allocation6 + $0x10] sm:$0xff]
        %v2520 = vld [vmem:[#allocation6 + $0x18] sm:$0xff]
        %v2521 = vld [vmem:[#allocation6 + $0x20] sm:$0xff]
        %v2522 = vld [vmem:[#allocation6 + $0x28] sm:$0xff]
        %v2523 = vld [vmem:[#allocation6 + $0x30] sm:$0xff]
        %v2524 = vld [vmem:[#allocation6 + $0x38] sm:$0xff]
        %v2525 = vld [vmem:[#allocation6 + $0x40] sm:$0xff]
        %v2526 = vld [vmem:[#allocation6 + $0x48] sm:$0xff]
        %v2527 = vld [vmem:[#allocation6 + $0x50] sm:$0xff]
        %v2528 = vld [vmem:[#allocation6 + $0x58] sm:$0xff]
        %v2529 = vld [vmem:[#allocation6 + $0x60] sm:$0xff]
        %v2530 = vld [vmem:[#allocation6 + $0x68] sm:$0xff]
        %v2531 = vld [vmem:[#allocation6 + $0x70] sm:$0xff]
        %v2532 = vld [vmem:[#allocation6 + $0x78] sm:$0xff]
        %v2533 = vld [vmem:[#allocation6 + $0x80] sm:$0xff]
        %v2534 = vld [vmem:[#allocation6 + $0x88] sm:$0xff]
        %v2535 = vld [vmem:[#allocation6 + $0x90] sm:$0xff]
        %v2536 = vld [vmem:[#allocation6 + $0x98] sm:$0xff]
        %v2537 = vld [vmem:[#allocation6 + $0xa0] sm:$0xff]
        %v2538 = vld [vmem:[#allocation6 + $0xa8] sm:$0xff]
        %v2539 = vld [vmem:[#allocation6 + $0xb0] sm:$0xff]
        %v2540 = vld [vmem:[#allocation6 + $0xb8] sm:$0xff]
        %v2541 = vld [vmem:[#allocation6 + $0xc0] sm:$0xff]
        %v2542 = vld [vmem:[#allocation6 + $0xc8] sm:$0xff]
        %v2543 = vld [vmem:[#allocation6 + $0xd0] sm:$0xff]
        %v2544 = vld [vmem:[#allocation6 + $0xd8] sm:$0xff]
        %v2545 = vld [vmem:[#allocation6 + $0xe0] sm:$0xff]
        %v2546 = vld [vmem:[#allocation6 + $0xe8] sm:$0xff]
        %v2547 = vld [vmem:[#allocation6 + $0xf0] sm:$0xff]
        %v2548 = vld [vmem:[#allocation6 + $0xf8] sm:$0xff]
        %2549 = vmatprep.subr.mxu0 0.0
        %2550 = vmatpush1.msra.mxu0 %v2517
        %2551 = vmatprep.subr.mxu0 0.0
        %2552 = vmatpush1.msra.mxu0 %v2518
        %2553 = vmatprep.subr.mxu0 0.0
        %2554 = vmatpush1.msra.mxu0 %v2519
        %2555 = vmatprep.subr.mxu0 0.0
        %2556 = vmatpush1.msra.mxu0 %v2520
        %2557 = vmatprep.subr.mxu0 0.0
        %2558 = vmatpush1.msra.mxu0 %v2521
        %2559 = vmatprep.subr.mxu0 0.0
        %2560 = vmatpush1.msra.mxu0 %v2522
        %2561 = vmatprep.subr.mxu0 0.0
        %2562 = vmatpush1.msra.mxu0 %v2523
        %2563 = vmatprep.subr.mxu0 0.0
        %2564 = vmatpush1.msra.mxu0 %v2524
        %2565 = vmatprep.subr.mxu0 0.0
        %2566 = vmatpush1.msra.mxu0 %v2525
        %2567 = vmatprep.subr.mxu0 0.0
        %2568 = vmatpush1.msra.mxu0 %v2526
        %2569 = vmatprep.subr.mxu0 0.0
        %2570 = vmatpush1.msra.mxu0 %v2527
        %2571 = vmatprep.subr.mxu0 0.0
        %2572 = vmatpush1.msra.mxu0 %v2528
        %2573 = vmatprep.subr.mxu0 0.0
        %2574 = vmatpush1.msra.mxu0 %v2529
        %2575 = vmatprep.subr.mxu0 0.0
        %2576 = vmatpush1.msra.mxu0 %v2530
        %2577 = vmatprep.subr.mxu0 0.0
        %2578 = vmatpush1.msra.mxu0 %v2531
        %2579 = vmatprep.subr.mxu0 0.0
        %2580 = vmatpush1.msra.mxu0 %v2532
        %2581 = vmatprep.subr.mxu0 0.0
        %2582 = vmatpush1.msra.mxu0 %v2533
        %2583 = vmatprep.subr.mxu0 0.0
        %2584 = vmatpush1.msra.mxu0 %v2534
        %2585 = vmatprep.subr.mxu0 0.0
        %2586 = vmatpush1.msra.mxu0 %v2535
        %2587 = vmatprep.subr.mxu0 0.0
        %2588 = vmatpush1.msra.mxu0 %v2536
        %2589 = vmatprep.subr.mxu0 0.0
        %2590 = vmatpush1.msra.mxu0 %v2537
        %2591 = vmatprep.subr.mxu0 0.0
        %2592 = vmatpush1.msra.mxu0 %v2538
        %2593 = vmatprep.subr.mxu0 0.0
        %2594 = vmatpush1.msra.mxu0 %v2539
        %2595 = vmatprep.subr.mxu0 0.0
        %2596 = vmatpush1.msra.mxu0 %v2540
        %2597 = vmatprep.subr.mxu0 0.0
        %2598 = vmatpush1.msra.mxu0 %v2541
        %2599 = vmatprep.subr.mxu0 0.0
        %2600 = vmatpush1.msra.mxu0 %v2542
        %2601 = vmatprep.subr.mxu0 0.0
        %2602 = vmatpush1.msra.mxu0 %v2543
        %2603 = vmatprep.subr.mxu0 0.0
        %2604 = vmatpush1.msra.mxu0 %v2544
        %2605 = vmatprep.subr.mxu0 0.0
        %2606 = vmatpush1.msra.mxu0 %v2545
        %2607 = vmatprep.subr.mxu0 0.0
        %2608 = vmatpush1.msra.mxu0 %v2546
        %2609 = vmatprep.subr.mxu0 0.0
        %2610 = vmatpush1.msra.mxu0 %v2547
        %2611 = vmatprep.subr.mxu0 0.0
        %2612 = vmatpush1.msra.mxu0 %v2548
        %2613 = vmatprep.mubr.f32.mxu0 %v2514
        %2614 = vmatmul.mubr.f32.gmra.mrb[0].mxu0 %v2513
        %v2615 = vpop.f32.mrb[0].mxu0
        %v2616 = vadd.f32 0.0, %v2615
        %v2617 = vpop.f32.mrb[0].mxu0
        %2618 = vdwg.mxu0
        %v2619 = vld [vmem:[%s3] sm:$0xff]
        %v2620 = vld [vmem:[%s3 + $0x8] sm:$0xff]
        %s2621 = scalar_lea.vmem [#allocation6], 256
        %v2622 = vld [vmem:[%s2621] sm:$0xff]
        %v2623 = vld [vmem:[%s2621 + $0x8] sm:$0xff]
        %v2624 = vld [vmem:[%s2621 + $0x10] sm:$0xff]
        %v2625 = vld [vmem:[%s2621 + $0x18] sm:$0xff]
        %v2626 = vld [vmem:[%s2621 + $0x20] sm:$0xff]
        %v2627 = vld [vmem:[%s2621 + $0x28] sm:$0xff]
        %v2628 = vld [vmem:[%s2621 + $0x30] sm:$0xff]
        %v2629 = vld [vmem:[%s2621 + $0x38] sm:$0xff]
        %v2630 = vld [vmem:[%s2621 + $0x40] sm:$0xff]
        %v2631 = vld [vmem:[%s2621 + $0x48] sm:$0xff]
        %v2632 = vld [vmem:[%s2621 + $0x50] sm:$0xff]
        %v2633 = vld [vmem:[%s2621 + $0x58] sm:$0xff]
        %v2634 = vld [vmem:[%s2621 + $0x60] sm:$0xff]
        %v2635 = vld [vmem:[%s2621 + $0x68] sm:$0xff]
        %v2636 = vld [vmem:[%s2621 + $0x70] sm:$0xff]
        %v2637 = vld [vmem:[%s2621 + $0x78] sm:$0xff]
        %v2638 = vld [vmem:[%s2621 + $0x80] sm:$0xff]
        %v2639 = vld [vmem:[%s2621 + $0x88] sm:$0xff]
        %v2640 = vld [vmem:[%s2621 + $0x90] sm:$0xff]
        %v2641 = vld [vmem:[%s2621 + $0x98] sm:$0xff]
        %v2642 = vld [vmem:[%s2621 + $0xa0] sm:$0xff]
        %v2643 = vld [vmem:[%s2621 + $0xa8] sm:$0xff]
        %v2644 = vld [vmem:[%s2621 + $0xb0] sm:$0xff]
        %v2645 = vld [vmem:[%s2621 + $0xb8] sm:$0xff]
        %v2646 = vld [vmem:[%s2621 + $0xc0] sm:$0xff]
        %v2647 = vld [vmem:[%s2621 + $0xc8] sm:$0xff]
        %v2648 = vld [vmem:[%s2621 + $0xd0] sm:$0xff]
        %v2649 = vld [vmem:[%s2621 + $0xd8] sm:$0xff]
        %v2650 = vld [vmem:[%s2621 + $0xe0] sm:$0xff]
        %v2651 = vld [vmem:[%s2621 + $0xe8] sm:$0xff]
        %v2652 = vld [vmem:[%s2621 + $0xf0] sm:$0xff]
        %v2653 = vld [vmem:[%s2621 + $0xf8] sm:$0xff]
        %2654 = vmatprep.subr.mxu0 0.0
        %2655 = vmatpush1.msra.mxu0 %v2622
        %2656 = vmatprep.subr.mxu0 0.0
        %2657 = vmatpush1.msra.mxu0 %v2623
        %2658 = vmatprep.subr.mxu0 0.0
        %2659 = vmatpush1.msra.mxu0 %v2624
        %2660 = vmatprep.subr.mxu0 0.0
        %2661 = vmatpush1.msra.mxu0 %v2625
        %2662 = vmatprep.subr.mxu0 0.0
        %2663 = vmatpush1.msra.mxu0 %v2626
        %2664 = vmatprep.subr.mxu0 0.0
        %2665 = vmatpush1.msra.mxu0 %v2627
        %2666 = vmatprep.subr.mxu0 0.0
        %2667 = vmatpush1.msra.mxu0 %v2628
        %2668 = vmatprep.subr.mxu0 0.0
        %2669 = vmatpush1.msra.mxu0 %v2629
        %2670 = vmatprep.subr.mxu0 0.0
        %2671 = vmatpush1.msra.mxu0 %v2630
        %2672 = vmatprep.subr.mxu0 0.0
        %2673 = vmatpush1.msra.mxu0 %v2631
        %2674 = vmatprep.subr.mxu0 0.0
        %2675 = vmatpush1.msra.mxu0 %v2632
        %2676 = vmatprep.subr.mxu0 0.0
        %2677 = vmatpush1.msra.mxu0 %v2633
        %2678 = vmatprep.subr.mxu0 0.0
        %2679 = vmatpush1.msra.mxu0 %v2634
        %2680 = vmatprep.subr.mxu0 0.0
        %2681 = vmatpush1.msra.mxu0 %v2635
        %2682 = vmatprep.subr.mxu0 0.0
        %2683 = vmatpush1.msra.mxu0 %v2636
        %2684 = vmatprep.subr.mxu0 0.0
        %2685 = vmatpush1.msra.mxu0 %v2637
        %2686 = vmatprep.subr.mxu0 0.0
        %2687 = vmatpush1.msra.mxu0 %v2638
        %2688 = vmatprep.subr.mxu0 0.0
        %2689 = vmatpush1.msra.mxu0 %v2639
        %2690 = vmatprep.subr.mxu0 0.0
        %2691 = vmatpush1.msra.mxu0 %v2640
        %2692 = vmatprep.subr.mxu0 0.0
        %2693 = vmatpush1.msra.mxu0 %v2641
        %2694 = vmatprep.subr.mxu0 0.0
        %2695 = vmatpush1.msra.mxu0 %v2642
        %2696 = vmatprep.subr.mxu0 0.0
        %2697 = vmatpush1.msra.mxu0 %v2643
        %2698 = vmatprep.subr.mxu0 0.0
        %2699 = vmatpush1.msra.mxu0 %v2644
        %2700 = vmatprep.subr.mxu0 0.0
        %2701 = vmatpush1.msra.mxu0 %v2645
        %2702 = vmatprep.subr.mxu0 0.0
        %2703 = vmatpush1.msra.mxu0 %v2646
        %2704 = vmatprep.subr.mxu0 0.0
        %2705 = vmatpush1.msra.mxu0 %v2647
        %2706 = vmatprep.subr.mxu0 0.0
        %2707 = vmatpush1.msra.mxu0 %v2648
        %2708 = vmatprep.subr.mxu0 0.0
        %2709 = vmatpush1.msra.mxu0 %v2649
        %2710 = vmatprep.subr.mxu0 0.0
        %2711 = vmatpush1.msra.mxu0 %v2650
        %2712 = vmatprep.subr.mxu0 0.0
        %2713 = vmatpush1.msra.mxu0 %v2651
        %2714 = vmatprep.subr.mxu0 0.0
        %2715 = vmatpush1.msra.mxu0 %v2652
        %2716 = vmatprep.subr.mxu0 0.0
        %2717 = vmatpush1.msra.mxu0 %v2653
        %2718 = vmatprep.mubr.f32.mxu0 %v2514
        %2719 = vmatmul.mubr.f32.gmra.mrb[0].mxu0 %v2513
        %v2720 = vpop.f32.mrb[0].mxu0
        %v2721 = vadd.f32 0.0, %v2720
        %v2722 = vpop.f32.mrb[0].mxu0
        %2723 = vdwg.mxu0
        %s2724 = scalar_lea.vmem %s3, 16
        %v2725 = vld [vmem:[%s2724] sm:$0xff]
        %v2726 = vld [vmem:[%s2724 + $0x8] sm:$0xff]
        %vm2727 = vcmask 64512
        %v2729 = vsel %vm2727, %v2725, 0
        %v2732 = vsel %vm2727, %v2726, 0
        %2734 = vmatprep.subr.mxu0 0.0
        %2735 = vmatpush1.msra.mxu0 %v2721
        %2736 = vmatprep.subr.mxu0 0.0
        %2737 = vmatpush1.msra.mxu0 0.0
        %2738 = vmatprep.subr.mxu0 0.0
        %2739 = vmatpush1.msra.mxu0 0.0
        %2740 = vmatprep.subr.mxu0 0.0
        %2741 = vmatpush1.msra.mxu0 0.0
        %2742 = vmatprep.subr.mxu0 0.0
        %2743 = vmatpush1.msra.mxu0 0.0
        %2744 = vmatprep.subr.mxu0 0.0
        %2745 = vmatpush1.msra.mxu0 0.0
        %2746 = vmatprep.subr.mxu0 0.0
        %2747 = vmatpush1.msra.mxu0 0.0
        %2748 = vmatprep.subr.mxu0 0.0
        %2749 = vmatpush1.msra.mxu0 0.0
        %2750 = vmatprep.subr.mxu0 0.0
        %2751 = vmatpush1.msra.mxu0 0.0
        %2752 = vmatprep.subr.mxu0 0.0
        %2753 = vmatpush1.msra.mxu0 0.0
        %2754 = vmatprep.subr.mxu0 0.0
        %2755 = vmatpush1.msra.mxu0 0.0
        %2756 = vmatprep.subr.mxu0 0.0
        %2757 = vmatpush1.msra.mxu0 0.0
        %2758 = vmatprep.subr.mxu0 0.0
        %2759 = vmatpush1.msra.mxu0 0.0
        %2760 = vmatprep.subr.mxu0 0.0
        %2761 = vmatpush1.msra.mxu0 0.0
        %2762 = vmatprep.subr.mxu0 0.0
        %2763 = vmatpush1.msra.mxu0 0.0
        %2764 = vmatprep.subr.mxu0 0.0
        %2765 = vmatpush1.msra.mxu0 0.0
        %2766 = vmatprep.subr.mxu0 0.0
        %2767 = vmatpush1.msra.mxu0 0.0
        %2768 = vmatprep.subr.mxu0 0.0
        %2769 = vmatpush1.msra.mxu0 0.0
        %2770 = vmatprep.subr.mxu0 0.0
        %2771 = vmatpush1.msra.mxu0 0.0
        %2772 = vmatprep.subr.mxu0 0.0
        %2773 = vmatpush1.msra.mxu0 0.0
        %2774 = vmatprep.subr.mxu0 0.0
        %2775 = vmatpush1.msra.mxu0 0.0
        %2776 = vmatprep.subr.mxu0 0.0
        %2777 = vmatpush1.msra.mxu0 0.0
        %2778 = vmatprep.subr.mxu0 0.0
        %2779 = vmatpush1.msra.mxu0 0.0
        %2780 = vmatprep.subr.mxu0 0.0
        %2781 = vmatpush1.msra.mxu0 0.0
        %2782 = vmatprep.subr.mxu0 0.0
        %2783 = vmatpush1.msra.mxu0 0.0
        %2784 = vmatprep.subr.mxu0 0.0
        %2785 = vmatpush1.msra.mxu0 0.0
        %2786 = vmatprep.subr.mxu0 0.0
        %2787 = vmatpush1.msra.mxu0 0.0
        %2788 = vmatprep.subr.mxu0 0.0
        %2789 = vmatpush1.msra.mxu0 0.0
        %2790 = vmatprep.subr.mxu0 0.0
        %2791 = vmatpush1.msra.mxu0 0.0
        %2792 = vmatprep.subr.mxu0 0.0
        %2793 = vmatpush1.msra.mxu0 0.0
        %2794 = vmatprep.subr.mxu0 0.0
        %2795 = vmatpush1.msra.mxu0 0.0
        %2796 = vmatprep.subr.mxu0 0.0
        %2797 = vmatpush1.msra.mxu0 0.0
        %2798 = vmatprep.mubr.f32.mxu0 0.0
        %2799 = vmatmul.mubr.f32.gmra.mrb[0].mxu0 %v2729
        %v2800 = vpop.f32.mrb[0].mxu0
        %v2801 = vadd.f32 0.0, %v2800
        %v2802 = vpop.f32.mrb[0].mxu0
        %2803 = vmatprep.mubr.f32.mxu0 0.0
        %2804 = vmatmul.mubr.f32.gmra.mrb[0].mxu0 %v2732
        %v2805 = vpop.f32.mrb[0].mxu0
        %v2806 = vadd.f32 0.0, %v2805
        %v2807 = vpop.f32.mrb[0].mxu0
        %2808 = vdwg.mxu0
        %v2810 = vsel %vm2727, %v2619, 0
        %v2813 = vsel %vm2727, %v2620, 0
        %2815 = vmatprep.subr.mxu0 0.0
        %2816 = vmatpush1.msra.mxu0 %v2616
        %2817 = vmatprep.subr.mxu0 0.0
        %2818 = vmatpush1.msra.mxu0 0.0
        %2819 = vmatprep.subr.mxu0 0.0
        %2820 = vmatpush1.msra.mxu0 0.0
        %2821 = vmatprep.subr.mxu0 0.0
        %2822 = vmatpush1.msra.mxu0 0.0
        %2823 = vmatprep.subr.mxu0 0.0
        %2824 = vmatpush1.msra.mxu0 0.0
        %2825 = vmatprep.subr.mxu0 0.0
        %2826 = vmatpush1.msra.mxu0 0.0
        %2827 = vmatprep.subr.mxu0 0.0
        %2828 = vmatpush1.msra.mxu0 0.0
        %2829 = vmatprep.subr.mxu0 0.0
        %2830 = vmatpush1.msra.mxu0 0.0
        %2831 = vmatprep.subr.mxu0 0.0
        %2832 = vmatpush1.msra.mxu0 0.0
        %2833 = vmatprep.subr.mxu0 0.0
        %2834 = vmatpush1.msra.mxu0 0.0
        %2835 = vmatprep.subr.mxu0 0.0
        %2836 = vmatpush1.msra.mxu0 0.0
        %2837 = vmatprep.subr.mxu0 0.0
        %2838 = vmatpush1.msra.mxu0 0.0
        %2839 = vmatprep.subr.mxu0 0.0
        %2840 = vmatpush1.msra.mxu0 0.0
        %2841 = vmatprep.subr.mxu0 0.0
        %2842 = vmatpush1.msra.mxu0 0.0
        %2843 = vmatprep.subr.mxu0 0.0
        %2844 = vmatpush1.msra.mxu0 0.0
        %2845 = vmatprep.subr.mxu0 0.0
        %2846 = vmatpush1.msra.mxu0 0.0
        %2847 = vmatprep.subr.mxu0 0.0
        %2848 = vmatpush1.msra.mxu0 0.0
        %2849 = vmatprep.subr.mxu0 0.0
        %2850 = vmatpush1.msra.mxu0 0.0
        %2851 = vmatprep.subr.mxu0 0.0
        %2852 = vmatpush1.msra.mxu0 0.0
        %2853 = vmatprep.subr.mxu0 0.0
        %2854 = vmatpush1.msra.mxu0 0.0
        %2855 = vmatprep.subr.mxu0 0.0
        %2856 = vmatpush1.msra.mxu0 0.0
        %2857 = vmatprep.subr.mxu0 0.0
        %2858 = vmatpush1.msra.mxu0 0.0
        %2859 = vmatprep.subr.mxu0 0.0
        %2860 = vmatpush1.msra.mxu0 0.0
        %2861 = vmatprep.subr.mxu0 0.0
        %2862 = vmatpush1.msra.mxu0 0.0
        %2863 = vmatprep.subr.mxu0 0.0
        %2864 = vmatpush1.msra.mxu0 0.0
        %2865 = vmatprep.subr.mxu0 0.0
        %2866 = vmatpush1.msra.mxu0 0.0
        %2867 = vmatprep.subr.mxu0 0.0
        %2868 = vmatpush1.msra.mxu0 0.0
        %2869 = vmatprep.subr.mxu0 0.0
        %2870 = vmatpush1.msra.mxu0 0.0
        %2871 = vmatprep.subr.mxu0 0.0
        %2872 = vmatpush1.msra.mxu0 0.0
        %2873 = vmatprep.subr.mxu0 0.0
        %2874 = vmatpush1.msra.mxu0 0.0
        %2875 = vmatprep.subr.mxu0 0.0
        %2876 = vmatpush1.msra.mxu0 0.0
        %2877 = vmatprep.subr.mxu0 0.0
        %2878 = vmatpush1.msra.mxu0 0.0
        %2879 = vmatprep.mubr.f32.mxu0 0.0
        %2880 = vmatmul.mubr.f32.gmra.mrb[0].mxu0 %v2810
        %v2881 = vpop.f32.mrb[0].mxu0
        %v2882 = vadd.f32 %v2801, %v2881
        %v2883 = vpop.f32.mrb[0].mxu0
        %2884 = vmatprep.mubr.f32.mxu0 0.0
        %2885 = vmatmul.mubr.f32.gmra.mrb[0].mxu0 %v2813
        %v2886 = vpop.f32.mrb[0].mxu0
        %v2887 = vadd.f32 %v2806, %v2886
        %v2888 = vpop.f32.mrb[0].mxu0
        %2889 = vdwg.mxu0
        %s2890 = scalar_lea.vmem [#allocation6], 512
        %v2891 = vld [vmem:[%s2890] sm:$0xff]
        %v2892 = vld [vmem:[%s2890 + $0x8] sm:$0xff]
        %v2893 = vld [vmem:[%s2890 + $0x10] sm:$0xff]
        %v2894 = vld [vmem:[%s2890 + $0x18] sm:$0xff]
        %v2895 = vld [vmem:[%s2890 + $0x20] sm:$0xff]
        %v2896 = vld [vmem:[%s2890 + $0x28] sm:$0xff]
        %v2897 = vld [vmem:[%s2890 + $0x30] sm:$0xff]
        %v2898 = vld [vmem:[%s2890 + $0x38] sm:$0xff]
        %v2899 = vld [vmem:[%s2890 + $0x40] sm:$0xff]
        %v2900 = vld [vmem:[%s2890 + $0x48] sm:$0xff]
        %v2901 = vld [vmem:[%s2890 + $0x50] sm:$0xff]
        %v2902 = vld [vmem:[%s2890 + $0x58] sm:$0xff]
        %v2903 = vld [vmem:[%s2890 + $0x60] sm:$0xff]
        %v2904 = vld [vmem:[%s2890 + $0x68] sm:$0xff]
        %v2905 = vld [vmem:[%s2890 + $0x70] sm:$0xff]
        %v2906 = vld [vmem:[%s2890 + $0x78] sm:$0xff]
        %v2907 = vld [vmem:[%s2890 + $0x80] sm:$0xff]
        %v2908 = vld [vmem:[%s2890 + $0x88] sm:$0xff]
        %v2909 = vld [vmem:[%s2890 + $0x90] sm:$0xff]
        %v2910 = vld [vmem:[%s2890 + $0x98] sm:$0xff]
        %v2911 = vld [vmem:[%s2890 + $0xa0] sm:$0xff]
        %v2912 = vld [vmem:[%s2890 + $0xa8] sm:$0xff]
        %v2913 = vld [vmem:[%s2890 + $0xb0] sm:$0xff]
        %v2914 = vld [vmem:[%s2890 + $0xb8] sm:$0xff]
        %v2915 = vld [vmem:[%s2890 + $0xc0] sm:$0xff]
        %v2916 = vld [vmem:[%s2890 + $0xc8] sm:$0xff]
        %v2917 = vld [vmem:[%s2890 + $0xd0] sm:$0xff]
        %v2918 = vld [vmem:[%s2890 + $0xd8] sm:$0xff]
        %v2919 = vld [vmem:[%s2890 + $0xe0] sm:$0xff]
        %v2920 = vld [vmem:[%s2890 + $0xe8] sm:$0xff]
        %v2921 = vld [vmem:[%s2890 + $0xf0] sm:$0xff]
        %v2922 = vld [vmem:[%s2890 + $0xf8] sm:$0xff]
        %2923 = vmatprep.subr.mxu0 0.0
        %2924 = vmatpush1.msra.mxu0 %v2891
        %2925 = vmatprep.subr.mxu0 0.0
        %2926 = vmatpush1.msra.mxu0 %v2892
        %2927 = vmatprep.subr.mxu0 0.0
        %2928 = vmatpush1.msra.mxu0 %v2893
        %2929 = vmatprep.subr.mxu0 0.0
        %2930 = vmatpush1.msra.mxu0 %v2894
        %2931 = vmatprep.subr.mxu0 0.0
        %2932 = vmatpush1.msra.mxu0 %v2895
        %2933 = vmatprep.subr.mxu0 0.0
        %2934 = vmatpush1.msra.mxu0 %v2896
        %2935 = vmatprep.subr.mxu0 0.0
        %2936 = vmatpush1.msra.mxu0 %v2897
        %2937 = vmatprep.subr.mxu0 0.0
        %2938 = vmatpush1.msra.mxu0 %v2898
        %2939 = vmatprep.subr.mxu0 0.0
        %2940 = vmatpush1.msra.mxu0 %v2899
        %2941 = vmatprep.subr.mxu0 0.0
        %2942 = vmatpush1.msra.mxu0 %v2900
        %2943 = vmatprep.subr.mxu0 0.0
        %2944 = vmatpush1.msra.mxu0 %v2901
        %2945 = vmatprep.subr.mxu0 0.0
        %2946 = vmatpush1.msra.mxu0 %v2902
        %2947 = vmatprep.subr.mxu0 0.0
        %2948 = vmatpush1.msra.mxu0 %v2903
        %2949 = vmatprep.subr.mxu0 0.0
        %2950 = vmatpush1.msra.mxu0 %v2904
        %2951 = vmatprep.subr.mxu0 0.0
        %2952 = vmatpush1.msra.mxu0 %v2905
        %2953 = vmatprep.subr.mxu0 0.0
        %2954 = vmatpush1.msra.mxu0 %v2906
        %2955 = vmatprep.subr.mxu0 0.0
        %2956 = vmatpush1.msra.mxu0 %v2907
        %2957 = vmatprep.subr.mxu0 0.0
        %2958 = vmatpush1.msra.mxu0 %v2908
        %2959 = vmatprep.subr.mxu0 0.0
        %2960 = vmatpush1.msra.mxu0 %v2909
        %2961 = vmatprep.subr.mxu0 0.0
        %2962 = vmatpush1.msra.mxu0 %v2910
        %2963 = vmatprep.subr.mxu0 0.0
        %2964 = vmatpush1.msra.mxu0 %v2911
        %2965 = vmatprep.subr.mxu0 0.0
        %2966 = vmatpush1.msra.mxu0 %v2912
        %2967 = vmatprep.subr.mxu0 0.0
        %2968 = vmatpush1.msra.mxu0 %v2913
        %2969 = vmatprep.subr.mxu0 0.0
        %2970 = vmatpush1.msra.mxu0 %v2914
        %2971 = vmatprep.subr.mxu0 0.0
        %2972 = vmatpush1.msra.mxu0 %v2915
        %2973 = vmatprep.subr.mxu0 0.0
        %2974 = vmatpush1.msra.mxu0 %v2916
        %2975 = vmatprep.subr.mxu0 0.0
        %2976 = vmatpush1.msra.mxu0 %v2917
        %2977 = vmatprep.subr.mxu0 0.0
        %2978 = vmatpush1.msra.mxu0 %v2918
        %2979 = vmatprep.subr.mxu0 0.0
        %2980 = vmatpush1.msra.mxu0 %v2919
        %2981 = vmatprep.subr.mxu0 0.0
        %2982 = vmatpush1.msra.mxu0 %v2920
        %2983 = vmatprep.subr.mxu0 0.0
        %2984 = vmatpush1.msra.mxu0 %v2921
        %2985 = vmatprep.subr.mxu0 0.0
        %2986 = vmatpush1.msra.mxu0 %v2922
        %2987 = vmatprep.mubr.f32.mxu0 %v2514
        %2988 = vmatmul.mubr.f32.gmra.mrb[0].mxu0 %v2513
        %v2989 = vpop.f32.mrb[0].mxu0
        %v2990 = vadd.f32 0.0, %v2989
        %v2991 = vpop.f32.mrb[0].mxu0
        %2992 = vdwg.mxu0
        %s2993 = scalar_lea.vmem %s3, 32
        %v2994 = vld [vmem:[%s2993] sm:$0xff]
        %v2995 = vld [vmem:[%s2993 + $0x8] sm:$0xff]
        %v2997 = vsel %vm2727, %v2994, 0
        %v3000 = vsel %vm2727, %v2995, 0
        %3002 = vmatprep.subr.mxu0 0.0
        %3003 = vmatpush1.msra.mxu0 %v2990
        %3004 = vmatprep.subr.mxu0 0.0
        %3005 = vmatpush1.msra.mxu0 0.0
        %3006 = vmatprep.subr.mxu0 0.0
        %3007 = vmatpush1.msra.mxu0 0.0
        %3008 = vmatprep.subr.mxu0 0.0
        %3009 = vmatpush1.msra.mxu0 0.0
        %3010 = vmatprep.subr.mxu0 0.0
        %3011 = vmatpush1.msra.mxu0 0.0
        %3012 = vmatprep.subr.mxu0 0.0
        %3013 = vmatpush1.msra.mxu0 0.0
        %3014 = vmatprep.subr.mxu0 0.0
        %3015 = vmatpush1.msra.mxu0 0.0
        %3016 = vmatprep.subr.mxu0 0.0
        %3017 = vmatpush1.msra.mxu0 0.0
        %3018 = vmatprep.subr.mxu0 0.0
        %3019 = vmatpush1.msra.mxu0 0.0
        %3020 = vmatprep.subr.mxu0 0.0
        %3021 = vmatpush1.msra.mxu0 0.0
        %3022 = vmatprep.subr.mxu0 0.0
        %3023 = vmatpush1.msra.mxu0 0.0
        %3024 = vmatprep.subr.mxu0 0.0
        %3025 = vmatpush1.msra.mxu0 0.0
        %3026 = vmatprep.subr.mxu0 0.0
        %3027 = vmatpush1.msra.mxu0 0.0
        %3028 = vmatprep.subr.mxu0 0.0
        %3029 = vmatpush1.msra.mxu0 0.0
        %3030 = vmatprep.subr.mxu0 0.0
        %3031 = vmatpush1.msra.mxu0 0.0
        %3032 = vmatprep.subr.mxu0 0.0
        %3033 = vmatpush1.msra.mxu0 0.0
        %3034 = vmatprep.subr.mxu0 0.0
        %3035 = vmatpush1.msra.mxu0 0.0
        %3036 = vmatprep.subr.mxu0 0.0
        %3037 = vmatpush1.msra.mxu0 0.0
        %3038 = vmatprep.subr.mxu0 0.0
        %3039 = vmatpush1.msra.mxu0 0.0
        %3040 = vmatprep.subr.mxu0 0.0
        %3041 = vmatpush1.msra.mxu0 0.0
        %3042 = vmatprep.subr.mxu0 0.0
        %3043 = vmatpush1.msra.mxu0 0.0
        %3044 = vmatprep.subr.mxu0 0.0
        %3045 = vmatpush1.msra.mxu0 0.0
        %3046 = vmatprep.subr.mxu0 0.0
        %3047 = vmatpush1.msra.mxu0 0.0
        %3048 = vmatprep.subr.mxu0 0.0
        %3049 = vmatpush1.msra.mxu0 0.0
        %3050 = vmatprep.subr.mxu0 0.0
        %3051 = vmatpush1.msra.mxu0 0.0
        %3052 = vmatprep.subr.mxu0 0.0
        %3053 = vmatpush1.msra.mxu0 0.0
        %3054 = vmatprep.subr.mxu0 0.0
        %3055 = vmatpush1.msra.mxu0 0.0
        %3056 = vmatprep.subr.mxu0 0.0
        %3057 = vmatpush1.msra.mxu0 0.0
        %3058 = vmatprep.subr.mxu0 0.0
        %3059 = vmatpush1.msra.mxu0 0.0
        %3060 = vmatprep.subr.mxu0 0.0
        %3061 = vmatpush1.msra.mxu0 0.0
        %3062 = vmatprep.subr.mxu0 0.0
        %3063 = vmatpush1.msra.mxu0 0.0
        %3064 = vmatprep.subr.mxu0 0.0
        %3065 = vmatpush1.msra.mxu0 0.0
        %3066 = vmatprep.mubr.f32.mxu0 0.0
        %3067 = vmatmul.mubr.f32.gmra.mrb[0].mxu0 %v2997
        %v3068 = vpop.f32.mrb[0].mxu0
        %v3069 = vadd.f32 0.0, %v3068
        %v3070 = vpop.f32.mrb[0].mxu0
        %3071 = vmatprep.mubr.f32.mxu0 0.0
        %3072 = vmatmul.mubr.f32.gmra.mrb[0].mxu0 %v3000
        %v3073 = vpop.f32.mrb[0].mxu0
        %v3074 = vadd.f32 0.0, %v3073
        %v3075 = vpop.f32.mrb[0].mxu0
        %3076 = vdwg.mxu0
        %v3077 = vadd.f32 %v2882, %v3069
        %v3078 = vadd.f32 %v2887, %v3074
        %s3079 = scalar_lea.vmem [#allocation6], 768
        %v3080 = vld [vmem:[%s3079] sm:$0xff]
        %v3081 = vld [vmem:[%s3079 + $0x8] sm:$0xff]
        %v3082 = vld [vmem:[%s3079 + $0x10] sm:$0xff]
        %v3083 = vld [vmem:[%s3079 + $0x18] sm:$0xff]
        %v3084 = vld [vmem:[%s3079 + $0x20] sm:$0xff]
        %v3085 = vld [vmem:[%s3079 + $0x28] sm:$0xff]
        %v3086 = vld [vmem:[%s3079 + $0x30] sm:$0xff]
        %v3087 = vld [vmem:[%s3079 + $0x38] sm:$0xff]
        %v3088 = vld [vmem:[%s3079 + $0x40] sm:$0xff]
        %v3089 = vld [vmem:[%s3079 + $0x48] sm:$0xff]
        %v3090 = vld [vmem:[%s3079 + $0x50] sm:$0xff]
        %v3091 = vld [vmem:[%s3079 + $0x58] sm:$0xff]
        %v3092 = vld [vmem:[%s3079 + $0x60] sm:$0xff]
        %v3093 = vld [vmem:[%s3079 + $0x68] sm:$0xff]
        %v3094 = vld [vmem:[%s3079 + $0x70] sm:$0xff]
        %v3095 = vld [vmem:[%s3079 + $0x78] sm:$0xff]
        %v3096 = vld [vmem:[%s3079 + $0x80] sm:$0xff]
        %v3097 = vld [vmem:[%s3079 + $0x88] sm:$0xff]
        %v3098 = vld [vmem:[%s3079 + $0x90] sm:$0xff]
        %v3099 = vld [vmem:[%s3079 + $0x98] sm:$0xff]
        %v3100 = vld [vmem:[%s3079 + $0xa0] sm:$0xff]
        %v3101 = vld [vmem:[%s3079 + $0xa8] sm:$0xff]
        %v3102 = vld [vmem:[%s3079 + $0xb0] sm:$0xff]
        %v3103 = vld [vmem:[%s3079 + $0xb8] sm:$0xff]
        %v3104 = vld [vmem:[%s3079 + $0xc0] sm:$0xff]
        %v3105 = vld [vmem:[%s3079 + $0xc8] sm:$0xff]
        %v3106 = vld [vmem:[%s3079 + $0xd0] sm:$0xff]
        %v3107 = vld [vmem:[%s3079 + $0xd8] sm:$0xff]
        %v3108 = vld [vmem:[%s3079 + $0xe0] sm:$0xff]
        %v3109 = vld [vmem:[%s3079 + $0xe8] sm:$0xff]
        %v3110 = vld [vmem:[%s3079 + $0xf0] sm:$0xff]
        %v3111 = vld [vmem:[%s3079 + $0xf8] sm:$0xff]
        %3112 = vmatprep.subr.mxu0 0.0
        %3113 = vmatpush1.msra.mxu0 %v3080
        %3114 = vmatprep.subr.mxu0 0.0
        %3115 = vmatpush1.msra.mxu0 %v3081
        %3116 = vmatprep.subr.mxu0 0.0
        %3117 = vmatpush1.msra.mxu0 %v3082
        %3118 = vmatprep.subr.mxu0 0.0
        %3119 = vmatpush1.msra.mxu0 %v3083
        %3120 = vmatprep.subr.mxu0 0.0
        %3121 = vmatpush1.msra.mxu0 %v3084
        %3122 = vmatprep.subr.mxu0 0.0
        %3123 = vmatpush1.msra.mxu0 %v3085
        %3124 = vmatprep.subr.mxu0 0.0
        %3125 = vmatpush1.msra.mxu0 %v3086
        %3126 = vmatprep.subr.mxu0 0.0
        %3127 = vmatpush1.msra.mxu0 %v3087
        %3128 = vmatprep.subr.mxu0 0.0
        %3129 = vmatpush1.msra.mxu0 %v3088
        %3130 = vmatprep.subr.mxu0 0.0
        %3131 = vmatpush1.msra.mxu0 %v3089
        %3132 = vmatprep.subr.mxu0 0.0
        %3133 = vmatpush1.msra.mxu0 %v3090
        %3134 = vmatprep.subr.mxu0 0.0
        %3135 = vmatpush1.msra.mxu0 %v3091
        %3136 = vmatprep.subr.mxu0 0.0
        %3137 = vmatpush1.msra.mxu0 %v3092
        %3138 = vmatprep.subr.mxu0 0.0
        %3139 = vmatpush1.msra.mxu0 %v3093
        %3140 = vmatprep.subr.mxu0 0.0
        %3141 = vmatpush1.msra.mxu0 %v3094
        %3142 = vmatprep.subr.mxu0 0.0
        %3143 = vmatpush1.msra.mxu0 %v3095
        %3144 = vmatprep.subr.mxu0 0.0
        %3145 = vmatpush1.msra.mxu0 %v3096
        %3146 = vmatprep.subr.mxu0 0.0
        %3147 = vmatpush1.msra.mxu0 %v3097
        %3148 = vmatprep.subr.mxu0 0.0
        %3149 = vmatpush1.msra.mxu0 %v3098
        %3150 = vmatprep.subr.mxu0 0.0
        %3151 = vmatpush1.msra.mxu0 %v3099
        %3152 = vmatprep.subr.mxu0 0.0
        %3153 = vmatpush1.msra.mxu0 %v3100
        %3154 = vmatprep.subr.mxu0 0.0
        %3155 = vmatpush1.msra.mxu0 %v3101
        %3156 = vmatprep.subr.mxu0 0.0
        %3157 = vmatpush1.msra.mxu0 %v3102
        %3158 = vmatprep.subr.mxu0 0.0
        %3159 = vmatpush1.msra.mxu0 %v3103
        %3160 = vmatprep.subr.mxu0 0.0
        %3161 = vmatpush1.msra.mxu0 %v3104
        %3162 = vmatprep.subr.mxu0 0.0
        %3163 = vmatpush1.msra.mxu0 %v3105
        %3164 = vmatprep.subr.mxu0 0.0
        %3165 = vmatpush1.msra.mxu0 %v3106
        %3166 = vmatprep.subr.mxu0 0.0
        %3167 = vmatpush1.msra.mxu0 %v3107
        %3168 = vmatprep.subr.mxu0 0.0
        %3169 = vmatpush1.msra.mxu0 %v3108
        %3170 = vmatprep.subr.mxu0 0.0
        %3171 = vmatpush1.msra.mxu0 %v3109
        %3172 = vmatprep.subr.mxu0 0.0
        %3173 = vmatpush1.msra.mxu0 %v3110
        %3174 = vmatprep.subr.mxu0 0.0
        %3175 = vmatpush1.msra.mxu0 %v3111
        %3176 = vmatprep.mubr.f32.mxu0 %v2514
        %3177 = vmatmul.mubr.f32.gmra.mrb[0].mxu0 %v2513
        %v3178 = vpop.f32.mrb[0].mxu0
        %v3179 = vadd.f32 0.0, %v3178
        %v3180 = vpop.f32.mrb[0].mxu0
        %3181 = vdwg.mxu0
        %s3182 = scalar_lea.vmem %s3, 48
        %v3183 = vld [vmem:[%s3182] sm:$0xff]
        %v3184 = vld [vmem:[%s3182 + $0x8] sm:$0xff]
        %v3186 = vsel %vm2727, %v3183, 0
        %v3189 = vsel %vm2727, %v3184, 0
        %3191 = vmatprep.subr.mxu0 0.0
        %3192 = vmatpush1.msra.mxu0 %v3179
        %3193 = vmatprep.subr.mxu0 0.0
        %3194 = vmatpush1.msra.mxu0 0.0
        %3195 = vmatprep.subr.mxu0 0.0
        %3196 = vmatpush1.msra.mxu0 0.0
        %3197 = vmatprep.subr.mxu0 0.0
        %3198 = vmatpush1.msra.mxu0 0.0
        %3199 = vmatprep.subr.mxu0 0.0
        %3200 = vmatpush1.msra.mxu0 0.0
        %3201 = vmatprep.subr.mxu0 0.0
        %3202 = vmatpush1.msra.mxu0 0.0
        %3203 = vmatprep.subr.mxu0 0.0
        %3204 = vmatpush1.msra.mxu0 0.0
        %3205 = vmatprep.subr.mxu0 0.0
        %3206 = vmatpush1.msra.mxu0 0.0
        %3207 = vmatprep.subr.mxu0 0.0
        %3208 = vmatpush1.msra.mxu0 0.0
        %3209 = vmatprep.subr.mxu0 0.0
        %3210 = vmatpush1.msra.mxu0 0.0
        %3211 = vmatprep.subr.mxu0 0.0
        %3212 = vmatpush1.msra.mxu0 0.0
        %3213 = vmatprep.subr.mxu0 0.0
        %3214 = vmatpush1.msra.mxu0 0.0
        %3215 = vmatprep.subr.mxu0 0.0
        %3216 = vmatpush1.msra.mxu0 0.0
        %3217 = vmatprep.subr.mxu0 0.0
        %3218 = vmatpush1.msra.mxu0 0.0
        %3219 = vmatprep.subr.mxu0 0.0
        %3220 = vmatpush1.msra.mxu0 0.0
        %3221 = vmatprep.subr.mxu0 0.0
        %3222 = vmatpush1.msra.mxu0 0.0
        %3223 = vmatprep.subr.mxu0 0.0
        %3224 = vmatpush1.msra.mxu0 0.0
        %3225 = vmatprep.subr.mxu0 0.0
        %3226 = vmatpush1.msra.mxu0 0.0
        %3227 = vmatprep.subr.mxu0 0.0
        %3228 = vmatpush1.msra.mxu0 0.0
        %3229 = vmatprep.subr.mxu0 0.0
        %3230 = vmatpush1.msra.mxu0 0.0
        %3231 = vmatprep.subr.mxu0 0.0
        %3232 = vmatpush1.msra.mxu0 0.0
        %3233 = vmatprep.subr.mxu0 0.0
        %3234 = vmatpush1.msra.mxu0 0.0
        %3235 = vmatprep.subr.mxu0 0.0
        %3236 = vmatpush1.msra.mxu0 0.0
        %3237 = vmatprep.subr.mxu0 0.0
        %3238 = vmatpush1.msra.mxu0 0.0
        %3239 = vmatprep.subr.mxu0 0.0
        %3240 = vmatpush1.msra.mxu0 0.0
        %3241 = vmatprep.subr.mxu0 0.0
        %3242 = vmatpush1.msra.mxu0 0.0
        %3243 = vmatprep.subr.mxu0 0.0
        %3244 = vmatpush1.msra.mxu0 0.0
        %3245 = vmatprep.subr.mxu0 0.0
        %3246 = vmatpush1.msra.mxu0 0.0
        %3247 = vmatprep.subr.mxu0 0.0
        %3248 = vmatpush1.msra.mxu0 0.0
        %3249 = vmatprep.subr.mxu0 0.0
        %3250 = vmatpush1.msra.mxu0 0.0
        %3251 = vmatprep.subr.mxu0 0.0
        %3252 = vmatpush1.msra.mxu0 0.0
        %3253 = vmatprep.subr.mxu0 0.0
        %3254 = vmatpush1.msra.mxu0 0.0
        %3255 = vmatprep.mubr.f32.mxu0 0.0
        %3256 = vmatmul.mubr.f32.gmra.mrb[0].mxu0 %v3186
        %v3257 = vpop.f32.mrb[0].mxu0
        %v3258 = vadd.f32 0.0, %v3257
        %v3259 = vpop.f32.mrb[0].mxu0
        %3260 = vmatprep.mubr.f32.mxu0 0.0
        %3261 = vmatmul.mubr.f32.gmra.mrb[0].mxu0 %v3189
        %v3262 = vpop.f32.mrb[0].mxu0
        %v3263 = vadd.f32 0.0, %v3262
        %v3264 = vpop.f32.mrb[0].mxu0
        %3265 = vdwg.mxu0
        %v3266 = vadd.f32 %v3077, %v3258
        %v3267 = vadd.f32 %v3078, %v3263
        %s3268 = scalar_lea.vmem [#allocation6], 1024
        %v3269 = vld [vmem:[%s3268] sm:$0xff]
        %v3270 = vld [vmem:[%s3268 + $0x8] sm:$0xff]
        %v3271 = vld [vmem:[%s3268 + $0x10] sm:$0xff]
        %v3272 = vld [vmem:[%s3268 + $0x18] sm:$0xff]
        %v3273 = vld [vmem:[%s3268 + $0x20] sm:$0xff]
        %v3274 = vld [vmem:[%s3268 + $0x28] sm:$0xff]
        %v3275 = vld [vmem:[%s3268 + $0x30] sm:$0xff]
        %v3276 = vld [vmem:[%s3268 + $0x38] sm:$0xff]
        %v3277 = vld [vmem:[%s3268 + $0x40] sm:$0xff]
        %v3278 = vld [vmem:[%s3268 + $0x48] sm:$0xff]
        %v3279 = vld [vmem:[%s3268 + $0x50] sm:$0xff]
        %v3280 = vld [vmem:[%s3268 + $0x58] sm:$0xff]
        %v3281 = vld [vmem:[%s3268 + $0x60] sm:$0xff]
        %v3282 = vld [vmem:[%s3268 + $0x68] sm:$0xff]
        %v3283 = vld [vmem:[%s3268 + $0x70] sm:$0xff]
        %v3284 = vld [vmem:[%s3268 + $0x78] sm:$0xff]
        %v3285 = vld [vmem:[%s3268 + $0x80] sm:$0xff]
        %v3286 = vld [vmem:[%s3268 + $0x88] sm:$0xff]
        %v3287 = vld [vmem:[%s3268 + $0x90] sm:$0xff]
        %v3288 = vld [vmem:[%s3268 + $0x98] sm:$0xff]
        %v3289 = vld [vmem:[%s3268 + $0xa0] sm:$0xff]
        %v3290 = vld [vmem:[%s3268 + $0xa8] sm:$0xff]
        %v3291 = vld [vmem:[%s3268 + $0xb0] sm:$0xff]
        %v3292 = vld [vmem:[%s3268 + $0xb8] sm:$0xff]
        %v3293 = vld [vmem:[%s3268 + $0xc0] sm:$0xff]
        %v3294 = vld [vmem:[%s3268 + $0xc8] sm:$0xff]
        %v3295 = vld [vmem:[%s3268 + $0xd0] sm:$0xff]
        %v3296 = vld [vmem:[%s3268 + $0xd8] sm:$0xff]
        %v3297 = vld [vmem:[%s3268 + $0xe0] sm:$0xff]
        %v3298 = vld [vmem:[%s3268 + $0xe8] sm:$0xff]
        %v3299 = vld [vmem:[%s3268 + $0xf0] sm:$0xff]
        %v3300 = vld [vmem:[%s3268 + $0xf8] sm:$0xff]
        %3301 = vmatprep.subr.mxu0 0.0
        %3302 = vmatpush1.msra.mxu0 %v3269
        %3303 = vmatprep.subr.mxu0 0.0
        %3304 = vmatpush1.msra.mxu0 %v3270
        %3305 = vmatprep.subr.mxu0 0.0
        %3306 = vmatpush1.msra.mxu0 %v3271
        %3307 = vmatprep.subr.mxu0 0.0
        %3308 = vmatpush1.msra.mxu0 %v3272
        %3309 = vmatprep.subr.mxu0 0.0
        %3310 = vmatpush1.msra.mxu0 %v3273
        %3311 = vmatprep.subr.mxu0 0.0
        %3312 = vmatpush1.msra.mxu0 %v3274
        %3313 = vmatprep.subr.mxu0 0.0
        %3314 = vmatpush1.msra.mxu0 %v3275
        %3315 = vmatprep.subr.mxu0 0.0
        %3316 = vmatpush1.msra.mxu0 %v3276
        %3317 = vmatprep.subr.mxu0 0.0
        %3318 = vmatpush1.msra.mxu0 %v3277
        %3319 = vmatprep.subr.mxu0 0.0
        %3320 = vmatpush1.msra.mxu0 %v3278
        %3321 = vmatprep.subr.mxu0 0.0
        %3322 = vmatpush1.msra.mxu0 %v3279
        %3323 = vmatprep.subr.mxu0 0.0
        %3324 = vmatpush1.msra.mxu0 %v3280
        %3325 = vmatprep.subr.mxu0 0.0
        %3326 = vmatpush1.msra.mxu0 %v3281
        %3327 = vmatprep.subr.mxu0 0.0
        %3328 = vmatpush1.msra.mxu0 %v3282
        %3329 = vmatprep.subr.mxu0 0.0
        %3330 = vmatpush1.msra.mxu0 %v3283
        %3331 = vmatprep.subr.mxu0 0.0
        %3332 = vmatpush1.msra.mxu0 %v3284
        %3333 = vmatprep.subr.mxu0 0.0
        %3334 = vmatpush1.msra.mxu0 %v3285
        %3335 = vmatprep.subr.mxu0 0.0
        %3336 = vmatpush1.msra.mxu0 %v3286
        %3337 = vmatprep.subr.mxu0 0.0
        %3338 = vmatpush1.msra.mxu0 %v3287
        %3339 = vmatprep.subr.mxu0 0.0
        %3340 = vmatpush1.msra.mxu0 %v3288
        %3341 = vmatprep.subr.mxu0 0.0
        %3342 = vmatpush1.msra.mxu0 %v3289
        %3343 = vmatprep.subr.mxu0 0.0
        %3344 = vmatpush1.msra.mxu0 %v3290
        %3345 = vmatprep.subr.mxu0 0.0
        %3346 = vmatpush1.msra.mxu0 %v3291
        %3347 = vmatprep.subr.mxu0 0.0
        %3348 = vmatpush1.msra.mxu0 %v3292
        %3349 = vmatprep.subr.mxu0 0.0
        %3350 = vmatpush1.msra.mxu0 %v3293
        %3351 = vmatprep.subr.mxu0 0.0
        %3352 = vmatpush1.msra.mxu0 %v3294
        %3353 = vmatprep.subr.mxu0 0.0
        %3354 = vmatpush1.msra.mxu0 %v3295
        %3355 = vmatprep.subr.mxu0 0.0
        %3356 = vmatpush1.msra.mxu0 %v3296
        %3357 = vmatprep.subr.mxu0 0.0
        %3358 = vmatpush1.msra.mxu0 %v3297
        %3359 = vmatprep.subr.mxu0 0.0
        %3360 = vmatpush1.msra.mxu0 %v3298
        %3361 = vmatprep.subr.mxu0 0.0
        %3362 = vmatpush1.msra.mxu0 %v3299
        %3363 = vmatprep.subr.mxu0 0.0
        %3364 = vmatpush1.msra.mxu0 %v3300
        %3365 = vmatprep.mubr.f32.mxu0 %v2514
        %3366 = vmatmul.mubr.f32.gmra.mrb[0].mxu0 %v2513
        %v3367 = vpop.f32.mrb[0].mxu0
        %v3368 = vadd.f32 0.0, %v3367
        %v3369 = vpop.f32.mrb[0].mxu0
        %3370 = vdwg.mxu0
        %s3371 = scalar_lea.vmem %s3, 64
        %v3372 = vld [vmem:[%s3371] sm:$0xff]
        %v3373 = vld [vmem:[%s3371 + $0x8] sm:$0xff]
        %v3375 = vsel %vm2727, %v3372, 0
        %v3378 = vsel %vm2727, %v3373, 0
        %3380 = vmatprep.subr.mxu0 0.0
        %3381 = vmatpush1.msra.mxu0 %v3368
        %3382 = vmatprep.subr.mxu0 0.0
        %3383 = vmatpush1.msra.mxu0 0.0
        %3384 = vmatprep.subr.mxu0 0.0
        %3385 = vmatpush1.msra.mxu0 0.0
        %3386 = vmatprep.subr.mxu0 0.0
        %3387 = vmatpush1.msra.mxu0 0.0
        %3388 = vmatprep.subr.mxu0 0.0
        %3389 = vmatpush1.msra.mxu0 0.0
        %3390 = vmatprep.subr.mxu0 0.0
        %3391 = vmatpush1.msra.mxu0 0.0
        %3392 = vmatprep.subr.mxu0 0.0
        %3393 = vmatpush1.msra.mxu0 0.0
        %3394 = vmatprep.subr.mxu0 0.0
        %3395 = vmatpush1.msra.mxu0 0.0
        %3396 = vmatprep.subr.mxu0 0.0
        %3397 = vmatpush1.msra.mxu0 0.0
        %3398 = vmatprep.subr.mxu0 0.0
        %3399 = vmatpush1.msra.mxu0 0.0
        %3400 = vmatprep.subr.mxu0 0.0
        %3401 = vmatpush1.msra.mxu0 0.0
        %3402 = vmatprep.subr.mxu0 0.0
        %3403 = vmatpush1.msra.mxu0 0.0
        %3404 = vmatprep.subr.mxu0 0.0
        %3405 = vmatpush1.msra.mxu0 0.0
        %3406 = vmatprep.subr.mxu0 0.0
        %3407 = vmatpush1.msra.mxu0 0.0
        %3408 = vmatprep.subr.mxu0 0.0
        %3409 = vmatpush1.msra.mxu0 0.0
        %3410 = vmatprep.subr.mxu0 0.0
        %3411 = vmatpush1.msra.mxu0 0.0
        %3412 = vmatprep.subr.mxu0 0.0
        %3413 = vmatpush1.msra.mxu0 0.0
        %3414 = vmatprep.subr.mxu0 0.0
        %3415 = vmatpush1.msra.mxu0 0.0
        %3416 = vmatprep.subr.mxu0 0.0
        %3417 = vmatpush1.msra.mxu0 0.0
        %3418 = vmatprep.subr.mxu0 0.0
        %3419 = vmatpush1.msra.mxu0 0.0
        %3420 = vmatprep.subr.mxu0 0.0
        %3421 = vmatpush1.msra.mxu0 0.0
        %3422 = vmatprep.subr.mxu0 0.0
        %3423 = vmatpush1.msra.mxu0 0.0
        %3424 = vmatprep.subr.mxu0 0.0
        %3425 = vmatpush1.msra.mxu0 0.0
        %3426 = vmatprep.subr.mxu0 0.0
        %3427 = vmatpush1.msra.mxu0 0.0
        %3428 = vmatprep.subr.mxu0 0.0
        %3429 = vmatpush1.msra.mxu0 0.0
        %3430 = vmatprep.subr.mxu0 0.0
        %3431 = vmatpush1.msra.mxu0 0.0
        %3432 = vmatprep.subr.mxu0 0.0
        %3433 = vmatpush1.msra.mxu0 0.0
        %3434 = vmatprep.subr.mxu0 0.0
        %3435 = vmatpush1.msra.mxu0 0.0
        %3436 = vmatprep.subr.mxu0 0.0
        %3437 = vmatpush1.msra.mxu0 0.0
        %3438 = vmatprep.subr.mxu0 0.0
        %3439 = vmatpush1.msra.mxu0 0.0
        %3440 = vmatprep.subr.mxu0 0.0
        %3441 = vmatpush1.msra.mxu0 0.0
        %3442 = vmatprep.subr.mxu0 0.0
        %3443 = vmatpush1.msra.mxu0 0.0
        %3444 = vmatprep.mubr.f32.mxu0 0.0
        %3445 = vmatmul.mubr.f32.gmra.mrb[0].mxu0 %v3375
        %v3446 = vpop.f32.mrb[0].mxu0
        %v3447 = vadd.f32 0.0, %v3446
        %v3448 = vpop.f32.mrb[0].mxu0
        %3449 = vmatprep.mubr.f32.mxu0 0.0
        %3450 = vmatmul.mubr.f32.gmra.mrb[0].mxu0 %v3378
        %v3451 = vpop.f32.mrb[0].mxu0
        %v3452 = vadd.f32 0.0, %v3451
        %v3453 = vpop.f32.mrb[0].mxu0
        %3454 = vdwg.mxu0
        %v3455 = vadd.f32 %v3266, %v3447
        %v3456 = vadd.f32 %v3267, %v3452
        %s3457 = scalar_lea.vmem [#allocation6], 1280
        %v3458 = vld [vmem:[%s3457] sm:$0xff]
        %v3459 = vld [vmem:[%s3457 + $0x8] sm:$0xff]
        %v3460 = vld [vmem:[%s3457 + $0x10] sm:$0xff]
        %v3461 = vld [vmem:[%s3457 + $0x18] sm:$0xff]
        %v3462 = vld [vmem:[%s3457 + $0x20] sm:$0xff]
        %v3463 = vld [vmem:[%s3457 + $0x28] sm:$0xff]
        %v3464 = vld [vmem:[%s3457 + $0x30] sm:$0xff]
        %v3465 = vld [vmem:[%s3457 + $0x38] sm:$0xff]
        %v3466 = vld [vmem:[%s3457 + $0x40] sm:$0xff]
        %v3467 = vld [vmem:[%s3457 + $0x48] sm:$0xff]
        %v3468 = vld [vmem:[%s3457 + $0x50] sm:$0xff]
        %v3469 = vld [vmem:[%s3457 + $0x58] sm:$0xff]
        %v3470 = vld [vmem:[%s3457 + $0x60] sm:$0xff]
        %v3471 = vld [vmem:[%s3457 + $0x68] sm:$0xff]
        %v3472 = vld [vmem:[%s3457 + $0x70] sm:$0xff]
        %v3473 = vld [vmem:[%s3457 + $0x78] sm:$0xff]
        %v3474 = vld [vmem:[%s3457 + $0x80] sm:$0xff]
        %v3475 = vld [vmem:[%s3457 + $0x88] sm:$0xff]
        %v3476 = vld [vmem:[%s3457 + $0x90] sm:$0xff]
        %v3477 = vld [vmem:[%s3457 + $0x98] sm:$0xff]
        %v3478 = vld [vmem:[%s3457 + $0xa0] sm:$0xff]
        %v3479 = vld [vmem:[%s3457 + $0xa8] sm:$0xff]
        %v3480 = vld [vmem:[%s3457 + $0xb0] sm:$0xff]
        %v3481 = vld [vmem:[%s3457 + $0xb8] sm:$0xff]
        %v3482 = vld [vmem:[%s3457 + $0xc0] sm:$0xff]
        %v3483 = vld [vmem:[%s3457 + $0xc8] sm:$0xff]
        %v3484 = vld [vmem:[%s3457 + $0xd0] sm:$0xff]
        %v3485 = vld [vmem:[%s3457 + $0xd8] sm:$0xff]
        %v3486 = vld [vmem:[%s3457 + $0xe0] sm:$0xff]
        %v3487 = vld [vmem:[%s3457 + $0xe8] sm:$0xff]
        %v3488 = vld [vmem:[%s3457 + $0xf0] sm:$0xff]
        %v3489 = vld [vmem:[%s3457 + $0xf8] sm:$0xff]
        %3490 = vmatprep.subr.mxu0 0.0
        %3491 = vmatpush1.msra.mxu0 %v3458
        %3492 = vmatprep.subr.mxu0 0.0
        %3493 = vmatpush1.msra.mxu0 %v3459
        %3494 = vmatprep.subr.mxu0 0.0
        %3495 = vmatpush1.msra.mxu0 %v3460
        %3496 = vmatprep.subr.mxu0 0.0
        %3497 = vmatpush1.msra.mxu0 %v3461
        %3498 = vmatprep.subr.mxu0 0.0
        %3499 = vmatpush1.msra.mxu0 %v3462
        %3500 = vmatprep.subr.mxu0 0.0
        %3501 = vmatpush1.msra.mxu0 %v3463
        %3502 = vmatprep.subr.mxu0 0.0
        %3503 = vmatpush1.msra.mxu0 %v3464
        %3504 = vmatprep.subr.mxu0 0.0
        %3505 = vmatpush1.msra.mxu0 %v3465
        %3506 = vmatprep.subr.mxu0 0.0
        %3507 = vmatpush1.msra.mxu0 %v3466
        %3508 = vmatprep.subr.mxu0 0.0
        %3509 = vmatpush1.msra.mxu0 %v3467
        %3510 = vmatprep.subr.mxu0 0.0
        %3511 = vmatpush1.msra.mxu0 %v3468
        %3512 = vmatprep.subr.mxu0 0.0
        %3513 = vmatpush1.msra.mxu0 %v3469
        %3514 = vmatprep.subr.mxu0 0.0
        %3515 = vmatpush1.msra.mxu0 %v3470
        %3516 = vmatprep.subr.mxu0 0.0
        %3517 = vmatpush1.msra.mxu0 %v3471
        %3518 = vmatprep.subr.mxu0 0.0
        %3519 = vmatpush1.msra.mxu0 %v3472
        %3520 = vmatprep.subr.mxu0 0.0
        %3521 = vmatpush1.msra.mxu0 %v3473
        %3522 = vmatprep.subr.mxu0 0.0
        %3523 = vmatpush1.msra.mxu0 %v3474
        %3524 = vmatprep.subr.mxu0 0.0
        %3525 = vmatpush1.msra.mxu0 %v3475
        %3526 = vmatprep.subr.mxu0 0.0
        %3527 = vmatpush1.msra.mxu0 %v3476
        %3528 = vmatprep.subr.mxu0 0.0
        %3529 = vmatpush1.msra.mxu0 %v3477
        %3530 = vmatprep.subr.mxu0 0.0
        %3531 = vmatpush1.msra.mxu0 %v3478
        %3532 = vmatprep.subr.mxu0 0.0
        %3533 = vmatpush1.msra.mxu0 %v3479
        %3534 = vmatprep.subr.mxu0 0.0
        %3535 = vmatpush1.msra.mxu0 %v3480
        %3536 = vmatprep.subr.mxu0 0.0
        %3537 = vmatpush1.msra.mxu0 %v3481
        %3538 = vmatprep.subr.mxu0 0.0
        %3539 = vmatpush1.msra.mxu0 %v3482
        %3540 = vmatprep.subr.mxu0 0.0
        %3541 = vmatpush1.msra.mxu0 %v3483
        %3542 = vmatprep.subr.mxu0 0.0
        %3543 = vmatpush1.msra.mxu0 %v3484
        %3544 = vmatprep.subr.mxu0 0.0
        %3545 = vmatpush1.msra.mxu0 %v3485
        %3546 = vmatprep.subr.mxu0 0.0
        %3547 = vmatpush1.msra.mxu0 %v3486
        %3548 = vmatprep.subr.mxu0 0.0
        %3549 = vmatpush1.msra.mxu0 %v3487
        %3550 = vmatprep.subr.mxu0 0.0
        %3551 = vmatpush1.msra.mxu0 %v3488
        %3552 = vmatprep.subr.mxu0 0.0
        %3553 = vmatpush1.msra.mxu0 %v3489
        %3554 = vmatprep.mubr.f32.mxu0 %v2514
        %3555 = vmatmul.mubr.f32.gmra.mrb[0].mxu0 %v2513
        %v3556 = vpop.f32.mrb[0].mxu0
        %v3557 = vadd.f32 0.0, %v3556
        %v3558 = vpop.f32.mrb[0].mxu0
        %3559 = vdwg.mxu0
        %s3560 = scalar_lea.vmem %s3, 80
        %v3561 = vld [vmem:[%s3560] sm:$0xff]
        %v3562 = vld [vmem:[%s3560 + $0x8] sm:$0xff]
        %v3564 = vsel %vm2727, %v3561, 0
        %v3567 = vsel %vm2727, %v3562, 0
        %3569 = vmatprep.subr.mxu0 0.0
        %3570 = vmatpush1.msra.mxu0 %v3557
        %3571 = vmatprep.subr.mxu0 0.0
        %3572 = vmatpush1.msra.mxu0 0.0
        %3573 = vmatprep.subr.mxu0 0.0
        %3574 = vmatpush1.msra.mxu0 0.0
        %3575 = vmatprep.subr.mxu0 0.0
        %3576 = vmatpush1.msra.mxu0 0.0
        %3577 = vmatprep.subr.mxu0 0.0
        %3578 = vmatpush1.msra.mxu0 0.0
        %3579 = vmatprep.subr.mxu0 0.0
        %3580 = vmatpush1.msra.mxu0 0.0
        %3581 = vmatprep.subr.mxu0 0.0
        %3582 = vmatpush1.msra.mxu0 0.0
        %3583 = vmatprep.subr.mxu0 0.0
        %3584 = vmatpush1.msra.mxu0 0.0
        %3585 = vmatprep.subr.mxu0 0.0
        %3586 = vmatpush1.msra.mxu0 0.0
        %3587 = vmatprep.subr.mxu0 0.0
        %3588 = vmatpush1.msra.mxu0 0.0
        %3589 = vmatprep.subr.mxu0 0.0
        %3590 = vmatpush1.msra.mxu0 0.0
        %3591 = vmatprep.subr.mxu0 0.0
        %3592 = vmatpush1.msra.mxu0 0.0
        %3593 = vmatprep.subr.mxu0 0.0
        %3594 = vmatpush1.msra.mxu0 0.0
        %3595 = vmatprep.subr.mxu0 0.0
        %3596 = vmatpush1.msra.mxu0 0.0
        %3597 = vmatprep.subr.mxu0 0.0
        %3598 = vmatpush1.msra.mxu0 0.0
        %3599 = vmatprep.subr.mxu0 0.0
        %3600 = vmatpush1.msra.mxu0 0.0
        %3601 = vmatprep.subr.mxu0 0.0
        %3602 = vmatpush1.msra.mxu0 0.0
        %3603 = vmatprep.subr.mxu0 0.0
        %3604 = vmatpush1.msra.mxu0 0.0
        %3605 = vmatprep.subr.mxu0 0.0
        %3606 = vmatpush1.msra.mxu0 0.0
        %3607 = vmatprep.subr.mxu0 0.0
        %3608 = vmatpush1.msra.mxu0 0.0
        %3609 = vmatprep.subr.mxu0 0.0
        %3610 = vmatpush1.msra.mxu0 0.0
        %3611 = vmatprep.subr.mxu0 0.0
        %3612 = vmatpush1.msra.mxu0 0.0
        %3613 = vmatprep.subr.mxu0 0.0
        %3614 = vmatpush1.msra.mxu0 0.0
        %3615 = vmatprep.subr.mxu0 0.0
        %3616 = vmatpush1.msra.mxu0 0.0
        %3617 = vmatprep.subr.mxu0 0.0
        %3618 = vmatpush1.msra.mxu0 0.0
        %3619 = vmatprep.subr.mxu0 0.0
        %3620 = vmatpush1.msra.mxu0 0.0
        %3621 = vmatprep.subr.mxu0 0.0
        %3622 = vmatpush1.msra.mxu0 0.0
        %3623 = vmatprep.subr.mxu0 0.0
        %3624 = vmatpush1.msra.mxu0 0.0
        %3625 = vmatprep.subr.mxu0 0.0
        %3626 = vmatpush1.msra.mxu0 0.0
        %3627 = vmatprep.subr.mxu0 0.0
        %3628 = vmatpush1.msra.mxu0 0.0
        %3629 = vmatprep.subr.mxu0 0.0
        %3630 = vmatpush1.msra.mxu0 0.0
        %3631 = vmatprep.subr.mxu0 0.0
        %3632 = vmatpush1.msra.mxu0 0.0
        %3633 = vmatprep.mubr.f32.mxu0 0.0
        %3634 = vmatmul.mubr.f32.gmra.mrb[0].mxu0 %v3564
        %v3635 = vpop.f32.mrb[0].mxu0
        %v3636 = vadd.f32 0.0, %v3635
        %v3637 = vpop.f32.mrb[0].mxu0
        %3638 = vmatprep.mubr.f32.mxu0 0.0
        %3639 = vmatmul.mubr.f32.gmra.mrb[0].mxu0 %v3567
        %v3640 = vpop.f32.mrb[0].mxu0
        %v3641 = vadd.f32 0.0, %v3640
        %v3642 = vpop.f32.mrb[0].mxu0
        %3643 = vdwg.mxu0
        %v3644 = vadd.f32 %v3455, %v3636
        %v3645 = vadd.f32 %v3456, %v3641
        %s3646 = scalar_lea.vmem [#allocation6], 1536
        %v3647 = vld [vmem:[%s3646] sm:$0xff]
        %v3648 = vld [vmem:[%s3646 + $0x8] sm:$0xff]
        %v3649 = vld [vmem:[%s3646 + $0x10] sm:$0xff]
        %v3650 = vld [vmem:[%s3646 + $0x18] sm:$0xff]
        %v3651 = vld [vmem:[%s3646 + $0x20] sm:$0xff]
        %v3652 = vld [vmem:[%s3646 + $0x28] sm:$0xff]
        %v3653 = vld [vmem:[%s3646 + $0x30] sm:$0xff]
        %v3654 = vld [vmem:[%s3646 + $0x38] sm:$0xff]
        %v3655 = vld [vmem:[%s3646 + $0x40] sm:$0xff]
        %v3656 = vld [vmem:[%s3646 + $0x48] sm:$0xff]
        %v3657 = vld [vmem:[%s3646 + $0x50] sm:$0xff]
        %v3658 = vld [vmem:[%s3646 + $0x58] sm:$0xff]
        %v3659 = vld [vmem:[%s3646 + $0x60] sm:$0xff]
        %v3660 = vld [vmem:[%s3646 + $0x68] sm:$0xff]
        %v3661 = vld [vmem:[%s3646 + $0x70] sm:$0xff]
        %v3662 = vld [vmem:[%s3646 + $0x78] sm:$0xff]
        %v3663 = vld [vmem:[%s3646 + $0x80] sm:$0xff]
        %v3664 = vld [vmem:[%s3646 + $0x88] sm:$0xff]
        %v3665 = vld [vmem:[%s3646 + $0x90] sm:$0xff]
        %v3666 = vld [vmem:[%s3646 + $0x98] sm:$0xff]
        %v3667 = vld [vmem:[%s3646 + $0xa0] sm:$0xff]
        %v3668 = vld [vmem:[%s3646 + $0xa8] sm:$0xff]
        %v3669 = vld [vmem:[%s3646 + $0xb0] sm:$0xff]
        %v3670 = vld [vmem:[%s3646 + $0xb8] sm:$0xff]
        %v3671 = vld [vmem:[%s3646 + $0xc0] sm:$0xff]
        %v3672 = vld [vmem:[%s3646 + $0xc8] sm:$0xff]
        %v3673 = vld [vmem:[%s3646 + $0xd0] sm:$0xff]
        %v3674 = vld [vmem:[%s3646 + $0xd8] sm:$0xff]
        %v3675 = vld [vmem:[%s3646 + $0xe0] sm:$0xff]
        %v3676 = vld [vmem:[%s3646 + $0xe8] sm:$0xff]
        %v3677 = vld [vmem:[%s3646 + $0xf0] sm:$0xff]
        %v3678 = vld [vmem:[%s3646 + $0xf8] sm:$0xff]
        %3679 = vmatprep.subr.mxu0 0.0
        %3680 = vmatpush1.msra.mxu0 %v3647
        %3681 = vmatprep.subr.mxu0 0.0
        %3682 = vmatpush1.msra.mxu0 %v3648
        %3683 = vmatprep.subr.mxu0 0.0
        %3684 = vmatpush1.msra.mxu0 %v3649
        %3685 = vmatprep.subr.mxu0 0.0
        %3686 = vmatpush1.msra.mxu0 %v3650
        %3687 = vmatprep.subr.mxu0 0.0
        %3688 = vmatpush1.msra.mxu0 %v3651
        %3689 = vmatprep.subr.mxu0 0.0
        %3690 = vmatpush1.msra.mxu0 %v3652
        %3691 = vmatprep.subr.mxu0 0.0
        %3692 = vmatpush1.msra.mxu0 %v3653
        %3693 = vmatprep.subr.mxu0 0.0
        %3694 = vmatpush1.msra.mxu0 %v3654
        %3695 = vmatprep.subr.mxu0 0.0
        %3696 = vmatpush1.msra.mxu0 %v3655
        %3697 = vmatprep.subr.mxu0 0.0
        %3698 = vmatpush1.msra.mxu0 %v3656
        %3699 = vmatprep.subr.mxu0 0.0
        %3700 = vmatpush1.msra.mxu0 %v3657
        %3701 = vmatprep.subr.mxu0 0.0
        %3702 = vmatpush1.msra.mxu0 %v3658
        %3703 = vmatprep.subr.mxu0 0.0
        %3704 = vmatpush1.msra.mxu0 %v3659
        %3705 = vmatprep.subr.mxu0 0.0
        %3706 = vmatpush1.msra.mxu0 %v3660
        %3707 = vmatprep.subr.mxu0 0.0
        %3708 = vmatpush1.msra.mxu0 %v3661
        %3709 = vmatprep.subr.mxu0 0.0
        %3710 = vmatpush1.msra.mxu0 %v3662
        %3711 = vmatprep.subr.mxu0 0.0
        %3712 = vmatpush1.msra.mxu0 %v3663
        %3713 = vmatprep.subr.mxu0 0.0
        %3714 = vmatpush1.msra.mxu0 %v3664
        %3715 = vmatprep.subr.mxu0 0.0
        %3716 = vmatpush1.msra.mxu0 %v3665
        %3717 = vmatprep.subr.mxu0 0.0
        %3718 = vmatpush1.msra.mxu0 %v3666
        %3719 = vmatprep.subr.mxu0 0.0
        %3720 = vmatpush1.msra.mxu0 %v3667
        %3721 = vmatprep.subr.mxu0 0.0
        %3722 = vmatpush1.msra.mxu0 %v3668
        %3723 = vmatprep.subr.mxu0 0.0
        %3724 = vmatpush1.msra.mxu0 %v3669
        %3725 = vmatprep.subr.mxu0 0.0
        %3726 = vmatpush1.msra.mxu0 %v3670
        %3727 = vmatprep.subr.mxu0 0.0
        %3728 = vmatpush1.msra.mxu0 %v3671
        %3729 = vmatprep.subr.mxu0 0.0
        %3730 = vmatpush1.msra.mxu0 %v3672
        %3731 = vmatprep.subr.mxu0 0.0
        %3732 = vmatpush1.msra.mxu0 %v3673
        %3733 = vmatprep.subr.mxu0 0.0
        %3734 = vmatpush1.msra.mxu0 %v3674
        %3735 = vmatprep.subr.mxu0 0.0
        %3736 = vmatpush1.msra.mxu0 %v3675
        %3737 = vmatprep.subr.mxu0 0.0
        %3738 = vmatpush1.msra.mxu0 %v3676
        %3739 = vmatprep.subr.mxu0 0.0
        %3740 = vmatpush1.msra.mxu0 %v3677
        %3741 = vmatprep.subr.mxu0 0.0
        %3742 = vmatpush1.msra.mxu0 %v3678
        %3743 = vmatprep.mubr.f32.mxu0 %v2514
        %3744 = vmatmul.mubr.f32.gmra.mrb[0].mxu0 %v2513
        %v3745 = vpop.f32.mrb[0].mxu0
        %v3746 = vadd.f32 0.0, %v3745
        %v3747 = vpop.f32.mrb[0].mxu0
        %3748 = vdwg.mxu0
        %s3749 = scalar_lea.vmem %s3, 96
        %v3750 = vld [vmem:[%s3749] sm:$0xff]
        %v3751 = vld [vmem:[%s3749 + $0x8] sm:$0xff]
        %v3753 = vsel %vm2727, %v3750, 0
        %v3756 = vsel %vm2727, %v3751, 0
        %3758 = vmatprep.subr.mxu0 0.0
        %3759 = vmatpush1.msra.mxu0 %v3746
        %3760 = vmatprep.subr.mxu0 0.0
        %3761 = vmatpush1.msra.mxu0 0.0
        %3762 = vmatprep.subr.mxu0 0.0
        %3763 = vmatpush1.msra.mxu0 0.0
        %3764 = vmatprep.subr.mxu0 0.0
        %3765 = vmatpush1.msra.mxu0 0.0
        %3766 = vmatprep.subr.mxu0 0.0
        %3767 = vmatpush1.msra.mxu0 0.0
        %3768 = vmatprep.subr.mxu0 0.0
        %3769 = vmatpush1.msra.mxu0 0.0
        %3770 = vmatprep.subr.mxu0 0.0
        %3771 = vmatpush1.msra.mxu0 0.0
        %3772 = vmatprep.subr.mxu0 0.0
        %3773 = vmatpush1.msra.mxu0 0.0
        %3774 = vmatprep.subr.mxu0 0.0
        %3775 = vmatpush1.msra.mxu0 0.0
        %3776 = vmatprep.subr.mxu0 0.0
        %3777 = vmatpush1.msra.mxu0 0.0
        %3778 = vmatprep.subr.mxu0 0.0
        %3779 = vmatpush1.msra.mxu0 0.0
        %3780 = vmatprep.subr.mxu0 0.0
        %3781 = vmatpush1.msra.mxu0 0.0
        %3782 = vmatprep.subr.mxu0 0.0
        %3783 = vmatpush1.msra.mxu0 0.0
        %3784 = vmatprep.subr.mxu0 0.0
        %3785 = vmatpush1.msra.mxu0 0.0
        %3786 = vmatprep.subr.mxu0 0.0
        %3787 = vmatpush1.msra.mxu0 0.0
        %3788 = vmatprep.subr.mxu0 0.0
        %3789 = vmatpush1.msra.mxu0 0.0
        %3790 = vmatprep.subr.mxu0 0.0
        %3791 = vmatpush1.msra.mxu0 0.0
        %3792 = vmatprep.subr.mxu0 0.0
        %3793 = vmatpush1.msra.mxu0 0.0
        %3794 = vmatprep.subr.mxu0 0.0
        %3795 = vmatpush1.msra.mxu0 0.0
        %3796 = vmatprep.subr.mxu0 0.0
        %3797 = vmatpush1.msra.mxu0 0.0
        %3798 = vmatprep.subr.mxu0 0.0
        %3799 = vmatpush1.msra.mxu0 0.0
        %3800 = vmatprep.subr.mxu0 0.0
        %3801 = vmatpush1.msra.mxu0 0.0
        %3802 = vmatprep.subr.mxu0 0.0
        %3803 = vmatpush1.msra.mxu0 0.0
        %3804 = vmatprep.subr.mxu0 0.0
        %3805 = vmatpush1.msra.mxu0 0.0
        %3806 = vmatprep.subr.mxu0 0.0
        %3807 = vmatpush1.msra.mxu0 0.0
        %3808 = vmatprep.subr.mxu0 0.0
        %3809 = vmatpush1.msra.mxu0 0.0
        %3810 = vmatprep.subr.mxu0 0.0
        %3811 = vmatpush1.msra.mxu0 0.0
        %3812 = vmatprep.subr.mxu0 0.0
        %3813 = vmatpush1.msra.mxu0 0.0
        %3814 = vmatprep.subr.mxu0 0.0
        %3815 = vmatpush1.msra.mxu0 0.0
        %3816 = vmatprep.subr.mxu0 0.0
        %3817 = vmatpush1.msra.mxu0 0.0
        %3818 = vmatprep.subr.mxu0 0.0
        %3819 = vmatpush1.msra.mxu0 0.0
        %3820 = vmatprep.subr.mxu0 0.0
        %3821 = vmatpush1.msra.mxu0 0.0
        %3822 = vmatprep.mubr.f32.mxu0 0.0
        %3823 = vmatmul.mubr.f32.gmra.mrb[0].mxu0 %v3753
        %v3824 = vpop.f32.mrb[0].mxu0
        %v3825 = vadd.f32 0.0, %v3824
        %v3826 = vpop.f32.mrb[0].mxu0
        %3827 = vmatprep.mubr.f32.mxu0 0.0
        %3828 = vmatmul.mubr.f32.gmra.mrb[0].mxu0 %v3756
        %v3829 = vpop.f32.mrb[0].mxu0
        %v3830 = vadd.f32 0.0, %v3829
        %v3831 = vpop.f32.mrb[0].mxu0
        %3832 = vdwg.mxu0
        %v3833 = vadd.f32 %v3644, %v3825
        %v3834 = vadd.f32 %v3645, %v3830
        %s3835 = scalar_lea.vmem [#allocation6], 1792
        %v3836 = vld [vmem:[%s3835] sm:$0xff]
        %v3837 = vld [vmem:[%s3835 + $0x8] sm:$0xff]
        %v3838 = vld [vmem:[%s3835 + $0x10] sm:$0xff]
        %v3839 = vld [vmem:[%s3835 + $0x18] sm:$0xff]
        %v3840 = vld [vmem:[%s3835 + $0x20] sm:$0xff]
        %v3841 = vld [vmem:[%s3835 + $0x28] sm:$0xff]
        %v3842 = vld [vmem:[%s3835 + $0x30] sm:$0xff]
        %v3843 = vld [vmem:[%s3835 + $0x38] sm:$0xff]
        %v3844 = vld [vmem:[%s3835 + $0x40] sm:$0xff]
        %v3845 = vld [vmem:[%s3835 + $0x48] sm:$0xff]
        %v3846 = vld [vmem:[%s3835 + $0x50] sm:$0xff]
        %v3847 = vld [vmem:[%s3835 + $0x58] sm:$0xff]
        %v3848 = vld [vmem:[%s3835 + $0x60] sm:$0xff]
        %v3849 = vld [vmem:[%s3835 + $0x68] sm:$0xff]
        %v3850 = vld [vmem:[%s3835 + $0x70] sm:$0xff]
        %v3851 = vld [vmem:[%s3835 + $0x78] sm:$0xff]
        %v3852 = vld [vmem:[%s3835 + $0x80] sm:$0xff]
        %v3853 = vld [vmem:[%s3835 + $0x88] sm:$0xff]
        %v3854 = vld [vmem:[%s3835 + $0x90] sm:$0xff]
        %v3855 = vld [vmem:[%s3835 + $0x98] sm:$0xff]
        %v3856 = vld [vmem:[%s3835 + $0xa0] sm:$0xff]
        %v3857 = vld [vmem:[%s3835 + $0xa8] sm:$0xff]
        %v3858 = vld [vmem:[%s3835 + $0xb0] sm:$0xff]
        %v3859 = vld [vmem:[%s3835 + $0xb8] sm:$0xff]
        %v3860 = vld [vmem:[%s3835 + $0xc0] sm:$0xff]
        %v3861 = vld [vmem:[%s3835 + $0xc8] sm:$0xff]
        %v3862 = vld [vmem:[%s3835 + $0xd0] sm:$0xff]
        %v3863 = vld [vmem:[%s3835 + $0xd8] sm:$0xff]
        %v3864 = vld [vmem:[%s3835 + $0xe0] sm:$0xff]
        %v3865 = vld [vmem:[%s3835 + $0xe8] sm:$0xff]
        %v3866 = vld [vmem:[%s3835 + $0xf0] sm:$0xff]
        %v3867 = vld [vmem:[%s3835 + $0xf8] sm:$0xff]
        %3868 = vmatprep.subr.mxu0 0.0
        %3869 = vmatpush1.msra.mxu0 %v3836
        %3870 = vmatprep.subr.mxu0 0.0
        %3871 = vmatpush1.msra.mxu0 %v3837
        %3872 = vmatprep.subr.mxu0 0.0
        %3873 = vmatpush1.msra.mxu0 %v3838
        %3874 = vmatprep.subr.mxu0 0.0
        %3875 = vmatpush1.msra.mxu0 %v3839
        %3876 = vmatprep.subr.mxu0 0.0
        %3877 = vmatpush1.msra.mxu0 %v3840
        %3878 = vmatprep.subr.mxu0 0.0
        %3879 = vmatpush1.msra.mxu0 %v3841
        %3880 = vmatprep.subr.mxu0 0.0
        %3881 = vmatpush1.msra.mxu0 %v3842
        %3882 = vmatprep.subr.mxu0 0.0
        %3883 = vmatpush1.msra.mxu0 %v3843
        %3884 = vmatprep.subr.mxu0 0.0
        %3885 = vmatpush1.msra.mxu0 %v3844
        %3886 = vmatprep.subr.mxu0 0.0
        %3887 = vmatpush1.msra.mxu0 %v3845
        %3888 = vmatprep.subr.mxu0 0.0
        %3889 = vmatpush1.msra.mxu0 %v3846
        %3890 = vmatprep.subr.mxu0 0.0
        %3891 = vmatpush1.msra.mxu0 %v3847
        %3892 = vmatprep.subr.mxu0 0.0
        %3893 = vmatpush1.msra.mxu0 %v3848
        %3894 = vmatprep.subr.mxu0 0.0
        %3895 = vmatpush1.msra.mxu0 %v3849
        %3896 = vmatprep.subr.mxu0 0.0
        %3897 = vmatpush1.msra.mxu0 %v3850
        %3898 = vmatprep.subr.mxu0 0.0
        %3899 = vmatpush1.msra.mxu0 %v3851
        %3900 = vmatprep.subr.mxu0 0.0
        %3901 = vmatpush1.msra.mxu0 %v3852
        %3902 = vmatprep.subr.mxu0 0.0
        %3903 = vmatpush1.msra.mxu0 %v3853
        %3904 = vmatprep.subr.mxu0 0.0
        %3905 = vmatpush1.msra.mxu0 %v3854
        %3906 = vmatprep.subr.mxu0 0.0
        %3907 = vmatpush1.msra.mxu0 %v3855
        %3908 = vmatprep.subr.mxu0 0.0
        %3909 = vmatpush1.msra.mxu0 %v3856
        %3910 = vmatprep.subr.mxu0 0.0
        %3911 = vmatpush1.msra.mxu0 %v3857
        %3912 = vmatprep.subr.mxu0 0.0
        %3913 = vmatpush1.msra.mxu0 %v3858
        %3914 = vmatprep.subr.mxu0 0.0
        %3915 = vmatpush1.msra.mxu0 %v3859
        %3916 = vmatprep.subr.mxu0 0.0
        %3917 = vmatpush1.msra.mxu0 %v3860
        %3918 = vmatprep.subr.mxu0 0.0
        %3919 = vmatpush1.msra.mxu0 %v3861
        %3920 = vmatprep.subr.mxu0 0.0
        %3921 = vmatpush1.msra.mxu0 %v3862
        %3922 = vmatprep.subr.mxu0 0.0
        %3923 = vmatpush1.msra.mxu0 %v3863
        %3924 = vmatprep.subr.mxu0 0.0
        %3925 = vmatpush1.msra.mxu0 %v3864
        %3926 = vmatprep.subr.mxu0 0.0
        %3927 = vmatpush1.msra.mxu0 %v3865
        %3928 = vmatprep.subr.mxu0 0.0
        %3929 = vmatpush1.msra.mxu0 %v3866
        %3930 = vmatprep.subr.mxu0 0.0
        %3931 = vmatpush1.msra.mxu0 %v3867
        %3932 = vmatprep.mubr.f32.mxu0 %v2514
        %3933 = vmatmul.mubr.f32.gmra.mrb[0].mxu0 %v2513
        %v3934 = vpop.f32.mrb[0].mxu0
        %v3935 = vadd.f32 0.0, %v3934
        %v3936 = vpop.f32.mrb[0].mxu0
        %3937 = vdwg.mxu0
        %s3938 = scalar_lea.vmem %s3, 112
        %v3939 = vld [vmem:[%s3938] sm:$0xff]
        %v3940 = vld [vmem:[%s3938 + $0x8] sm:$0xff]
        %v3942 = vsel %vm2727, %v3939, 0
        %v3945 = vsel %vm2727, %v3940, 0
        %3947 = vmatprep.subr.mxu0 0.0
        %3948 = vmatpush1.msra.mxu0 %v3935
        %3949 = vmatprep.subr.mxu0 0.0
        %3950 = vmatpush1.msra.mxu0 0.0
        %3951 = vmatprep.subr.mxu0 0.0
        %3952 = vmatpush1.msra.mxu0 0.0
        %3953 = vmatprep.subr.mxu0 0.0
        %3954 = vmatpush1.msra.mxu0 0.0
        %3955 = vmatprep.subr.mxu0 0.0
        %3956 = vmatpush1.msra.mxu0 0.0
        %3957 = vmatprep.subr.mxu0 0.0
        %3958 = vmatpush1.msra.mxu0 0.0
        %3959 = vmatprep.subr.mxu0 0.0
        %3960 = vmatpush1.msra.mxu0 0.0
        %3961 = vmatprep.subr.mxu0 0.0
        %3962 = vmatpush1.msra.mxu0 0.0
        %3963 = vmatprep.subr.mxu0 0.0
        %3964 = vmatpush1.msra.mxu0 0.0
        %3965 = vmatprep.subr.mxu0 0.0
        %3966 = vmatpush1.msra.mxu0 0.0
        %3967 = vmatprep.subr.mxu0 0.0
        %3968 = vmatpush1.msra.mxu0 0.0
        %3969 = vmatprep.subr.mxu0 0.0
        %3970 = vmatpush1.msra.mxu0 0.0
        %3971 = vmatprep.subr.mxu0 0.0
        %3972 = vmatpush1.msra.mxu0 0.0
        %3973 = vmatprep.subr.mxu0 0.0
        %3974 = vmatpush1.msra.mxu0 0.0
        %3975 = vmatprep.subr.mxu0 0.0
        %3976 = vmatpush1.msra.mxu0 0.0
        %3977 = vmatprep.subr.mxu0 0.0
        %3978 = vmatpush1.msra.mxu0 0.0
        %3979 = vmatprep.subr.mxu0 0.0
        %3980 = vmatpush1.msra.mxu0 0.0
        %3981 = vmatprep.subr.mxu0 0.0
        %3982 = vmatpush1.msra.mxu0 0.0
        %3983 = vmatprep.subr.mxu0 0.0
        %3984 = vmatpush1.msra.mxu0 0.0
        %3985 = vmatprep.subr.mxu0 0.0
        %3986 = vmatpush1.msra.mxu0 0.0
        %3987 = vmatprep.subr.mxu0 0.0
        %3988 = vmatpush1.msra.mxu0 0.0
        %3989 = vmatprep.subr.mxu0 0.0
        %3990 = vmatpush1.msra.mxu0 0.0
        %3991 = vmatprep.subr.mxu0 0.0
        %3992 = vmatpush1.msra.mxu0 0.0
        %3993 = vmatprep.subr.mxu0 0.0
        %3994 = vmatpush1.msra.mxu0 0.0
        %3995 = vmatprep.subr.mxu0 0.0
        %3996 = vmatpush1.msra.mxu0 0.0
        %3997 = vmatprep.subr.mxu0 0.0
        %3998 = vmatpush1.msra.mxu0 0.0
        %3999 = vmatprep.subr.mxu0 0.0
        %4000 = vmatpush1.msra.mxu0 0.0
        %4001 = vmatprep.subr.mxu0 0.0
        %4002 = vmatpush1.msra.mxu0 0.0
        %4003 = vmatprep.subr.mxu0 0.0
        %4004 = vmatpush1.msra.mxu0 0.0
        %4005 = vmatprep.subr.mxu0 0.0
        %4006 = vmatpush1.msra.mxu0 0.0
        %4007 = vmatprep.subr.mxu0 0.0
        %4008 = vmatpush1.msra.mxu0 0.0
        %4009 = vmatprep.subr.mxu0 0.0
        %4010 = vmatpush1.msra.mxu0 0.0
        %4011 = vmatprep.mubr.f32.mxu0 0.0
        %4012 = vmatmul.mubr.f32.gmra.mrb[0].mxu0 %v3942
        %v4013 = vpop.f32.mrb[0].mxu0
        %v4014 = vadd.f32 0.0, %v4013
        %v4015 = vpop.f32.mrb[0].mxu0
        %4016 = vmatprep.mubr.f32.mxu0 0.0
        %4017 = vmatmul.mubr.f32.gmra.mrb[0].mxu0 %v3945
        %v4018 = vpop.f32.mrb[0].mxu0
        %v4019 = vadd.f32 0.0, %v4018
        %v4020 = vpop.f32.mrb[0].mxu0
        %4021 = vdwg.mxu0
        %v4022 = vadd.f32 %v3833, %v4014
        %v4023 = vadd.f32 %v3834, %v4019
        %s4024 = scalar_lea.vmem [#allocation6], 2048
        %v4025 = vld [vmem:[%s4024] sm:$0xff]
        %v4026 = vld [vmem:[%s4024 + $0x8] sm:$0xff]
        %v4027 = vld [vmem:[%s4024 + $0x10] sm:$0xff]
        %v4028 = vld [vmem:[%s4024 + $0x18] sm:$0xff]
        %v4029 = vld [vmem:[%s4024 + $0x20] sm:$0xff]
        %v4030 = vld [vmem:[%s4024 + $0x28] sm:$0xff]
        %v4031 = vld [vmem:[%s4024 + $0x30] sm:$0xff]
        %v4032 = vld [vmem:[%s4024 + $0x38] sm:$0xff]
        %v4033 = vld [vmem:[%s4024 + $0x40] sm:$0xff]
        %v4034 = vld [vmem:[%s4024 + $0x48] sm:$0xff]
        %v4035 = vld [vmem:[%s4024 + $0x50] sm:$0xff]
        %v4036 = vld [vmem:[%s4024 + $0x58] sm:$0xff]
        %v4037 = vld [vmem:[%s4024 + $0x60] sm:$0xff]
        %v4038 = vld [vmem:[%s4024 + $0x68] sm:$0xff]
        %v4039 = vld [vmem:[%s4024 + $0x70] sm:$0xff]
        %v4040 = vld [vmem:[%s4024 + $0x78] sm:$0xff]
        %v4041 = vld [vmem:[%s4024 + $0x80] sm:$0xff]
        %v4042 = vld [vmem:[%s4024 + $0x88] sm:$0xff]
        %v4043 = vld [vmem:[%s4024 + $0x90] sm:$0xff]
        %v4044 = vld [vmem:[%s4024 + $0x98] sm:$0xff]
        %v4045 = vld [vmem:[%s4024 + $0xa0] sm:$0xff]
        %v4046 = vld [vmem:[%s4024 + $0xa8] sm:$0xff]
        %v4047 = vld [vmem:[%s4024 + $0xb0] sm:$0xff]
        %v4048 = vld [vmem:[%s4024 + $0xb8] sm:$0xff]
        %v4049 = vld [vmem:[%s4024 + $0xc0] sm:$0xff]
        %v4050 = vld [vmem:[%s4024 + $0xc8] sm:$0xff]
        %v4051 = vld [vmem:[%s4024 + $0xd0] sm:$0xff]
        %v4052 = vld [vmem:[%s4024 + $0xd8] sm:$0xff]
        %v4053 = vld [vmem:[%s4024 + $0xe0] sm:$0xff]
        %v4054 = vld [vmem:[%s4024 + $0xe8] sm:$0xff]
        %v4055 = vld [vmem:[%s4024 + $0xf0] sm:$0xff]
        %v4056 = vld [vmem:[%s4024 + $0xf8] sm:$0xff]
        %4057 = vmatprep.subr.mxu0 0.0
        %4058 = vmatpush1.msra.mxu0 %v4025
        %4059 = vmatprep.subr.mxu0 0.0
        %4060 = vmatpush1.msra.mxu0 %v4026
        %4061 = vmatprep.subr.mxu0 0.0
        %4062 = vmatpush1.msra.mxu0 %v4027
        %4063 = vmatprep.subr.mxu0 0.0
        %4064 = vmatpush1.msra.mxu0 %v4028
        %4065 = vmatprep.subr.mxu0 0.0
        %4066 = vmatpush1.msra.mxu0 %v4029
        %4067 = vmatprep.subr.mxu0 0.0
        %4068 = vmatpush1.msra.mxu0 %v4030
        %4069 = vmatprep.subr.mxu0 0.0
        %4070 = vmatpush1.msra.mxu0 %v4031
        %4071 = vmatprep.subr.mxu0 0.0
        %4072 = vmatpush1.msra.mxu0 %v4032
        %4073 = vmatprep.subr.mxu0 0.0
        %4074 = vmatpush1.msra.mxu0 %v4033
        %4075 = vmatprep.subr.mxu0 0.0
        %4076 = vmatpush1.msra.mxu0 %v4034
        %4077 = vmatprep.subr.mxu0 0.0
        %4078 = vmatpush1.msra.mxu0 %v4035
        %4079 = vmatprep.subr.mxu0 0.0
        %4080 = vmatpush1.msra.mxu0 %v4036
        %4081 = vmatprep.subr.mxu0 0.0
        %4082 = vmatpush1.msra.mxu0 %v4037
        %4083 = vmatprep.subr.mxu0 0.0
        %4084 = vmatpush1.msra.mxu0 %v4038
        %4085 = vmatprep.subr.mxu0 0.0
        %4086 = vmatpush1.msra.mxu0 %v4039
        %4087 = vmatprep.subr.mxu0 0.0
        %4088 = vmatpush1.msra.mxu0 %v4040
        %4089 = vmatprep.subr.mxu0 0.0
        %4090 = vmatpush1.msra.mxu0 %v4041
        %4091 = vmatprep.subr.mxu0 0.0
        %4092 = vmatpush1.msra.mxu0 %v4042
        %4093 = vmatprep.subr.mxu0 0.0
        %4094 = vmatpush1.msra.mxu0 %v4043
        %4095 = vmatprep.subr.mxu0 0.0
        %4096 = vmatpush1.msra.mxu0 %v4044
        %4097 = vmatprep.subr.mxu0 0.0
        %4098 = vmatpush1.msra.mxu0 %v4045
        %4099 = vmatprep.subr.mxu0 0.0
        %4100 = vmatpush1.msra.mxu0 %v4046
        %4101 = vmatprep.subr.mxu0 0.0
        %4102 = vmatpush1.msra.mxu0 %v4047
        %4103 = vmatprep.subr.mxu0 0.0
        %4104 = vmatpush1.msra.mxu0 %v4048
        %4105 = vmatprep.subr.mxu0 0.0
        %4106 = vmatpush1.msra.mxu0 %v4049
        %4107 = vmatprep.subr.mxu0 0.0
        %4108 = vmatpush1.msra.mxu0 %v4050
        %4109 = vmatprep.subr.mxu0 0.0
        %4110 = vmatpush1.msra.mxu0 %v4051
        %4111 = vmatprep.subr.mxu0 0.0
        %4112 = vmatpush1.msra.mxu0 %v4052
        %4113 = vmatprep.subr.mxu0 0.0
        %4114 = vmatpush1.msra.mxu0 %v4053
        %4115 = vmatprep.subr.mxu0 0.0
        %4116 = vmatpush1.msra.mxu0 %v4054
        %4117 = vmatprep.subr.mxu0 0.0
        %4118 = vmatpush1.msra.mxu0 %v4055
        %4119 = vmatprep.subr.mxu0 0.0
        %4120 = vmatpush1.msra.mxu0 %v4056
        %4121 = vmatprep.mubr.f32.mxu0 %v2514
        %4122 = vmatmul.mubr.f32.gmra.mrb[0].mxu0 %v2513
        %v4123 = vpop.f32.mrb[0].mxu0
        %v4124 = vadd.f32 0.0, %v4123
        %v4125 = vpop.f32.mrb[0].mxu0
        %4126 = vdwg.mxu0
        %s4127 = scalar_lea.vmem %s3, 128
        %v4128 = vld [vmem:[%s4127] sm:$0xff]
        %v4129 = vld [vmem:[%s4127 + $0x8] sm:$0xff]
        %v4131 = vsel %vm2727, %v4128, 0
        %v4134 = vsel %vm2727, %v4129, 0
        %4136 = vmatprep.subr.mxu0 0.0
        %4137 = vmatpush1.msra.mxu0 %v4124
        %4138 = vmatprep.subr.mxu0 0.0
        %4139 = vmatpush1.msra.mxu0 0.0
        %4140 = vmatprep.subr.mxu0 0.0
        %4141 = vmatpush1.msra.mxu0 0.0
        %4142 = vmatprep.subr.mxu0 0.0
        %4143 = vmatpush1.msra.mxu0 0.0
        %4144 = vmatprep.subr.mxu0 0.0
        %4145 = vmatpush1.msra.mxu0 0.0
        %4146 = vmatprep.subr.mxu0 0.0
        %4147 = vmatpush1.msra.mxu0 0.0
        %4148 = vmatprep.subr.mxu0 0.0
        %4149 = vmatpush1.msra.mxu0 0.0
        %4150 = vmatprep.subr.mxu0 0.0
        %4151 = vmatpush1.msra.mxu0 0.0
        %4152 = vmatprep.subr.mxu0 0.0
        %4153 = vmatpush1.msra.mxu0 0.0
        %4154 = vmatprep.subr.mxu0 0.0
        %4155 = vmatpush1.msra.mxu0 0.0
        %4156 = vmatprep.subr.mxu0 0.0
        %4157 = vmatpush1.msra.mxu0 0.0
        %4158 = vmatprep.subr.mxu0 0.0
        %4159 = vmatpush1.msra.mxu0 0.0
        %4160 = vmatprep.subr.mxu0 0.0
        %4161 = vmatpush1.msra.mxu0 0.0
        %4162 = vmatprep.subr.mxu0 0.0
        %4163 = vmatpush1.msra.mxu0 0.0
        %4164 = vmatprep.subr.mxu0 0.0
        %4165 = vmatpush1.msra.mxu0 0.0
        %4166 = vmatprep.subr.mxu0 0.0
        %4167 = vmatpush1.msra.mxu0 0.0
        %4168 = vmatprep.subr.mxu0 0.0
        %4169 = vmatpush1.msra.mxu0 0.0
        %4170 = vmatprep.subr.mxu0 0.0
        %4171 = vmatpush1.msra.mxu0 0.0
        %4172 = vmatprep.subr.mxu0 0.0
        %4173 = vmatpush1.msra.mxu0 0.0
        %4174 = vmatprep.subr.mxu0 0.0
        %4175 = vmatpush1.msra.mxu0 0.0
        %4176 = vmatprep.subr.mxu0 0.0
        %4177 = vmatpush1.msra.mxu0 0.0
        %4178 = vmatprep.subr.mxu0 0.0
        %4179 = vmatpush1.msra.mxu0 0.0
        %4180 = vmatprep.subr.mxu0 0.0
        %4181 = vmatpush1.msra.mxu0 0.0
        %4182 = vmatprep.subr.mxu0 0.0
        %4183 = vmatpush1.msra.mxu0 0.0
        %4184 = vmatprep.subr.mxu0 0.0
        %4185 = vmatpush1.msra.mxu0 0.0
        %4186 = vmatprep.subr.mxu0 0.0
        %4187 = vmatpush1.msra.mxu0 0.0
        %4188 = vmatprep.subr.mxu0 0.0
        %4189 = vmatpush1.msra.mxu0 0.0
        %4190 = vmatprep.subr.mxu0 0.0
        %4191 = vmatpush1.msra.mxu0 0.0
        %4192 = vmatprep.subr.mxu0 0.0
        %4193 = vmatpush1.msra.mxu0 0.0
        %4194 = vmatprep.subr.mxu0 0.0
        %4195 = vmatpush1.msra.mxu0 0.0
        %4196 = vmatprep.subr.mxu0 0.0
        %4197 = vmatpush1.msra.mxu0 0.0
        %4198 = vmatprep.subr.mxu0 0.0
        %4199 = vmatpush1.msra.mxu0 0.0
        %4200 = vmatprep.mubr.f32.mxu0 0.0
        %4201 = vmatmul.mubr.f32.gmra.mrb[0].mxu0 %v4131
        %v4202 = vpop.f32.mrb[0].mxu0
        %v4203 = vadd.f32 0.0, %v4202
        %v4204 = vpop.f32.mrb[0].mxu0
        %4205 = vmatprep.mubr.f32.mxu0 0.0
        %4206 = vmatmul.mubr.f32.gmra.mrb[0].mxu0 %v4134
        %v4207 = vpop.f32.mrb[0].mxu0
        %v4208 = vadd.f32 0.0, %v4207
        %v4209 = vpop.f32.mrb[0].mxu0
        %4210 = vdwg.mxu0
        %v4211 = vadd.f32 %v4022, %v4203
        %v4212 = vadd.f32 %v4023, %v4208
        %vm4213 = vcmask 523264
        %v4214 = vsel %vm4213, %v4211, 0.0
        %4215 = vadd.xlane.f32.xlu0 %v4214
        %v4216 = vpop.xlane.xlu0 %4215
        %v4217 = vsel %vm4213, %v4212, 0.0
        %4218 = vadd.xlane.f32.xlu0 %v4217
        %v4219 = vpop.xlane.xlu0 %4218
        %v4220 = vrcp.pop 64.0
        %v4221 = vmul.f32 %v4216, %v4220
        %v4222 = vmul.f32 %v4219, %v4220
        %v4223 = vsub.f32 %v4211, %v4221
        %v4224 = vsub.f32 %v4212, %v4222
        %v4225 = vmul.f32 %v4223, %v4223
        %v4226 = vmul.f32 %v4224, %v4224
        %v4227 = vsel %vm4213, %v4225, 0.0
        %4228 = vadd.xlane.f32.xlu0 %v4227
        %v4229 = vpop.xlane.xlu0 %4228
        %v4230 = vsel %vm4213, %v4226, 0.0
        %4231 = vadd.xlane.f32.xlu0 %v4230
        %v4232 = vpop.xlane.xlu0 %4231
        %v4233 = vmul.f32 %v4229, %v4220
        %v4234 = vmul.f32 %v4232, %v4220
        %v4235 = vadd.f32 %v4233, 1e-05
        %v4236 = vadd.f32 %v4234, 1e-05
        %v4237 = vrsqrt.pop %v4235
        %v4238 = vrsqrt.pop %v4236
        %v4239 = vmul.f32 %v4223, %v4237
        %v4240 = vmul.f32 %v4224, %v4238
        %s4241 = sld [smem:[#allocation2 + $0x1]]
        %vm4242 = vcmp.ge.f32.partialorder %v4239, 0.0
        %vm4243 = vcmp.ge.f32.partialorder %v4240, 0.0
        %v4244 = vstv %s4241
        %v4245 = vmul.f32 %v4244, %v4239
        %v4246 = vmul.f32 %v4244, %v4240
        %v4247 = vsel %vm4242, %v4239, %v4245
        %v4248 = vsel %vm4243, %v4240, %v4246
        %4249 = vst.msk [vmem:[%s504] sm:$0xff] %vm4213, %v4247
        %4250 = vst.msk [vmem:[%s504 + $0x8] sm:$0xff] %vm4213, %v4248
        %v4251 = vld [vmem:[#allocation8] sm:$0xff]
        %v4252 = vld [vmem:[#allocation8 + $0x8] sm:$0xff]
        %v4253 = vld [vmem:[#allocation8 + $0x10] sm:$0xff]
        %v4254 = vld [vmem:[#allocation8 + $0x18] sm:$0xff]
        %v4255 = vld [vmem:[#allocation8 + $0x20] sm:$0xff]
        %v4256 = vld [vmem:[#allocation8 + $0x28] sm:$0xff]
        %v4257 = vld [vmem:[#allocation8 + $0x30] sm:$0xff]
        %v4258 = vld [vmem:[#allocation8 + $0x38] sm:$0xff]
        %v4260 = vsel %vm4213, %v4247, 0
        %v4263 = vsel %vm4213, %v4248, 0
        %4265 = vmatprep.subr.mxu0 0.0
        %4266 = vmatpush1.msra.mxu0 %v4251
        %4267 = vmatprep.subr.mxu0 0.0
        %4268 = vmatpush1.msra.mxu0 %v4252
        %4269 = vmatprep.subr.mxu0 0.0
        %4270 = vmatpush1.msra.mxu0 %v4253
        %4271 = vmatprep.subr.mxu0 0.0
        %4272 = vmatpush1.msra.mxu0 %v4254
        %4273 = vmatprep.subr.mxu0 0.0
        %4274 = vmatpush1.msra.mxu0 %v4255
        %4275 = vmatprep.subr.mxu0 0.0
        %4276 = vmatpush1.msra.mxu0 %v4256
        %4277 = vmatprep.subr.mxu0 0.0
        %4278 = vmatpush1.msra.mxu0 %v4257
        %4279 = vmatprep.subr.mxu0 0.0
        %4280 = vmatpush1.msra.mxu0 %v4258
        %4281 = vmatprep.subr.mxu0 0.0
        %4282 = vmatpush1.msra.mxu0 0.0
        %4283 = vmatprep.subr.mxu0 0.0
        %4284 = vmatpush1.msra.mxu0 0.0
        %4285 = vmatprep.subr.mxu0 0.0
        %4286 = vmatpush1.msra.mxu0 0.0
        %4287 = vmatprep.subr.mxu0 0.0
        %4288 = vmatpush1.msra.mxu0 0.0
        %4289 = vmatprep.subr.mxu0 0.0
        %4290 = vmatpush1.msra.mxu0 0.0
        %4291 = vmatprep.subr.mxu0 0.0
        %4292 = vmatpush1.msra.mxu0 0.0
        %4293 = vmatprep.subr.mxu0 0.0
        %4294 = vmatpush1.msra.mxu0 0.0
        %4295 = vmatprep.subr.mxu0 0.0
        %4296 = vmatpush1.msra.mxu0 0.0
        %4297 = vmatprep.subr.mxu0 0.0
        %4298 = vmatpush1.msra.mxu0 0.0
        %4299 = vmatprep.subr.mxu0 0.0
        %4300 = vmatpush1.msra.mxu0 0.0
        %4301 = vmatprep.subr.mxu0 0.0
        %4302 = vmatpush1.msra.mxu0 0.0
        %4303 = vmatprep.subr.mxu0 0.0
        %4304 = vmatpush1.msra.mxu0 0.0
        %4305 = vmatprep.subr.mxu0 0.0
        %4306 = vmatpush1.msra.mxu0 0.0
        %4307 = vmatprep.subr.mxu0 0.0
        %4308 = vmatpush1.msra.mxu0 0.0
        %4309 = vmatprep.subr.mxu0 0.0
        %4310 = vmatpush1.msra.mxu0 0.0
        %4311 = vmatprep.subr.mxu0 0.0
        %4312 = vmatpush1.msra.mxu0 0.0
        %4313 = vmatprep.subr.mxu0 0.0
        %4314 = vmatpush1.msra.mxu0 0.0
        %4315 = vmatprep.subr.mxu0 0.0
        %4316 = vmatpush1.msra.mxu0 0.0
        %4317 = vmatprep.subr.mxu0 0.0
        %4318 = vmatpush1.msra.mxu0 0.0
        %4319 = vmatprep.subr.mxu0 0.0
        %4320 = vmatpush1.msra.mxu0 0.0
        %4321 = vmatprep.subr.mxu0 0.0
        %4322 = vmatpush1.msra.mxu0 0.0
        %4323 = vmatprep.subr.mxu0 0.0
        %4324 = vmatpush1.msra.mxu0 0.0
        %4325 = vmatprep.subr.mxu0 0.0
        %4326 = vmatpush1.msra.mxu0 0.0
        %4327 = vmatprep.subr.mxu0 0.0
        %4328 = vmatpush1.msra.mxu0 0.0
        %4329 = vmatprep.mubr.f32.mxu0 0.0
        %4330 = vmatmul.mubr.f32.gmra.mrb[0].mxu0 %v4260
        %v4331 = vpop.f32.mrb[0].mxu0
        %v4332 = vadd.f32 0.0, %v4331
        %v4333 = vpop.f32.mrb[0].mxu0
        %4334 = vmatprep.mubr.f32.mxu0 0.0
        %4335 = vmatmul.mubr.f32.gmra.mrb[0].mxu0 %v4263
        %v4336 = vpop.f32.mrb[0].mxu0
        %v4337 = vadd.f32 0.0, %v4336
        %v4338 = vpop.f32.mrb[0].mxu0
        %4339 = vdwg.mxu0
        %v4340 = vld [vmem:[%s4] sm:$0xff]
        %v4341 = vld [vmem:[%s4 + $0x8] sm:$0xff]
        %v4342 = vld [vmem:[%s4 + $0x10] sm:$0xff]
        %v4343 = vld [vmem:[%s4 + $0x18] sm:$0xff]
        %s4344 = scalar_lea.vmem [#allocation8], 64
        %v4345 = vld [vmem:[%s4344] sm:$0xff]
        %v4346 = vld [vmem:[%s4344 + $0x8] sm:$0xff]
        %v4347 = vld [vmem:[%s4344 + $0x10] sm:$0xff]
        %v4348 = vld [vmem:[%s4344 + $0x18] sm:$0xff]
        %v4349 = vld [vmem:[%s4344 + $0x20] sm:$0xff]
        %v4350 = vld [vmem:[%s4344 + $0x28] sm:$0xff]
        %v4351 = vld [vmem:[%s4344 + $0x30] sm:$0xff]
        %v4352 = vld [vmem:[%s4344 + $0x38] sm:$0xff]
        %4353 = vmatprep.subr.mxu0 0.0
        %4354 = vmatpush1.msra.mxu0 %v4345
        %4355 = vmatprep.subr.mxu0 0.0
        %4356 = vmatpush1.msra.mxu0 %v4346
        %4357 = vmatprep.subr.mxu0 0.0
        %4358 = vmatpush1.msra.mxu0 %v4347
        %4359 = vmatprep.subr.mxu0 0.0
        %4360 = vmatpush1.msra.mxu0 %v4348
        %4361 = vmatprep.subr.mxu0 0.0
        %4362 = vmatpush1.msra.mxu0 %v4349
        %4363 = vmatprep.subr.mxu0 0.0
        %4364 = vmatpush1.msra.mxu0 %v4350
        %4365 = vmatprep.subr.mxu0 0.0
        %4366 = vmatpush1.msra.mxu0 %v4351
        %4367 = vmatprep.subr.mxu0 0.0
        %4368 = vmatpush1.msra.mxu0 %v4352
        %4369 = vmatprep.subr.mxu0 0.0
        %4370 = vmatpush1.msra.mxu0 0.0
        %4371 = vmatprep.subr.mxu0 0.0
        %4372 = vmatpush1.msra.mxu0 0.0
        %4373 = vmatprep.subr.mxu0 0.0
        %4374 = vmatpush1.msra.mxu0 0.0
        %4375 = vmatprep.subr.mxu0 0.0
        %4376 = vmatpush1.msra.mxu0 0.0
        %4377 = vmatprep.subr.mxu0 0.0
        %4378 = vmatpush1.msra.mxu0 0.0
        %4379 = vmatprep.subr.mxu0 0.0
        %4380 = vmatpush1.msra.mxu0 0.0
        %4381 = vmatprep.subr.mxu0 0.0
        %4382 = vmatpush1.msra.mxu0 0.0
        %4383 = vmatprep.subr.mxu0 0.0
        %4384 = vmatpush1.msra.mxu0 0.0
        %4385 = vmatprep.subr.mxu0 0.0
        %4386 = vmatpush1.msra.mxu0 0.0
        %4387 = vmatprep.subr.mxu0 0.0
        %4388 = vmatpush1.msra.mxu0 0.0
        %4389 = vmatprep.subr.mxu0 0.0
        %4390 = vmatpush1.msra.mxu0 0.0
        %4391 = vmatprep.subr.mxu0 0.0
        %4392 = vmatpush1.msra.mxu0 0.0
        %4393 = vmatprep.subr.mxu0 0.0
        %4394 = vmatpush1.msra.mxu0 0.0
        %4395 = vmatprep.subr.mxu0 0.0
        %4396 = vmatpush1.msra.mxu0 0.0
        %4397 = vmatprep.subr.mxu0 0.0
        %4398 = vmatpush1.msra.mxu0 0.0
        %4399 = vmatprep.subr.mxu0 0.0
        %4400 = vmatpush1.msra.mxu0 0.0
        %4401 = vmatprep.subr.mxu0 0.0
        %4402 = vmatpush1.msra.mxu0 0.0
        %4403 = vmatprep.subr.mxu0 0.0
        %4404 = vmatpush1.msra.mxu0 0.0
        %4405 = vmatprep.subr.mxu0 0.0
        %4406 = vmatpush1.msra.mxu0 0.0
        %4407 = vmatprep.subr.mxu0 0.0
        %4408 = vmatpush1.msra.mxu0 0.0
        %4409 = vmatprep.subr.mxu0 0.0
        %4410 = vmatpush1.msra.mxu0 0.0
        %4411 = vmatprep.subr.mxu0 0.0
        %4412 = vmatpush1.msra.mxu0 0.0
        %4413 = vmatprep.subr.mxu0 0.0
        %4414 = vmatpush1.msra.mxu0 0.0
        %4415 = vmatprep.subr.mxu0 0.0
        %4416 = vmatpush1.msra.mxu0 0.0
        %4417 = vmatprep.mubr.f32.mxu0 0.0
        %4418 = vmatmul.mubr.f32.gmra.mrb[0].mxu0 %v4260
        %v4419 = vpop.f32.mrb[0].mxu0
        %v4420 = vadd.f32 0.0, %v4419
        %v4421 = vpop.f32.mrb[0].mxu0
        %4422 = vmatprep.mubr.f32.mxu0 0.0
        %4423 = vmatmul.mubr.f32.gmra.mrb[0].mxu0 %v4263
        %v4424 = vpop.f32.mrb[0].mxu0
        %v4425 = vadd.f32 0.0, %v4424
        %v4426 = vpop.f32.mrb[0].mxu0
        %4427 = vdwg.mxu0
        %s4428 = scalar_lea.vmem %s4, 32
        %v4429 = vld [vmem:[%s4428] sm:$0xff]
        %v4430 = vld [vmem:[%s4428 + $0x8] sm:$0xff]
        %v4431 = vld [vmem:[%s4428 + $0x10] sm:$0xff]
        %v4432 = vld [vmem:[%s4428 + $0x18] sm:$0xff]
        %vm4433 = vcmask 130048
        %v4435 = vsel %vm4433, %v4429, 0
        %v4438 = vsel %vm4433, %v4430, 0
        %v4441 = vsel %vm4433, %v4431, 0
        %v4444 = vsel %vm4433, %v4432, 0
        %4446 = vmatprep.subr.mxu0 0.0
        %4447 = vmatpush1.msra.mxu0 %v4420
        %4448 = vmatprep.subr.mxu0 0.0
        %4449 = vmatpush1.msra.mxu0 %v4425
        %4450 = vmatprep.subr.mxu0 0.0
        %4451 = vmatpush1.msra.mxu0 0.0
        %4452 = vmatprep.subr.mxu0 0.0
        %4453 = vmatpush1.msra.mxu0 0.0
        %4454 = vmatprep.subr.mxu0 0.0
        %4455 = vmatpush1.msra.mxu0 0.0
        %4456 = vmatprep.subr.mxu0 0.0
        %4457 = vmatpush1.msra.mxu0 0.0
        %4458 = vmatprep.subr.mxu0 0.0
        %4459 = vmatpush1.msra.mxu0 0.0
        %4460 = vmatprep.subr.mxu0 0.0
        %4461 = vmatpush1.msra.mxu0 0.0
        %4462 = vmatprep.subr.mxu0 0.0
        %4463 = vmatpush1.msra.mxu0 0.0
        %4464 = vmatprep.subr.mxu0 0.0
        %4465 = vmatpush1.msra.mxu0 0.0
        %4466 = vmatprep.subr.mxu0 0.0
        %4467 = vmatpush1.msra.mxu0 0.0
        %4468 = vmatprep.subr.mxu0 0.0
        %4469 = vmatpush1.msra.mxu0 0.0
        %4470 = vmatprep.subr.mxu0 0.0
        %4471 = vmatpush1.msra.mxu0 0.0
        %4472 = vmatprep.subr.mxu0 0.0
        %4473 = vmatpush1.msra.mxu0 0.0
        %4474 = vmatprep.subr.mxu0 0.0
        %4475 = vmatpush1.msra.mxu0 0.0
        %4476 = vmatprep.subr.mxu0 0.0
        %4477 = vmatpush1.msra.mxu0 0.0
        %4478 = vmatprep.subr.mxu0 0.0
        %4479 = vmatpush1.msra.mxu0 0.0
        %4480 = vmatprep.subr.mxu0 0.0
        %4481 = vmatpush1.msra.mxu0 0.0
        %4482 = vmatprep.subr.mxu0 0.0
        %4483 = vmatpush1.msra.mxu0 0.0
        %4484 = vmatprep.subr.mxu0 0.0
        %4485 = vmatpush1.msra.mxu0 0.0
        %4486 = vmatprep.subr.mxu0 0.0
        %4487 = vmatpush1.msra.mxu0 0.0
        %4488 = vmatprep.subr.mxu0 0.0
        %4489 = vmatpush1.msra.mxu0 0.0
        %4490 = vmatprep.subr.mxu0 0.0
        %4491 = vmatpush1.msra.mxu0 0.0
        %4492 = vmatprep.subr.mxu0 0.0
        %4493 = vmatpush1.msra.mxu0 0.0
        %4494 = vmatprep.subr.mxu0 0.0
        %4495 = vmatpush1.msra.mxu0 0.0
        %4496 = vmatprep.subr.mxu0 0.0
        %4497 = vmatpush1.msra.mxu0 0.0
        %4498 = vmatprep.subr.mxu0 0.0
        %4499 = vmatpush1.msra.mxu0 0.0
        %4500 = vmatprep.subr.mxu0 0.0
        %4501 = vmatpush1.msra.mxu0 0.0
        %4502 = vmatprep.subr.mxu0 0.0
        %4503 = vmatpush1.msra.mxu0 0.0
        %4504 = vmatprep.subr.mxu0 0.0
        %4505 = vmatpush1.msra.mxu0 0.0
        %4506 = vmatprep.subr.mxu0 0.0
        %4507 = vmatpush1.msra.mxu0 0.0
        %4508 = vmatprep.subr.mxu0 0.0
        %4509 = vmatpush1.msra.mxu0 0.0
        %4510 = vmatprep.mubr.f32.mxu0 0.0
        %4511 = vmatmul.mubr.f32.gmra.mrb[0].mxu0 %v4435
        %v4512 = vpop.f32.mrb[0].mxu0
        %v4513 = vadd.f32 0.0, %v4512
        %v4514 = vpop.f32.mrb[0].mxu0
        %4515 = vmatprep.mubr.f32.mxu0 0.0
        %4516 = vmatmul.mubr.f32.gmra.mrb[0].mxu0 %v4438
        %v4517 = vpop.f32.mrb[0].mxu0
        %v4518 = vadd.f32 0.0, %v4517
        %v4519 = vpop.f32.mrb[0].mxu0
        %4520 = vmatprep.mubr.f32.mxu0 0.0
        %4521 = vmatmul.mubr.f32.gmra.mrb[0].mxu0 %v4441
        %v4522 = vpop.f32.mrb[0].mxu0
        %v4523 = vadd.f32 0.0, %v4522
        %v4524 = vpop.f32.mrb[0].mxu0
        %4525 = vmatprep.mubr.f32.mxu0 0.0
        %4526 = vmatmul.mubr.f32.gmra.mrb[0].mxu0 %v4444
        %v4527 = vpop.f32.mrb[0].mxu0
        %v4528 = vadd.f32 0.0, %v4527
        %v4529 = vpop.f32.mrb[0].mxu0
        %4530 = vdwg.mxu0
        %v4532 = vsel %vm4433, %v4340, 0
        %v4535 = vsel %vm4433, %v4341, 0
        %v4538 = vsel %vm4433, %v4342, 0
        %v4541 = vsel %vm4433, %v4343, 0
        %4543 = vmatprep.subr.mxu0 0.0
        %4544 = vmatpush1.msra.mxu0 %v4332
        %4545 = vmatprep.subr.mxu0 0.0
        %4546 = vmatpush1.msra.mxu0 %v4337
        %4547 = vmatprep.subr.mxu0 0.0
        %4548 = vmatpush1.msra.mxu0 0.0
        %4549 = vmatprep.subr.mxu0 0.0
        %4550 = vmatpush1.msra.mxu0 0.0
        %4551 = vmatprep.subr.mxu0 0.0
        %4552 = vmatpush1.msra.mxu0 0.0
        %4553 = vmatprep.subr.mxu0 0.0
        %4554 = vmatpush1.msra.mxu0 0.0
        %4555 = vmatprep.subr.mxu0 0.0
        %4556 = vmatpush1.msra.mxu0 0.0
        %4557 = vmatprep.subr.mxu0 0.0
        %4558 = vmatpush1.msra.mxu0 0.0
        %4559 = vmatprep.subr.mxu0 0.0
        %4560 = vmatpush1.msra.mxu0 0.0
        %4561 = vmatprep.subr.mxu0 0.0
        %4562 = vmatpush1.msra.mxu0 0.0
        %4563 = vmatprep.subr.mxu0 0.0
        %4564 = vmatpush1.msra.mxu0 0.0
        %4565 = vmatprep.subr.mxu0 0.0
        %4566 = vmatpush1.msra.mxu0 0.0
        %4567 = vmatprep.subr.mxu0 0.0
        %4568 = vmatpush1.msra.mxu0 0.0
        %4569 = vmatprep.subr.mxu0 0.0
        %4570 = vmatpush1.msra.mxu0 0.0
        %4571 = vmatprep.subr.mxu0 0.0
        %4572 = vmatpush1.msra.mxu0 0.0
        %4573 = vmatprep.subr.mxu0 0.0
        %4574 = vmatpush1.msra.mxu0 0.0
        %4575 = vmatprep.subr.mxu0 0.0
        %4576 = vmatpush1.msra.mxu0 0.0
        %4577 = vmatprep.subr.mxu0 0.0
        %4578 = vmatpush1.msra.mxu0 0.0
        %4579 = vmatprep.subr.mxu0 0.0
        %4580 = vmatpush1.msra.mxu0 0.0
        %4581 = vmatprep.subr.mxu0 0.0
        %4582 = vmatpush1.msra.mxu0 0.0
        %4583 = vmatprep.subr.mxu0 0.0
        %4584 = vmatpush1.msra.mxu0 0.0
        %4585 = vmatprep.subr.mxu0 0.0
        %4586 = vmatpush1.msra.mxu0 0.0
        %4587 = vmatprep.subr.mxu0 0.0
        %4588 = vmatpush1.msra.mxu0 0.0
        %4589 = vmatprep.subr.mxu0 0.0
        %4590 = vmatpush1.msra.mxu0 0.0
        %4591 = vmatprep.subr.mxu0 0.0
        %4592 = vmatpush1.msra.mxu0 0.0
        %4593 = vmatprep.subr.mxu0 0.0
        %4594 = vmatpush1.msra.mxu0 0.0
        %4595 = vmatprep.subr.mxu0 0.0
        %4596 = vmatpush1.msra.mxu0 0.0
        %4597 = vmatprep.subr.mxu0 0.0
        %4598 = vmatpush1.msra.mxu0 0.0
        %4599 = vmatprep.subr.mxu0 0.0
        %4600 = vmatpush1.msra.mxu0 0.0
        %4601 = vmatprep.subr.mxu0 0.0
        %4602 = vmatpush1.msra.mxu0 0.0
        %4603 = vmatprep.subr.mxu0 0.0
        %4604 = vmatpush1.msra.mxu0 0.0
        %4605 = vmatprep.subr.mxu0 0.0
        %4606 = vmatpush1.msra.mxu0 0.0
        %4607 = vmatprep.mubr.f32.mxu0 0.0
        %4608 = vmatmul.mubr.f32.gmra.mrb[0].mxu0 %v4532
        %v4609 = vpop.f32.mrb[0].mxu0
        %v4610 = vadd.f32 %v4513, %v4609
        %v4611 = vpop.f32.mrb[0].mxu0
        %4612 = vmatprep.mubr.f32.mxu0 0.0
        %4613 = vmatmul.mubr.f32.gmra.mrb[0].mxu0 %v4535
        %v4614 = vpop.f32.mrb[0].mxu0
        %v4615 = vadd.f32 %v4518, %v4614
        %v4616 = vpop.f32.mrb[0].mxu0
        %4617 = vmatprep.mubr.f32.mxu0 0.0
        %4618 = vmatmul.mubr.f32.gmra.mrb[0].mxu0 %v4538
        %v4619 = vpop.f32.mrb[0].mxu0
        %v4620 = vadd.f32 %v4523, %v4619
        %v4621 = vpop.f32.mrb[0].mxu0
        %4622 = vmatprep.mubr.f32.mxu0 0.0
        %4623 = vmatmul.mubr.f32.gmra.mrb[0].mxu0 %v4541
        %v4624 = vpop.f32.mrb[0].mxu0
        %v4625 = vadd.f32 %v4528, %v4624
        %v4626 = vpop.f32.mrb[0].mxu0
        %4627 = vdwg.mxu0
        %s4628 = scalar_lea.vmem [#allocation8], 128
        %v4629 = vld [vmem:[%s4628] sm:$0xff]
        %v4630 = vld [vmem:[%s4628 + $0x8] sm:$0xff]
        %v4631 = vld [vmem:[%s4628 + $0x10] sm:$0xff]
        %v4632 = vld [vmem:[%s4628 + $0x18] sm:$0xff]
        %v4633 = vld [vmem:[%s4628 + $0x20] sm:$0xff]
        %v4634 = vld [vmem:[%s4628 + $0x28] sm:$0xff]
        %v4635 = vld [vmem:[%s4628 + $0x30] sm:$0xff]
        %v4636 = vld [vmem:[%s4628 + $0x38] sm:$0xff]
        %4637 = vmatprep.subr.mxu0 0.0
        %4638 = vmatpush1.msra.mxu0 %v4629
        %4639 = vmatprep.subr.mxu0 0.0
        %4640 = vmatpush1.msra.mxu0 %v4630
        %4641 = vmatprep.subr.mxu0 0.0
        %4642 = vmatpush1.msra.mxu0 %v4631
        %4643 = vmatprep.subr.mxu0 0.0
        %4644 = vmatpush1.msra.mxu0 %v4632
        %4645 = vmatprep.subr.mxu0 0.0
        %4646 = vmatpush1.msra.mxu0 %v4633
        %4647 = vmatprep.subr.mxu0 0.0
        %4648 = vmatpush1.msra.mxu0 %v4634
        %4649 = vmatprep.subr.mxu0 0.0
        %4650 = vmatpush1.msra.mxu0 %v4635
        %4651 = vmatprep.subr.mxu0 0.0
        %4652 = vmatpush1.msra.mxu0 %v4636
        %4653 = vmatprep.subr.mxu0 0.0
        %4654 = vmatpush1.msra.mxu0 0.0
        %4655 = vmatprep.subr.mxu0 0.0
        %4656 = vmatpush1.msra.mxu0 0.0
        %4657 = vmatprep.subr.mxu0 0.0
        %4658 = vmatpush1.msra.mxu0 0.0
        %4659 = vmatprep.subr.mxu0 0.0
        %4660 = vmatpush1.msra.mxu0 0.0
        %4661 = vmatprep.subr.mxu0 0.0
        %4662 = vmatpush1.msra.mxu0 0.0
        %4663 = vmatprep.subr.mxu0 0.0
        %4664 = vmatpush1.msra.mxu0 0.0
        %4665 = vmatprep.subr.mxu0 0.0
        %4666 = vmatpush1.msra.mxu0 0.0
        %4667 = vmatprep.subr.mxu0 0.0
        %4668 = vmatpush1.msra.mxu0 0.0
        %4669 = vmatprep.subr.mxu0 0.0
        %4670 = vmatpush1.msra.mxu0 0.0
        %4671 = vmatprep.subr.mxu0 0.0
        %4672 = vmatpush1.msra.mxu0 0.0
        %4673 = vmatprep.subr.mxu0 0.0
        %4674 = vmatpush1.msra.mxu0 0.0
        %4675 = vmatprep.subr.mxu0 0.0
        %4676 = vmatpush1.msra.mxu0 0.0
        %4677 = vmatprep.subr.mxu0 0.0
        %4678 = vmatpush1.msra.mxu0 0.0
        %4679 = vmatprep.subr.mxu0 0.0
        %4680 = vmatpush1.msra.mxu0 0.0
        %4681 = vmatprep.subr.mxu0 0.0
        %4682 = vmatpush1.msra.mxu0 0.0
        %4683 = vmatprep.subr.mxu0 0.0
        %4684 = vmatpush1.msra.mxu0 0.0
        %4685 = vmatprep.subr.mxu0 0.0
        %4686 = vmatpush1.msra.mxu0 0.0
        %4687 = vmatprep.subr.mxu0 0.0
        %4688 = vmatpush1.msra.mxu0 0.0
        %4689 = vmatprep.subr.mxu0 0.0
        %4690 = vmatpush1.msra.mxu0 0.0
        %4691 = vmatprep.subr.mxu0 0.0
        %4692 = vmatpush1.msra.mxu0 0.0
        %4693 = vmatprep.subr.mxu0 0.0
        %4694 = vmatpush1.msra.mxu0 0.0
        %4695 = vmatprep.subr.mxu0 0.0
        %4696 = vmatpush1.msra.mxu0 0.0
        %4697 = vmatprep.subr.mxu0 0.0
        %4698 = vmatpush1.msra.mxu0 0.0
        %4699 = vmatprep.subr.mxu0 0.0
        %4700 = vmatpush1.msra.mxu0 0.0
        %4701 = vmatprep.mubr.f32.mxu0 0.0
        %4702 = vmatmul.mubr.f32.gmra.mrb[0].mxu0 %v4260
        %v4703 = vpop.f32.mrb[0].mxu0
        %v4704 = vadd.f32 0.0, %v4703
        %v4705 = vpop.f32.mrb[0].mxu0
        %4706 = vmatprep.mubr.f32.mxu0 0.0
        %4707 = vmatmul.mubr.f32.gmra.mrb[0].mxu0 %v4263
        %v4708 = vpop.f32.mrb[0].mxu0
        %v4709 = vadd.f32 0.0, %v4708
        %v4710 = vpop.f32.mrb[0].mxu0
        %4711 = vdwg.mxu0
        %s4712 = scalar_lea.vmem %s4, 64
        %v4713 = vld [vmem:[%s4712] sm:$0xff]
        %v4714 = vld [vmem:[%s4712 + $0x8] sm:$0xff]
        %v4715 = vld [vmem:[%s4712 + $0x10] sm:$0xff]
        %v4716 = vld [vmem:[%s4712 + $0x18] sm:$0xff]
        %v4718 = vsel %vm4433, %v4713, 0
        %v4721 = vsel %vm4433, %v4714, 0
        %v4724 = vsel %vm4433, %v4715, 0
        %v4727 = vsel %vm4433, %v4716, 0
        %4729 = vmatprep.subr.mxu0 0.0
        %4730 = vmatpush1.msra.mxu0 %v4704
        %4731 = vmatprep.subr.mxu0 0.0
        %4732 = vmatpush1.msra.mxu0 %v4709
        %4733 = vmatprep.subr.mxu0 0.0
        %4734 = vmatpush1.msra.mxu0 0.0
        %4735 = vmatprep.subr.mxu0 0.0
        %4736 = vmatpush1.msra.mxu0 0.0
        %4737 = vmatprep.subr.mxu0 0.0
        %4738 = vmatpush1.msra.mxu0 0.0
        %4739 = vmatprep.subr.mxu0 0.0
        %4740 = vmatpush1.msra.mxu0 0.0
        %4741 = vmatprep.subr.mxu0 0.0
        %4742 = vmatpush1.msra.mxu0 0.0
        %4743 = vmatprep.subr.mxu0 0.0
        %4744 = vmatpush1.msra.mxu0 0.0
        %4745 = vmatprep.subr.mxu0 0.0
        %4746 = vmatpush1.msra.mxu0 0.0
        %4747 = vmatprep.subr.mxu0 0.0
        %4748 = vmatpush1.msra.mxu0 0.0
        %4749 = vmatprep.subr.mxu0 0.0
        %4750 = vmatpush1.msra.mxu0 0.0
        %4751 = vmatprep.subr.mxu0 0.0
        %4752 = vmatpush1.msra.mxu0 0.0
        %4753 = vmatprep.subr.mxu0 0.0
        %4754 = vmatpush1.msra.mxu0 0.0
        %4755 = vmatprep.subr.mxu0 0.0
        %4756 = vmatpush1.msra.mxu0 0.0
        %4757 = vmatprep.subr.mxu0 0.0
        %4758 = vmatpush1.msra.mxu0 0.0
        %4759 = vmatprep.subr.mxu0 0.0
        %4760 = vmatpush1.msra.mxu0 0.0
        %4761 = vmatprep.subr.mxu0 0.0
        %4762 = vmatpush1.msra.mxu0 0.0
        %4763 = vmatprep.subr.mxu0 0.0
        %4764 = vmatpush1.msra.mxu0 0.0
        %4765 = vmatprep.subr.mxu0 0.0
        %4766 = vmatpush1.msra.mxu0 0.0
        %4767 = vmatprep.subr.mxu0 0.0
        %4768 = vmatpush1.msra.mxu0 0.0
        %4769 = vmatprep.subr.mxu0 0.0
        %4770 = vmatpush1.msra.mxu0 0.0
        %4771 = vmatprep.subr.mxu0 0.0
        %4772 = vmatpush1.msra.mxu0 0.0
        %4773 = vmatprep.subr.mxu0 0.0
        %4774 = vmatpush1.msra.mxu0 0.0
        %4775 = vmatprep.subr.mxu0 0.0
        %4776 = vmatpush1.msra.mxu0 0.0
        %4777 = vmatprep.subr.mxu0 0.0
        %4778 = vmatpush1.msra.mxu0 0.0
        %4779 = vmatprep.subr.mxu0 0.0
        %4780 = vmatpush1.msra.mxu0 0.0
        %4781 = vmatprep.subr.mxu0 0.0
        %4782 = vmatpush1.msra.mxu0 0.0
        %4783 = vmatprep.subr.mxu0 0.0
        %4784 = vmatpush1.msra.mxu0 0.0
        %4785 = vmatprep.subr.mxu0 0.0
        %4786 = vmatpush1.msra.mxu0 0.0
        %4787 = vmatprep.subr.mxu0 0.0
        %4788 = vmatpush1.msra.mxu0 0.0
        %4789 = vmatprep.subr.mxu0 0.0
        %4790 = vmatpush1.msra.mxu0 0.0
        %4791 = vmatprep.subr.mxu0 0.0
        %4792 = vmatpush1.msra.mxu0 0.0
        %4793 = vmatprep.mubr.f32.mxu0 0.0
        %4794 = vmatmul.mubr.f32.gmra.mrb[0].mxu0 %v4718
        %v4795 = vpop.f32.mrb[0].mxu0
        %v4796 = vadd.f32 0.0, %v4795
        %v4797 = vpop.f32.mrb[0].mxu0
        %4798 = vmatprep.mubr.f32.mxu0 0.0
        %4799 = vmatmul.mubr.f32.gmra.mrb[0].mxu0 %v4721
        %v4800 = vpop.f32.mrb[0].mxu0
        %v4801 = vadd.f32 0.0, %v4800
        %v4802 = vpop.f32.mrb[0].mxu0
        %4803 = vmatprep.mubr.f32.mxu0 0.0
        %4804 = vmatmul.mubr.f32.gmra.mrb[0].mxu0 %v4724
        %v4805 = vpop.f32.mrb[0].mxu0
        %v4806 = vadd.f32 0.0, %v4805
        %v4807 = vpop.f32.mrb[0].mxu0
        %4808 = vmatprep.mubr.f32.mxu0 0.0
        %4809 = vmatmul.mubr.f32.gmra.mrb[0].mxu0 %v4727
        %v4810 = vpop.f32.mrb[0].mxu0
        %v4811 = vadd.f32 0.0, %v4810
        %v4812 = vpop.f32.mrb[0].mxu0
        %4813 = vdwg.mxu0
        %v4814 = vadd.f32 %v4610, %v4796
        %v4815 = vadd.f32 %v4615, %v4801
        %v4816 = vadd.f32 %v4620, %v4806
        %v4817 = vadd.f32 %v4625, %v4811
        %s4818 = scalar_lea.vmem [#allocation8], 192
        %v4819 = vld [vmem:[%s4818] sm:$0xff]
        %v4820 = vld [vmem:[%s4818 + $0x8] sm:$0xff]
        %v4821 = vld [vmem:[%s4818 + $0x10] sm:$0xff]
        %v4822 = vld [vmem:[%s4818 + $0x18] sm:$0xff]
        %v4823 = vld [vmem:[%s4818 + $0x20] sm:$0xff]
        %v4824 = vld [vmem:[%s4818 + $0x28] sm:$0xff]
        %v4825 = vld [vmem:[%s4818 + $0x30] sm:$0xff]
        %v4826 = vld [vmem:[%s4818 + $0x38] sm:$0xff]
        %4827 = vmatprep.subr.mxu0 0.0
        %4828 = vmatpush1.msra.mxu0 %v4819
        %4829 = vmatprep.subr.mxu0 0.0
        %4830 = vmatpush1.msra.mxu0 %v4820
        %4831 = vmatprep.subr.mxu0 0.0
        %4832 = vmatpush1.msra.mxu0 %v4821
        %4833 = vmatprep.subr.mxu0 0.0
        %4834 = vmatpush1.msra.mxu0 %v4822
        %4835 = vmatprep.subr.mxu0 0.0
        %4836 = vmatpush1.msra.mxu0 %v4823
        %4837 = vmatprep.subr.mxu0 0.0
        %4838 = vmatpush1.msra.mxu0 %v4824
        %4839 = vmatprep.subr.mxu0 0.0
        %4840 = vmatpush1.msra.mxu0 %v4825
        %4841 = vmatprep.subr.mxu0 0.0
        %4842 = vmatpush1.msra.mxu0 %v4826
        %4843 = vmatprep.subr.mxu0 0.0
        %4844 = vmatpush1.msra.mxu0 0.0
        %4845 = vmatprep.subr.mxu0 0.0
        %4846 = vmatpush1.msra.mxu0 0.0
        %4847 = vmatprep.subr.mxu0 0.0
        %4848 = vmatpush1.msra.mxu0 0.0
        %4849 = vmatprep.subr.mxu0 0.0
        %4850 = vmatpush1.msra.mxu0 0.0
        %4851 = vmatprep.subr.mxu0 0.0
        %4852 = vmatpush1.msra.mxu0 0.0
        %4853 = vmatprep.subr.mxu0 0.0
        %4854 = vmatpush1.msra.mxu0 0.0
        %4855 = vmatprep.subr.mxu0 0.0
        %4856 = vmatpush1.msra.mxu0 0.0
        %4857 = vmatprep.subr.mxu0 0.0
        %4858 = vmatpush1.msra.mxu0 0.0
        %4859 = vmatprep.subr.mxu0 0.0
        %4860 = vmatpush1.msra.mxu0 0.0
        %4861 = vmatprep.subr.mxu0 0.0
        %4862 = vmatpush1.msra.mxu0 0.0
        %4863 = vmatprep.subr.mxu0 0.0
        %4864 = vmatpush1.msra.mxu0 0.0
        %4865 = vmatprep.subr.mxu0 0.0
        %4866 = vmatpush1.msra.mxu0 0.0
        %4867 = vmatprep.subr.mxu0 0.0
        %4868 = vmatpush1.msra.mxu0 0.0
        %4869 = vmatprep.subr.mxu0 0.0
        %4870 = vmatpush1.msra.mxu0 0.0
        %4871 = vmatprep.subr.mxu0 0.0
        %4872 = vmatpush1.msra.mxu0 0.0
        %4873 = vmatprep.subr.mxu0 0.0
        %4874 = vmatpush1.msra.mxu0 0.0
        %4875 = vmatprep.subr.mxu0 0.0
        %4876 = vmatpush1.msra.mxu0 0.0
        %4877 = vmatprep.subr.mxu0 0.0
        %4878 = vmatpush1.msra.mxu0 0.0
        %4879 = vmatprep.subr.mxu0 0.0
        %4880 = vmatpush1.msra.mxu0 0.0
        %4881 = vmatprep.subr.mxu0 0.0
        %4882 = vmatpush1.msra.mxu0 0.0
        %4883 = vmatprep.subr.mxu0 0.0
        %4884 = vmatpush1.msra.mxu0 0.0
        %4885 = vmatprep.subr.mxu0 0.0
        %4886 = vmatpush1.msra.mxu0 0.0
        %4887 = vmatprep.subr.mxu0 0.0
        %4888 = vmatpush1.msra.mxu0 0.0
        %4889 = vmatprep.subr.mxu0 0.0
        %4890 = vmatpush1.msra.mxu0 0.0
        %4891 = vmatprep.mubr.f32.mxu0 0.0
        %4892 = vmatmul.mubr.f32.gmra.mrb[0].mxu0 %v4260
        %v4893 = vpop.f32.mrb[0].mxu0
        %v4894 = vadd.f32 0.0, %v4893
        %v4895 = vpop.f32.mrb[0].mxu0
        %4896 = vmatprep.mubr.f32.mxu0 0.0
        %4897 = vmatmul.mubr.f32.gmra.mrb[0].mxu0 %v4263
        %v4898 = vpop.f32.mrb[0].mxu0
        %v4899 = vadd.f32 0.0, %v4898
        %v4900 = vpop.f32.mrb[0].mxu0
        %4901 = vdwg.mxu0
        %s4902 = scalar_lea.vmem %s4, 96
        %v4903 = vld [vmem:[%s4902] sm:$0xff]
        %v4904 = vld [vmem:[%s4902 + $0x8] sm:$0xff]
        %v4905 = vld [vmem:[%s4902 + $0x10] sm:$0xff]
        %v4906 = vld [vmem:[%s4902 + $0x18] sm:$0xff]
        %v4908 = vsel %vm4433, %v4903, 0
        %v4911 = vsel %vm4433, %v4904, 0
        %v4914 = vsel %vm4433, %v4905, 0
        %v4917 = vsel %vm4433, %v4906, 0
        %4919 = vmatprep.subr.mxu0 0.0
        %4920 = vmatpush1.msra.mxu0 %v4894
        %4921 = vmatprep.subr.mxu0 0.0
        %4922 = vmatpush1.msra.mxu0 %v4899
        %4923 = vmatprep.subr.mxu0 0.0
        %4924 = vmatpush1.msra.mxu0 0.0
        %4925 = vmatprep.subr.mxu0 0.0
        %4926 = vmatpush1.msra.mxu0 0.0
        %4927 = vmatprep.subr.mxu0 0.0
        %4928 = vmatpush1.msra.mxu0 0.0
        %4929 = vmatprep.subr.mxu0 0.0
        %4930 = vmatpush1.msra.mxu0 0.0
        %4931 = vmatprep.subr.mxu0 0.0
        %4932 = vmatpush1.msra.mxu0 0.0
        %4933 = vmatprep.subr.mxu0 0.0
        %4934 = vmatpush1.msra.mxu0 0.0
        %4935 = vmatprep.subr.mxu0 0.0
        %4936 = vmatpush1.msra.mxu0 0.0
        %4937 = vmatprep.subr.mxu0 0.0
        %4938 = vmatpush1.msra.mxu0 0.0
        %4939 = vmatprep.subr.mxu0 0.0
        %4940 = vmatpush1.msra.mxu0 0.0
        %4941 = vmatprep.subr.mxu0 0.0
        %4942 = vmatpush1.msra.mxu0 0.0
        %4943 = vmatprep.subr.mxu0 0.0
        %4944 = vmatpush1.msra.mxu0 0.0
        %4945 = vmatprep.subr.mxu0 0.0
        %4946 = vmatpush1.msra.mxu0 0.0
        %4947 = vmatprep.subr.mxu0 0.0
        %4948 = vmatpush1.msra.mxu0 0.0
        %4949 = vmatprep.subr.mxu0 0.0
        %4950 = vmatpush1.msra.mxu0 0.0
        %4951 = vmatprep.subr.mxu0 0.0
        %4952 = vmatpush1.msra.mxu0 0.0
        %4953 = vmatprep.subr.mxu0 0.0
        %4954 = vmatpush1.msra.mxu0 0.0
        %4955 = vmatprep.subr.mxu0 0.0
        %4956 = vmatpush1.msra.mxu0 0.0
        %4957 = vmatprep.subr.mxu0 0.0
        %4958 = vmatpush1.msra.mxu0 0.0
        %4959 = vmatprep.subr.mxu0 0.0
        %4960 = vmatpush1.msra.mxu0 0.0
        %4961 = vmatprep.subr.mxu0 0.0
        %4962 = vmatpush1.msra.mxu0 0.0
        %4963 = vmatprep.subr.mxu0 0.0
        %4964 = vmatpush1.msra.mxu0 0.0
        %4965 = vmatprep.subr.mxu0 0.0
        %4966 = vmatpush1.msra.mxu0 0.0
        %4967 = vmatprep.subr.mxu0 0.0
        %4968 = vmatpush1.msra.mxu0 0.0
        %4969 = vmatprep.subr.mxu0 0.0
        %4970 = vmatpush1.msra.mxu0 0.0
        %4971 = vmatprep.subr.mxu0 0.0
        %4972 = vmatpush1.msra.mxu0 0.0
        %4973 = vmatprep.subr.mxu0 0.0
        %4974 = vmatpush1.msra.mxu0 0.0
        %4975 = vmatprep.subr.mxu0 0.0
        %4976 = vmatpush1.msra.mxu0 0.0
        %4977 = vmatprep.subr.mxu0 0.0
        %4978 = vmatpush1.msra.mxu0 0.0
        %4979 = vmatprep.subr.mxu0 0.0
        %4980 = vmatpush1.msra.mxu0 0.0
        %4981 = vmatprep.subr.mxu0 0.0
        %4982 = vmatpush1.msra.mxu0 0.0
        %4983 = vmatprep.mubr.f32.mxu0 0.0
        %4984 = vmatmul.mubr.f32.gmra.mrb[0].mxu0 %v4908
        %v4985 = vpop.f32.mrb[0].mxu0
        %v4986 = vadd.f32 0.0, %v4985
        %v4987 = vpop.f32.mrb[0].mxu0
        %4988 = vmatprep.mubr.f32.mxu0 0.0
        %4989 = vmatmul.mubr.f32.gmra.mrb[0].mxu0 %v4911
        %v4990 = vpop.f32.mrb[0].mxu0
        %v4991 = vadd.f32 0.0, %v4990
        %v4992 = vpop.f32.mrb[0].mxu0
        %4993 = vmatprep.mubr.f32.mxu0 0.0
        %4994 = vmatmul.mubr.f32.gmra.mrb[0].mxu0 %v4914
        %v4995 = vpop.f32.mrb[0].mxu0
        %v4996 = vadd.f32 0.0, %v4995
        %v4997 = vpop.f32.mrb[0].mxu0
        %4998 = vmatprep.mubr.f32.mxu0 0.0
        %4999 = vmatmul.mubr.f32.gmra.mrb[0].mxu0 %v4917
        %v5000 = vpop.f32.mrb[0].mxu0
        %v5001 = vadd.f32 0.0, %v5000
        %v5002 = vpop.f32.mrb[0].mxu0
        %5003 = vdwg.mxu0
        %v5004 = vadd.f32 %v4814, %v4986
        %v5005 = vadd.f32 %v4815, %v4991
        %v5006 = vadd.f32 %v4816, %v4996
        %v5007 = vadd.f32 %v4817, %v5001
        %s5008 = scalar_lea.vmem [#allocation8], 256
        %v5009 = vld [vmem:[%s5008] sm:$0xff]
        %v5010 = vld [vmem:[%s5008 + $0x8] sm:$0xff]
        %v5011 = vld [vmem:[%s5008 + $0x10] sm:$0xff]
        %v5012 = vld [vmem:[%s5008 + $0x18] sm:$0xff]
        %v5013 = vld [vmem:[%s5008 + $0x20] sm:$0xff]
        %v5014 = vld [vmem:[%s5008 + $0x28] sm:$0xff]
        %v5015 = vld [vmem:[%s5008 + $0x30] sm:$0xff]
        %v5016 = vld [vmem:[%s5008 + $0x38] sm:$0xff]
        %5017 = vmatprep.subr.mxu0 0.0
        %5018 = vmatpush1.msra.mxu0 %v5009
        %5019 = vmatprep.subr.mxu0 0.0
        %5020 = vmatpush1.msra.mxu0 %v5010
        %5021 = vmatprep.subr.mxu0 0.0
        %5022 = vmatpush1.msra.mxu0 %v5011
        %5023 = vmatprep.subr.mxu0 0.0
        %5024 = vmatpush1.msra.mxu0 %v5012
        %5025 = vmatprep.subr.mxu0 0.0
        %5026 = vmatpush1.msra.mxu0 %v5013
        %5027 = vmatprep.subr.mxu0 0.0
        %5028 = vmatpush1.msra.mxu0 %v5014
        %5029 = vmatprep.subr.mxu0 0.0
        %5030 = vmatpush1.msra.mxu0 %v5015
        %5031 = vmatprep.subr.mxu0 0.0
        %5032 = vmatpush1.msra.mxu0 %v5016
        %5033 = vmatprep.subr.mxu0 0.0
        %5034 = vmatpush1.msra.mxu0 0.0
        %5035 = vmatprep.subr.mxu0 0.0
        %5036 = vmatpush1.msra.mxu0 0.0
        %5037 = vmatprep.subr.mxu0 0.0
        %5038 = vmatpush1.msra.mxu0 0.0
        %5039 = vmatprep.subr.mxu0 0.0
        %5040 = vmatpush1.msra.mxu0 0.0
        %5041 = vmatprep.subr.mxu0 0.0
        %5042 = vmatpush1.msra.mxu0 0.0
        %5043 = vmatprep.subr.mxu0 0.0
        %5044 = vmatpush1.msra.mxu0 0.0
        %5045 = vmatprep.subr.mxu0 0.0
        %5046 = vmatpush1.msra.mxu0 0.0
        %5047 = vmatprep.subr.mxu0 0.0
        %5048 = vmatpush1.msra.mxu0 0.0
        %5049 = vmatprep.subr.mxu0 0.0
        %5050 = vmatpush1.msra.mxu0 0.0
        %5051 = vmatprep.subr.mxu0 0.0
        %5052 = vmatpush1.msra.mxu0 0.0
        %5053 = vmatprep.subr.mxu0 0.0
        %5054 = vmatpush1.msra.mxu0 0.0
        %5055 = vmatprep.subr.mxu0 0.0
        %5056 = vmatpush1.msra.mxu0 0.0
        %5057 = vmatprep.subr.mxu0 0.0
        %5058 = vmatpush1.msra.mxu0 0.0
        %5059 = vmatprep.subr.mxu0 0.0
        %5060 = vmatpush1.msra.mxu0 0.0
        %5061 = vmatprep.subr.mxu0 0.0
        %5062 = vmatpush1.msra.mxu0 0.0
        %5063 = vmatprep.subr.mxu0 0.0
        %5064 = vmatpush1.msra.mxu0 0.0
        %5065 = vmatprep.subr.mxu0 0.0
        %5066 = vmatpush1.msra.mxu0 0.0
        %5067 = vmatprep.subr.mxu0 0.0
        %5068 = vmatpush1.msra.mxu0 0.0
        %5069 = vmatprep.subr.mxu0 0.0
        %5070 = vmatpush1.msra.mxu0 0.0
        %5071 = vmatprep.subr.mxu0 0.0
        %5072 = vmatpush1.msra.mxu0 0.0
        %5073 = vmatprep.subr.mxu0 0.0
        %5074 = vmatpush1.msra.mxu0 0.0
        %5075 = vmatprep.subr.mxu0 0.0
        %5076 = vmatpush1.msra.mxu0 0.0
        %5077 = vmatprep.subr.mxu0 0.0
        %5078 = vmatpush1.msra.mxu0 0.0
        %5079 = vmatprep.subr.mxu0 0.0
        %5080 = vmatpush1.msra.mxu0 0.0
        %5081 = vmatprep.mubr.f32.mxu0 0.0
        %5082 = vmatmul.mubr.f32.gmra.mrb[0].mxu0 %v4260
        %v5083 = vpop.f32.mrb[0].mxu0
        %v5084 = vadd.f32 0.0, %v5083
        %v5085 = vpop.f32.mrb[0].mxu0
        %5086 = vmatprep.mubr.f32.mxu0 0.0
        %5087 = vmatmul.mubr.f32.gmra.mrb[0].mxu0 %v4263
        %v5088 = vpop.f32.mrb[0].mxu0
        %v5089 = vadd.f32 0.0, %v5088
        %v5090 = vpop.f32.mrb[0].mxu0
        %5091 = vdwg.mxu0
        %s5092 = scalar_lea.vmem %s4, 128
        %v5093 = vld [vmem:[%s5092] sm:$0xff]
        %v5094 = vld [vmem:[%s5092 + $0x8] sm:$0xff]
        %v5095 = vld [vmem:[%s5092 + $0x10] sm:$0xff]
        %v5096 = vld [vmem:[%s5092 + $0x18] sm:$0xff]
        %v5098 = vsel %vm4433, %v5093, 0
        %v5101 = vsel %vm4433, %v5094, 0
        %v5104 = vsel %vm4433, %v5095, 0
        %v5107 = vsel %vm4433, %v5096, 0
        %5109 = vmatprep.subr.mxu0 0.0
        %5110 = vmatpush1.msra.mxu0 %v5084
        %5111 = vmatprep.subr.mxu0 0.0
        %5112 = vmatpush1.msra.mxu0 %v5089
        %5113 = vmatprep.subr.mxu0 0.0
        %5114 = vmatpush1.msra.mxu0 0.0
        %5115 = vmatprep.subr.mxu0 0.0
        %5116 = vmatpush1.msra.mxu0 0.0
        %5117 = vmatprep.subr.mxu0 0.0
        %5118 = vmatpush1.msra.mxu0 0.0
        %5119 = vmatprep.subr.mxu0 0.0
        %5120 = vmatpush1.msra.mxu0 0.0
        %5121 = vmatprep.subr.mxu0 0.0
        %5122 = vmatpush1.msra.mxu0 0.0
        %5123 = vmatprep.subr.mxu0 0.0
        %5124 = vmatpush1.msra.mxu0 0.0
        %5125 = vmatprep.subr.mxu0 0.0
        %5126 = vmatpush1.msra.mxu0 0.0
        %5127 = vmatprep.subr.mxu0 0.0
        %5128 = vmatpush1.msra.mxu0 0.0
        %5129 = vmatprep.subr.mxu0 0.0
        %5130 = vmatpush1.msra.mxu0 0.0
        %5131 = vmatprep.subr.mxu0 0.0
        %5132 = vmatpush1.msra.mxu0 0.0
        %5133 = vmatprep.subr.mxu0 0.0
        %5134 = vmatpush1.msra.mxu0 0.0
        %5135 = vmatprep.subr.mxu0 0.0
        %5136 = vmatpush1.msra.mxu0 0.0
        %5137 = vmatprep.subr.mxu0 0.0
        %5138 = vmatpush1.msra.mxu0 0.0
        %5139 = vmatprep.subr.mxu0 0.0
        %5140 = vmatpush1.msra.mxu0 0.0
        %5141 = vmatprep.subr.mxu0 0.0
        %5142 = vmatpush1.msra.mxu0 0.0
        %5143 = vmatprep.subr.mxu0 0.0
        %5144 = vmatpush1.msra.mxu0 0.0
        %5145 = vmatprep.subr.mxu0 0.0
        %5146 = vmatpush1.msra.mxu0 0.0
        %5147 = vmatprep.subr.mxu0 0.0
        %5148 = vmatpush1.msra.mxu0 0.0
        %5149 = vmatprep.subr.mxu0 0.0
        %5150 = vmatpush1.msra.mxu0 0.0
        %5151 = vmatprep.subr.mxu0 0.0
        %5152 = vmatpush1.msra.mxu0 0.0
        %5153 = vmatprep.subr.mxu0 0.0
        %5154 = vmatpush1.msra.mxu0 0.0
        %5155 = vmatprep.subr.mxu0 0.0
        %5156 = vmatpush1.msra.mxu0 0.0
        %5157 = vmatprep.subr.mxu0 0.0
        %5158 = vmatpush1.msra.mxu0 0.0
        %5159 = vmatprep.subr.mxu0 0.0
        %5160 = vmatpush1.msra.mxu0 0.0
        %5161 = vmatprep.subr.mxu0 0.0
        %5162 = vmatpush1.msra.mxu0 0.0
        %5163 = vmatprep.subr.mxu0 0.0
        %5164 = vmatpush1.msra.mxu0 0.0
        %5165 = vmatprep.subr.mxu0 0.0
        %5166 = vmatpush1.msra.mxu0 0.0
        %5167 = vmatprep.subr.mxu0 0.0
        %5168 = vmatpush1.msra.mxu0 0.0
        %5169 = vmatprep.subr.mxu0 0.0
        %5170 = vmatpush1.msra.mxu0 0.0
        %5171 = vmatprep.subr.mxu0 0.0
        %5172 = vmatpush1.msra.mxu0 0.0
        %5173 = vmatprep.mubr.f32.mxu0 0.0
        %5174 = vmatmul.mubr.f32.gmra.mrb[0].mxu0 %v5098
        %v5175 = vpop.f32.mrb[0].mxu0
        %v5176 = vadd.f32 0.0, %v5175
        %v5177 = vpop.f32.mrb[0].mxu0
        %5178 = vmatprep.mubr.f32.mxu0 0.0
        %5179 = vmatmul.mubr.f32.gmra.mrb[0].mxu0 %v5101
        %v5180 = vpop.f32.mrb[0].mxu0
        %v5181 = vadd.f32 0.0, %v5180
        %v5182 = vpop.f32.mrb[0].mxu0
        %5183 = vmatprep.mubr.f32.mxu0 0.0
        %5184 = vmatmul.mubr.f32.gmra.mrb[0].mxu0 %v5104
        %v5185 = vpop.f32.mrb[0].mxu0
        %v5186 = vadd.f32 0.0, %v5185
        %v5187 = vpop.f32.mrb[0].mxu0
        %5188 = vmatprep.mubr.f32.mxu0 0.0
        %5189 = vmatmul.mubr.f32.gmra.mrb[0].mxu0 %v5107
        %v5190 = vpop.f32.mrb[0].mxu0
        %v5191 = vadd.f32 0.0, %v5190
        %v5192 = vpop.f32.mrb[0].mxu0
        %5193 = vdwg.mxu0
        %v5194 = vadd.f32 %v5004, %v5176
        %v5195 = vadd.f32 %v5005, %v5181
        %v5196 = vadd.f32 %v5006, %v5186
        %v5197 = vadd.f32 %v5007, %v5191
        %s5198 = scalar_lea.vmem [#allocation8], 320
        %v5199 = vld [vmem:[%s5198] sm:$0xff]
        %v5200 = vld [vmem:[%s5198 + $0x8] sm:$0xff]
        %v5201 = vld [vmem:[%s5198 + $0x10] sm:$0xff]
        %v5202 = vld [vmem:[%s5198 + $0x18] sm:$0xff]
        %v5203 = vld [vmem:[%s5198 + $0x20] sm:$0xff]
        %v5204 = vld [vmem:[%s5198 + $0x28] sm:$0xff]
        %v5205 = vld [vmem:[%s5198 + $0x30] sm:$0xff]
        %v5206 = vld [vmem:[%s5198 + $0x38] sm:$0xff]
        %5207 = vmatprep.subr.mxu0 0.0
        %5208 = vmatpush1.msra.mxu0 %v5199
        %5209 = vmatprep.subr.mxu0 0.0
        %5210 = vmatpush1.msra.mxu0 %v5200
        %5211 = vmatprep.subr.mxu0 0.0
        %5212 = vmatpush1.msra.mxu0 %v5201
        %5213 = vmatprep.subr.mxu0 0.0
        %5214 = vmatpush1.msra.mxu0 %v5202
        %5215 = vmatprep.subr.mxu0 0.0
        %5216 = vmatpush1.msra.mxu0 %v5203
        %5217 = vmatprep.subr.mxu0 0.0
        %5218 = vmatpush1.msra.mxu0 %v5204
        %5219 = vmatprep.subr.mxu0 0.0
        %5220 = vmatpush1.msra.mxu0 %v5205
        %5221 = vmatprep.subr.mxu0 0.0
        %5222 = vmatpush1.msra.mxu0 %v5206
        %5223 = vmatprep.subr.mxu0 0.0
        %5224 = vmatpush1.msra.mxu0 0.0
        %5225 = vmatprep.subr.mxu0 0.0
        %5226 = vmatpush1.msra.mxu0 0.0
        %5227 = vmatprep.subr.mxu0 0.0
        %5228 = vmatpush1.msra.mxu0 0.0
        %5229 = vmatprep.subr.mxu0 0.0
        %5230 = vmatpush1.msra.mxu0 0.0
        %5231 = vmatprep.subr.mxu0 0.0
        %5232 = vmatpush1.msra.mxu0 0.0
        %5233 = vmatprep.subr.mxu0 0.0
        %5234 = vmatpush1.msra.mxu0 0.0
        %5235 = vmatprep.subr.mxu0 0.0
        %5236 = vmatpush1.msra.mxu0 0.0
        %5237 = vmatprep.subr.mxu0 0.0
        %5238 = vmatpush1.msra.mxu0 0.0
        %5239 = vmatprep.subr.mxu0 0.0
        %5240 = vmatpush1.msra.mxu0 0.0
        %5241 = vmatprep.subr.mxu0 0.0
        %5242 = vmatpush1.msra.mxu0 0.0
        %5243 = vmatprep.subr.mxu0 0.0
        %5244 = vmatpush1.msra.mxu0 0.0
        %5245 = vmatprep.subr.mxu0 0.0
        %5246 = vmatpush1.msra.mxu0 0.0
        %5247 = vmatprep.subr.mxu0 0.0
        %5248 = vmatpush1.msra.mxu0 0.0
        %5249 = vmatprep.subr.mxu0 0.0
        %5250 = vmatpush1.msra.mxu0 0.0
        %5251 = vmatprep.subr.mxu0 0.0
        %5252 = vmatpush1.msra.mxu0 0.0
        %5253 = vmatprep.subr.mxu0 0.0
        %5254 = vmatpush1.msra.mxu0 0.0
        %5255 = vmatprep.subr.mxu0 0.0
        %5256 = vmatpush1.msra.mxu0 0.0
        %5257 = vmatprep.subr.mxu0 0.0
        %5258 = vmatpush1.msra.mxu0 0.0
        %5259 = vmatprep.subr.mxu0 0.0
        %5260 = vmatpush1.msra.mxu0 0.0
        %5261 = vmatprep.subr.mxu0 0.0
        %5262 = vmatpush1.msra.mxu0 0.0
        %5263 = vmatprep.subr.mxu0 0.0
        %5264 = vmatpush1.msra.mxu0 0.0
        %5265 = vmatprep.subr.mxu0 0.0
        %5266 = vmatpush1.msra.mxu0 0.0
        %5267 = vmatprep.subr.mxu0 0.0
        %5268 = vmatpush1.msra.mxu0 0.0
        %5269 = vmatprep.subr.mxu0 0.0
        %5270 = vmatpush1.msra.mxu0 0.0
        %5271 = vmatprep.mubr.f32.mxu0 0.0
        %5272 = vmatmul.mubr.f32.gmra.mrb[0].mxu0 %v4260
        %v5273 = vpop.f32.mrb[0].mxu0
        %v5274 = vadd.f32 0.0, %v5273
        %v5275 = vpop.f32.mrb[0].mxu0
        %5276 = vmatprep.mubr.f32.mxu0 0.0
        %5277 = vmatmul.mubr.f32.gmra.mrb[0].mxu0 %v4263
        %v5278 = vpop.f32.mrb[0].mxu0
        %v5279 = vadd.f32 0.0, %v5278
        %v5280 = vpop.f32.mrb[0].mxu0
        %5281 = vdwg.mxu0
        %s5282 = scalar_lea.vmem %s4, 160
        %v5283 = vld [vmem:[%s5282] sm:$0xff]
        %v5284 = vld [vmem:[%s5282 + $0x8] sm:$0xff]
        %v5285 = vld [vmem:[%s5282 + $0x10] sm:$0xff]
        %v5286 = vld [vmem:[%s5282 + $0x18] sm:$0xff]
        %v5288 = vsel %vm4433, %v5283, 0
        %v5291 = vsel %vm4433, %v5284, 0
        %v5294 = vsel %vm4433, %v5285, 0
        %v5297 = vsel %vm4433, %v5286, 0
        %5299 = vmatprep.subr.mxu0 0.0
        %5300 = vmatpush1.msra.mxu0 %v5274
        %5301 = vmatprep.subr.mxu0 0.0
        %5302 = vmatpush1.msra.mxu0 %v5279
        %5303 = vmatprep.subr.mxu0 0.0
        %5304 = vmatpush1.msra.mxu0 0.0
        %5305 = vmatprep.subr.mxu0 0.0
        %5306 = vmatpush1.msra.mxu0 0.0
        %5307 = vmatprep.subr.mxu0 0.0
        %5308 = vmatpush1.msra.mxu0 0.0
        %5309 = vmatprep.subr.mxu0 0.0
        %5310 = vmatpush1.msra.mxu0 0.0
        %5311 = vmatprep.subr.mxu0 0.0
        %5312 = vmatpush1.msra.mxu0 0.0
        %5313 = vmatprep.subr.mxu0 0.0
        %5314 = vmatpush1.msra.mxu0 0.0
        %5315 = vmatprep.subr.mxu0 0.0
        %5316 = vmatpush1.msra.mxu0 0.0
        %5317 = vmatprep.subr.mxu0 0.0
        %5318 = vmatpush1.msra.mxu0 0.0
        %5319 = vmatprep.subr.mxu0 0.0
        %5320 = vmatpush1.msra.mxu0 0.0
        %5321 = vmatprep.subr.mxu0 0.0
        %5322 = vmatpush1.msra.mxu0 0.0
        %5323 = vmatprep.subr.mxu0 0.0
        %5324 = vmatpush1.msra.mxu0 0.0
        %5325 = vmatprep.subr.mxu0 0.0
        %5326 = vmatpush1.msra.mxu0 0.0
        %5327 = vmatprep.subr.mxu0 0.0
        %5328 = vmatpush1.msra.mxu0 0.0
        %5329 = vmatprep.subr.mxu0 0.0
        %5330 = vmatpush1.msra.mxu0 0.0
        %5331 = vmatprep.subr.mxu0 0.0
        %5332 = vmatpush1.msra.mxu0 0.0
        %5333 = vmatprep.subr.mxu0 0.0
        %5334 = vmatpush1.msra.mxu0 0.0
        %5335 = vmatprep.subr.mxu0 0.0
        %5336 = vmatpush1.msra.mxu0 0.0
        %5337 = vmatprep.subr.mxu0 0.0
        %5338 = vmatpush1.msra.mxu0 0.0
        %5339 = vmatprep.subr.mxu0 0.0
        %5340 = vmatpush1.msra.mxu0 0.0
        %5341 = vmatprep.subr.mxu0 0.0
        %5342 = vmatpush1.msra.mxu0 0.0
        %5343 = vmatprep.subr.mxu0 0.0
        %5344 = vmatpush1.msra.mxu0 0.0
        %5345 = vmatprep.subr.mxu0 0.0
        %5346 = vmatpush1.msra.mxu0 0.0
        %5347 = vmatprep.subr.mxu0 0.0
        %5348 = vmatpush1.msra.mxu0 0.0
        %5349 = vmatprep.subr.mxu0 0.0
        %5350 = vmatpush1.msra.mxu0 0.0
        %5351 = vmatprep.subr.mxu0 0.0
        %5352 = vmatpush1.msra.mxu0 0.0
        %5353 = vmatprep.subr.mxu0 0.0
        %5354 = vmatpush1.msra.mxu0 0.0
        %5355 = vmatprep.subr.mxu0 0.0
        %5356 = vmatpush1.msra.mxu0 0.0
        %5357 = vmatprep.subr.mxu0 0.0
        %5358 = vmatpush1.msra.mxu0 0.0
        %5359 = vmatprep.subr.mxu0 0.0
        %5360 = vmatpush1.msra.mxu0 0.0
        %5361 = vmatprep.subr.mxu0 0.0
        %5362 = vmatpush1.msra.mxu0 0.0
        %5363 = vmatprep.mubr.f32.mxu0 0.0
        %5364 = vmatmul.mubr.f32.gmra.mrb[0].mxu0 %v5288
        %v5365 = vpop.f32.mrb[0].mxu0
        %v5366 = vadd.f32 0.0, %v5365
        %v5367 = vpop.f32.mrb[0].mxu0
        %5368 = vmatprep.mubr.f32.mxu0 0.0
        %5369 = vmatmul.mubr.f32.gmra.mrb[0].mxu0 %v5291
        %v5370 = vpop.f32.mrb[0].mxu0
        %v5371 = vadd.f32 0.0, %v5370
        %v5372 = vpop.f32.mrb[0].mxu0
        %5373 = vmatprep.mubr.f32.mxu0 0.0
        %5374 = vmatmul.mubr.f32.gmra.mrb[0].mxu0 %v5294
        %v5375 = vpop.f32.mrb[0].mxu0
        %v5376 = vadd.f32 0.0, %v5375
        %v5377 = vpop.f32.mrb[0].mxu0
        %5378 = vmatprep.mubr.f32.mxu0 0.0
        %5379 = vmatmul.mubr.f32.gmra.mrb[0].mxu0 %v5297
        %v5380 = vpop.f32.mrb[0].mxu0
        %v5381 = vadd.f32 0.0, %v5380
        %v5382 = vpop.f32.mrb[0].mxu0
        %5383 = vdwg.mxu0
        %v5384 = vadd.f32 %v5194, %v5366
        %v5385 = vadd.f32 %v5195, %v5371
        %v5386 = vadd.f32 %v5196, %v5376
        %v5387 = vadd.f32 %v5197, %v5381
        %s5388 = scalar_lea.vmem [#allocation8], 384
        %v5389 = vld [vmem:[%s5388] sm:$0xff]
        %v5390 = vld [vmem:[%s5388 + $0x8] sm:$0xff]
        %v5391 = vld [vmem:[%s5388 + $0x10] sm:$0xff]
        %v5392 = vld [vmem:[%s5388 + $0x18] sm:$0xff]
        %v5393 = vld [vmem:[%s5388 + $0x20] sm:$0xff]
        %v5394 = vld [vmem:[%s5388 + $0x28] sm:$0xff]
        %v5395 = vld [vmem:[%s5388 + $0x30] sm:$0xff]
        %v5396 = vld [vmem:[%s5388 + $0x38] sm:$0xff]
        %5397 = vmatprep.subr.mxu0 0.0
        %5398 = vmatpush1.msra.mxu0 %v5389
        %5399 = vmatprep.subr.mxu0 0.0
        %5400 = vmatpush1.msra.mxu0 %v5390
        %5401 = vmatprep.subr.mxu0 0.0
        %5402 = vmatpush1.msra.mxu0 %v5391
        %5403 = vmatprep.subr.mxu0 0.0
        %5404 = vmatpush1.msra.mxu0 %v5392
        %5405 = vmatprep.subr.mxu0 0.0
        %5406 = vmatpush1.msra.mxu0 %v5393
        %5407 = vmatprep.subr.mxu0 0.0
        %5408 = vmatpush1.msra.mxu0 %v5394
        %5409 = vmatprep.subr.mxu0 0.0
        %5410 = vmatpush1.msra.mxu0 %v5395
        %5411 = vmatprep.subr.mxu0 0.0
        %5412 = vmatpush1.msra.mxu0 %v5396
        %5413 = vmatprep.subr.mxu0 0.0
        %5414 = vmatpush1.msra.mxu0 0.0
        %5415 = vmatprep.subr.mxu0 0.0
        %5416 = vmatpush1.msra.mxu0 0.0
        %5417 = vmatprep.subr.mxu0 0.0
        %5418 = vmatpush1.msra.mxu0 0.0
        %5419 = vmatprep.subr.mxu0 0.0
        %5420 = vmatpush1.msra.mxu0 0.0
        %5421 = vmatprep.subr.mxu0 0.0
        %5422 = vmatpush1.msra.mxu0 0.0
        %5423 = vmatprep.subr.mxu0 0.0
        %5424 = vmatpush1.msra.mxu0 0.0
        %5425 = vmatprep.subr.mxu0 0.0
        %5426 = vmatpush1.msra.mxu0 0.0
        %5427 = vmatprep.subr.mxu0 0.0
        %5428 = vmatpush1.msra.mxu0 0.0
        %5429 = vmatprep.subr.mxu0 0.0
        %5430 = vmatpush1.msra.mxu0 0.0
        %5431 = vmatprep.subr.mxu0 0.0
        %5432 = vmatpush1.msra.mxu0 0.0
        %5433 = vmatprep.subr.mxu0 0.0
        %5434 = vmatpush1.msra.mxu0 0.0
        %5435 = vmatprep.subr.mxu0 0.0
        %5436 = vmatpush1.msra.mxu0 0.0
        %5437 = vmatprep.subr.mxu0 0.0
        %5438 = vmatpush1.msra.mxu0 0.0
        %5439 = vmatprep.subr.mxu0 0.0
        %5440 = vmatpush1.msra.mxu0 0.0
        %5441 = vmatprep.subr.mxu0 0.0
        %5442 = vmatpush1.msra.mxu0 0.0
        %5443 = vmatprep.subr.mxu0 0.0
        %5444 = vmatpush1.msra.mxu0 0.0
        %5445 = vmatprep.subr.mxu0 0.0
        %5446 = vmatpush1.msra.mxu0 0.0
        %5447 = vmatprep.subr.mxu0 0.0
        %5448 = vmatpush1.msra.mxu0 0.0
        %5449 = vmatprep.subr.mxu0 0.0
        %5450 = vmatpush1.msra.mxu0 0.0
        %5451 = vmatprep.subr.mxu0 0.0
        %5452 = vmatpush1.msra.mxu0 0.0
        %5453 = vmatprep.subr.mxu0 0.0
        %5454 = vmatpush1.msra.mxu0 0.0
        %5455 = vmatprep.subr.mxu0 0.0
        %5456 = vmatpush1.msra.mxu0 0.0
        %5457 = vmatprep.subr.mxu0 0.0
        %5458 = vmatpush1.msra.mxu0 0.0
        %5459 = vmatprep.subr.mxu0 0.0
        %5460 = vmatpush1.msra.mxu0 0.0
        %5461 = vmatprep.mubr.f32.mxu0 0.0
        %5462 = vmatmul.mubr.f32.gmra.mrb[0].mxu0 %v4260
        %v5463 = vpop.f32.mrb[0].mxu0
        %v5464 = vadd.f32 0.0, %v5463
        %v5465 = vpop.f32.mrb[0].mxu0
        %5466 = vmatprep.mubr.f32.mxu0 0.0
        %5467 = vmatmul.mubr.f32.gmra.mrb[0].mxu0 %v4263
        %v5468 = vpop.f32.mrb[0].mxu0
        %v5469 = vadd.f32 0.0, %v5468
        %v5470 = vpop.f32.mrb[0].mxu0
        %5471 = vdwg.mxu0
        %s5472 = scalar_lea.vmem %s4, 192
        %v5473 = vld [vmem:[%s5472] sm:$0xff]
        %v5474 = vld [vmem:[%s5472 + $0x8] sm:$0xff]
        %v5475 = vld [vmem:[%s5472 + $0x10] sm:$0xff]
        %v5476 = vld [vmem:[%s5472 + $0x18] sm:$0xff]
        %v5478 = vsel %vm4433, %v5473, 0
        %v5481 = vsel %vm4433, %v5474, 0
        %v5484 = vsel %vm4433, %v5475, 0
        %v5487 = vsel %vm4433, %v5476, 0
        %5489 = vmatprep.subr.mxu0 0.0
        %5490 = vmatpush1.msra.mxu0 %v5464
        %5491 = vmatprep.subr.mxu0 0.0
        %5492 = vmatpush1.msra.mxu0 %v5469
        %5493 = vmatprep.subr.mxu0 0.0
        %5494 = vmatpush1.msra.mxu0 0.0
        %5495 = vmatprep.subr.mxu0 0.0
        %5496 = vmatpush1.msra.mxu0 0.0
        %5497 = vmatprep.subr.mxu0 0.0
        %5498 = vmatpush1.msra.mxu0 0.0
        %5499 = vmatprep.subr.mxu0 0.0
        %5500 = vmatpush1.msra.mxu0 0.0
        %5501 = vmatprep.subr.mxu0 0.0
        %5502 = vmatpush1.msra.mxu0 0.0
        %5503 = vmatprep.subr.mxu0 0.0
        %5504 = vmatpush1.msra.mxu0 0.0
        %5505 = vmatprep.subr.mxu0 0.0
        %5506 = vmatpush1.msra.mxu0 0.0
        %5507 = vmatprep.subr.mxu0 0.0
        %5508 = vmatpush1.msra.mxu0 0.0
        %5509 = vmatprep.subr.mxu0 0.0
        %5510 = vmatpush1.msra.mxu0 0.0
        %5511 = vmatprep.subr.mxu0 0.0
        %5512 = vmatpush1.msra.mxu0 0.0
        %5513 = vmatprep.subr.mxu0 0.0
        %5514 = vmatpush1.msra.mxu0 0.0
        %5515 = vmatprep.subr.mxu0 0.0
        %5516 = vmatpush1.msra.mxu0 0.0
        %5517 = vmatprep.subr.mxu0 0.0
        %5518 = vmatpush1.msra.mxu0 0.0
        %5519 = vmatprep.subr.mxu0 0.0
        %5520 = vmatpush1.msra.mxu0 0.0
        %5521 = vmatprep.subr.mxu0 0.0
        %5522 = vmatpush1.msra.mxu0 0.0
        %5523 = vmatprep.subr.mxu0 0.0
        %5524 = vmatpush1.msra.mxu0 0.0
        %5525 = vmatprep.subr.mxu0 0.0
        %5526 = vmatpush1.msra.mxu0 0.0
        %5527 = vmatprep.subr.mxu0 0.0
        %5528 = vmatpush1.msra.mxu0 0.0
        %5529 = vmatprep.subr.mxu0 0.0
        %5530 = vmatpush1.msra.mxu0 0.0
        %5531 = vmatprep.subr.mxu0 0.0
        %5532 = vmatpush1.msra.mxu0 0.0
        %5533 = vmatprep.subr.mxu0 0.0
        %5534 = vmatpush1.msra.mxu0 0.0
        %5535 = vmatprep.subr.mxu0 0.0
        %5536 = vmatpush1.msra.mxu0 0.0
        %5537 = vmatprep.subr.mxu0 0.0
        %5538 = vmatpush1.msra.mxu0 0.0
        %5539 = vmatprep.subr.mxu0 0.0
        %5540 = vmatpush1.msra.mxu0 0.0
        %5541 = vmatprep.subr.mxu0 0.0
        %5542 = vmatpush1.msra.mxu0 0.0
        %5543 = vmatprep.subr.mxu0 0.0
        %5544 = vmatpush1.msra.mxu0 0.0
        %5545 = vmatprep.subr.mxu0 0.0
        %5546 = vmatpush1.msra.mxu0 0.0
        %5547 = vmatprep.subr.mxu0 0.0
        %5548 = vmatpush1.msra.mxu0 0.0
        %5549 = vmatprep.subr.mxu0 0.0
        %5550 = vmatpush1.msra.mxu0 0.0
        %5551 = vmatprep.subr.mxu0 0.0
        %5552 = vmatpush1.msra.mxu0 0.0
        %5553 = vmatprep.mubr.f32.mxu0 0.0
        %5554 = vmatmul.mubr.f32.gmra.mrb[0].mxu0 %v5478
        %v5555 = vpop.f32.mrb[0].mxu0
        %v5556 = vadd.f32 0.0, %v5555
        %v5557 = vpop.f32.mrb[0].mxu0
        %5558 = vmatprep.mubr.f32.mxu0 0.0
        %5559 = vmatmul.mubr.f32.gmra.mrb[0].mxu0 %v5481
        %v5560 = vpop.f32.mrb[0].mxu0
        %v5561 = vadd.f32 0.0, %v5560
        %v5562 = vpop.f32.mrb[0].mxu0
        %5563 = vmatprep.mubr.f32.mxu0 0.0
        %5564 = vmatmul.mubr.f32.gmra.mrb[0].mxu0 %v5484
        %v5565 = vpop.f32.mrb[0].mxu0
        %v5566 = vadd.f32 0.0, %v5565
        %v5567 = vpop.f32.mrb[0].mxu0
        %5568 = vmatprep.mubr.f32.mxu0 0.0
        %5569 = vmatmul.mubr.f32.gmra.mrb[0].mxu0 %v5487
        %v5570 = vpop.f32.mrb[0].mxu0
        %v5571 = vadd.f32 0.0, %v5570
        %v5572 = vpop.f32.mrb[0].mxu0
        %5573 = vdwg.mxu0
        %v5574 = vadd.f32 %v5384, %v5556
        %v5575 = vadd.f32 %v5385, %v5561
        %v5576 = vadd.f32 %v5386, %v5566
        %v5577 = vadd.f32 %v5387, %v5571
        %s5578 = scalar_lea.vmem [#allocation8], 448
        %v5579 = vld [vmem:[%s5578] sm:$0xff]
        %v5580 = vld [vmem:[%s5578 + $0x8] sm:$0xff]
        %v5581 = vld [vmem:[%s5578 + $0x10] sm:$0xff]
        %v5582 = vld [vmem:[%s5578 + $0x18] sm:$0xff]
        %v5583 = vld [vmem:[%s5578 + $0x20] sm:$0xff]
        %v5584 = vld [vmem:[%s5578 + $0x28] sm:$0xff]
        %v5585 = vld [vmem:[%s5578 + $0x30] sm:$0xff]
        %v5586 = vld [vmem:[%s5578 + $0x38] sm:$0xff]
        %5587 = vmatprep.subr.mxu0 0.0
        %5588 = vmatpush1.msra.mxu0 %v5579
        %5589 = vmatprep.subr.mxu0 0.0
        %5590 = vmatpush1.msra.mxu0 %v5580
        %5591 = vmatprep.subr.mxu0 0.0
        %5592 = vmatpush1.msra.mxu0 %v5581
        %5593 = vmatprep.subr.mxu0 0.0
        %5594 = vmatpush1.msra.mxu0 %v5582
        %5595 = vmatprep.subr.mxu0 0.0
        %5596 = vmatpush1.msra.mxu0 %v5583
        %5597 = vmatprep.subr.mxu0 0.0
        %5598 = vmatpush1.msra.mxu0 %v5584
        %5599 = vmatprep.subr.mxu0 0.0
        %5600 = vmatpush1.msra.mxu0 %v5585
        %5601 = vmatprep.subr.mxu0 0.0
        %5602 = vmatpush1.msra.mxu0 %v5586
        %5603 = vmatprep.subr.mxu0 0.0
        %5604 = vmatpush1.msra.mxu0 0.0
        %5605 = vmatprep.subr.mxu0 0.0
        %5606 = vmatpush1.msra.mxu0 0.0
        %5607 = vmatprep.subr.mxu0 0.0
        %5608 = vmatpush1.msra.mxu0 0.0
        %5609 = vmatprep.subr.mxu0 0.0
        %5610 = vmatpush1.msra.mxu0 0.0
        %5611 = vmatprep.subr.mxu0 0.0
        %5612 = vmatpush1.msra.mxu0 0.0
        %5613 = vmatprep.subr.mxu0 0.0
        %5614 = vmatpush1.msra.mxu0 0.0
        %5615 = vmatprep.subr.mxu0 0.0
        %5616 = vmatpush1.msra.mxu0 0.0
        %5617 = vmatprep.subr.mxu0 0.0
        %5618 = vmatpush1.msra.mxu0 0.0
        %5619 = vmatprep.subr.mxu0 0.0
        %5620 = vmatpush1.msra.mxu0 0.0
        %5621 = vmatprep.subr.mxu0 0.0
        %5622 = vmatpush1.msra.mxu0 0.0
        %5623 = vmatprep.subr.mxu0 0.0
        %5624 = vmatpush1.msra.mxu0 0.0
        %5625 = vmatprep.subr.mxu0 0.0
        %5626 = vmatpush1.msra.mxu0 0.0
        %5627 = vmatprep.subr.mxu0 0.0
        %5628 = vmatpush1.msra.mxu0 0.0
        %5629 = vmatprep.subr.mxu0 0.0
        %5630 = vmatpush1.msra.mxu0 0.0
        %5631 = vmatprep.subr.mxu0 0.0
        %5632 = vmatpush1.msra.mxu0 0.0
        %5633 = vmatprep.subr.mxu0 0.0
        %5634 = vmatpush1.msra.mxu0 0.0
        %5635 = vmatprep.subr.mxu0 0.0
        %5636 = vmatpush1.msra.mxu0 0.0
        %5637 = vmatprep.subr.mxu0 0.0
        %5638 = vmatpush1.msra.mxu0 0.0
        %5639 = vmatprep.subr.mxu0 0.0
        %5640 = vmatpush1.msra.mxu0 0.0
        %5641 = vmatprep.subr.mxu0 0.0
        %5642 = vmatpush1.msra.mxu0 0.0
        %5643 = vmatprep.subr.mxu0 0.0
        %5644 = vmatpush1.msra.mxu0 0.0
        %5645 = vmatprep.subr.mxu0 0.0
        %5646 = vmatpush1.msra.mxu0 0.0
        %5647 = vmatprep.subr.mxu0 0.0
        %5648 = vmatpush1.msra.mxu0 0.0
        %5649 = vmatprep.subr.mxu0 0.0
        %5650 = vmatpush1.msra.mxu0 0.0
        %5651 = vmatprep.mubr.f32.mxu0 0.0
        %5652 = vmatmul.mubr.f32.gmra.mrb[0].mxu0 %v4260
        %v5653 = vpop.f32.mrb[0].mxu0
        %v5654 = vadd.f32 0.0, %v5653
        %v5655 = vpop.f32.mrb[0].mxu0
        %5656 = vmatprep.mubr.f32.mxu0 0.0
        %5657 = vmatmul.mubr.f32.gmra.mrb[0].mxu0 %v4263
        %v5658 = vpop.f32.mrb[0].mxu0
        %v5659 = vadd.f32 0.0, %v5658
        %v5660 = vpop.f32.mrb[0].mxu0
        %5661 = vdwg.mxu0
        %s5662 = scalar_lea.vmem %s4, 224
        %v5663 = vld [vmem:[%s5662] sm:$0xff]
        %v5664 = vld [vmem:[%s5662 + $0x8] sm:$0xff]
        %v5665 = vld [vmem:[%s5662 + $0x10] sm:$0xff]
        %v5666 = vld [vmem:[%s5662 + $0x18] sm:$0xff]
        %v5668 = vsel %vm4433, %v5663, 0
        %v5671 = vsel %vm4433, %v5664, 0
        %v5674 = vsel %vm4433, %v5665, 0
        %v5677 = vsel %vm4433, %v5666, 0
        %5679 = vmatprep.subr.mxu0 0.0
        %5680 = vmatpush1.msra.mxu0 %v5654
        %5681 = vmatprep.subr.mxu0 0.0
        %5682 = vmatpush1.msra.mxu0 %v5659
        %5683 = vmatprep.subr.mxu0 0.0
        %5684 = vmatpush1.msra.mxu0 0.0
        %5685 = vmatprep.subr.mxu0 0.0
        %5686 = vmatpush1.msra.mxu0 0.0
        %5687 = vmatprep.subr.mxu0 0.0
        %5688 = vmatpush1.msra.mxu0 0.0
        %5689 = vmatprep.subr.mxu0 0.0
        %5690 = vmatpush1.msra.mxu0 0.0
        %5691 = vmatprep.subr.mxu0 0.0
        %5692 = vmatpush1.msra.mxu0 0.0
        %5693 = vmatprep.subr.mxu0 0.0
        %5694 = vmatpush1.msra.mxu0 0.0
        %5695 = vmatprep.subr.mxu0 0.0
        %5696 = vmatpush1.msra.mxu0 0.0
        %5697 = vmatprep.subr.mxu0 0.0
        %5698 = vmatpush1.msra.mxu0 0.0
        %5699 = vmatprep.subr.mxu0 0.0
        %5700 = vmatpush1.msra.mxu0 0.0
        %5701 = vmatprep.subr.mxu0 0.0
        %5702 = vmatpush1.msra.mxu0 0.0
        %5703 = vmatprep.subr.mxu0 0.0
        %5704 = vmatpush1.msra.mxu0 0.0
        %5705 = vmatprep.subr.mxu0 0.0
        %5706 = vmatpush1.msra.mxu0 0.0
        %5707 = vmatprep.subr.mxu0 0.0
        %5708 = vmatpush1.msra.mxu0 0.0
        %5709 = vmatprep.subr.mxu0 0.0
        %5710 = vmatpush1.msra.mxu0 0.0
        %5711 = vmatprep.subr.mxu0 0.0
        %5712 = vmatpush1.msra.mxu0 0.0
        %5713 = vmatprep.subr.mxu0 0.0
        %5714 = vmatpush1.msra.mxu0 0.0
        %5715 = vmatprep.subr.mxu0 0.0
        %5716 = vmatpush1.msra.mxu0 0.0
        %5717 = vmatprep.subr.mxu0 0.0
        %5718 = vmatpush1.msra.mxu0 0.0
        %5719 = vmatprep.subr.mxu0 0.0
        %5720 = vmatpush1.msra.mxu0 0.0
        %5721 = vmatprep.subr.mxu0 0.0
        %5722 = vmatpush1.msra.mxu0 0.0
        %5723 = vmatprep.subr.mxu0 0.0
        %5724 = vmatpush1.msra.mxu0 0.0
        %5725 = vmatprep.subr.mxu0 0.0
        %5726 = vmatpush1.msra.mxu0 0.0
        %5727 = vmatprep.subr.mxu0 0.0
        %5728 = vmatpush1.msra.mxu0 0.0
        %5729 = vmatprep.subr.mxu0 0.0
        %5730 = vmatpush1.msra.mxu0 0.0
        %5731 = vmatprep.subr.mxu0 0.0
        %5732 = vmatpush1.msra.mxu0 0.0
        %5733 = vmatprep.subr.mxu0 0.0
        %5734 = vmatpush1.msra.mxu0 0.0
        %5735 = vmatprep.subr.mxu0 0.0
        %5736 = vmatpush1.msra.mxu0 0.0
        %5737 = vmatprep.subr.mxu0 0.0
        %5738 = vmatpush1.msra.mxu0 0.0
        %5739 = vmatprep.subr.mxu0 0.0
        %5740 = vmatpush1.msra.mxu0 0.0
        %5741 = vmatprep.subr.mxu0 0.0
        %5742 = vmatpush1.msra.mxu0 0.0
        %5743 = vmatprep.mubr.f32.mxu0 0.0
        %5744 = vmatmul.mubr.f32.gmra.mrb[0].mxu0 %v5668
        %v5745 = vpop.f32.mrb[0].mxu0
        %v5746 = vadd.f32 0.0, %v5745
        %v5747 = vpop.f32.mrb[0].mxu0
        %5748 = vmatprep.mubr.f32.mxu0 0.0
        %5749 = vmatmul.mubr.f32.gmra.mrb[0].mxu0 %v5671
        %v5750 = vpop.f32.mrb[0].mxu0
        %v5751 = vadd.f32 0.0, %v5750
        %v5752 = vpop.f32.mrb[0].mxu0
        %5753 = vmatprep.mubr.f32.mxu0 0.0
        %5754 = vmatmul.mubr.f32.gmra.mrb[0].mxu0 %v5674
        %v5755 = vpop.f32.mrb[0].mxu0
        %v5756 = vadd.f32 0.0, %v5755
        %v5757 = vpop.f32.mrb[0].mxu0
        %5758 = vmatprep.mubr.f32.mxu0 0.0
        %5759 = vmatmul.mubr.f32.gmra.mrb[0].mxu0 %v5677
        %v5760 = vpop.f32.mrb[0].mxu0
        %v5761 = vadd.f32 0.0, %v5760
        %v5762 = vpop.f32.mrb[0].mxu0
        %5763 = vdwg.mxu0
        %v5764 = vadd.f32 %v5574, %v5746
        %v5765 = vadd.f32 %v5575, %v5751
        %v5766 = vadd.f32 %v5576, %v5756
        %v5767 = vadd.f32 %v5577, %v5761
        %s5768 = scalar_lea.vmem [#allocation8], 512
        %v5769 = vld [vmem:[%s5768] sm:$0xff]
        %v5770 = vld [vmem:[%s5768 + $0x8] sm:$0xff]
        %v5771 = vld [vmem:[%s5768 + $0x10] sm:$0xff]
        %v5772 = vld [vmem:[%s5768 + $0x18] sm:$0xff]
        %v5773 = vld [vmem:[%s5768 + $0x20] sm:$0xff]
        %v5774 = vld [vmem:[%s5768 + $0x28] sm:$0xff]
        %v5775 = vld [vmem:[%s5768 + $0x30] sm:$0xff]
        %v5776 = vld [vmem:[%s5768 + $0x38] sm:$0xff]
        %5777 = vmatprep.subr.mxu0 0.0
        %5778 = vmatpush1.msra.mxu0 %v5769
        %5779 = vmatprep.subr.mxu0 0.0
        %5780 = vmatpush1.msra.mxu0 %v5770
        %5781 = vmatprep.subr.mxu0 0.0
        %5782 = vmatpush1.msra.mxu0 %v5771
        %5783 = vmatprep.subr.mxu0 0.0
        %5784 = vmatpush1.msra.mxu0 %v5772
        %5785 = vmatprep.subr.mxu0 0.0
        %5786 = vmatpush1.msra.mxu0 %v5773
        %5787 = vmatprep.subr.mxu0 0.0
        %5788 = vmatpush1.msra.mxu0 %v5774
        %5789 = vmatprep.subr.mxu0 0.0
        %5790 = vmatpush1.msra.mxu0 %v5775
        %5791 = vmatprep.subr.mxu0 0.0
        %5792 = vmatpush1.msra.mxu0 %v5776
        %5793 = vmatprep.subr.mxu0 0.0
        %5794 = vmatpush1.msra.mxu0 0.0
        %5795 = vmatprep.subr.mxu0 0.0
        %5796 = vmatpush1.msra.mxu0 0.0
        %5797 = vmatprep.subr.mxu0 0.0
        %5798 = vmatpush1.msra.mxu0 0.0
        %5799 = vmatprep.subr.mxu0 0.0
        %5800 = vmatpush1.msra.mxu0 0.0
        %5801 = vmatprep.subr.mxu0 0.0
        %5802 = vmatpush1.msra.mxu0 0.0
        %5803 = vmatprep.subr.mxu0 0.0
        %5804 = vmatpush1.msra.mxu0 0.0
        %5805 = vmatprep.subr.mxu0 0.0
        %5806 = vmatpush1.msra.mxu0 0.0
        %5807 = vmatprep.subr.mxu0 0.0
        %5808 = vmatpush1.msra.mxu0 0.0
        %5809 = vmatprep.subr.mxu0 0.0
        %5810 = vmatpush1.msra.mxu0 0.0
        %5811 = vmatprep.subr.mxu0 0.0
        %5812 = vmatpush1.msra.mxu0 0.0
        %5813 = vmatprep.subr.mxu0 0.0
        %5814 = vmatpush1.msra.mxu0 0.0
        %5815 = vmatprep.subr.mxu0 0.0
        %5816 = vmatpush1.msra.mxu0 0.0
        %5817 = vmatprep.subr.mxu0 0.0
        %5818 = vmatpush1.msra.mxu0 0.0
        %5819 = vmatprep.subr.mxu0 0.0
        %5820 = vmatpush1.msra.mxu0 0.0
        %5821 = vmatprep.subr.mxu0 0.0
        %5822 = vmatpush1.msra.mxu0 0.0
        %5823 = vmatprep.subr.mxu0 0.0
        %5824 = vmatpush1.msra.mxu0 0.0
        %5825 = vmatprep.subr.mxu0 0.0
        %5826 = vmatpush1.msra.mxu0 0.0
        %5827 = vmatprep.subr.mxu0 0.0
        %5828 = vmatpush1.msra.mxu0 0.0
        %5829 = vmatprep.subr.mxu0 0.0
        %5830 = vmatpush1.msra.mxu0 0.0
        %5831 = vmatprep.subr.mxu0 0.0
        %5832 = vmatpush1.msra.mxu0 0.0
        %5833 = vmatprep.subr.mxu0 0.0
        %5834 = vmatpush1.msra.mxu0 0.0
        %5835 = vmatprep.subr.mxu0 0.0
        %5836 = vmatpush1.msra.mxu0 0.0
        %5837 = vmatprep.subr.mxu0 0.0
        %5838 = vmatpush1.msra.mxu0 0.0
        %5839 = vmatprep.subr.mxu0 0.0
        %5840 = vmatpush1.msra.mxu0 0.0
        %5841 = vmatprep.mubr.f32.mxu0 0.0
        %5842 = vmatmul.mubr.f32.gmra.mrb[0].mxu0 %v4260
        %v5843 = vpop.f32.mrb[0].mxu0
        %v5844 = vadd.f32 0.0, %v5843
        %v5845 = vpop.f32.mrb[0].mxu0
        %5846 = vmatprep.mubr.f32.mxu0 0.0
        %5847 = vmatmul.mubr.f32.gmra.mrb[0].mxu0 %v4263
        %v5848 = vpop.f32.mrb[0].mxu0
        %v5849 = vadd.f32 0.0, %v5848
        %v5850 = vpop.f32.mrb[0].mxu0
        %5851 = vdwg.mxu0
        %s5852 = scalar_lea.vmem %s4, 256
        %v5853 = vld [vmem:[%s5852] sm:$0xff]
        %v5854 = vld [vmem:[%s5852 + $0x8] sm:$0xff]
        %v5855 = vld [vmem:[%s5852 + $0x10] sm:$0xff]
        %v5856 = vld [vmem:[%s5852 + $0x18] sm:$0xff]
        %v5858 = vsel %vm4433, %v5853, 0
        %v5861 = vsel %vm4433, %v5854, 0
        %v5864 = vsel %vm4433, %v5855, 0
        %v5867 = vsel %vm4433, %v5856, 0
        %5869 = vmatprep.subr.mxu0 0.0
        %5870 = vmatpush1.msra.mxu0 %v5844
        %5871 = vmatprep.subr.mxu0 0.0
        %5872 = vmatpush1.msra.mxu0 %v5849
        %5873 = vmatprep.subr.mxu0 0.0
        %5874 = vmatpush1.msra.mxu0 0.0
        %5875 = vmatprep.subr.mxu0 0.0
        %5876 = vmatpush1.msra.mxu0 0.0
        %5877 = vmatprep.subr.mxu0 0.0
        %5878 = vmatpush1.msra.mxu0 0.0
        %5879 = vmatprep.subr.mxu0 0.0
        %5880 = vmatpush1.msra.mxu0 0.0
        %5881 = vmatprep.subr.mxu0 0.0
        %5882 = vmatpush1.msra.mxu0 0.0
        %5883 = vmatprep.subr.mxu0 0.0
        %5884 = vmatpush1.msra.mxu0 0.0
        %5885 = vmatprep.subr.mxu0 0.0
        %5886 = vmatpush1.msra.mxu0 0.0
        %5887 = vmatprep.subr.mxu0 0.0
        %5888 = vmatpush1.msra.mxu0 0.0
        %5889 = vmatprep.subr.mxu0 0.0
        %5890 = vmatpush1.msra.mxu0 0.0
        %5891 = vmatprep.subr.mxu0 0.0
        %5892 = vmatpush1.msra.mxu0 0.0
        %5893 = vmatprep.subr.mxu0 0.0
        %5894 = vmatpush1.msra.mxu0 0.0
        %5895 = vmatprep.subr.mxu0 0.0
        %5896 = vmatpush1.msra.mxu0 0.0
        %5897 = vmatprep.subr.mxu0 0.0
        %5898 = vmatpush1.msra.mxu0 0.0
        %5899 = vmatprep.subr.mxu0 0.0
        %5900 = vmatpush1.msra.mxu0 0.0
        %5901 = vmatprep.subr.mxu0 0.0
        %5902 = vmatpush1.msra.mxu0 0.0
        %5903 = vmatprep.subr.mxu0 0.0
        %5904 = vmatpush1.msra.mxu0 0.0
        %5905 = vmatprep.subr.mxu0 0.0
        %5906 = vmatpush1.msra.mxu0 0.0
        %5907 = vmatprep.subr.mxu0 0.0
        %5908 = vmatpush1.msra.mxu0 0.0
        %5909 = vmatprep.subr.mxu0 0.0
        %5910 = vmatpush1.msra.mxu0 0.0
        %5911 = vmatprep.subr.mxu0 0.0
        %5912 = vmatpush1.msra.mxu0 0.0
        %5913 = vmatprep.subr.mxu0 0.0
        %5914 = vmatpush1.msra.mxu0 0.0
        %5915 = vmatprep.subr.mxu0 0.0
        %5916 = vmatpush1.msra.mxu0 0.0
        %5917 = vmatprep.subr.mxu0 0.0
        %5918 = vmatpush1.msra.mxu0 0.0
        %5919 = vmatprep.subr.mxu0 0.0
        %5920 = vmatpush1.msra.mxu0 0.0
        %5921 = vmatprep.subr.mxu0 0.0
        %5922 = vmatpush1.msra.mxu0 0.0
        %5923 = vmatprep.subr.mxu0 0.0
        %5924 = vmatpush1.msra.mxu0 0.0
        %5925 = vmatprep.subr.mxu0 0.0
        %5926 = vmatpush1.msra.mxu0 0.0
        %5927 = vmatprep.subr.mxu0 0.0
        %5928 = vmatpush1.msra.mxu0 0.0
        %5929 = vmatprep.subr.mxu0 0.0
        %5930 = vmatpush1.msra.mxu0 0.0
        %5931 = vmatprep.subr.mxu0 0.0
        %5932 = vmatpush1.msra.mxu0 0.0
        %5933 = vmatprep.mubr.f32.mxu0 0.0
        %5934 = vmatmul.mubr.f32.gmra.mrb[0].mxu0 %v5858
        %v5935 = vpop.f32.mrb[0].mxu0
        %v5936 = vadd.f32 0.0, %v5935
        %v5937 = vpop.f32.mrb[0].mxu0
        %5938 = vmatprep.mubr.f32.mxu0 0.0
        %5939 = vmatmul.mubr.f32.gmra.mrb[0].mxu0 %v5861
        %v5940 = vpop.f32.mrb[0].mxu0
        %v5941 = vadd.f32 0.0, %v5940
        %v5942 = vpop.f32.mrb[0].mxu0
        %5943 = vmatprep.mubr.f32.mxu0 0.0
        %5944 = vmatmul.mubr.f32.gmra.mrb[0].mxu0 %v5864
        %v5945 = vpop.f32.mrb[0].mxu0
        %v5946 = vadd.f32 0.0, %v5945
        %v5947 = vpop.f32.mrb[0].mxu0
        %5948 = vmatprep.mubr.f32.mxu0 0.0
        %5949 = vmatmul.mubr.f32.gmra.mrb[0].mxu0 %v5867
        %v5950 = vpop.f32.mrb[0].mxu0
        %v5951 = vadd.f32 0.0, %v5950
        %v5952 = vpop.f32.mrb[0].mxu0
        %5953 = vdwg.mxu0
        %v5954 = vadd.f32 %v5764, %v5936
        %v5955 = vadd.f32 %v5765, %v5941
        %v5956 = vadd.f32 %v5766, %v5946
        %v5957 = vadd.f32 %v5767, %v5951
        %v5958 = vsel %vm4433, %v5954, 0.0
        %5959 = vadd.xlane.f32.xlu0 %v5958
        %v5960 = vpop.xlane.xlu0 %5959
        %v5961 = vsel %vm4433, %v5955, 0.0
        %5962 = vadd.xlane.f32.xlu0 %v5961
        %v5963 = vpop.xlane.xlu0 %5962
        %v5964 = vsel %vm4433, %v5956, 0.0
        %5965 = vadd.xlane.f32.xlu0 %v5964
        %v5966 = vpop.xlane.xlu0 %5965
        %v5967 = vsel %vm4433, %v5957, 0.0
        %5968 = vadd.xlane.f32.xlu0 %v5967
        %v5969 = vpop.xlane.xlu0 %5968
        %v5970 = vrcp.pop 16.0
        %v5971 = vmul.f32 %v5960, %v5970
        %v5972 = vmul.f32 %v5963, %v5970
        %v5973 = vmul.f32 %v5966, %v5970
        %v5974 = vmul.f32 %v5969, %v5970
        %v5975 = vsub.f32 %v5954, %v5971
        %v5976 = vsub.f32 %v5955, %v5972
        %v5977 = vsub.f32 %v5956, %v5973
        %v5978 = vsub.f32 %v5957, %v5974
        %v5979 = vmul.f32 %v5975, %v5975
        %v5980 = vmul.f32 %v5976, %v5976
        %v5981 = vmul.f32 %v5977, %v5977
        %v5982 = vmul.f32 %v5978, %v5978
        %v5983 = vsel %vm4433, %v5979, 0.0
        %5984 = vadd.xlane.f32.xlu0 %v5983
        %v5985 = vpop.xlane.xlu0 %5984
        %v5986 = vsel %vm4433, %v5980, 0.0
        %5987 = vadd.xlane.f32.xlu0 %v5986
        %v5988 = vpop.xlane.xlu0 %5987
        %v5989 = vsel %vm4433, %v5981, 0.0
        %5990 = vadd.xlane.f32.xlu0 %v5989
        %v5991 = vpop.xlane.xlu0 %5990
        %v5992 = vsel %vm4433, %v5982, 0.0
        %5993 = vadd.xlane.f32.xlu0 %v5992
        %v5994 = vpop.xlane.xlu0 %5993
        %v5995 = vmul.f32 %v5985, %v5970
        %v5996 = vmul.f32 %v5988, %v5970
        %v5997 = vmul.f32 %v5991, %v5970
        %v5998 = vmul.f32 %v5994, %v5970
        %v5999 = vadd.f32 %v5995, 1e-05
        %v6000 = vadd.f32 %v5996, 1e-05
        %v6001 = vadd.f32 %v5997, 1e-05
        %v6002 = vadd.f32 %v5998, 1e-05
        %v6003 = vrsqrt.pop %v5999
        %v6004 = vrsqrt.pop %v6000
        %v6005 = vrsqrt.pop %v6001
        %v6006 = vrsqrt.pop %v6002
        %v6007 = vmul.f32 %v5975, %v6003
        %v6008 = vmul.f32 %v5976, %v6004
        %v6009 = vmul.f32 %v5977, %v6005
        %v6010 = vmul.f32 %v5978, %v6006
        %s6011 = sld [smem:[#allocation2 + $0x2]]
        %vm6012 = vcmp.ge.f32.partialorder %v6007, 0.0
        %vm6013 = vcmp.ge.f32.partialorder %v6008, 0.0
        %vm6014 = vcmp.ge.f32.partialorder %v6009, 0.0
        %vm6015 = vcmp.ge.f32.partialorder %v6010, 0.0
        %v6016 = vstv %s6011
        %v6017 = vmul.f32 %v6016, %v6007
        %v6018 = vmul.f32 %v6016, %v6008
        %v6019 = vmul.f32 %v6016, %v6009
        %v6020 = vmul.f32 %v6016, %v6010
        %v6021 = vsel %vm6012, %v6007, %v6017
        %v6022 = vsel %vm6013, %v6008, %v6018
        %v6023 = vsel %vm6014, %v6009, %v6019
        %v6024 = vsel %vm6015, %v6010, %v6020
        %v6025 = vld [vmem:[#allocation9] sm:$0xff]
        %v6026 = vld [vmem:[#allocation9 + $0x8] sm:$0xff]
        %v6028 = vsel %vm4433, %v6021, 0
        %v6031 = vsel %vm4433, %v6022, 0
        %v6034 = vsel %vm4433, %v6023, 0
        %v6037 = vsel %vm4433, %v6024, 0
        %6039 = vmatprep.subr.mxu0 0.0
        %6040 = vmatpush1.msra.mxu0 %v6025
        %6041 = vmatprep.subr.mxu0 0.0
        %6042 = vmatpush1.msra.mxu0 %v6026
        %6043 = vmatprep.subr.mxu0 0.0
        %6044 = vmatpush1.msra.mxu0 0.0
        %6045 = vmatprep.subr.mxu0 0.0
        %6046 = vmatpush1.msra.mxu0 0.0
        %6047 = vmatprep.subr.mxu0 0.0
        %6048 = vmatpush1.msra.mxu0 0.0
        %6049 = vmatprep.subr.mxu0 0.0
        %6050 = vmatpush1.msra.mxu0 0.0
        %6051 = vmatprep.subr.mxu0 0.0
        %6052 = vmatpush1.msra.mxu0 0.0
        %6053 = vmatprep.subr.mxu0 0.0
        %6054 = vmatpush1.msra.mxu0 0.0
        %6055 = vmatprep.subr.mxu0 0.0
        %6056 = vmatpush1.msra.mxu0 0.0
        %6057 = vmatprep.subr.mxu0 0.0
        %6058 = vmatpush1.msra.mxu0 0.0
        %6059 = vmatprep.subr.mxu0 0.0
        %6060 = vmatpush1.msra.mxu0 0.0
        %6061 = vmatprep.subr.mxu0 0.0
        %6062 = vmatpush1.msra.mxu0 0.0
        %6063 = vmatprep.subr.mxu0 0.0
        %6064 = vmatpush1.msra.mxu0 0.0
        %6065 = vmatprep.subr.mxu0 0.0
        %6066 = vmatpush1.msra.mxu0 0.0
        %6067 = vmatprep.subr.mxu0 0.0
        %6068 = vmatpush1.msra.mxu0 0.0
        %6069 = vmatprep.subr.mxu0 0.0
        %6070 = vmatpush1.msra.mxu0 0.0
        %6071 = vmatprep.subr.mxu0 0.0
        %6072 = vmatpush1.msra.mxu0 0.0
        %6073 = vmatprep.subr.mxu0 0.0
        %6074 = vmatpush1.msra.mxu0 0.0
        %6075 = vmatprep.subr.mxu0 0.0
        %6076 = vmatpush1.msra.mxu0 0.0
        %6077 = vmatprep.subr.mxu0 0.0
        %6078 = vmatpush1.msra.mxu0 0.0
        %6079 = vmatprep.subr.mxu0 0.0
        %6080 = vmatpush1.msra.mxu0 0.0
        %6081 = vmatprep.subr.mxu0 0.0
        %6082 = vmatpush1.msra.mxu0 0.0
        %6083 = vmatprep.subr.mxu0 0.0
        %6084 = vmatpush1.msra.mxu0 0.0
        %6085 = vmatprep.subr.mxu0 0.0
        %6086 = vmatpush1.msra.mxu0 0.0
        %6087 = vmatprep.subr.mxu0 0.0
        %6088 = vmatpush1.msra.mxu0 0.0
        %6089 = vmatprep.subr.mxu0 0.0
        %6090 = vmatpush1.msra.mxu0 0.0
        %6091 = vmatprep.subr.mxu0 0.0
        %6092 = vmatpush1.msra.mxu0 0.0
        %6093 = vmatprep.subr.mxu0 0.0
        %6094 = vmatpush1.msra.mxu0 0.0
        %6095 = vmatprep.subr.mxu0 0.0
        %6096 = vmatpush1.msra.mxu0 0.0
        %6097 = vmatprep.subr.mxu0 0.0
        %6098 = vmatpush1.msra.mxu0 0.0
        %6099 = vmatprep.subr.mxu0 0.0
        %6100 = vmatpush1.msra.mxu0 0.0
        %6101 = vmatprep.subr.mxu0 0.0
        %6102 = vmatpush1.msra.mxu0 0.0
        %6103 = vmatprep.mubr.f32.mxu0 0.0
        %6104 = vmatmul.mubr.f32.gmra.mrb[0].mxu0 %v6028
        %v6105 = vpop.f32.mrb[0].mxu0
        %v6106 = vadd.f32 0.0, %v6105
        %v6107 = vpop.f32.mrb[0].mxu0
        %6108 = vmatprep.mubr.f32.mxu0 0.0
        %6109 = vmatmul.mubr.f32.gmra.mrb[0].mxu0 %v6031
        %v6110 = vpop.f32.mrb[0].mxu0
        %v6111 = vadd.f32 0.0, %v6110
        %v6112 = vpop.f32.mrb[0].mxu0
        %6113 = vmatprep.mubr.f32.mxu0 0.0
        %6114 = vmatmul.mubr.f32.gmra.mrb[0].mxu0 %v6034
        %v6115 = vpop.f32.mrb[0].mxu0
        %v6116 = vadd.f32 0.0, %v6115
        %v6117 = vpop.f32.mrb[0].mxu0
        %6118 = vmatprep.mubr.f32.mxu0 0.0
        %6119 = vmatmul.mubr.f32.gmra.mrb[0].mxu0 %v6037
        %v6120 = vpop.f32.mrb[0].mxu0
        %v6121 = vadd.f32 0.0, %v6120
        %v6122 = vpop.f32.mrb[0].mxu0
        %6123 = vdwg.mxu0
        %v6124 = vld [vmem:[%s5] sm:$0xff]
        %v6125 = vld [vmem:[%s5 + $0x8] sm:$0xff]
        %v6126 = vld [vmem:[%s5 + $0x10] sm:$0xff]
        %v6127 = vld [vmem:[%s5 + $0x18] sm:$0xff]
        %s6128 = scalar_lea.vmem [#allocation9], 16
        %v6129 = vld [vmem:[%s6128] sm:$0xff]
        %v6130 = vld [vmem:[%s6128 + $0x8] sm:$0xff]
        %6131 = vmatprep.subr.mxu0 0.0
        %6132 = vmatpush1.msra.mxu0 %v6129
        %6133 = vmatprep.subr.mxu0 0.0
        %6134 = vmatpush1.msra.mxu0 %v6130
        %6135 = vmatprep.subr.mxu0 0.0
        %6136 = vmatpush1.msra.mxu0 0.0
        %6137 = vmatprep.subr.mxu0 0.0
        %6138 = vmatpush1.msra.mxu0 0.0
        %6139 = vmatprep.subr.mxu0 0.0
        %6140 = vmatpush1.msra.mxu0 0.0
        %6141 = vmatprep.subr.mxu0 0.0
        %6142 = vmatpush1.msra.mxu0 0.0
        %6143 = vmatprep.subr.mxu0 0.0
        %6144 = vmatpush1.msra.mxu0 0.0
        %6145 = vmatprep.subr.mxu0 0.0
        %6146 = vmatpush1.msra.mxu0 0.0
        %6147 = vmatprep.subr.mxu0 0.0
        %6148 = vmatpush1.msra.mxu0 0.0
        %6149 = vmatprep.subr.mxu0 0.0
        %6150 = vmatpush1.msra.mxu0 0.0
        %6151 = vmatprep.subr.mxu0 0.0
        %6152 = vmatpush1.msra.mxu0 0.0
        %6153 = vmatprep.subr.mxu0 0.0
        %6154 = vmatpush1.msra.mxu0 0.0
        %6155 = vmatprep.subr.mxu0 0.0
        %6156 = vmatpush1.msra.mxu0 0.0
        %6157 = vmatprep.subr.mxu0 0.0
        %6158 = vmatpush1.msra.mxu0 0.0
        %6159 = vmatprep.subr.mxu0 0.0
        %6160 = vmatpush1.msra.mxu0 0.0
        %6161 = vmatprep.subr.mxu0 0.0
        %6162 = vmatpush1.msra.mxu0 0.0
        %6163 = vmatprep.subr.mxu0 0.0
        %6164 = vmatpush1.msra.mxu0 0.0
        %6165 = vmatprep.subr.mxu0 0.0
        %6166 = vmatpush1.msra.mxu0 0.0
        %6167 = vmatprep.subr.mxu0 0.0
        %6168 = vmatpush1.msra.mxu0 0.0
        %6169 = vmatprep.subr.mxu0 0.0
        %6170 = vmatpush1.msra.mxu0 0.0
        %6171 = vmatprep.subr.mxu0 0.0
        %6172 = vmatpush1.msra.mxu0 0.0
        %6173 = vmatprep.subr.mxu0 0.0
        %6174 = vmatpush1.msra.mxu0 0.0
        %6175 = vmatprep.subr.mxu0 0.0
        %6176 = vmatpush1.msra.mxu0 0.0
        %6177 = vmatprep.subr.mxu0 0.0
        %6178 = vmatpush1.msra.mxu0 0.0
        %6179 = vmatprep.subr.mxu0 0.0
        %6180 = vmatpush1.msra.mxu0 0.0
        %6181 = vmatprep.subr.mxu0 0.0
        %6182 = vmatpush1.msra.mxu0 0.0
        %6183 = vmatprep.subr.mxu0 0.0
        %6184 = vmatpush1.msra.mxu0 0.0
        %6185 = vmatprep.subr.mxu0 0.0
        %6186 = vmatpush1.msra.mxu0 0.0
        %6187 = vmatprep.subr.mxu0 0.0
        %6188 = vmatpush1.msra.mxu0 0.0
        %6189 = vmatprep.subr.mxu0 0.0
        %6190 = vmatpush1.msra.mxu0 0.0
        %6191 = vmatprep.subr.mxu0 0.0
        %6192 = vmatpush1.msra.mxu0 0.0
        %6193 = vmatprep.subr.mxu0 0.0
        %6194 = vmatpush1.msra.mxu0 0.0
        %6195 = vmatprep.mubr.f32.mxu0 0.0
        %6196 = vmatmul.mubr.f32.gmra.mrb[0].mxu0 %v6028
        %v6197 = vpop.f32.mrb[0].mxu0
        %v6198 = vadd.f32 0.0, %v6197
        %v6199 = vpop.f32.mrb[0].mxu0
        %6200 = vmatprep.mubr.f32.mxu0 0.0
        %6201 = vmatmul.mubr.f32.gmra.mrb[0].mxu0 %v6031
        %v6202 = vpop.f32.mrb[0].mxu0
        %v6203 = vadd.f32 0.0, %v6202
        %v6204 = vpop.f32.mrb[0].mxu0
        %6205 = vmatprep.mubr.f32.mxu0 0.0
        %6206 = vmatmul.mubr.f32.gmra.mrb[0].mxu0 %v6034
        %v6207 = vpop.f32.mrb[0].mxu0
        %v6208 = vadd.f32 0.0, %v6207
        %v6209 = vpop.f32.mrb[0].mxu0
        %6210 = vmatprep.mubr.f32.mxu0 0.0
        %6211 = vmatmul.mubr.f32.gmra.mrb[0].mxu0 %v6037
        %v6212 = vpop.f32.mrb[0].mxu0
        %v6213 = vadd.f32 0.0, %v6212
        %v6214 = vpop.f32.mrb[0].mxu0
        %6215 = vdwg.mxu0
        %s6216 = scalar_lea.vmem %s5, 32
        %v6217 = vld [vmem:[%s6216] sm:$0xff]
        %v6218 = vld [vmem:[%s6216 + $0x8] sm:$0xff]
        %v6219 = vld [vmem:[%s6216 + $0x10] sm:$0xff]
        %v6220 = vld [vmem:[%s6216 + $0x18] sm:$0xff]
        %vm6221 = vcmask 261120
        %v6223 = vsel %vm6221, %v6217, 0
        %v6226 = vsel %vm6221, %v6218, 0
        %v6229 = vsel %vm6221, %v6219, 0
        %v6232 = vsel %vm6221, %v6220, 0
        %6234 = vmatprep.subr.mxu0 0.0
        %6235 = vmatpush1.msra.mxu0 %v6198
        %6236 = vmatprep.subr.mxu0 0.0
        %6237 = vmatpush1.msra.mxu0 %v6203
        %6238 = vmatprep.subr.mxu0 0.0
        %6239 = vmatpush1.msra.mxu0 %v6208
        %6240 = vmatprep.subr.mxu0 0.0
        %6241 = vmatpush1.msra.mxu0 %v6213
        %6242 = vmatprep.subr.mxu0 0.0
        %6243 = vmatpush1.msra.mxu0 0.0
        %6244 = vmatprep.subr.mxu0 0.0
        %6245 = vmatpush1.msra.mxu0 0.0
        %6246 = vmatprep.subr.mxu0 0.0
        %6247 = vmatpush1.msra.mxu0 0.0
        %6248 = vmatprep.subr.mxu0 0.0
        %6249 = vmatpush1.msra.mxu0 0.0
        %6250 = vmatprep.subr.mxu0 0.0
        %6251 = vmatpush1.msra.mxu0 0.0
        %6252 = vmatprep.subr.mxu0 0.0
        %6253 = vmatpush1.msra.mxu0 0.0
        %6254 = vmatprep.subr.mxu0 0.0
        %6255 = vmatpush1.msra.mxu0 0.0
        %6256 = vmatprep.subr.mxu0 0.0
        %6257 = vmatpush1.msra.mxu0 0.0
        %6258 = vmatprep.subr.mxu0 0.0
        %6259 = vmatpush1.msra.mxu0 0.0
        %6260 = vmatprep.subr.mxu0 0.0
        %6261 = vmatpush1.msra.mxu0 0.0
        %6262 = vmatprep.subr.mxu0 0.0
        %6263 = vmatpush1.msra.mxu0 0.0
        %6264 = vmatprep.subr.mxu0 0.0
        %6265 = vmatpush1.msra.mxu0 0.0
        %6266 = vmatprep.subr.mxu0 0.0
        %6267 = vmatpush1.msra.mxu0 0.0
        %6268 = vmatprep.subr.mxu0 0.0
        %6269 = vmatpush1.msra.mxu0 0.0
        %6270 = vmatprep.subr.mxu0 0.0
        %6271 = vmatpush1.msra.mxu0 0.0
        %6272 = vmatprep.subr.mxu0 0.0
        %6273 = vmatpush1.msra.mxu0 0.0
        %6274 = vmatprep.subr.mxu0 0.0
        %6275 = vmatpush1.msra.mxu0 0.0
        %6276 = vmatprep.subr.mxu0 0.0
        %6277 = vmatpush1.msra.mxu0 0.0
        %6278 = vmatprep.subr.mxu0 0.0
        %6279 = vmatpush1.msra.mxu0 0.0
        %6280 = vmatprep.subr.mxu0 0.0
        %6281 = vmatpush1.msra.mxu0 0.0
        %6282 = vmatprep.subr.mxu0 0.0
        %6283 = vmatpush1.msra.mxu0 0.0
        %6284 = vmatprep.subr.mxu0 0.0
        %6285 = vmatpush1.msra.mxu0 0.0
        %6286 = vmatprep.subr.mxu0 0.0
        %6287 = vmatpush1.msra.mxu0 0.0
        %6288 = vmatprep.subr.mxu0 0.0
        %6289 = vmatpush1.msra.mxu0 0.0
        %6290 = vmatprep.subr.mxu0 0.0
        %6291 = vmatpush1.msra.mxu0 0.0
        %6292 = vmatprep.subr.mxu0 0.0
        %6293 = vmatpush1.msra.mxu0 0.0
        %6294 = vmatprep.subr.mxu0 0.0
        %6295 = vmatpush1.msra.mxu0 0.0
        %6296 = vmatprep.subr.mxu0 0.0
        %6297 = vmatpush1.msra.mxu0 0.0
        %6298 = vmatprep.mubr.f32.mxu0 0.0
        %6299 = vmatmul.mubr.f32.gmra.mrb[0].mxu0 %v6223
        %v6300 = vpop.f32.mrb[0].mxu0
        %v6301 = vadd.f32 0.0, %v6300
        %v6302 = vpop.f32.mrb[0].mxu0
        %6303 = vmatprep.mubr.f32.mxu0 0.0
        %6304 = vmatmul.mubr.f32.gmra.mrb[0].mxu0 %v6226
        %v6305 = vpop.f32.mrb[0].mxu0
        %v6306 = vadd.f32 0.0, %v6305
        %v6307 = vpop.f32.mrb[0].mxu0
        %6308 = vmatprep.mubr.f32.mxu0 0.0
        %6309 = vmatmul.mubr.f32.gmra.mrb[0].mxu0 %v6229
        %v6310 = vpop.f32.mrb[0].mxu0
        %v6311 = vadd.f32 0.0, %v6310
        %v6312 = vpop.f32.mrb[0].mxu0
        %6313 = vmatprep.mubr.f32.mxu0 0.0
        %6314 = vmatmul.mubr.f32.gmra.mrb[0].mxu0 %v6232
        %v6315 = vpop.f32.mrb[0].mxu0
        %v6316 = vadd.f32 0.0, %v6315
        %v6317 = vpop.f32.mrb[0].mxu0
        %6318 = vdwg.mxu0
        %v6320 = vsel %vm6221, %v6124, 0
        %v6323 = vsel %vm6221, %v6125, 0
        %v6326 = vsel %vm6221, %v6126, 0
        %v6329 = vsel %vm6221, %v6127, 0
        %6331 = vmatprep.subr.mxu0 0.0
        %6332 = vmatpush1.msra.mxu0 %v6106
        %6333 = vmatprep.subr.mxu0 0.0
        %6334 = vmatpush1.msra.mxu0 %v6111
        %6335 = vmatprep.subr.mxu0 0.0
        %6336 = vmatpush1.msra.mxu0 %v6116
        %6337 = vmatprep.subr.mxu0 0.0
        %6338 = vmatpush1.msra.mxu0 %v6121
        %6339 = vmatprep.subr.mxu0 0.0
        %6340 = vmatpush1.msra.mxu0 0.0
        %6341 = vmatprep.subr.mxu0 0.0
        %6342 = vmatpush1.msra.mxu0 0.0
        %6343 = vmatprep.subr.mxu0 0.0
        %6344 = vmatpush1.msra.mxu0 0.0
        %6345 = vmatprep.subr.mxu0 0.0
        %6346 = vmatpush1.msra.mxu0 0.0
        %6347 = vmatprep.subr.mxu0 0.0
        %6348 = vmatpush1.msra.mxu0 0.0
        %6349 = vmatprep.subr.mxu0 0.0
        %6350 = vmatpush1.msra.mxu0 0.0
        %6351 = vmatprep.subr.mxu0 0.0
        %6352 = vmatpush1.msra.mxu0 0.0
        %6353 = vmatprep.subr.mxu0 0.0
        %6354 = vmatpush1.msra.mxu0 0.0
        %6355 = vmatprep.subr.mxu0 0.0
        %6356 = vmatpush1.msra.mxu0 0.0
        %6357 = vmatprep.subr.mxu0 0.0
        %6358 = vmatpush1.msra.mxu0 0.0
        %6359 = vmatprep.subr.mxu0 0.0
        %6360 = vmatpush1.msra.mxu0 0.0
        %6361 = vmatprep.subr.mxu0 0.0
        %6362 = vmatpush1.msra.mxu0 0.0
        %6363 = vmatprep.subr.mxu0 0.0
        %6364 = vmatpush1.msra.mxu0 0.0
        %6365 = vmatprep.subr.mxu0 0.0
        %6366 = vmatpush1.msra.mxu0 0.0
        %6367 = vmatprep.subr.mxu0 0.0
        %6368 = vmatpush1.msra.mxu0 0.0
        %6369 = vmatprep.subr.mxu0 0.0
        %6370 = vmatpush1.msra.mxu0 0.0
        %6371 = vmatprep.subr.mxu0 0.0
        %6372 = vmatpush1.msra.mxu0 0.0
        %6373 = vmatprep.subr.mxu0 0.0
        %6374 = vmatpush1.msra.mxu0 0.0
        %6375 = vmatprep.subr.mxu0 0.0
        %6376 = vmatpush1.msra.mxu0 0.0
        %6377 = vmatprep.subr.mxu0 0.0
        %6378 = vmatpush1.msra.mxu0 0.0
        %6379 = vmatprep.subr.mxu0 0.0
        %6380 = vmatpush1.msra.mxu0 0.0
        %6381 = vmatprep.subr.mxu0 0.0
        %6382 = vmatpush1.msra.mxu0 0.0
        %6383 = vmatprep.subr.mxu0 0.0
        %6384 = vmatpush1.msra.mxu0 0.0
        %6385 = vmatprep.subr.mxu0 0.0
        %6386 = vmatpush1.msra.mxu0 0.0
        %6387 = vmatprep.subr.mxu0 0.0
        %6388 = vmatpush1.msra.mxu0 0.0
        %6389 = vmatprep.subr.mxu0 0.0
        %6390 = vmatpush1.msra.mxu0 0.0
        %6391 = vmatprep.subr.mxu0 0.0
        %6392 = vmatpush1.msra.mxu0 0.0
        %6393 = vmatprep.subr.mxu0 0.0
        %6394 = vmatpush1.msra.mxu0 0.0
        %6395 = vmatprep.mubr.f32.mxu0 0.0
        %6396 = vmatmul.mubr.f32.gmra.mrb[0].mxu0 %v6320
        %v6397 = vpop.f32.mrb[0].mxu0
        %v6398 = vadd.f32 %v6301, %v6397
        %v6399 = vpop.f32.mrb[0].mxu0
        %6400 = vmatprep.mubr.f32.mxu0 0.0
        %6401 = vmatmul.mubr.f32.gmra.mrb[0].mxu0 %v6323
        %v6402 = vpop.f32.mrb[0].mxu0
        %v6403 = vadd.f32 %v6306, %v6402
        %v6404 = vpop.f32.mrb[0].mxu0
        %6405 = vmatprep.mubr.f32.mxu0 0.0
        %6406 = vmatmul.mubr.f32.gmra.mrb[0].mxu0 %v6326
        %v6407 = vpop.f32.mrb[0].mxu0
        %v6408 = vadd.f32 %v6311, %v6407
        %v6409 = vpop.f32.mrb[0].mxu0
        %6410 = vmatprep.mubr.f32.mxu0 0.0
        %6411 = vmatmul.mubr.f32.gmra.mrb[0].mxu0 %v6329
        %v6412 = vpop.f32.mrb[0].mxu0
        %v6413 = vadd.f32 %v6316, %v6412
        %v6414 = vpop.f32.mrb[0].mxu0
        %6415 = vdwg.mxu0
        %s6416 = scalar_lea.vmem [#allocation9], 32
        %v6417 = vld [vmem:[%s6416] sm:$0xff]
        %v6418 = vld [vmem:[%s6416 + $0x8] sm:$0xff]
        %6419 = vmatprep.subr.mxu0 0.0
        %6420 = vmatpush1.msra.mxu0 %v6417
        %6421 = vmatprep.subr.mxu0 0.0
        %6422 = vmatpush1.msra.mxu0 %v6418
        %6423 = vmatprep.subr.mxu0 0.0
        %6424 = vmatpush1.msra.mxu0 0.0
        %6425 = vmatprep.subr.mxu0 0.0
        %6426 = vmatpush1.msra.mxu0 0.0
        %6427 = vmatprep.subr.mxu0 0.0
        %6428 = vmatpush1.msra.mxu0 0.0
        %6429 = vmatprep.subr.mxu0 0.0
        %6430 = vmatpush1.msra.mxu0 0.0
        %6431 = vmatprep.subr.mxu0 0.0
        %6432 = vmatpush1.msra.mxu0 0.0
        %6433 = vmatprep.subr.mxu0 0.0
        %6434 = vmatpush1.msra.mxu0 0.0
        %6435 = vmatprep.subr.mxu0 0.0
        %6436 = vmatpush1.msra.mxu0 0.0
        %6437 = vmatprep.subr.mxu0 0.0
        %6438 = vmatpush1.msra.mxu0 0.0
        %6439 = vmatprep.subr.mxu0 0.0
        %6440 = vmatpush1.msra.mxu0 0.0
        %6441 = vmatprep.subr.mxu0 0.0
        %6442 = vmatpush1.msra.mxu0 0.0
        %6443 = vmatprep.subr.mxu0 0.0
        %6444 = vmatpush1.msra.mxu0 0.0
        %6445 = vmatprep.subr.mxu0 0.0
        %6446 = vmatpush1.msra.mxu0 0.0
        %6447 = vmatprep.subr.mxu0 0.0
        %6448 = vmatpush1.msra.mxu0 0.0
        %6449 = vmatprep.subr.mxu0 0.0
        %6450 = vmatpush1.msra.mxu0 0.0
        %6451 = vmatprep.subr.mxu0 0.0
        %6452 = vmatpush1.msra.mxu0 0.0
        %6453 = vmatprep.subr.mxu0 0.0
        %6454 = vmatpush1.msra.mxu0 0.0
        %6455 = vmatprep.subr.mxu0 0.0
        %6456 = vmatpush1.msra.mxu0 0.0
        %6457 = vmatprep.subr.mxu0 0.0
        %6458 = vmatpush1.msra.mxu0 0.0
        %6459 = vmatprep.subr.mxu0 0.0
        %6460 = vmatpush1.msra.mxu0 0.0
        %6461 = vmatprep.subr.mxu0 0.0
        %6462 = vmatpush1.msra.mxu0 0.0
        %6463 = vmatprep.subr.mxu0 0.0
        %6464 = vmatpush1.msra.mxu0 0.0
        %6465 = vmatprep.subr.mxu0 0.0
        %6466 = vmatpush1.msra.mxu0 0.0
        %6467 = vmatprep.subr.mxu0 0.0
        %6468 = vmatpush1.msra.mxu0 0.0
        %6469 = vmatprep.subr.mxu0 0.0
        %6470 = vmatpush1.msra.mxu0 0.0
        %6471 = vmatprep.subr.mxu0 0.0
        %6472 = vmatpush1.msra.mxu0 0.0
        %6473 = vmatprep.subr.mxu0 0.0
        %6474 = vmatpush1.msra.mxu0 0.0
        %6475 = vmatprep.subr.mxu0 0.0
        %6476 = vmatpush1.msra.mxu0 0.0
        %6477 = vmatprep.subr.mxu0 0.0
        %6478 = vmatpush1.msra.mxu0 0.0
        %6479 = vmatprep.subr.mxu0 0.0
        %6480 = vmatpush1.msra.mxu0 0.0
        %6481 = vmatprep.subr.mxu0 0.0
        %6482 = vmatpush1.msra.mxu0 0.0
        %6483 = vmatprep.mubr.f32.mxu0 0.0
        %6484 = vmatmul.mubr.f32.gmra.mrb[0].mxu0 %v6028
        %v6485 = vpop.f32.mrb[0].mxu0
        %v6486 = vadd.f32 0.0, %v6485
        %v6487 = vpop.f32.mrb[0].mxu0
        %6488 = vmatprep.mubr.f32.mxu0 0.0
        %6489 = vmatmul.mubr.f32.gmra.mrb[0].mxu0 %v6031
        %v6490 = vpop.f32.mrb[0].mxu0
        %v6491 = vadd.f32 0.0, %v6490
        %v6492 = vpop.f32.mrb[0].mxu0
        %6493 = vmatprep.mubr.f32.mxu0 0.0
        %6494 = vmatmul.mubr.f32.gmra.mrb[0].mxu0 %v6034
        %v6495 = vpop.f32.mrb[0].mxu0
        %v6496 = vadd.f32 0.0, %v6495
        %v6497 = vpop.f32.mrb[0].mxu0
        %6498 = vmatprep.mubr.f32.mxu0 0.0
        %6499 = vmatmul.mubr.f32.gmra.mrb[0].mxu0 %v6037
        %v6500 = vpop.f32.mrb[0].mxu0
        %v6501 = vadd.f32 0.0, %v6500
        %v6502 = vpop.f32.mrb[0].mxu0
        %6503 = vdwg.mxu0
        %s6504 = scalar_lea.vmem %s5, 64
        %v6505 = vld [vmem:[%s6504] sm:$0xff]
        %v6506 = vld [vmem:[%s6504 + $0x8] sm:$0xff]
        %v6507 = vld [vmem:[%s6504 + $0x10] sm:$0xff]
        %v6508 = vld [vmem:[%s6504 + $0x18] sm:$0xff]
        %v6510 = vsel %vm6221, %v6505, 0
        %v6513 = vsel %vm6221, %v6506, 0
        %v6516 = vsel %vm6221, %v6507, 0
        %v6519 = vsel %vm6221, %v6508, 0
        %6521 = vmatprep.subr.mxu0 0.0
        %6522 = vmatpush1.msra.mxu0 %v6486
        %6523 = vmatprep.subr.mxu0 0.0
        %6524 = vmatpush1.msra.mxu0 %v6491
        %6525 = vmatprep.subr.mxu0 0.0
        %6526 = vmatpush1.msra.mxu0 %v6496
        %6527 = vmatprep.subr.mxu0 0.0
        %6528 = vmatpush1.msra.mxu0 %v6501
        %6529 = vmatprep.subr.mxu0 0.0
        %6530 = vmatpush1.msra.mxu0 0.0
        %6531 = vmatprep.subr.mxu0 0.0
        %6532 = vmatpush1.msra.mxu0 0.0
        %6533 = vmatprep.subr.mxu0 0.0
        %6534 = vmatpush1.msra.mxu0 0.0
        %6535 = vmatprep.subr.mxu0 0.0
        %6536 = vmatpush1.msra.mxu0 0.0
        %6537 = vmatprep.subr.mxu0 0.0
        %6538 = vmatpush1.msra.mxu0 0.0
        %6539 = vmatprep.subr.mxu0 0.0
        %6540 = vmatpush1.msra.mxu0 0.0
        %6541 = vmatprep.subr.mxu0 0.0
        %6542 = vmatpush1.msra.mxu0 0.0
        %6543 = vmatprep.subr.mxu0 0.0
        %6544 = vmatpush1.msra.mxu0 0.0
        %6545 = vmatprep.subr.mxu0 0.0
        %6546 = vmatpush1.msra.mxu0 0.0
        %6547 = vmatprep.subr.mxu0 0.0
        %6548 = vmatpush1.msra.mxu0 0.0
        %6549 = vmatprep.subr.mxu0 0.0
        %6550 = vmatpush1.msra.mxu0 0.0
        %6551 = vmatprep.subr.mxu0 0.0
        %6552 = vmatpush1.msra.mxu0 0.0
        %6553 = vmatprep.subr.mxu0 0.0
        %6554 = vmatpush1.msra.mxu0 0.0
        %6555 = vmatprep.subr.mxu0 0.0
        %6556 = vmatpush1.msra.mxu0 0.0
        %6557 = vmatprep.subr.mxu0 0.0
        %6558 = vmatpush1.msra.mxu0 0.0
        %6559 = vmatprep.subr.mxu0 0.0
        %6560 = vmatpush1.msra.mxu0 0.0
        %6561 = vmatprep.subr.mxu0 0.0
        %6562 = vmatpush1.msra.mxu0 0.0
        %6563 = vmatprep.subr.mxu0 0.0
        %6564 = vmatpush1.msra.mxu0 0.0
        %6565 = vmatprep.subr.mxu0 0.0
        %6566 = vmatpush1.msra.mxu0 0.0
        %6567 = vmatprep.subr.mxu0 0.0
        %6568 = vmatpush1.msra.mxu0 0.0
        %6569 = vmatprep.subr.mxu0 0.0
        %6570 = vmatpush1.msra.mxu0 0.0
        %6571 = vmatprep.subr.mxu0 0.0
        %6572 = vmatpush1.msra.mxu0 0.0
        %6573 = vmatprep.subr.mxu0 0.0
        %6574 = vmatpush1.msra.mxu0 0.0
        %6575 = vmatprep.subr.mxu0 0.0
        %6576 = vmatpush1.msra.mxu0 0.0
        %6577 = vmatprep.subr.mxu0 0.0
        %6578 = vmatpush1.msra.mxu0 0.0
        %6579 = vmatprep.subr.mxu0 0.0
        %6580 = vmatpush1.msra.mxu0 0.0
        %6581 = vmatprep.subr.mxu0 0.0
        %6582 = vmatpush1.msra.mxu0 0.0
        %6583 = vmatprep.subr.mxu0 0.0
        %6584 = vmatpush1.msra.mxu0 0.0
        %6585 = vmatprep.mubr.f32.mxu0 0.0
        %6586 = vmatmul.mubr.f32.gmra.mrb[0].mxu0 %v6510
        %v6587 = vpop.f32.mrb[0].mxu0
        %v6588 = vadd.f32 0.0, %v6587
        %v6589 = vpop.f32.mrb[0].mxu0
        %6590 = vmatprep.mubr.f32.mxu0 0.0
        %6591 = vmatmul.mubr.f32.gmra.mrb[0].mxu0 %v6513
        %v6592 = vpop.f32.mrb[0].mxu0
        %v6593 = vadd.f32 0.0, %v6592
        %v6594 = vpop.f32.mrb[0].mxu0
        %6595 = vmatprep.mubr.f32.mxu0 0.0
        %6596 = vmatmul.mubr.f32.gmra.mrb[0].mxu0 %v6516
        %v6597 = vpop.f32.mrb[0].mxu0
        %v6598 = vadd.f32 0.0, %v6597
        %v6599 = vpop.f32.mrb[0].mxu0
        %6600 = vmatprep.mubr.f32.mxu0 0.0
        %6601 = vmatmul.mubr.f32.gmra.mrb[0].mxu0 %v6519
        %v6602 = vpop.f32.mrb[0].mxu0
        %v6603 = vadd.f32 0.0, %v6602
        %v6604 = vpop.f32.mrb[0].mxu0
        %6605 = vdwg.mxu0
        %v6606 = vadd.f32 %v6398, %v6588
        %v6607 = vadd.f32 %v6403, %v6593
        %v6608 = vadd.f32 %v6408, %v6598
        %v6609 = vadd.f32 %v6413, %v6603
        %s6610 = scalar_lea.vmem [#allocation9], 48
        %v6611 = vld [vmem:[%s6610] sm:$0xff]
        %v6612 = vld [vmem:[%s6610 + $0x8] sm:$0xff]
        %6613 = vmatprep.subr.mxu0 0.0
        %6614 = vmatpush1.msra.mxu0 %v6611
        %6615 = vmatprep.subr.mxu0 0.0
        %6616 = vmatpush1.msra.mxu0 %v6612
        %6617 = vmatprep.subr.mxu0 0.0
        %6618 = vmatpush1.msra.mxu0 0.0
        %6619 = vmatprep.subr.mxu0 0.0
        %6620 = vmatpush1.msra.mxu0 0.0
        %6621 = vmatprep.subr.mxu0 0.0
        %6622 = vmatpush1.msra.mxu0 0.0
        %6623 = vmatprep.subr.mxu0 0.0
        %6624 = vmatpush1.msra.mxu0 0.0
        %6625 = vmatprep.subr.mxu0 0.0
        %6626 = vmatpush1.msra.mxu0 0.0
        %6627 = vmatprep.subr.mxu0 0.0
        %6628 = vmatpush1.msra.mxu0 0.0
        %6629 = vmatprep.subr.mxu0 0.0
        %6630 = vmatpush1.msra.mxu0 0.0
        %6631 = vmatprep.subr.mxu0 0.0
        %6632 = vmatpush1.msra.mxu0 0.0
        %6633 = vmatprep.subr.mxu0 0.0
        %6634 = vmatpush1.msra.mxu0 0.0
        %6635 = vmatprep.subr.mxu0 0.0
        %6636 = vmatpush1.msra.mxu0 0.0
        %6637 = vmatprep.subr.mxu0 0.0
        %6638 = vmatpush1.msra.mxu0 0.0
        %6639 = vmatprep.subr.mxu0 0.0
        %6640 = vmatpush1.msra.mxu0 0.0
        %6641 = vmatprep.subr.mxu0 0.0
        %6642 = vmatpush1.msra.mxu0 0.0
        %6643 = vmatprep.subr.mxu0 0.0
        %6644 = vmatpush1.msra.mxu0 0.0
        %6645 = vmatprep.subr.mxu0 0.0
        %6646 = vmatpush1.msra.mxu0 0.0
        %6647 = vmatprep.subr.mxu0 0.0
        %6648 = vmatpush1.msra.mxu0 0.0
        %6649 = vmatprep.subr.mxu0 0.0
        %6650 = vmatpush1.msra.mxu0 0.0
        %6651 = vmatprep.subr.mxu0 0.0
        %6652 = vmatpush1.msra.mxu0 0.0
        %6653 = vmatprep.subr.mxu0 0.0
        %6654 = vmatpush1.msra.mxu0 0.0
        %6655 = vmatprep.subr.mxu0 0.0
        %6656 = vmatpush1.msra.mxu0 0.0
        %6657 = vmatprep.subr.mxu0 0.0
        %6658 = vmatpush1.msra.mxu0 0.0
        %6659 = vmatprep.subr.mxu0 0.0
        %6660 = vmatpush1.msra.mxu0 0.0
        %6661 = vmatprep.subr.mxu0 0.0
        %6662 = vmatpush1.msra.mxu0 0.0
        %6663 = vmatprep.subr.mxu0 0.0
        %6664 = vmatpush1.msra.mxu0 0.0
        %6665 = vmatprep.subr.mxu0 0.0
        %6666 = vmatpush1.msra.mxu0 0.0
        %6667 = vmatprep.subr.mxu0 0.0
        %6668 = vmatpush1.msra.mxu0 0.0
        %6669 = vmatprep.subr.mxu0 0.0
        %6670 = vmatpush1.msra.mxu0 0.0
        %6671 = vmatprep.subr.mxu0 0.0
        %6672 = vmatpush1.msra.mxu0 0.0
        %6673 = vmatprep.subr.mxu0 0.0
        %6674 = vmatpush1.msra.mxu0 0.0
        %6675 = vmatprep.subr.mxu0 0.0
        %6676 = vmatpush1.msra.mxu0 0.0
        %6677 = vmatprep.mubr.f32.mxu0 0.0
        %6678 = vmatmul.mubr.f32.gmra.mrb[0].mxu0 %v6028
        %v6679 = vpop.f32.mrb[0].mxu0
        %v6680 = vadd.f32 0.0, %v6679
        %v6681 = vpop.f32.mrb[0].mxu0
        %6682 = vmatprep.mubr.f32.mxu0 0.0
        %6683 = vmatmul.mubr.f32.gmra.mrb[0].mxu0 %v6031
        %v6684 = vpop.f32.mrb[0].mxu0
        %v6685 = vadd.f32 0.0, %v6684
        %v6686 = vpop.f32.mrb[0].mxu0
        %6687 = vmatprep.mubr.f32.mxu0 0.0
        %6688 = vmatmul.mubr.f32.gmra.mrb[0].mxu0 %v6034
        %v6689 = vpop.f32.mrb[0].mxu0
        %v6690 = vadd.f32 0.0, %v6689
        %v6691 = vpop.f32.mrb[0].mxu0
        %6692 = vmatprep.mubr.f32.mxu0 0.0
        %6693 = vmatmul.mubr.f32.gmra.mrb[0].mxu0 %v6037
        %v6694 = vpop.f32.mrb[0].mxu0
        %v6695 = vadd.f32 0.0, %v6694
        %v6696 = vpop.f32.mrb[0].mxu0
        %6697 = vdwg.mxu0
        %s6698 = scalar_lea.vmem %s5, 96
        %v6699 = vld [vmem:[%s6698] sm:$0xff]
        %v6700 = vld [vmem:[%s6698 + $0x8] sm:$0xff]
        %v6701 = vld [vmem:[%s6698 + $0x10] sm:$0xff]
        %v6702 = vld [vmem:[%s6698 + $0x18] sm:$0xff]
        %v6704 = vsel %vm6221, %v6699, 0
        %v6707 = vsel %vm6221, %v6700, 0
        %v6710 = vsel %vm6221, %v6701, 0
        %v6713 = vsel %vm6221, %v6702, 0
        %6715 = vmatprep.subr.mxu0 0.0
        %6716 = vmatpush1.msra.mxu0 %v6680
        %6717 = vmatprep.subr.mxu0 0.0
        %6718 = vmatpush1.msra.mxu0 %v6685
        %6719 = vmatprep.subr.mxu0 0.0
        %6720 = vmatpush1.msra.mxu0 %v6690
        %6721 = vmatprep.subr.mxu0 0.0
        %6722 = vmatpush1.msra.mxu0 %v6695
        %6723 = vmatprep.subr.mxu0 0.0
        %6724 = vmatpush1.msra.mxu0 0.0
        %6725 = vmatprep.subr.mxu0 0.0
        %6726 = vmatpush1.msra.mxu0 0.0
        %6727 = vmatprep.subr.mxu0 0.0
        %6728 = vmatpush1.msra.mxu0 0.0
        %6729 = vmatprep.subr.mxu0 0.0
        %6730 = vmatpush1.msra.mxu0 0.0
        %6731 = vmatprep.subr.mxu0 0.0
        %6732 = vmatpush1.msra.mxu0 0.0
        %6733 = vmatprep.subr.mxu0 0.0
        %6734 = vmatpush1.msra.mxu0 0.0
        %6735 = vmatprep.subr.mxu0 0.0
        %6736 = vmatpush1.msra.mxu0 0.0
        %6737 = vmatprep.subr.mxu0 0.0
        %6738 = vmatpush1.msra.mxu0 0.0
        %6739 = vmatprep.subr.mxu0 0.0
        %6740 = vmatpush1.msra.mxu0 0.0
        %6741 = vmatprep.subr.mxu0 0.0
        %6742 = vmatpush1.msra.mxu0 0.0
        %6743 = vmatprep.subr.mxu0 0.0
        %6744 = vmatpush1.msra.mxu0 0.0
        %6745 = vmatprep.subr.mxu0 0.0
        %6746 = vmatpush1.msra.mxu0 0.0
        %6747 = vmatprep.subr.mxu0 0.0
        %6748 = vmatpush1.msra.mxu0 0.0
        %6749 = vmatprep.subr.mxu0 0.0
        %6750 = vmatpush1.msra.mxu0 0.0
        %6751 = vmatprep.subr.mxu0 0.0
        %6752 = vmatpush1.msra.mxu0 0.0
        %6753 = vmatprep.subr.mxu0 0.0
        %6754 = vmatpush1.msra.mxu0 0.0
        %6755 = vmatprep.subr.mxu0 0.0
        %6756 = vmatpush1.msra.mxu0 0.0
        %6757 = vmatprep.subr.mxu0 0.0
        %6758 = vmatpush1.msra.mxu0 0.0
        %6759 = vmatprep.subr.mxu0 0.0
        %6760 = vmatpush1.msra.mxu0 0.0
        %6761 = vmatprep.subr.mxu0 0.0
        %6762 = vmatpush1.msra.mxu0 0.0
        %6763 = vmatprep.subr.mxu0 0.0
        %6764 = vmatpush1.msra.mxu0 0.0
        %6765 = vmatprep.subr.mxu0 0.0
        %6766 = vmatpush1.msra.mxu0 0.0
        %6767 = vmatprep.subr.mxu0 0.0
        %6768 = vmatpush1.msra.mxu0 0.0
        %6769 = vmatprep.subr.mxu0 0.0
        %6770 = vmatpush1.msra.mxu0 0.0
        %6771 = vmatprep.subr.mxu0 0.0
        %6772 = vmatpush1.msra.mxu0 0.0
        %6773 = vmatprep.subr.mxu0 0.0
        %6774 = vmatpush1.msra.mxu0 0.0
        %6775 = vmatprep.subr.mxu0 0.0
        %6776 = vmatpush1.msra.mxu0 0.0
        %6777 = vmatprep.subr.mxu0 0.0
        %6778 = vmatpush1.msra.mxu0 0.0
        %6779 = vmatprep.mubr.f32.mxu0 0.0
        %6780 = vmatmul.mubr.f32.gmra.mrb[0].mxu0 %v6704
        %v6781 = vpop.f32.mrb[0].mxu0
        %v6782 = vadd.f32 0.0, %v6781
        %v6783 = vpop.f32.mrb[0].mxu0
        %6784 = vmatprep.mubr.f32.mxu0 0.0
        %6785 = vmatmul.mubr.f32.gmra.mrb[0].mxu0 %v6707
        %v6786 = vpop.f32.mrb[0].mxu0
        %v6787 = vadd.f32 0.0, %v6786
        %v6788 = vpop.f32.mrb[0].mxu0
        %6789 = vmatprep.mubr.f32.mxu0 0.0
        %6790 = vmatmul.mubr.f32.gmra.mrb[0].mxu0 %v6710
        %v6791 = vpop.f32.mrb[0].mxu0
        %v6792 = vadd.f32 0.0, %v6791
        %v6793 = vpop.f32.mrb[0].mxu0
        %6794 = vmatprep.mubr.f32.mxu0 0.0
        %6795 = vmatmul.mubr.f32.gmra.mrb[0].mxu0 %v6713
        %v6796 = vpop.f32.mrb[0].mxu0
        %v6797 = vadd.f32 0.0, %v6796
        %v6798 = vpop.f32.mrb[0].mxu0
        %6799 = vdwg.mxu0
        %v6800 = vadd.f32 %v6606, %v6782
        %v6801 = vadd.f32 %v6607, %v6787
        %v6802 = vadd.f32 %v6608, %v6792
        %v6803 = vadd.f32 %v6609, %v6797
        %s6804 = scalar_lea.vmem [#allocation9], 64
        %v6805 = vld [vmem:[%s6804] sm:$0xff]
        %v6806 = vld [vmem:[%s6804 + $0x8] sm:$0xff]
        %6807 = vmatprep.subr.mxu0 0.0
        %6808 = vmatpush1.msra.mxu0 %v6805
        %6809 = vmatprep.subr.mxu0 0.0
        %6810 = vmatpush1.msra.mxu0 %v6806
        %6811 = vmatprep.subr.mxu0 0.0
        %6812 = vmatpush1.msra.mxu0 0.0
        %6813 = vmatprep.subr.mxu0 0.0
        %6814 = vmatpush1.msra.mxu0 0.0
        %6815 = vmatprep.subr.mxu0 0.0
        %6816 = vmatpush1.msra.mxu0 0.0
        %6817 = vmatprep.subr.mxu0 0.0
        %6818 = vmatpush1.msra.mxu0 0.0
        %6819 = vmatprep.subr.mxu0 0.0
        %6820 = vmatpush1.msra.mxu0 0.0
        %6821 = vmatprep.subr.mxu0 0.0
        %6822 = vmatpush1.msra.mxu0 0.0
        %6823 = vmatprep.subr.mxu0 0.0
        %6824 = vmatpush1.msra.mxu0 0.0
        %6825 = vmatprep.subr.mxu0 0.0
        %6826 = vmatpush1.msra.mxu0 0.0
        %6827 = vmatprep.subr.mxu0 0.0
        %6828 = vmatpush1.msra.mxu0 0.0
        %6829 = vmatprep.subr.mxu0 0.0
        %6830 = vmatpush1.msra.mxu0 0.0
        %6831 = vmatprep.subr.mxu0 0.0
        %6832 = vmatpush1.msra.mxu0 0.0
        %6833 = vmatprep.subr.mxu0 0.0
        %6834 = vmatpush1.msra.mxu0 0.0
        %6835 = vmatprep.subr.mxu0 0.0
        %6836 = vmatpush1.msra.mxu0 0.0
        %6837 = vmatprep.subr.mxu0 0.0
        %6838 = vmatpush1.msra.mxu0 0.0
        %6839 = vmatprep.subr.mxu0 0.0
        %6840 = vmatpush1.msra.mxu0 0.0
        %6841 = vmatprep.subr.mxu0 0.0
        %6842 = vmatpush1.msra.mxu0 0.0
        %6843 = vmatprep.subr.mxu0 0.0
        %6844 = vmatpush1.msra.mxu0 0.0
        %6845 = vmatprep.subr.mxu0 0.0
        %6846 = vmatpush1.msra.mxu0 0.0
        %6847 = vmatprep.subr.mxu0 0.0
        %6848 = vmatpush1.msra.mxu0 0.0
        %6849 = vmatprep.subr.mxu0 0.0
        %6850 = vmatpush1.msra.mxu0 0.0
        %6851 = vmatprep.subr.mxu0 0.0
        %6852 = vmatpush1.msra.mxu0 0.0
        %6853 = vmatprep.subr.mxu0 0.0
        %6854 = vmatpush1.msra.mxu0 0.0
        %6855 = vmatprep.subr.mxu0 0.0
        %6856 = vmatpush1.msra.mxu0 0.0
        %6857 = vmatprep.subr.mxu0 0.0
        %6858 = vmatpush1.msra.mxu0 0.0
        %6859 = vmatprep.subr.mxu0 0.0
        %6860 = vmatpush1.msra.mxu0 0.0
        %6861 = vmatprep.subr.mxu0 0.0
        %6862 = vmatpush1.msra.mxu0 0.0
        %6863 = vmatprep.subr.mxu0 0.0
        %6864 = vmatpush1.msra.mxu0 0.0
        %6865 = vmatprep.subr.mxu0 0.0
        %6866 = vmatpush1.msra.mxu0 0.0
        %6867 = vmatprep.subr.mxu0 0.0
        %6868 = vmatpush1.msra.mxu0 0.0
        %6869 = vmatprep.subr.mxu0 0.0
        %6870 = vmatpush1.msra.mxu0 0.0
        %6871 = vmatprep.mubr.f32.mxu0 0.0
        %6872 = vmatmul.mubr.f32.gmra.mrb[0].mxu0 %v6028
        %v6873 = vpop.f32.mrb[0].mxu0
        %v6874 = vadd.f32 0.0, %v6873
        %v6875 = vpop.f32.mrb[0].mxu0
        %6876 = vmatprep.mubr.f32.mxu0 0.0
        %6877 = vmatmul.mubr.f32.gmra.mrb[0].mxu0 %v6031
        %v6878 = vpop.f32.mrb[0].mxu0
        %v6879 = vadd.f32 0.0, %v6878
        %v6880 = vpop.f32.mrb[0].mxu0
        %6881 = vmatprep.mubr.f32.mxu0 0.0
        %6882 = vmatmul.mubr.f32.gmra.mrb[0].mxu0 %v6034
        %v6883 = vpop.f32.mrb[0].mxu0
        %v6884 = vadd.f32 0.0, %v6883
        %v6885 = vpop.f32.mrb[0].mxu0
        %6886 = vmatprep.mubr.f32.mxu0 0.0
        %6887 = vmatmul.mubr.f32.gmra.mrb[0].mxu0 %v6037
        %v6888 = vpop.f32.mrb[0].mxu0
        %v6889 = vadd.f32 0.0, %v6888
        %v6890 = vpop.f32.mrb[0].mxu0
        %6891 = vdwg.mxu0
        %s6892 = scalar_lea.vmem %s5, 128
        %v6893 = vld [vmem:[%s6892] sm:$0xff]
        %v6894 = vld [vmem:[%s6892 + $0x8] sm:$0xff]
        %v6895 = vld [vmem:[%s6892 + $0x10] sm:$0xff]
        %v6896 = vld [vmem:[%s6892 + $0x18] sm:$0xff]
        %v6898 = vsel %vm6221, %v6893, 0
        %v6901 = vsel %vm6221, %v6894, 0
        %v6904 = vsel %vm6221, %v6895, 0
        %v6907 = vsel %vm6221, %v6896, 0
        %6909 = vmatprep.subr.mxu0 0.0
        %6910 = vmatpush1.msra.mxu0 %v6874
        %6911 = vmatprep.subr.mxu0 0.0
        %6912 = vmatpush1.msra.mxu0 %v6879
        %6913 = vmatprep.subr.mxu0 0.0
        %6914 = vmatpush1.msra.mxu0 %v6884
        %6915 = vmatprep.subr.mxu0 0.0
        %6916 = vmatpush1.msra.mxu0 %v6889
        %6917 = vmatprep.subr.mxu0 0.0
        %6918 = vmatpush1.msra.mxu0 0.0
        %6919 = vmatprep.subr.mxu0 0.0
        %6920 = vmatpush1.msra.mxu0 0.0
        %6921 = vmatprep.subr.mxu0 0.0
        %6922 = vmatpush1.msra.mxu0 0.0
        %6923 = vmatprep.subr.mxu0 0.0
        %6924 = vmatpush1.msra.mxu0 0.0
        %6925 = vmatprep.subr.mxu0 0.0
        %6926 = vmatpush1.msra.mxu0 0.0
        %6927 = vmatprep.subr.mxu0 0.0
        %6928 = vmatpush1.msra.mxu0 0.0
        %6929 = vmatprep.subr.mxu0 0.0
        %6930 = vmatpush1.msra.mxu0 0.0
        %6931 = vmatprep.subr.mxu0 0.0
        %6932 = vmatpush1.msra.mxu0 0.0
        %6933 = vmatprep.subr.mxu0 0.0
        %6934 = vmatpush1.msra.mxu0 0.0
        %6935 = vmatprep.subr.mxu0 0.0
        %6936 = vmatpush1.msra.mxu0 0.0
        %6937 = vmatprep.subr.mxu0 0.0
        %6938 = vmatpush1.msra.mxu0 0.0
        %6939 = vmatprep.subr.mxu0 0.0
        %6940 = vmatpush1.msra.mxu0 0.0
        %6941 = vmatprep.subr.mxu0 0.0
        %6942 = vmatpush1.msra.mxu0 0.0
        %6943 = vmatprep.subr.mxu0 0.0
        %6944 = vmatpush1.msra.mxu0 0.0
        %6945 = vmatprep.subr.mxu0 0.0
        %6946 = vmatpush1.msra.mxu0 0.0
        %6947 = vmatprep.subr.mxu0 0.0
        %6948 = vmatpush1.msra.mxu0 0.0
        %6949 = vmatprep.subr.mxu0 0.0
        %6950 = vmatpush1.msra.mxu0 0.0
        %6951 = vmatprep.subr.mxu0 0.0
        %6952 = vmatpush1.msra.mxu0 0.0
        %6953 = vmatprep.subr.mxu0 0.0
        %6954 = vmatpush1.msra.mxu0 0.0
        %6955 = vmatprep.subr.mxu0 0.0
        %6956 = vmatpush1.msra.mxu0 0.0
        %6957 = vmatprep.subr.mxu0 0.0
        %6958 = vmatpush1.msra.mxu0 0.0
        %6959 = vmatprep.subr.mxu0 0.0
        %6960 = vmatpush1.msra.mxu0 0.0
        %6961 = vmatprep.subr.mxu0 0.0
        %6962 = vmatpush1.msra.mxu0 0.0
        %6963 = vmatprep.subr.mxu0 0.0
        %6964 = vmatpush1.msra.mxu0 0.0
        %6965 = vmatprep.subr.mxu0 0.0
        %6966 = vmatpush1.msra.mxu0 0.0
        %6967 = vmatprep.subr.mxu0 0.0
        %6968 = vmatpush1.msra.mxu0 0.0
        %6969 = vmatprep.subr.mxu0 0.0
        %6970 = vmatpush1.msra.mxu0 0.0
        %6971 = vmatprep.subr.mxu0 0.0
        %6972 = vmatpush1.msra.mxu0 0.0
        %6973 = vmatprep.mubr.f32.mxu0 0.0
        %6974 = vmatmul.mubr.f32.gmra.mrb[0].mxu0 %v6898
        %v6975 = vpop.f32.mrb[0].mxu0
        %v6976 = vadd.f32 0.0, %v6975
        %v6977 = vpop.f32.mrb[0].mxu0
        %6978 = vmatprep.mubr.f32.mxu0 0.0
        %6979 = vmatmul.mubr.f32.gmra.mrb[0].mxu0 %v6901
        %v6980 = vpop.f32.mrb[0].mxu0
        %v6981 = vadd.f32 0.0, %v6980
        %v6982 = vpop.f32.mrb[0].mxu0
        %6983 = vmatprep.mubr.f32.mxu0 0.0
        %6984 = vmatmul.mubr.f32.gmra.mrb[0].mxu0 %v6904
        %v6985 = vpop.f32.mrb[0].mxu0
        %v6986 = vadd.f32 0.0, %v6985
        %v6987 = vpop.f32.mrb[0].mxu0
        %6988 = vmatprep.mubr.f32.mxu0 0.0
        %6989 = vmatmul.mubr.f32.gmra.mrb[0].mxu0 %v6907
        %v6990 = vpop.f32.mrb[0].mxu0
        %v6991 = vadd.f32 0.0, %v6990
        %v6992 = vpop.f32.mrb[0].mxu0
        %6993 = vdwg.mxu0
        %v6994 = vadd.f32 %v6800, %v6976
        %v6995 = vadd.f32 %v6801, %v6981
        %v6996 = vadd.f32 %v6802, %v6986
        %v6997 = vadd.f32 %v6803, %v6991
        %s6998 = scalar_lea.vmem [#allocation9], 80
        %v6999 = vld [vmem:[%s6998] sm:$0xff]
        %v7000 = vld [vmem:[%s6998 + $0x8] sm:$0xff]
        %7001 = vmatprep.subr.mxu0 0.0
        %7002 = vmatpush1.msra.mxu0 %v6999
        %7003 = vmatprep.subr.mxu0 0.0
        %7004 = vmatpush1.msra.mxu0 %v7000
        %7005 = vmatprep.subr.mxu0 0.0
        %7006 = vmatpush1.msra.mxu0 0.0
        %7007 = vmatprep.subr.mxu0 0.0
        %7008 = vmatpush1.msra.mxu0 0.0
        %7009 = vmatprep.subr.mxu0 0.0
        %7010 = vmatpush1.msra.mxu0 0.0
        %7011 = vmatprep.subr.mxu0 0.0
        %7012 = vmatpush1.msra.mxu0 0.0
        %7013 = vmatprep.subr.mxu0 0.0
        %7014 = vmatpush1.msra.mxu0 0.0
        %7015 = vmatprep.subr.mxu0 0.0
        %7016 = vmatpush1.msra.mxu0 0.0
        %7017 = vmatprep.subr.mxu0 0.0
        %7018 = vmatpush1.msra.mxu0 0.0
        %7019 = vmatprep.subr.mxu0 0.0
        %7020 = vmatpush1.msra.mxu0 0.0
        %7021 = vmatprep.subr.mxu0 0.0
        %7022 = vmatpush1.msra.mxu0 0.0
        %7023 = vmatprep.subr.mxu0 0.0
        %7024 = vmatpush1.msra.mxu0 0.0
        %7025 = vmatprep.subr.mxu0 0.0
        %7026 = vmatpush1.msra.mxu0 0.0
        %7027 = vmatprep.subr.mxu0 0.0
        %7028 = vmatpush1.msra.mxu0 0.0
        %7029 = vmatprep.subr.mxu0 0.0
        %7030 = vmatpush1.msra.mxu0 0.0
        %7031 = vmatprep.subr.mxu0 0.0
        %7032 = vmatpush1.msra.mxu0 0.0
        %7033 = vmatprep.subr.mxu0 0.0
        %7034 = vmatpush1.msra.mxu0 0.0
        %7035 = vmatprep.subr.mxu0 0.0
        %7036 = vmatpush1.msra.mxu0 0.0
        %7037 = vmatprep.subr.mxu0 0.0
        %7038 = vmatpush1.msra.mxu0 0.0
        %7039 = vmatprep.subr.mxu0 0.0
        %7040 = vmatpush1.msra.mxu0 0.0
        %7041 = vmatprep.subr.mxu0 0.0
        %7042 = vmatpush1.msra.mxu0 0.0
        %7043 = vmatprep.subr.mxu0 0.0
        %7044 = vmatpush1.msra.mxu0 0.0
        %7045 = vmatprep.subr.mxu0 0.0
        %7046 = vmatpush1.msra.mxu0 0.0
        %7047 = vmatprep.subr.mxu0 0.0
        %7048 = vmatpush1.msra.mxu0 0.0
        %7049 = vmatprep.subr.mxu0 0.0
        %7050 = vmatpush1.msra.mxu0 0.0
        %7051 = vmatprep.subr.mxu0 0.0
        %7052 = vmatpush1.msra.mxu0 0.0
        %7053 = vmatprep.subr.mxu0 0.0
        %7054 = vmatpush1.msra.mxu0 0.0
        %7055 = vmatprep.subr.mxu0 0.0
        %7056 = vmatpush1.msra.mxu0 0.0
        %7057 = vmatprep.subr.mxu0 0.0
        %7058 = vmatpush1.msra.mxu0 0.0
        %7059 = vmatprep.subr.mxu0 0.0
        %7060 = vmatpush1.msra.mxu0 0.0
        %7061 = vmatprep.subr.mxu0 0.0
        %7062 = vmatpush1.msra.mxu0 0.0
        %7063 = vmatprep.subr.mxu0 0.0
        %7064 = vmatpush1.msra.mxu0 0.0
        %7065 = vmatprep.mubr.f32.mxu0 0.0
        %7066 = vmatmul.mubr.f32.gmra.mrb[0].mxu0 %v6028
        %v7067 = vpop.f32.mrb[0].mxu0
        %v7068 = vadd.f32 0.0, %v7067
        %v7069 = vpop.f32.mrb[0].mxu0
        %7070 = vmatprep.mubr.f32.mxu0 0.0
        %7071 = vmatmul.mubr.f32.gmra.mrb[0].mxu0 %v6031
        %v7072 = vpop.f32.mrb[0].mxu0
        %v7073 = vadd.f32 0.0, %v7072
        %v7074 = vpop.f32.mrb[0].mxu0
        %7075 = vmatprep.mubr.f32.mxu0 0.0
        %7076 = vmatmul.mubr.f32.gmra.mrb[0].mxu0 %v6034
        %v7077 = vpop.f32.mrb[0].mxu0
        %v7078 = vadd.f32 0.0, %v7077
        %v7079 = vpop.f32.mrb[0].mxu0
        %7080 = vmatprep.mubr.f32.mxu0 0.0
        %7081 = vmatmul.mubr.f32.gmra.mrb[0].mxu0 %v6037
        %v7082 = vpop.f32.mrb[0].mxu0
        %v7083 = vadd.f32 0.0, %v7082
        %v7084 = vpop.f32.mrb[0].mxu0
        %7085 = vdwg.mxu0
        %s7086 = scalar_lea.vmem %s5, 160
        %v7087 = vld [vmem:[%s7086] sm:$0xff]
        %v7088 = vld [vmem:[%s7086 + $0x8] sm:$0xff]
        %v7089 = vld [vmem:[%s7086 + $0x10] sm:$0xff]
        %v7090 = vld [vmem:[%s7086 + $0x18] sm:$0xff]
        %v7092 = vsel %vm6221, %v7087, 0
        %v7095 = vsel %vm6221, %v7088, 0
        %v7098 = vsel %vm6221, %v7089, 0
        %v7101 = vsel %vm6221, %v7090, 0
        %7103 = vmatprep.subr.mxu0 0.0
        %7104 = vmatpush1.msra.mxu0 %v7068
        %7105 = vmatprep.subr.mxu0 0.0
        %7106 = vmatpush1.msra.mxu0 %v7073
        %7107 = vmatprep.subr.mxu0 0.0
        %7108 = vmatpush1.msra.mxu0 %v7078
        %7109 = vmatprep.subr.mxu0 0.0
        %7110 = vmatpush1.msra.mxu0 %v7083
        %7111 = vmatprep.subr.mxu0 0.0
        %7112 = vmatpush1.msra.mxu0 0.0
        %7113 = vmatprep.subr.mxu0 0.0
        %7114 = vmatpush1.msra.mxu0 0.0
        %7115 = vmatprep.subr.mxu0 0.0
        %7116 = vmatpush1.msra.mxu0 0.0
        %7117 = vmatprep.subr.mxu0 0.0
        %7118 = vmatpush1.msra.mxu0 0.0
        %7119 = vmatprep.subr.mxu0 0.0
        %7120 = vmatpush1.msra.mxu0 0.0
        %7121 = vmatprep.subr.mxu0 0.0
        %7122 = vmatpush1.msra.mxu0 0.0
        %7123 = vmatprep.subr.mxu0 0.0
        %7124 = vmatpush1.msra.mxu0 0.0
        %7125 = vmatprep.subr.mxu0 0.0
        %7126 = vmatpush1.msra.mxu0 0.0
        %7127 = vmatprep.subr.mxu0 0.0
        %7128 = vmatpush1.msra.mxu0 0.0
        %7129 = vmatprep.subr.mxu0 0.0
        %7130 = vmatpush1.msra.mxu0 0.0
        %7131 = vmatprep.subr.mxu0 0.0
        %7132 = vmatpush1.msra.mxu0 0.0
        %7133 = vmatprep.subr.mxu0 0.0
        %7134 = vmatpush1.msra.mxu0 0.0
        %7135 = vmatprep.subr.mxu0 0.0
        %7136 = vmatpush1.msra.mxu0 0.0
        %7137 = vmatprep.subr.mxu0 0.0
        %7138 = vmatpush1.msra.mxu0 0.0
        %7139 = vmatprep.subr.mxu0 0.0
        %7140 = vmatpush1.msra.mxu0 0.0
        %7141 = vmatprep.subr.mxu0 0.0
        %7142 = vmatpush1.msra.mxu0 0.0
        %7143 = vmatprep.subr.mxu0 0.0
        %7144 = vmatpush1.msra.mxu0 0.0
        %7145 = vmatprep.subr.mxu0 0.0
        %7146 = vmatpush1.msra.mxu0 0.0
        %7147 = vmatprep.subr.mxu0 0.0
        %7148 = vmatpush1.msra.mxu0 0.0
        %7149 = vmatprep.subr.mxu0 0.0
        %7150 = vmatpush1.msra.mxu0 0.0
        %7151 = vmatprep.subr.mxu0 0.0
        %7152 = vmatpush1.msra.mxu0 0.0
        %7153 = vmatprep.subr.mxu0 0.0
        %7154 = vmatpush1.msra.mxu0 0.0
        %7155 = vmatprep.subr.mxu0 0.0
        %7156 = vmatpush1.msra.mxu0 0.0
        %7157 = vmatprep.subr.mxu0 0.0
        %7158 = vmatpush1.msra.mxu0 0.0
        %7159 = vmatprep.subr.mxu0 0.0
        %7160 = vmatpush1.msra.mxu0 0.0
        %7161 = vmatprep.subr.mxu0 0.0
        %7162 = vmatpush1.msra.mxu0 0.0
        %7163 = vmatprep.subr.mxu0 0.0
        %7164 = vmatpush1.msra.mxu0 0.0
        %7165 = vmatprep.subr.mxu0 0.0
        %7166 = vmatpush1.msra.mxu0 0.0
        %7167 = vmatprep.mubr.f32.mxu0 0.0
        %7168 = vmatmul.mubr.f32.gmra.mrb[0].mxu0 %v7092
        %v7169 = vpop.f32.mrb[0].mxu0
        %v7170 = vadd.f32 0.0, %v7169
        %v7171 = vpop.f32.mrb[0].mxu0
        %7172 = vmatprep.mubr.f32.mxu0 0.0
        %7173 = vmatmul.mubr.f32.gmra.mrb[0].mxu0 %v7095
        %v7174 = vpop.f32.mrb[0].mxu0
        %v7175 = vadd.f32 0.0, %v7174
        %v7176 = vpop.f32.mrb[0].mxu0
        %7177 = vmatprep.mubr.f32.mxu0 0.0
        %7178 = vmatmul.mubr.f32.gmra.mrb[0].mxu0 %v7098
        %v7179 = vpop.f32.mrb[0].mxu0
        %v7180 = vadd.f32 0.0, %v7179
        %v7181 = vpop.f32.mrb[0].mxu0
        %7182 = vmatprep.mubr.f32.mxu0 0.0
        %7183 = vmatmul.mubr.f32.gmra.mrb[0].mxu0 %v7101
        %v7184 = vpop.f32.mrb[0].mxu0
        %v7185 = vadd.f32 0.0, %v7184
        %v7186 = vpop.f32.mrb[0].mxu0
        %7187 = vdwg.mxu0
        %v7188 = vadd.f32 %v6994, %v7170
        %v7189 = vadd.f32 %v6995, %v7175
        %v7190 = vadd.f32 %v6996, %v7180
        %v7191 = vadd.f32 %v6997, %v7185
        %s7192 = scalar_lea.vmem [#allocation9], 96
        %v7193 = vld [vmem:[%s7192] sm:$0xff]
        %v7194 = vld [vmem:[%s7192 + $0x8] sm:$0xff]
        %7195 = vmatprep.subr.mxu0 0.0
        %7196 = vmatpush1.msra.mxu0 %v7193
        %7197 = vmatprep.subr.mxu0 0.0
        %7198 = vmatpush1.msra.mxu0 %v7194
        %7199 = vmatprep.subr.mxu0 0.0
        %7200 = vmatpush1.msra.mxu0 0.0
        %7201 = vmatprep.subr.mxu0 0.0
        %7202 = vmatpush1.msra.mxu0 0.0
        %7203 = vmatprep.subr.mxu0 0.0
        %7204 = vmatpush1.msra.mxu0 0.0
        %7205 = vmatprep.subr.mxu0 0.0
        %7206 = vmatpush1.msra.mxu0 0.0
        %7207 = vmatprep.subr.mxu0 0.0
        %7208 = vmatpush1.msra.mxu0 0.0
        %7209 = vmatprep.subr.mxu0 0.0
        %7210 = vmatpush1.msra.mxu0 0.0
        %7211 = vmatprep.subr.mxu0 0.0
        %7212 = vmatpush1.msra.mxu0 0.0
        %7213 = vmatprep.subr.mxu0 0.0
        %7214 = vmatpush1.msra.mxu0 0.0
        %7215 = vmatprep.subr.mxu0 0.0
        %7216 = vmatpush1.msra.mxu0 0.0
        %7217 = vmatprep.subr.mxu0 0.0
        %7218 = vmatpush1.msra.mxu0 0.0
        %7219 = vmatprep.subr.mxu0 0.0
        %7220 = vmatpush1.msra.mxu0 0.0
        %7221 = vmatprep.subr.mxu0 0.0
        %7222 = vmatpush1.msra.mxu0 0.0
        %7223 = vmatprep.subr.mxu0 0.0
        %7224 = vmatpush1.msra.mxu0 0.0
        %7225 = vmatprep.subr.mxu0 0.0
        %7226 = vmatpush1.msra.mxu0 0.0
        %7227 = vmatprep.subr.mxu0 0.0
        %7228 = vmatpush1.msra.mxu0 0.0
        %7229 = vmatprep.subr.mxu0 0.0
        %7230 = vmatpush1.msra.mxu0 0.0
        %7231 = vmatprep.subr.mxu0 0.0
        %7232 = vmatpush1.msra.mxu0 0.0
        %7233 = vmatprep.subr.mxu0 0.0
        %7234 = vmatpush1.msra.mxu0 0.0
        %7235 = vmatprep.subr.mxu0 0.0
        %7236 = vmatpush1.msra.mxu0 0.0
        %7237 = vmatprep.subr.mxu0 0.0
        %7238 = vmatpush1.msra.mxu0 0.0
        %7239 = vmatprep.subr.mxu0 0.0
        %7240 = vmatpush1.msra.mxu0 0.0
        %7241 = vmatprep.subr.mxu0 0.0
        %7242 = vmatpush1.msra.mxu0 0.0
        %7243 = vmatprep.subr.mxu0 0.0
        %7244 = vmatpush1.msra.mxu0 0.0
        %7245 = vmatprep.subr.mxu0 0.0
        %7246 = vmatpush1.msra.mxu0 0.0
        %7247 = vmatprep.subr.mxu0 0.0
        %7248 = vmatpush1.msra.mxu0 0.0
        %7249 = vmatprep.subr.mxu0 0.0
        %7250 = vmatpush1.msra.mxu0 0.0
        %7251 = vmatprep.subr.mxu0 0.0
        %7252 = vmatpush1.msra.mxu0 0.0
        %7253 = vmatprep.subr.mxu0 0.0
        %7254 = vmatpush1.msra.mxu0 0.0
        %7255 = vmatprep.subr.mxu0 0.0
        %7256 = vmatpush1.msra.mxu0 0.0
        %7257 = vmatprep.subr.mxu0 0.0
        %7258 = vmatpush1.msra.mxu0 0.0
        %7259 = vmatprep.mubr.f32.mxu0 0.0
        %7260 = vmatmul.mubr.f32.gmra.mrb[0].mxu0 %v6028
        %v7261 = vpop.f32.mrb[0].mxu0
        %v7262 = vadd.f32 0.0, %v7261
        %v7263 = vpop.f32.mrb[0].mxu0
        %7264 = vmatprep.mubr.f32.mxu0 0.0
        %7265 = vmatmul.mubr.f32.gmra.mrb[0].mxu0 %v6031
        %v7266 = vpop.f32.mrb[0].mxu0
        %v7267 = vadd.f32 0.0, %v7266
        %v7268 = vpop.f32.mrb[0].mxu0
        %7269 = vmatprep.mubr.f32.mxu0 0.0
        %7270 = vmatmul.mubr.f32.gmra.mrb[0].mxu0 %v6034
        %v7271 = vpop.f32.mrb[0].mxu0
        %v7272 = vadd.f32 0.0, %v7271
        %v7273 = vpop.f32.mrb[0].mxu0
        %7274 = vmatprep.mubr.f32.mxu0 0.0
        %7275 = vmatmul.mubr.f32.gmra.mrb[0].mxu0 %v6037
        %v7276 = vpop.f32.mrb[0].mxu0
        %v7277 = vadd.f32 0.0, %v7276
        %v7278 = vpop.f32.mrb[0].mxu0
        %7279 = vdwg.mxu0
        %s7280 = scalar_lea.vmem %s5, 192
        %v7281 = vld [vmem:[%s7280] sm:$0xff]
        %v7282 = vld [vmem:[%s7280 + $0x8] sm:$0xff]
        %v7283 = vld [vmem:[%s7280 + $0x10] sm:$0xff]
        %v7284 = vld [vmem:[%s7280 + $0x18] sm:$0xff]
        %v7286 = vsel %vm6221, %v7281, 0
        %v7289 = vsel %vm6221, %v7282, 0
        %v7292 = vsel %vm6221, %v7283, 0
        %v7295 = vsel %vm6221, %v7284, 0
        %7297 = vmatprep.subr.mxu0 0.0
        %7298 = vmatpush1.msra.mxu0 %v7262
        %7299 = vmatprep.subr.mxu0 0.0
        %7300 = vmatpush1.msra.mxu0 %v7267
        %7301 = vmatprep.subr.mxu0 0.0
        %7302 = vmatpush1.msra.mxu0 %v7272
        %7303 = vmatprep.subr.mxu0 0.0
        %7304 = vmatpush1.msra.mxu0 %v7277
        %7305 = vmatprep.subr.mxu0 0.0
        %7306 = vmatpush1.msra.mxu0 0.0
        %7307 = vmatprep.subr.mxu0 0.0
        %7308 = vmatpush1.msra.mxu0 0.0
        %7309 = vmatprep.subr.mxu0 0.0
        %7310 = vmatpush1.msra.mxu0 0.0
        %7311 = vmatprep.subr.mxu0 0.0
        %7312 = vmatpush1.msra.mxu0 0.0
        %7313 = vmatprep.subr.mxu0 0.0
        %7314 = vmatpush1.msra.mxu0 0.0
        %7315 = vmatprep.subr.mxu0 0.0
        %7316 = vmatpush1.msra.mxu0 0.0
        %7317 = vmatprep.subr.mxu0 0.0
        %7318 = vmatpush1.msra.mxu0 0.0
        %7319 = vmatprep.subr.mxu0 0.0
        %7320 = vmatpush1.msra.mxu0 0.0
        %7321 = vmatprep.subr.mxu0 0.0
        %7322 = vmatpush1.msra.mxu0 0.0
        %7323 = vmatprep.subr.mxu0 0.0
        %7324 = vmatpush1.msra.mxu0 0.0
        %7325 = vmatprep.subr.mxu0 0.0
        %7326 = vmatpush1.msra.mxu0 0.0
        %7327 = vmatprep.subr.mxu0 0.0
        %7328 = vmatpush1.msra.mxu0 0.0
        %7329 = vmatprep.subr.mxu0 0.0
        %7330 = vmatpush1.msra.mxu0 0.0
        %7331 = vmatprep.subr.mxu0 0.0
        %7332 = vmatpush1.msra.mxu0 0.0
        %7333 = vmatprep.subr.mxu0 0.0
        %7334 = vmatpush1.msra.mxu0 0.0
        %7335 = vmatprep.subr.mxu0 0.0
        %7336 = vmatpush1.msra.mxu0 0.0
        %7337 = vmatprep.subr.mxu0 0.0
        %7338 = vmatpush1.msra.mxu0 0.0
        %7339 = vmatprep.subr.mxu0 0.0
        %7340 = vmatpush1.msra.mxu0 0.0
        %7341 = vmatprep.subr.mxu0 0.0
        %7342 = vmatpush1.msra.mxu0 0.0
        %7343 = vmatprep.subr.mxu0 0.0
        %7344 = vmatpush1.msra.mxu0 0.0
        %7345 = vmatprep.subr.mxu0 0.0
        %7346 = vmatpush1.msra.mxu0 0.0
        %7347 = vmatprep.subr.mxu0 0.0
        %7348 = vmatpush1.msra.mxu0 0.0
        %7349 = vmatprep.subr.mxu0 0.0
        %7350 = vmatpush1.msra.mxu0 0.0
        %7351 = vmatprep.subr.mxu0 0.0
        %7352 = vmatpush1.msra.mxu0 0.0
        %7353 = vmatprep.subr.mxu0 0.0
        %7354 = vmatpush1.msra.mxu0 0.0
        %7355 = vmatprep.subr.mxu0 0.0
        %7356 = vmatpush1.msra.mxu0 0.0
        %7357 = vmatprep.subr.mxu0 0.0
        %7358 = vmatpush1.msra.mxu0 0.0
        %7359 = vmatprep.subr.mxu0 0.0
        %7360 = vmatpush1.msra.mxu0 0.0
        %7361 = vmatprep.mubr.f32.mxu0 0.0
        %7362 = vmatmul.mubr.f32.gmra.mrb[0].mxu0 %v7286
        %v7363 = vpop.f32.mrb[0].mxu0
        %v7364 = vadd.f32 0.0, %v7363
        %v7365 = vpop.f32.mrb[0].mxu0
        %7366 = vmatprep.mubr.f32.mxu0 0.0
        %7367 = vmatmul.mubr.f32.gmra.mrb[0].mxu0 %v7289
        %v7368 = vpop.f32.mrb[0].mxu0
        %v7369 = vadd.f32 0.0, %v7368
        %v7370 = vpop.f32.mrb[0].mxu0
        %7371 = vmatprep.mubr.f32.mxu0 0.0
        %7372 = vmatmul.mubr.f32.gmra.mrb[0].mxu0 %v7292
        %v7373 = vpop.f32.mrb[0].mxu0
        %v7374 = vadd.f32 0.0, %v7373
        %v7375 = vpop.f32.mrb[0].mxu0
        %7376 = vmatprep.mubr.f32.mxu0 0.0
        %7377 = vmatmul.mubr.f32.gmra.mrb[0].mxu0 %v7295
        %v7378 = vpop.f32.mrb[0].mxu0
        %v7379 = vadd.f32 0.0, %v7378
        %v7380 = vpop.f32.mrb[0].mxu0
        %7381 = vdwg.mxu0
        %v7382 = vadd.f32 %v7188, %v7364
        %v7383 = vadd.f32 %v7189, %v7369
        %v7384 = vadd.f32 %v7190, %v7374
        %v7385 = vadd.f32 %v7191, %v7379
        %s7386 = scalar_lea.vmem [#allocation9], 112
        %v7387 = vld [vmem:[%s7386] sm:$0xff]
        %v7388 = vld [vmem:[%s7386 + $0x8] sm:$0xff]
        %7389 = vmatprep.subr.mxu0 0.0
        %7390 = vmatpush1.msra.mxu0 %v7387
        %7391 = vmatprep.subr.mxu0 0.0
        %7392 = vmatpush1.msra.mxu0 %v7388
        %7393 = vmatprep.subr.mxu0 0.0
        %7394 = vmatpush1.msra.mxu0 0.0
        %7395 = vmatprep.subr.mxu0 0.0
        %7396 = vmatpush1.msra.mxu0 0.0
        %7397 = vmatprep.subr.mxu0 0.0
        %7398 = vmatpush1.msra.mxu0 0.0
        %7399 = vmatprep.subr.mxu0 0.0
        %7400 = vmatpush1.msra.mxu0 0.0
        %7401 = vmatprep.subr.mxu0 0.0
        %7402 = vmatpush1.msra.mxu0 0.0
        %7403 = vmatprep.subr.mxu0 0.0
        %7404 = vmatpush1.msra.mxu0 0.0
        %7405 = vmatprep.subr.mxu0 0.0
        %7406 = vmatpush1.msra.mxu0 0.0
        %7407 = vmatprep.subr.mxu0 0.0
        %7408 = vmatpush1.msra.mxu0 0.0
        %7409 = vmatprep.subr.mxu0 0.0
        %7410 = vmatpush1.msra.mxu0 0.0
        %7411 = vmatprep.subr.mxu0 0.0
        %7412 = vmatpush1.msra.mxu0 0.0
        %7413 = vmatprep.subr.mxu0 0.0
        %7414 = vmatpush1.msra.mxu0 0.0
        %7415 = vmatprep.subr.mxu0 0.0
        %7416 = vmatpush1.msra.mxu0 0.0
        %7417 = vmatprep.subr.mxu0 0.0
        %7418 = vmatpush1.msra.mxu0 0.0
        %7419 = vmatprep.subr.mxu0 0.0
        %7420 = vmatpush1.msra.mxu0 0.0
        %7421 = vmatprep.subr.mxu0 0.0
        %7422 = vmatpush1.msra.mxu0 0.0
        %7423 = vmatprep.subr.mxu0 0.0
        %7424 = vmatpush1.msra.mxu0 0.0
        %7425 = vmatprep.subr.mxu0 0.0
        %7426 = vmatpush1.msra.mxu0 0.0
        %7427 = vmatprep.subr.mxu0 0.0
        %7428 = vmatpush1.msra.mxu0 0.0
        %7429 = vmatprep.subr.mxu0 0.0
        %7430 = vmatpush1.msra.mxu0 0.0
        %7431 = vmatprep.subr.mxu0 0.0
        %7432 = vmatpush1.msra.mxu0 0.0
        %7433 = vmatprep.subr.mxu0 0.0
        %7434 = vmatpush1.msra.mxu0 0.0
        %7435 = vmatprep.subr.mxu0 0.0
        %7436 = vmatpush1.msra.mxu0 0.0
        %7437 = vmatprep.subr.mxu0 0.0
        %7438 = vmatpush1.msra.mxu0 0.0
        %7439 = vmatprep.subr.mxu0 0.0
        %7440 = vmatpush1.msra.mxu0 0.0
        %7441 = vmatprep.subr.mxu0 0.0
        %7442 = vmatpush1.msra.mxu0 0.0
        %7443 = vmatprep.subr.mxu0 0.0
        %7444 = vmatpush1.msra.mxu0 0.0
        %7445 = vmatprep.subr.mxu0 0.0
        %7446 = vmatpush1.msra.mxu0 0.0
        %7447 = vmatprep.subr.mxu0 0.0
        %7448 = vmatpush1.msra.mxu0 0.0
        %7449 = vmatprep.subr.mxu0 0.0
        %7450 = vmatpush1.msra.mxu0 0.0
        %7451 = vmatprep.subr.mxu0 0.0
        %7452 = vmatpush1.msra.mxu0 0.0
        %7453 = vmatprep.mubr.f32.mxu0 0.0
        %7454 = vmatmul.mubr.f32.gmra.mrb[0].mxu0 %v6028
        %v7455 = vpop.f32.mrb[0].mxu0
        %v7456 = vadd.f32 0.0, %v7455
        %v7457 = vpop.f32.mrb[0].mxu0
        %7458 = vmatprep.mubr.f32.mxu0 0.0
        %7459 = vmatmul.mubr.f32.gmra.mrb[0].mxu0 %v6031
        %v7460 = vpop.f32.mrb[0].mxu0
        %v7461 = vadd.f32 0.0, %v7460
        %v7462 = vpop.f32.mrb[0].mxu0
        %7463 = vmatprep.mubr.f32.mxu0 0.0
        %7464 = vmatmul.mubr.f32.gmra.mrb[0].mxu0 %v6034
        %v7465 = vpop.f32.mrb[0].mxu0
        %v7466 = vadd.f32 0.0, %v7465
        %v7467 = vpop.f32.mrb[0].mxu0
        %7468 = vmatprep.mubr.f32.mxu0 0.0
        %7469 = vmatmul.mubr.f32.gmra.mrb[0].mxu0 %v6037
        %v7470 = vpop.f32.mrb[0].mxu0
        %v7471 = vadd.f32 0.0, %v7470
        %v7472 = vpop.f32.mrb[0].mxu0
        %7473 = vdwg.mxu0
        %s7474 = scalar_lea.vmem %s5, 224
        %v7475 = vld [vmem:[%s7474] sm:$0xff]
        %v7476 = vld [vmem:[%s7474 + $0x8] sm:$0xff]
        %v7477 = vld [vmem:[%s7474 + $0x10] sm:$0xff]
        %v7478 = vld [vmem:[%s7474 + $0x18] sm:$0xff]
        %v7480 = vsel %vm6221, %v7475, 0
        %v7483 = vsel %vm6221, %v7476, 0
        %v7486 = vsel %vm6221, %v7477, 0
        %v7489 = vsel %vm6221, %v7478, 0
        %7491 = vmatprep.subr.mxu0 0.0
        %7492 = vmatpush1.msra.mxu0 %v7456
        %7493 = vmatprep.subr.mxu0 0.0
        %7494 = vmatpush1.msra.mxu0 %v7461
        %7495 = vmatprep.subr.mxu0 0.0
        %7496 = vmatpush1.msra.mxu0 %v7466
        %7497 = vmatprep.subr.mxu0 0.0
        %7498 = vmatpush1.msra.mxu0 %v7471
        %7499 = vmatprep.subr.mxu0 0.0
        %7500 = vmatpush1.msra.mxu0 0.0
        %7501 = vmatprep.subr.mxu0 0.0
        %7502 = vmatpush1.msra.mxu0 0.0
        %7503 = vmatprep.subr.mxu0 0.0
        %7504 = vmatpush1.msra.mxu0 0.0
        %7505 = vmatprep.subr.mxu0 0.0
        %7506 = vmatpush1.msra.mxu0 0.0
        %7507 = vmatprep.subr.mxu0 0.0
        %7508 = vmatpush1.msra.mxu0 0.0
        %7509 = vmatprep.subr.mxu0 0.0
        %7510 = vmatpush1.msra.mxu0 0.0
        %7511 = vmatprep.subr.mxu0 0.0
        %7512 = vmatpush1.msra.mxu0 0.0
        %7513 = vmatprep.subr.mxu0 0.0
        %7514 = vmatpush1.msra.mxu0 0.0
        %7515 = vmatprep.subr.mxu0 0.0
        %7516 = vmatpush1.msra.mxu0 0.0
        %7517 = vmatprep.subr.mxu0 0.0
        %7518 = vmatpush1.msra.mxu0 0.0
        %7519 = vmatprep.subr.mxu0 0.0
        %7520 = vmatpush1.msra.mxu0 0.0
        %7521 = vmatprep.subr.mxu0 0.0
        %7522 = vmatpush1.msra.mxu0 0.0
        %7523 = vmatprep.subr.mxu0 0.0
        %7524 = vmatpush1.msra.mxu0 0.0
        %7525 = vmatprep.subr.mxu0 0.0
        %7526 = vmatpush1.msra.mxu0 0.0
        %7527 = vmatprep.subr.mxu0 0.0
        %7528 = vmatpush1.msra.mxu0 0.0
        %7529 = vmatprep.subr.mxu0 0.0
        %7530 = vmatpush1.msra.mxu0 0.0
        %7531 = vmatprep.subr.mxu0 0.0
        %7532 = vmatpush1.msra.mxu0 0.0
        %7533 = vmatprep.subr.mxu0 0.0
        %7534 = vmatpush1.msra.mxu0 0.0
        %7535 = vmatprep.subr.mxu0 0.0
        %7536 = vmatpush1.msra.mxu0 0.0
        %7537 = vmatprep.subr.mxu0 0.0
        %7538 = vmatpush1.msra.mxu0 0.0
        %7539 = vmatprep.subr.mxu0 0.0
        %7540 = vmatpush1.msra.mxu0 0.0
        %7541 = vmatprep.subr.mxu0 0.0
        %7542 = vmatpush1.msra.mxu0 0.0
        %7543 = vmatprep.subr.mxu0 0.0
        %7544 = vmatpush1.msra.mxu0 0.0
        %7545 = vmatprep.subr.mxu0 0.0
        %7546 = vmatpush1.msra.mxu0 0.0
        %7547 = vmatprep.subr.mxu0 0.0
        %7548 = vmatpush1.msra.mxu0 0.0
        %7549 = vmatprep.subr.mxu0 0.0
        %7550 = vmatpush1.msra.mxu0 0.0
        %7551 = vmatprep.subr.mxu0 0.0
        %7552 = vmatpush1.msra.mxu0 0.0
        %7553 = vmatprep.subr.mxu0 0.0
        %7554 = vmatpush1.msra.mxu0 0.0
        %7555 = vmatprep.mubr.f32.mxu0 0.0
        %7556 = vmatmul.mubr.f32.gmra.mrb[0].mxu0 %v7480
        %v7557 = vpop.f32.mrb[0].mxu0
        %v7558 = vadd.f32 0.0, %v7557
        %v7559 = vpop.f32.mrb[0].mxu0
        %7560 = vmatprep.mubr.f32.mxu0 0.0
        %7561 = vmatmul.mubr.f32.gmra.mrb[0].mxu0 %v7483
        %v7562 = vpop.f32.mrb[0].mxu0
        %v7563 = vadd.f32 0.0, %v7562
        %v7564 = vpop.f32.mrb[0].mxu0
        %7565 = vmatprep.mubr.f32.mxu0 0.0
        %7566 = vmatmul.mubr.f32.gmra.mrb[0].mxu0 %v7486
        %v7567 = vpop.f32.mrb[0].mxu0
        %v7568 = vadd.f32 0.0, %v7567
        %v7569 = vpop.f32.mrb[0].mxu0
        %7570 = vmatprep.mubr.f32.mxu0 0.0
        %7571 = vmatmul.mubr.f32.gmra.mrb[0].mxu0 %v7489
        %v7572 = vpop.f32.mrb[0].mxu0
        %v7573 = vadd.f32 0.0, %v7572
        %v7574 = vpop.f32.mrb[0].mxu0
        %7575 = vdwg.mxu0
        %v7576 = vadd.f32 %v7382, %v7558
        %v7577 = vadd.f32 %v7383, %v7563
        %v7578 = vadd.f32 %v7384, %v7568
        %v7579 = vadd.f32 %v7385, %v7573
        %s7580 = scalar_lea.vmem [#allocation9], 128
        %v7581 = vld [vmem:[%s7580] sm:$0xff]
        %v7582 = vld [vmem:[%s7580 + $0x8] sm:$0xff]
        %7583 = vmatprep.subr.mxu0 0.0
        %7584 = vmatpush1.msra.mxu0 %v7581
        %7585 = vmatprep.subr.mxu0 0.0
        %7586 = vmatpush1.msra.mxu0 %v7582
        %7587 = vmatprep.subr.mxu0 0.0
        %7588 = vmatpush1.msra.mxu0 0.0
        %7589 = vmatprep.subr.mxu0 0.0
        %7590 = vmatpush1.msra.mxu0 0.0
        %7591 = vmatprep.subr.mxu0 0.0
        %7592 = vmatpush1.msra.mxu0 0.0
        %7593 = vmatprep.subr.mxu0 0.0
        %7594 = vmatpush1.msra.mxu0 0.0
        %7595 = vmatprep.subr.mxu0 0.0
        %7596 = vmatpush1.msra.mxu0 0.0
        %7597 = vmatprep.subr.mxu0 0.0
        %7598 = vmatpush1.msra.mxu0 0.0
        %7599 = vmatprep.subr.mxu0 0.0
        %7600 = vmatpush1.msra.mxu0 0.0
        %7601 = vmatprep.subr.mxu0 0.0
        %7602 = vmatpush1.msra.mxu0 0.0
        %7603 = vmatprep.subr.mxu0 0.0
        %7604 = vmatpush1.msra.mxu0 0.0
        %7605 = vmatprep.subr.mxu0 0.0
        %7606 = vmatpush1.msra.mxu0 0.0
        %7607 = vmatprep.subr.mxu0 0.0
        %7608 = vmatpush1.msra.mxu0 0.0
        %7609 = vmatprep.subr.mxu0 0.0
        %7610 = vmatpush1.msra.mxu0 0.0
        %7611 = vmatprep.subr.mxu0 0.0
        %7612 = vmatpush1.msra.mxu0 0.0
        %7613 = vmatprep.subr.mxu0 0.0
        %7614 = vmatpush1.msra.mxu0 0.0
        %7615 = vmatprep.subr.mxu0 0.0
        %7616 = vmatpush1.msra.mxu0 0.0
        %7617 = vmatprep.subr.mxu0 0.0
        %7618 = vmatpush1.msra.mxu0 0.0
        %7619 = vmatprep.subr.mxu0 0.0
        %7620 = vmatpush1.msra.mxu0 0.0
        %7621 = vmatprep.subr.mxu0 0.0
        %7622 = vmatpush1.msra.mxu0 0.0
        %7623 = vmatprep.subr.mxu0 0.0
        %7624 = vmatpush1.msra.mxu0 0.0
        %7625 = vmatprep.subr.mxu0 0.0
        %7626 = vmatpush1.msra.mxu0 0.0
        %7627 = vmatprep.subr.mxu0 0.0
        %7628 = vmatpush1.msra.mxu0 0.0
        %7629 = vmatprep.subr.mxu0 0.0
        %7630 = vmatpush1.msra.mxu0 0.0
        %7631 = vmatprep.subr.mxu0 0.0
        %7632 = vmatpush1.msra.mxu0 0.0
        %7633 = vmatprep.subr.mxu0 0.0
        %7634 = vmatpush1.msra.mxu0 0.0
        %7635 = vmatprep.subr.mxu0 0.0
        %7636 = vmatpush1.msra.mxu0 0.0
        %7637 = vmatprep.subr.mxu0 0.0
        %7638 = vmatpush1.msra.mxu0 0.0
        %7639 = vmatprep.subr.mxu0 0.0
        %7640 = vmatpush1.msra.mxu0 0.0
        %7641 = vmatprep.subr.mxu0 0.0
        %7642 = vmatpush1.msra.mxu0 0.0
        %7643 = vmatprep.subr.mxu0 0.0
        %7644 = vmatpush1.msra.mxu0 0.0
        %7645 = vmatprep.subr.mxu0 0.0
        %7646 = vmatpush1.msra.mxu0 0.0
        %7647 = vmatprep.mubr.f32.mxu0 0.0
        %7648 = vmatmul.mubr.f32.gmra.mrb[0].mxu0 %v6028
        %v7649 = vpop.f32.mrb[0].mxu0
        %v7650 = vadd.f32 0.0, %v7649
        %v7651 = vpop.f32.mrb[0].mxu0
        %7652 = vmatprep.mubr.f32.mxu0 0.0
        %7653 = vmatmul.mubr.f32.gmra.mrb[0].mxu0 %v6031
        %v7654 = vpop.f32.mrb[0].mxu0
        %v7655 = vadd.f32 0.0, %v7654
        %v7656 = vpop.f32.mrb[0].mxu0
        %7657 = vmatprep.mubr.f32.mxu0 0.0
        %7658 = vmatmul.mubr.f32.gmra.mrb[0].mxu0 %v6034
        %v7659 = vpop.f32.mrb[0].mxu0
        %v7660 = vadd.f32 0.0, %v7659
        %v7661 = vpop.f32.mrb[0].mxu0
        %7662 = vmatprep.mubr.f32.mxu0 0.0
        %7663 = vmatmul.mubr.f32.gmra.mrb[0].mxu0 %v6037
        %v7664 = vpop.f32.mrb[0].mxu0
        %v7665 = vadd.f32 0.0, %v7664
        %v7666 = vpop.f32.mrb[0].mxu0
        %7667 = vdwg.mxu0
        %s7668 = scalar_lea.vmem %s5, 256
        %v7669 = vld [vmem:[%s7668] sm:$0xff]
        %v7670 = vld [vmem:[%s7668 + $0x8] sm:$0xff]
        %v7671 = vld [vmem:[%s7668 + $0x10] sm:$0xff]
        %v7672 = vld [vmem:[%s7668 + $0x18] sm:$0xff]
        %v7674 = vsel %vm6221, %v7669, 0
        %v7677 = vsel %vm6221, %v7670, 0
        %v7680 = vsel %vm6221, %v7671, 0
        %v7683 = vsel %vm6221, %v7672, 0
        %7685 = vmatprep.subr.mxu0 0.0
        %7686 = vmatpush1.msra.mxu0 %v7650
        %7687 = vmatprep.subr.mxu0 0.0
        %7688 = vmatpush1.msra.mxu0 %v7655
        %7689 = vmatprep.subr.mxu0 0.0
        %7690 = vmatpush1.msra.mxu0 %v7660
        %7691 = vmatprep.subr.mxu0 0.0
        %7692 = vmatpush1.msra.mxu0 %v7665
        %7693 = vmatprep.subr.mxu0 0.0
        %7694 = vmatpush1.msra.mxu0 0.0
        %7695 = vmatprep.subr.mxu0 0.0
        %7696 = vmatpush1.msra.mxu0 0.0
        %7697 = vmatprep.subr.mxu0 0.0
        %7698 = vmatpush1.msra.mxu0 0.0
        %7699 = vmatprep.subr.mxu0 0.0
        %7700 = vmatpush1.msra.mxu0 0.0
        %7701 = vmatprep.subr.mxu0 0.0
        %7702 = vmatpush1.msra.mxu0 0.0
        %7703 = vmatprep.subr.mxu0 0.0
        %7704 = vmatpush1.msra.mxu0 0.0
        %7705 = vmatprep.subr.mxu0 0.0
        %7706 = vmatpush1.msra.mxu0 0.0
        %7707 = vmatprep.subr.mxu0 0.0
        %7708 = vmatpush1.msra.mxu0 0.0
        %7709 = vmatprep.subr.mxu0 0.0
        %7710 = vmatpush1.msra.mxu0 0.0
        %7711 = vmatprep.subr.mxu0 0.0
        %7712 = vmatpush1.msra.mxu0 0.0
        %7713 = vmatprep.subr.mxu0 0.0
        %7714 = vmatpush1.msra.mxu0 0.0
        %7715 = vmatprep.subr.mxu0 0.0
        %7716 = vmatpush1.msra.mxu0 0.0
        %7717 = vmatprep.subr.mxu0 0.0
        %7718 = vmatpush1.msra.mxu0 0.0
        %7719 = vmatprep.subr.mxu0 0.0
        %7720 = vmatpush1.msra.mxu0 0.0
        %7721 = vmatprep.subr.mxu0 0.0
        %7722 = vmatpush1.msra.mxu0 0.0
        %7723 = vmatprep.subr.mxu0 0.0
        %7724 = vmatpush1.msra.mxu0 0.0
        %7725 = vmatprep.subr.mxu0 0.0
        %7726 = vmatpush1.msra.mxu0 0.0
        %7727 = vmatprep.subr.mxu0 0.0
        %7728 = vmatpush1.msra.mxu0 0.0
        %7729 = vmatprep.subr.mxu0 0.0
        %7730 = vmatpush1.msra.mxu0 0.0
        %7731 = vmatprep.subr.mxu0 0.0
        %7732 = vmatpush1.msra.mxu0 0.0
        %7733 = vmatprep.subr.mxu0 0.0
        %7734 = vmatpush1.msra.mxu0 0.0
        %7735 = vmatprep.subr.mxu0 0.0
        %7736 = vmatpush1.msra.mxu0 0.0
        %7737 = vmatprep.subr.mxu0 0.0
        %7738 = vmatpush1.msra.mxu0 0.0
        %7739 = vmatprep.subr.mxu0 0.0
        %7740 = vmatpush1.msra.mxu0 0.0
        %7741 = vmatprep.subr.mxu0 0.0
        %7742 = vmatpush1.msra.mxu0 0.0
        %7743 = vmatprep.subr.mxu0 0.0
        %7744 = vmatpush1.msra.mxu0 0.0
        %7745 = vmatprep.subr.mxu0 0.0
        %7746 = vmatpush1.msra.mxu0 0.0
        %7747 = vmatprep.subr.mxu0 0.0
        %7748 = vmatpush1.msra.mxu0 0.0
        %7749 = vmatprep.mubr.f32.mxu0 0.0
        %7750 = vmatmul.mubr.f32.gmra.mrb[0].mxu0 %v7674
        %v7751 = vpop.f32.mrb[0].mxu0
        %v7752 = vadd.f32 0.0, %v7751
        %v7753 = vpop.f32.mrb[0].mxu0
        %7754 = vmatprep.mubr.f32.mxu0 0.0
        %7755 = vmatmul.mubr.f32.gmra.mrb[0].mxu0 %v7677
        %v7756 = vpop.f32.mrb[0].mxu0
        %v7757 = vadd.f32 0.0, %v7756
        %v7758 = vpop.f32.mrb[0].mxu0
        %7759 = vmatprep.mubr.f32.mxu0 0.0
        %7760 = vmatmul.mubr.f32.gmra.mrb[0].mxu0 %v7680
        %v7761 = vpop.f32.mrb[0].mxu0
        %v7762 = vadd.f32 0.0, %v7761
        %v7763 = vpop.f32.mrb[0].mxu0
        %7764 = vmatprep.mubr.f32.mxu0 0.0
        %7765 = vmatmul.mubr.f32.gmra.mrb[0].mxu0 %v7683
        %v7766 = vpop.f32.mrb[0].mxu0
        %v7767 = vadd.f32 0.0, %v7766
        %v7768 = vpop.f32.mrb[0].mxu0
        %7769 = vdwg.mxu0
        %v7770 = vadd.f32 %v7576, %v7752
        %v7771 = vadd.f32 %v7577, %v7757
        %v7772 = vadd.f32 %v7578, %v7762
        %v7773 = vadd.f32 %v7579, %v7767
        %v7774 = vsel %vm4433, %v7770, 0.0
        %7775 = vadd.xlane.f32.xlu0 %v7774
        %v7776 = vpop.xlane.xlu0 %7775
        %v7777 = vsel %vm4433, %v7771, 0.0
        %7778 = vadd.xlane.f32.xlu0 %v7777
        %v7779 = vpop.xlane.xlu0 %7778
        %v7780 = vsel %vm4433, %v7772, 0.0
        %7781 = vadd.xlane.f32.xlu0 %v7780
        %v7782 = vpop.xlane.xlu0 %7781
        %v7783 = vsel %vm4433, %v7773, 0.0
        %7784 = vadd.xlane.f32.xlu0 %v7783
        %v7785 = vpop.xlane.xlu0 %7784
        %v7786 = vmul.f32 %v7776, %v5970
        %v7787 = vmul.f32 %v7779, %v5970
        %v7788 = vmul.f32 %v7782, %v5970
        %v7789 = vmul.f32 %v7785, %v5970
        %v7790 = vsub.f32 %v7770, %v7786
        %v7791 = vsub.f32 %v7771, %v7787
        %v7792 = vsub.f32 %v7772, %v7788
        %v7793 = vsub.f32 %v7773, %v7789
        %v7794 = vmul.f32 %v7790, %v7790
        %v7795 = vmul.f32 %v7791, %v7791
        %v7796 = vmul.f32 %v7792, %v7792
        %v7797 = vmul.f32 %v7793, %v7793
        %v7798 = vsel %vm4433, %v7794, 0.0
        %7799 = vadd.xlane.f32.xlu0 %v7798
        %v7800 = vpop.xlane.xlu0 %7799
        %v7801 = vsel %vm4433, %v7795, 0.0
        %7802 = vadd.xlane.f32.xlu0 %v7801
        %v7803 = vpop.xlane.xlu0 %7802
        %v7804 = vsel %vm4433, %v7796, 0.0
        %7805 = vadd.xlane.f32.xlu0 %v7804
        %v7806 = vpop.xlane.xlu0 %7805
        %v7807 = vsel %vm4433, %v7797, 0.0
        %7808 = vadd.xlane.f32.xlu0 %v7807
        %v7809 = vpop.xlane.xlu0 %7808
        %v7810 = vmul.f32 %v7800, %v5970
        %v7811 = vmul.f32 %v7803, %v5970
        %v7812 = vmul.f32 %v7806, %v5970
        %v7813 = vmul.f32 %v7809, %v5970
        %v7814 = vadd.f32 %v7810, 1e-05
        %v7815 = vadd.f32 %v7811, 1e-05
        %v7816 = vadd.f32 %v7812, 1e-05
        %v7817 = vadd.f32 %v7813, 1e-05
        %v7818 = vrsqrt.pop %v7814
        %v7819 = vrsqrt.pop %v7815
        %v7820 = vrsqrt.pop %v7816
        %v7821 = vrsqrt.pop %v7817
        %v7822 = vmul.f32 %v7790, %v7818
        %v7823 = vmul.f32 %v7791, %v7819
        %v7824 = vmul.f32 %v7792, %v7820
        %v7825 = vmul.f32 %v7793, %v7821
        %s7826 = sld [smem:[#allocation2 + $0x3]]
        %vm7827 = vcmp.ge.f32.partialorder %v7822, 0.0
        %vm7828 = vcmp.ge.f32.partialorder %v7823, 0.0
        %vm7829 = vcmp.ge.f32.partialorder %v7824, 0.0
        %vm7830 = vcmp.ge.f32.partialorder %v7825, 0.0
        %v7831 = vstv %s7826
        %v7832 = vmul.f32 %v7831, %v7822
        %v7833 = vmul.f32 %v7831, %v7823
        %v7834 = vmul.f32 %v7831, %v7824
        %v7835 = vmul.f32 %v7831, %v7825
        %v7836 = vsel %vm7827, %v7822, %v7832
        %v7837 = vsel %vm7828, %v7823, %v7833
        %v7838 = vsel %vm7829, %v7824, %v7834
        %v7839 = vsel %vm7830, %v7825, %v7835
        %7840 = vst.msk [vmem:[%s509] sm:$0xff] %vm4433, %v7836
        %7841 = vst.msk [vmem:[%s509 + $0x8] sm:$0xff] %vm4433, %v7837
        %7842 = vst.msk [vmem:[%s509 + $0x10] sm:$0xff] %vm4433, %v7838
        %7843 = vst.msk [vmem:[%s509 + $0x18] sm:$0xff] %vm4433, %v7839
        %p7844 = scmp.lt.s32.totalorder %s28, 1
        %s7845 = scalar_select %p7844, %s28, 1
        %s7846 = smul.addr %s7845, 2
        %s7847 = smul.addr %s7846, 8
        %s7848 = scalar_lea.vmem %s10, %s7847
        %p7849 = scmp.lt.s32.totalorder %s28, 1
        %s7850 = scalar_select %p7849, %s28, 1
        %s7851 = smul.addr %s7850, 2
        %s7852 = smul.addr %s7851, 8
        %s7853 = scalar_lea.vmem %s11, %s7852
        %p7854 = scmp.lt.s32.totalorder %s28, 1
        %s7855 = scalar_select %p7854, %s28, 1
        %s7856 = smul.addr %s7855, 4
        %s7857 = smul.addr %s7856, 8
        %s7858 = scalar_lea.vmem %s12, %s7857
        // Predicated region
        $region81: #{encoder_forward.1} parent=59 // pred_check
          %p7859 = pneg %p261
        $region82: #{encoder_forward.1} parent=59 // pred_check_branch
          %7861 = sbr.rel (%p7859) target = $region84
        $region83: #{encoder_forward.1} parent=59 // pred_region
          _
        $region84: #{encoder_forward.1} parent=59 // pred_fallthru
          _
        // Predicated region
        $region85: #{encoder_forward.1} parent=59 // pred_check
          %p7862 = pneg %p287
        $region86: #{encoder_forward.1} parent=59 // pred_check_branch
          %7864 = sbr.rel (%p7862) target = $region88
        $region87: #{encoder_forward.1} parent=59 // pred_region
          _
        $region88: #{encoder_forward.1} parent=59 // pred_fallthru
          _
        // Predicated region
        $region89: #{encoder_forward.1} parent=59 // pred_check
          %p7865 = pneg %p313
        $region90: #{encoder_forward.1} parent=59 // pred_check_branch
          %7867 = sbr.rel (%p7865) target = $region92
        $region91: #{encoder_forward.1} parent=59 // pred_region
          _
        $region92: #{encoder_forward.1} parent=59 // pred_fallthru
          _
      $region60: #{encoder_forward.1} parent=5 // pred_fallthru
        _
      %p7868 = scmp.le.s32.totalorder 2, %s23
      // Predicated region
      $region93: #{encoder_forward.1} parent=5 // pred_check
        %p7869 = pneg %p7868
      $region94: #{encoder_forward.1} parent=5 // pred_check_branch
        %7871 = sbr.rel (%p7869) target = $region96
      $region95: #{encoder_forward.1} parent=5 // pred_region
        %s7872 = ssub.s32 %s23, 2
        // Predicated region
        $region97: #{encoder_forward.1} parent=95 // pred_check
          %p7873 = pneg %p267
        $region98: #{encoder_forward.1} parent=95 // pred_check_branch
          %7875 = sbr.rel (%p7873) target = $region100
        $region99: #{encoder_forward.1} parent=95 // pred_region
          %p7876 = scmp.lt.s32.totalorder %s29, 1
          %s7877 = scalar_select %p7876, %s29, 1
          %s7878 = smul.addr %s7877, 2
          %s7879 = smul.addr %s7878, 8
          %s7880 = scalar_lea.vmem %s10, %s7879
        $region100: #{encoder_forward.1} parent=95 // pred_fallthru
          _
        // Predicated region
        $region101: #{encoder_forward.1} parent=95 // pred_check
          %p7881 = pneg %p293
        $region102: #{encoder_forward.1} parent=95 // pred_check_branch
          %7883 = sbr.rel (%p7881) target = $region104
        $region103: #{encoder_forward.1} parent=95 // pred_region
          %p7884 = scmp.lt.s32.totalorder %s29, 1
          %s7885 = scalar_select %p7884, %s29, 1
          %s7886 = smul.addr %s7885, 2
          %s7887 = smul.addr %s7886, 8
          %s7888 = scalar_lea.vmem %s11, %s7887
        $region104: #{encoder_forward.1} parent=95 // pred_fallthru
          _
        // Predicated region
        $region105: #{encoder_forward.1} parent=95 // pred_check
          %p7889 = pneg %p319
        $region106: #{encoder_forward.1} parent=95 // pred_check_branch
          %7891 = sbr.rel (%p7889) target = $region108
        $region107: #{encoder_forward.1} parent=95 // pred_region
          %p7892 = scmp.lt.s32.totalorder %s29, 1
          %s7893 = scalar_select %p7892, %s29, 1
          %s7894 = smul.addr %s7893, 4
          %s7895 = smul.addr %s7894, 8
          %s7896 = scalar_lea.vmem %s12, %s7895
        $region108: #{encoder_forward.1} parent=95 // pred_fallthru
          _
      $region96: #{encoder_forward.1} parent=5 // pred_fallthru
        _
    $region6: #{encoder_forward.1} parent=1 // loop_footer
      %s27 = sadd.s32 1, %s23
    $region7: #{encoder_forward.1} parent=1 // loop_footer_branch
      %22 = sbr.rel target = $region3
    $region8: #{encoder_forward.1} parent=1 // loop_exit
      _
    %7897 = vsyncpa [#allocation3], 1
    %s7898 = scalar_lea.sflag [#allocation3], 1
    %7899 = vsyncpa %s7898, 1
    %7900 = vsyncpa [#allocation7], 1
    %7901 = vsyncpa [#allocation10], 1
    %7902 = vsyncpa [#allocation4], 1
    %s7903 = scalar_lea.sflag [#allocation4], 1
    %7904 = vsyncpa %s7903, 1

</llo_original>
